<compile_context>
chip_gen: v7x
topology: tpu7x:2x2x1
jax: 0.10.0
libtpu: 0.0.40
codegen_flags: <defaults>
</compile_context>

<pallas_src>
import functools

import jax
import jax.numpy as jnp
from jax import lax
from jax.experimental import pallas as pl
from jax.experimental.pallas import tpu as pltpu

EPS = 1e-5


# --------------------------- in-kernel helpers -------------------------------

def _bn_scale_shift(hs, count, g, be):
    """Training-mode BatchNorm1d scale/shift from VMEM-resident activations.

    hs: list of (C, cols) f32 slabs (one per batch item); count: elements per
    channel over the whole batch; g/be: (C, 1) f32.  Two-pass (centered)
    variance.  Returns (scale, shift), each (C, 1) f32.
    """
    mean = sum(jnp.sum(h, axis=1, keepdims=True) for h in hs) / count
    var = sum(jnp.sum((h - mean) ** 2, axis=1, keepdims=True) for h in hs) / count
    scale = g * lax.rsqrt(var + EPS)
    shift = be - mean * scale
    return scale, shift


def _fold_bn_into_conv(w, b, hs, count, g, be, n_taps):
    """Fold BatchNorm(prev activations) into the next conv's weight/bias.

    w: (C_out, n_taps*C_in) f32, column index = t*C_in + ci; b: (C_out, 1).
    Returns (w_folded bf16, b_folded f32) with
        conv(w, bn(h)) + b == conv(w_folded, h) + b_folded.
    """
    scale, shift = _bn_scale_shift(hs, count, g, be)          # (C_in, 1)
    scale_row = jnp.concatenate([jnp.transpose(scale)] * n_taps, axis=1)
    shift_row = jnp.concatenate([jnp.transpose(shift)] * n_taps, axis=1)
    w_fold = w * scale_row                                    # (C_out, n_taps*C_in)
    b_fold = b + jnp.sum(w * shift_row, axis=1, keepdims=True)
    return w_fold.astype(jnp.bfloat16), b_fold


def _tap_conv(src, w_bf16, bias, *, n_taps, d, n_cols):
    """Valid 1-D conv over the flattened (length*regions) lane axis.

    src: (C_in, L_in*d) f32 with column index l*d + r, so tap t is the
    contiguous lane slice [t*d, t*d + n_cols).  The full im2col patch is built
    once (each tap slice copied exactly once) and contracted in one jnp.dot;
    Mosaic splits K = n_taps*C_in into native MXU pushes per chip generation.
    """
    s16 = src.astype(jnp.bfloat16)
    patch = jnp.concatenate(
        [s16[:, t * d:t * d + n_cols] for t in range(n_taps)], axis=0)
    return jnp.dot(w_bf16, patch, preferred_element_type=jnp.float32) + bias


# --------------------------------- kernels ----------------------------------

def _in0_kernel(x_ref, o_ref, *, d):
    """InstanceNorm1d(time_series) over the region axis, emitted as the two
    stride-2 parity streams so conv1's taps become contiguous lane slices.

    x_ref: (1, T//2, 2*d) f32 (free row-major view of (1, T, d); per row a the
           columns are [x[2a, :], x[2a+1, :]]).
    o_ref: (1, 2, T//2, d) f32 with o[0, p, a, r] = normalized x[0, 2a+p, r].
    """
    xa = x_ref[0]                                             # (T//2, 2d)
    for p in range(2):
        s = xa[:, p * d:(p + 1) * d]                          # (T//2, d)
        mu = jnp.mean(s, axis=-1, keepdims=True)
        var = jnp.mean((s - mu) ** 2, axis=-1, keepdims=True)
        o_ref[0, p] = (s - mu) * lax.rsqrt(var + EPS)


def _fused_kernel(xp_ref, w1_ref, b1_ref, g1_ref, be1_ref,
                  w2_ref, b2_ref, g2_ref, be2_ref,
                  w3_ref, b3_ref, g3_ref, be3_ref,
                  wl1_ref, bl1_ref, wl2_ref, bl2_ref, o_ref,
                  *, b, d, k1, L1, L2, L3, L4, pool, out_size):
    """conv1 + BN1 + conv2 + BN2 + conv3 + BN3 + maxpool + hack + MLP head,
    whole batch in VMEM.  Activation columns are ordered l*d + r (lane-dense)
    so every conv tap is a contiguous lane slice."""
    f32, bf16 = jnp.float32, jnp.bfloat16
    c3 = w3_ref.shape[0]

    # ---- conv1: Conv1d(1, 32, k1, stride=2) on the parity streams ----------
    w1 = w1_ref[...].astype(bf16)                             # (32, k1)
    h1 = []
    for i in range(b):
        streams = xp_ref[i]                                   # (2, (T//2)*d) f32
        pm = jnp.concatenate(
            [streams[t % 2:t % 2 + 1, (t // 2) * d:(t // 2) * d + L1 * d]
             for t in range(k1)], axis=0)                     # (k1, L1*d)
        h1.append(jnp.dot(w1, pm.astype(bf16),
                          preferred_element_type=f32) + b1_ref[...])

    # ---- BN1 folded into conv2: Conv1d(32, 32, 16) --------------------------
    w2f, b2f = _fold_bn_into_conv(w2_ref[...], b2_ref[...], h1,
                                  float(b * d * L1),
                                  g1_ref[...], be1_ref[...], n_taps=16)
    h2 = [_tap_conv(h1[i], w2f, b2f, n_taps=16, d=d, n_cols=L2 * d)
          for i in range(b)]

    # ---- BN2 folded into conv3: Conv1d(32, 16, 8) ----------------------------
    w3f, b3f = _fold_bn_into_conv(w3_ref[...], b3_ref[...], h2,
                                  float(b * d * L2),
                                  g2_ref[...], be2_ref[...], n_taps=8)
    h3 = [_tap_conv(h2[i], w3f, b3f, n_taps=8, d=d, n_cols=L3 * d)
          for i in range(b)]

    # ---- BN3 + MaxPool1d(pool) + transposed channel-major flatten -----------
    scale3, shift3 = _bn_scale_shift(h3, float(b * d * L3),
                                     g3_ref[...], be3_ref[...])
    cols = []
    for i in range(b):
        hn = h3[i] * scale3 + shift3                          # (C3, L3*d) f32
        blocks = []
        for li in range(L4):
            base = li * pool * d
            m = hn[:, base:base + d]
            for j in range(1, pool):
                m = jnp.maximum(m, hn[:, base + j * d:base + (j + 1) * d])
            blocks.append(m)                                  # (C3, d)
        cols.append(jnp.concatenate(blocks, axis=0))          # (L4*C3, d)
    # feat[g = li*C3 + c, n = i*d + r] = pooled[b=i, region=r, channel=c, li]
    feat = jnp.concatenate(cols, axis=1)                      # (L4*C3, b*d) f32

    # ---- torch: if (x == x[0,0,-1]).sum() > d: x[x == x[0,0,-1]] = 0 ---------
    rv = feat[L4 * c3 - 1:L4 * c3, 0:1]                       # (1, 1)
    eq = feat == rv
    cnt = jnp.sum(jnp.sum(eq.astype(f32), axis=1, keepdims=True),
                  axis=0, keepdims=True)                      # (1, 1)
    feat = jnp.where(jnp.logical_and(cnt > float(d), eq), 0.0, feat)

    # ---- Linear(L4*C3, 32) -> LeakyReLU(0.2) -> Linear(32, out_size) --------
    y1 = jnp.dot(wl1_ref[...].astype(bf16), feat.astype(bf16),
                 preferred_element_type=f32) + bl1_ref[...]   # (32, b*d)
    y1 = jnp.where(y1 >= 0, y1, 0.2 * y1)
    y2 = jnp.dot(wl2_ref[...].astype(bf16), y1.astype(bf16),
                 preferred_element_type=f32) + bl2_ref[...]   # (out, b*d)
    o_ref[...] = jnp.transpose(y2).reshape(b, d, out_size)


# --------------------------------- wrappers ----------------------------------

def init_params(key, *, k=1, out_size=8, kernel_size=8, pool_size=8,
                time_series=180):
    """Deterministic synthetic parameters in the torch module's layout."""
    L1 = (time_series - kernel_size) // 2 + 1
    L2 = L1 - 16 + 1
    L3 = L2 - 8 + 1
    L4 = L3 // pool_size
    feat = L4 * 16
    keys = jax.random.split(key, 10)

    def u(kk, shape, fan_in):
        bound = 1.0 / float(fan_in) ** 0.5
        return jax.random.uniform(kk, shape, jnp.float32, -bound, bound)

    return dict(
        w_conv1=u(keys[0], (32, k, kernel_size), k * kernel_size),
        b_conv1=u(keys[1], (32,), k * kernel_size),
        w_conv2=u(keys[2], (32, 32, 16), 32 * 16),
        b_conv2=u(keys[3], (32,), 32 * 16),
        w_conv3=u(keys[4], (16, 32, 8), 32 * 8),
        b_conv3=u(keys[5], (16,), 32 * 8),
        g1=jnp.ones((32,), jnp.float32), be1=jnp.zeros((32,), jnp.float32),
        g2=jnp.ones((32,), jnp.float32), be2=jnp.zeros((32,), jnp.float32),
        g3=jnp.ones((16,), jnp.float32), be3=jnp.zeros((16,), jnp.float32),
        w_lin1=u(keys[6], (32, feat), feat),                   # torch (out, in)
        b_lin1=u(keys[7], (32,), feat),
        w_lin2=u(keys[8], (out_size, 32), 32),
        b_lin2=u(keys[9], (out_size,), 32),
    )


def prepare_params(params):
    """One-time re-layout of torch-shaped parameters into kernel operands."""
    f32 = jnp.float32
    col = lambda v: v.reshape(-1, 1).astype(f32)
    c3 = params['w_conv3'].shape[0]                            # 16
    l4 = params['w_lin1'].shape[1] // c3                       # pooled length
    # Linear1 weight with columns reordered from torch's (c, l4) to (l4, c).
    w_l1 = (params['w_lin1'].reshape(-1, c3, l4)
            .transpose(0, 2, 1).reshape(-1, l4 * c3))
    return dict(
        w1=params['w_conv1'][:, 0, :].astype(f32),                         # (32, K1)
        b1=col(params['b_conv1']),
        # conv weights as (C_out, n_taps*C_in), column index = t*C_in + ci
        w2=jnp.transpose(params['w_conv2'], (0, 2, 1))
        .reshape(params['w_conv2'].shape[0], -1).astype(f32),              # (32, 512)
        b2=col(params['b_conv2']),
        w3=jnp.transpose(params['w_conv3'], (0, 2, 1))
        .reshape(params['w_conv3'].shape[0], -1).astype(f32),              # (16, 256)
        b3=col(params['b_conv3']),
        g1=col(params['g1']), be1=col(params['be1']),
        g2=col(params['g2']), be2=col(params['be2']),
        g3=col(params['g3']), be3=col(params['be3']),
        wl1=w_l1.astype(f32),                                              # (32, 128)
        bl1=col(params['b_lin1']),
        wl2=params['w_lin2'].astype(f32),                                  # (out, 32)
        bl2=col(params['b_lin2']),
    )


def conv_k_region_forward(prep, x, *, out_size=8, kernel_size=8, pool_size=8):
    b, T, d = x.shape
    assert T % 2 == 0, "time_series must be even (stride-2 parity split)"
    S = T // 2
    L1 = (T - kernel_size) // 2 + 1
    L2 = L1 - 16 + 1
    L3 = L2 - 8 + 1
    L4 = L3 // pool_size
    f32 = jnp.float32

    # ---- InstanceNorm1d fused with the stride-2 parity split (tiny) --------
    xn = pl.pallas_call(
        functools.partial(_in0_kernel, d=d),
        grid=(b,),
        in_specs=[pl.BlockSpec((1, S, 2 * d), lambda i: (i, 0, 0))],
        out_specs=pl.BlockSpec((1, 2, S, d), lambda i: (i, 0, 0, 0)),
        out_shape=jax.ShapeDtypeStruct((b, 2, S, d), f32),
        compiler_params=pltpu.CompilerParams(
            dimension_semantics=("parallel",)),
    )(x.astype(f32).reshape(b, S, 2 * d))       # free row-major re-view
    xp = xn.reshape(b, 2, S * d)                # free row-major re-view

    # ---- everything else fused: whole batch resident in VMEM ---------------
    vmem = pl.BlockSpec(memory_space=pltpu.MemorySpace.VMEM)
    out = pl.pallas_call(
        functools.partial(_fused_kernel, b=b, d=d, k1=kernel_size,
                          L1=L1, L2=L2, L3=L3, L4=L4, pool=pool_size,
                          out_size=out_size),
        in_specs=[vmem] * 17,
        out_specs=vmem,
        out_shape=jax.ShapeDtypeStruct((b, d, out_size), f32),
    )(xp, prep['w1'], prep['b1'], prep['g1'], prep['be1'],
      prep['w2'], prep['b2'], prep['g2'], prep['be2'],
      prep['w3'], prep['b3'], prep['g3'], prep['be3'],
      prep['wl1'], prep['bl1'], prep['wl2'], prep['bl2'])
    return out


if __name__ == "__main__":
    key = jax.random.PRNGKey(0)
    kx, kp = jax.random.split(key)
    b, d, time_series = 2, 8, 180      # x is (b, time_series, d) == torch (b, k, d)
    x = jax.random.normal(kx, (b, time_series, d), jnp.float32)
    params = init_params(kp, time_series=time_series)
    prep = prepare_params(params)      # one-time weight re-layout (hoisted)

    fwd = jax.jit(functools.partial(conv_k_region_forward,
                                    out_size=8, kernel_size=8, pool_size=8))
    out = jax.block_until_ready(fwd(prep, x))

    assert out.shape == (b, d, 8), out.shape
    assert bool(jnp.all(jnp.isfinite(out)))
    print("KERNEL_OK")
</pallas_src>

<mosaic_0001>
module attributes {stable_mosaic.version = 11 : i64} {
  func.func @_in0_kernel(%arg0: i32, %arg1: memref<1x90x16xf32, #tpu.memory_space<vmem>>, %arg2: memref<1x2x90x8xf32, #tpu.memory_space<vmem>>) attributes {dimension_semantics = [#tpu.dimension_semantics<parallel>], iteration_bounds = array<i64: 2>, scalar_prefetch = 0 : i64, scratch_operands = 0 : i64, tpu.core_type = #tpu.core_type<tc>, window_params = [{transform_indices = @transform_0, window_bounds = array<i64: 1, 90, 16>}, {transform_indices = @transform_1, window_bounds = array<i64: 1, 2, 90, 8>}]} {
    %c0 = arith.constant 0 : index
    %c0_0 = arith.constant 0 : index
    %c0_1 = arith.constant 0 : index
    %0 = vector.load %arg1[%c0, %c0_0, %c0_1] : memref<1x90x16xf32, #tpu.memory_space<vmem>>, vector<1x90x16xf32>
    %1 = vector.shape_cast %0 : vector<1x90x16xf32> to vector<90x16xf32>
    %2 = vector.extract_strided_slice %1 {offsets = [0, 0], sizes = [90, 8], strides = [1, 1]} : vector<90x16xf32> to vector<90x8xf32>
    %cst = arith.constant dense<0.000000e+00> : vector<90xf32>
    %3 = vector.multi_reduction <add>, %2, %cst [1] : vector<90x8xf32> to vector<90xf32>
    %4 = vector.shape_cast %3 : vector<90xf32> to vector<90x1xf32>
    %cst_2 = arith.constant 8.000000e+00 : f32
    %5 = vector.broadcast %cst_2 : f32 to vector<90x1xf32>
    %6 = arith.divf %4, %5 : vector<90x1xf32>
    %7 = vector.broadcast %6 : vector<90x1xf32> to vector<90x8xf32>
    %8 = arith.subf %2, %7 : vector<90x8xf32>
    %9 = arith.mulf %8, %8 : vector<90x8xf32>
    %cst_3 = arith.constant dense<0.000000e+00> : vector<90xf32>
    %10 = vector.multi_reduction <add>, %9, %cst_3 [1] : vector<90x8xf32> to vector<90xf32>
    %11 = vector.shape_cast %10 : vector<90xf32> to vector<90x1xf32>
    %cst_4 = arith.constant 8.000000e+00 : f32
    %12 = vector.broadcast %cst_4 : f32 to vector<90x1xf32>
    %13 = arith.divf %11, %12 : vector<90x1xf32>
    %14 = vector.broadcast %6 : vector<90x1xf32> to vector<90x8xf32>
    %15 = arith.subf %2, %14 : vector<90x8xf32>
    %cst_5 = arith.constant 9.99999974E-6 : f32
    %16 = vector.broadcast %cst_5 : f32 to vector<90x1xf32>
    %17 = arith.addf %13, %16 : vector<90x1xf32>
    %18 = math.rsqrt %17 : vector<90x1xf32>
    %19 = vector.broadcast %18 : vector<90x1xf32> to vector<90x8xf32>
    %20 = arith.mulf %15, %19 : vector<90x8xf32>
    %c0_6 = arith.constant 0 : index
    %c0_7 = arith.constant 0 : index
    %c0_8 = arith.constant 0 : index
    %c0_9 = arith.constant 0 : index
    %21 = vector.load %arg2[%c0_6, %c0_7, %c0_8, %c0_9] : memref<1x2x90x8xf32, #tpu.memory_space<vmem>>, vector<1x1x90x8xf32>
    %22 = vector.shape_cast %21 : vector<1x1x90x8xf32> to vector<90x8xf32>
    %23 = vector.shape_cast %20 : vector<90x8xf32> to vector<1x1x90x8xf32>
    tpu.vector_store %arg2[%c0_6, %c0_7, %c0_8, %c0_9], %23 {strides = array<i32>} : memref<1x2x90x8xf32, #tpu.memory_space<vmem>>, vector<1x1x90x8xf32>,
    %24 = vector.extract_strided_slice %1 {offsets = [0, 8], sizes = [90, 8], strides = [1, 1]} : vector<90x16xf32> to vector<90x8xf32>
    %cst_10 = arith.constant dense<0.000000e+00> : vector<90xf32>
    %25 = vector.multi_reduction <add>, %24, %cst_10 [1] : vector<90x8xf32> to vector<90xf32>
    %26 = vector.shape_cast %25 : vector<90xf32> to vector<90x1xf32>
    %cst_11 = arith.constant 8.000000e+00 : f32
    %27 = vector.broadcast %cst_11 : f32 to vector<90x1xf32>
    %28 = arith.divf %26, %27 : vector<90x1xf32>
    %29 = vector.broadcast %28 : vector<90x1xf32> to vector<90x8xf32>
    %30 = arith.subf %24, %29 : vector<90x8xf32>
    %31 = arith.mulf %30, %30 : vector<90x8xf32>
    %cst_12 = arith.constant dense<0.000000e+00> : vector<90xf32>
    %32 = vector.multi_reduction <add>, %31, %cst_12 [1] : vector<90x8xf32> to vector<90xf32>
    %33 = vector.shape_cast %32 : vector<90xf32> to vector<90x1xf32>
    %cst_13 = arith.constant 8.000000e+00 : f32
    %34 = vector.broadcast %cst_13 : f32 to vector<90x1xf32>
    %35 = arith.divf %33, %34 : vector<90x1xf32>
    %36 = vector.broadcast %28 : vector<90x1xf32> to vector<90x8xf32>
    %37 = arith.subf %24, %36 : vector<90x8xf32>
    %cst_14 = arith.constant 9.99999974E-6 : f32
    %38 = vector.broadcast %cst_14 : f32 to vector<90x1xf32>
    %39 = arith.addf %35, %38 : vector<90x1xf32>
    %40 = math.rsqrt %39 : vector<90x1xf32>
    %41 = vector.broadcast %40 : vector<90x1xf32> to vector<90x8xf32>
    %42 = arith.mulf %37, %41 : vector<90x8xf32>
    %c0_15 = arith.constant 0 : index
    %c1 = arith.constant 1 : index
    %c0_16 = arith.constant 0 : index
    %c0_17 = arith.constant 0 : index
    %43 = vector.load %arg2[%c0_15, %c1, %c0_16, %c0_17] : memref<1x2x90x8xf32, #tpu.memory_space<vmem>>, vector<1x1x90x8xf32>
    %44 = vector.shape_cast %43 : vector<1x1x90x8xf32> to vector<90x8xf32>
    %45 = vector.shape_cast %42 : vector<90x8xf32> to vector<1x1x90x8xf32>
    tpu.vector_store %arg2[%c0_15, %c1, %c0_16, %c0_17], %45 {strides = array<i32>} : memref<1x2x90x8xf32, #tpu.memory_space<vmem>>, vector<1x1x90x8xf32>,
    return
  }
  func.func @transform_0(%arg0: i32) -> (i32, i32, i32) {
    %c0_i32 = arith.constant 0 : i32
    %c0_i32_0 = arith.constant 0 : i32
    %c0_i32_1 = arith.constant 0 : i32
    return %arg0, %c0_i32, %c0_i32_0 : i32, i32, i32
  }
  func.func @transform_1(%arg0: i32) -> (i32, i32, i32, i32) {
    %c0_i32 = arith.constant 0 : i32
    %c0_i32_0 = arith.constant 0 : i32
    %c0_i32_1 = arith.constant 0 : i32
    %c0_i32_2 = arith.constant 0 : i32
    return %arg0, %c0_i32, %c0_i32_0, %c0_i32_1 : i32, i32, i32, i32
  }
}

module attributes {stable_mosaic.version = 11 : i64} {
  func.func @_fused_kernel(%arg0: memref<2x2x720xf32, #tpu.memory_space<vmem>>, %arg1: memref<32x8xf32, #tpu.memory_space<vmem>>, %arg2: memref<32x1xf32, #tpu.memory_space<vmem>>, %arg3: memref<32x1xf32, #tpu.memory_space<vmem>>, %arg4: memref<32x1xf32, #tpu.memory_space<vmem>>, %arg5: memref<32x512xf32, #tpu.memory_space<vmem>>, %arg6: memref<32x1xf32, #tpu.memory_space<vmem>>, %arg7: memref<32x1xf32, #tpu.memory_space<vmem>>, %arg8: memref<32x1xf32, #tpu.memory_space<vmem>>, %arg9: memref<16x256xf32, #tpu.memory_space<vmem>>, %arg10: memref<16x1xf32, #tpu.memory_space<vmem>>, %arg11: memref<16x1xf32, #tpu.memory_space<vmem>>, %arg12: memref<16x1xf32, #tpu.memory_space<vmem>>, %arg13: memref<32x128xf32, #tpu.memory_space<vmem>>, %arg14: memref<32x1xf32, #tpu.memory_space<vmem>>, %arg15: memref<8x32xf32, #tpu.memory_space<vmem>>, %arg16: memref<8x1xf32, #tpu.memory_space<vmem>>, %arg17: memref<2x8x8xf32, #tpu.memory_space<vmem>>) attributes {dimension_semantics = [], scalar_prefetch = 0 : i64, scratch_operands = 0 : i64, tpu.core_type = #tpu.core_type<tc>} {
    %c0 = arith.constant 0 : index
    %c0_0 = arith.constant 0 : index
    %0 = vector.load %arg1[%c0, %c0_0] : memref<32x8xf32, #tpu.memory_space<vmem>>, vector<32x8xf32>
    %1 = arith.truncf %0 : vector<32x8xf32> to vector<32x8xbf16>
    %c0_1 = arith.constant 0 : index
    %c0_2 = arith.constant 0 : index
    %c0_3 = arith.constant 0 : index
    %2 = vector.load %arg0[%c0_1, %c0_2, %c0_3] : memref<2x2x720xf32, #tpu.memory_space<vmem>>, vector<1x2x720xf32>
    %3 = vector.shape_cast %2 : vector<1x2x720xf32> to vector<2x720xf32>
    %4 = vector.extract_strided_slice %3 {offsets = [0, 0], sizes = [1, 696], strides = [1, 1]} : vector<2x720xf32> to vector<1x696xf32>
    %5 = vector.extract_strided_slice %3 {offsets = [1, 0], sizes = [1, 696], strides = [1, 1]} : vector<2x720xf32> to vector<1x696xf32>
    %6 = vector.extract_strided_slice %3 {offsets = [0, 8], sizes = [1, 696], strides = [1, 1]} : vector<2x720xf32> to vector<1x696xf32>
    %7 = vector.extract_strided_slice %3 {offsets = [1, 8], sizes = [1, 696], strides = [1, 1]} : vector<2x720xf32> to vector<1x696xf32>
    %8 = vector.extract_strided_slice %3 {offsets = [0, 16], sizes = [1, 696], strides = [1, 1]} : vector<2x720xf32> to vector<1x696xf32>
    %9 = vector.extract_strided_slice %3 {offsets = [1, 16], sizes = [1, 696], strides = [1, 1]} : vector<2x720xf32> to vector<1x696xf32>
    %10 = vector.extract_strided_slice %3 {offsets = [0, 24], sizes = [1, 696], strides = [1, 1]} : vector<2x720xf32> to vector<1x696xf32>
    %11 = vector.extract_strided_slice %3 {offsets = [1, 24], sizes = [1, 696], strides = [1, 1]} : vector<2x720xf32> to vector<1x696xf32>
    %12 = tpu.concatenate %4, %5, %6, %7, %8, %9, %10, %11 in 0 : vector<1x696xf32>, vector<1x696xf32>, vector<1x696xf32>, vector<1x696xf32>, vector<1x696xf32>, vector<1x696xf32>, vector<1x696xf32>, vector<1x696xf32> -> vector<8x696xf32>
    %13 = arith.truncf %12 : vector<8x696xf32> to vector<8x696xbf16>
    %cst = arith.constant dense<0.000000e+00> : vector<32x696xf32>
    %14 = tpu.matmul %1, %13, %cst {dimension_numbers = #tpu.dot_dimension_numbers<[1], [0], [0], [1], [0, 0, 1, 1], [], []>} : vector<32x8xbf16>, vector<8x696xbf16>, vector<32x696xf32> -> vector<32x696xf32>
    %c0_4 = arith.constant 0 : index
    %c0_5 = arith.constant 0 : index
    %15 = vector.load %arg2[%c0_4, %c0_5] : memref<32x1xf32, #tpu.memory_space<vmem>>, vector<32x1xf32>
    %16 = vector.broadcast %15 : vector<32x1xf32> to vector<32x696xf32>
    %17 = arith.addf %14, %16 : vector<32x696xf32>
    %c1 = arith.constant 1 : index
    %c0_6 = arith.constant 0 : index
    %c0_7 = arith.constant 0 : index
    %18 = vector.load %arg0[%c1, %c0_6, %c0_7] : memref<2x2x720xf32, #tpu.memory_space<vmem>>, vector<1x2x720xf32>
    %19 = vector.shape_cast %18 : vector<1x2x720xf32> to vector<2x720xf32>
    %20 = vector.extract_strided_slice %19 {offsets = [0, 0], sizes = [1, 696], strides = [1, 1]} : vector<2x720xf32> to vector<1x696xf32>
    %21 = vector.extract_strided_slice %19 {offsets = [1, 0], sizes = [1, 696], strides = [1, 1]} : vector<2x720xf32> to vector<1x696xf32>
    %22 = vector.extract_strided_slice %19 {offsets = [0, 8], sizes = [1, 696], strides = [1, 1]} : vector<2x720xf32> to vector<1x696xf32>
    %23 = vector.extract_strided_slice %19 {offsets = [1, 8], sizes = [1, 696], strides = [1, 1]} : vector<2x720xf32> to vector<1x696xf32>
    %24 = vector.extract_strided_slice %19 {offsets = [0, 16], sizes = [1, 696], strides = [1, 1]} : vector<2x720xf32> to vector<1x696xf32>
    %25 = vector.extract_strided_slice %19 {offsets = [1, 16], sizes = [1, 696], strides = [1, 1]} : vector<2x720xf32> to vector<1x696xf32>
    %26 = vector.extract_strided_slice %19 {offsets = [0, 24], sizes = [1, 696], strides = [1, 1]} : vector<2x720xf32> to vector<1x696xf32>
    %27 = vector.extract_strided_slice %19 {offsets = [1, 24], sizes = [1, 696], strides = [1, 1]} : vector<2x720xf32> to vector<1x696xf32>
    %28 = tpu.concatenate %20, %21, %22, %23, %24, %25, %26, %27 in 0 : vector<1x696xf32>, vector<1x696xf32>, vector<1x696xf32>, vector<1x696xf32>, vector<1x696xf32>, vector<1x696xf32>, vector<1x696xf32>, vector<1x696xf32> -> vector<8x696xf32>
    %29 = arith.truncf %28 : vector<8x696xf32> to vector<8x696xbf16>
    %cst_8 = arith.constant dense<0.000000e+00> : vector<32x696xf32>
    %30 = tpu.matmul %1, %29, %cst_8 {dimension_numbers = #tpu.dot_dimension_numbers<[1], [0], [0], [1], [0, 0, 1, 1], [], []>} : vector<32x8xbf16>, vector<8x696xbf16>, vector<32x696xf32> -> vector<32x696xf32>
    %c0_9 = arith.constant 0 : index
    %c0_10 = arith.constant 0 : index
    %31 = vector.load %arg2[%c0_9, %c0_10] : memref<32x1xf32, #tpu.memory_space<vmem>>, vector<32x1xf32>
    %32 = vector.broadcast %31 : vector<32x1xf32> to vector<32x696xf32>
    %33 = arith.addf %30, %32 : vector<32x696xf32>
    %c0_11 = arith.constant 0 : index
    %c0_12 = arith.constant 0 : index
    %34 = vector.load %arg5[%c0_11, %c0_12] : memref<32x512xf32, #tpu.memory_space<vmem>>, vector<32x512xf32>
    %c0_13 = arith.constant 0 : index
    %c0_14 = arith.constant 0 : index
    %35 = vector.load %arg6[%c0_13, %c0_14] : memref<32x1xf32, #tpu.memory_space<vmem>>, vector<32x1xf32>
    %c0_15 = arith.constant 0 : index
    %c0_16 = arith.constant 0 : index
    %36 = vector.load %arg3[%c0_15, %c0_16] : memref<32x1xf32, #tpu.memory_space<vmem>>, vector<32x1xf32>
    %c0_17 = arith.constant 0 : index
    %c0_18 = arith.constant 0 : index
    %37 = vector.load %arg4[%c0_17, %c0_18] : memref<32x1xf32, #tpu.memory_space<vmem>>, vector<32x1xf32>
    %cst_19 = arith.constant dense<0.000000e+00> : vector<32xf32>
    %38 = vector.multi_reduction <add>, %17, %cst_19 [1] : vector<32x696xf32> to vector<32xf32>
    %39 = vector.shape_cast %38 : vector<32xf32> to vector<32x1xf32>
    %cst_20 = arith.constant 0.000000e+00 : f32
    %40 = vector.broadcast %cst_20 : f32 to vector<32x1xf32>
    %41 = arith.addf %40, %39 : vector<32x1xf32>
    %cst_21 = arith.constant dense<0.000000e+00> : vector<32xf32>
    %42 = vector.multi_reduction <add>, %33, %cst_21 [1] : vector<32x696xf32> to vector<32xf32>
    %43 = vector.shape_cast %42 : vector<32xf32> to vector<32x1xf32>
    %44 = arith.addf %41, %43 : vector<32x1xf32>
    %cst_22 = arith.constant 1.392000e+03 : f32
    %45 = vector.broadcast %cst_22 : f32 to vector<32x1xf32>
    %46 = arith.divf %44, %45 : vector<32x1xf32>
    %47 = vector.broadcast %46 : vector<32x1xf32> to vector<32x696xf32>
    %48 = arith.subf %17, %47 : vector<32x696xf32>
    %49 = arith.mulf %48, %48 : vector<32x696xf32>
    %cst_23 = arith.constant dense<0.000000e+00> : vector<32xf32>
    %50 = vector.multi_reduction <add>, %49, %cst_23 [1] : vector<32x696xf32> to vector<32xf32>
    %51 = vector.shape_cast %50 : vector<32xf32> to vector<32x1xf32>
    %cst_24 = arith.constant 0.000000e+00 : f32
    %52 = vector.broadcast %cst_24 : f32 to vector<32x1xf32>
    %53 = arith.addf %52, %51 : vector<32x1xf32>
    %54 = vector.broadcast %46 : vector<32x1xf32> to vector<32x696xf32>
    %55 = arith.subf %33, %54 : vector<32x696xf32>
    %56 = arith.mulf %55, %55 : vector<32x696xf32>
    %cst_25 = arith.constant dense<0.000000e+00> : vector<32xf32>
    %57 = vector.multi_reduction <add>, %56, %cst_25 [1] : vector<32x696xf32> to vector<32xf32>
    %58 = vector.shape_cast %57 : vector<32xf32> to vector<32x1xf32>
    %59 = arith.addf %53, %58 : vector<32x1xf32>
    %cst_26 = arith.constant 1.392000e+03 : f32
    %60 = vector.broadcast %cst_26 : f32 to vector<32x1xf32>
    %61 = arith.divf %59, %60 : vector<32x1xf32>
    %cst_27 = arith.constant 9.99999974E-6 : f32
    %62 = vector.broadcast %cst_27 : f32 to vector<32x1xf32>
    %63 = arith.addf %61, %62 : vector<32x1xf32>
    %64 = math.rsqrt %63 : vector<32x1xf32>
    %65 = arith.mulf %36, %64 : vector<32x1xf32>
    %66 = arith.mulf %46, %65 : vector<32x1xf32>
    %67 = arith.subf %37, %66 : vector<32x1xf32>
    %68 = tpu.transpose %65, [1, 0] : vector<32x1xf32> -> vector<1x32xf32>
    %69 = tpu.concatenate %68, %68, %68, %68, %68, %68, %68, %68, %68, %68, %68, %68, %68, %68, %68, %68 in 1 : vector<1x32xf32>, vector<1x32xf32>, vector<1x32xf32>, vector<1x32xf32>, vector<1x32xf32>, vector<1x32xf32>, vector<1x32xf32>, vector<1x32xf32>, vector<1x32xf32>, vector<1x32xf32>, vector<1x32xf32>, vector<1x32xf32>, vector<1x32xf32>, vector<1x32xf32>, vector<1x32xf32>, vector<1x32xf32> -> vector<1x512xf32>
    %70 = tpu.transpose %67, [1, 0] : vector<32x1xf32> -> vector<1x32xf32>
    %71 = tpu.concatenate %70, %70, %70, %70, %70, %70, %70, %70, %70, %70, %70, %70, %70, %70, %70, %70 in 1 : vector<1x32xf32>, vector<1x32xf32>, vector<1x32xf32>, vector<1x32xf32>, vector<1x32xf32>, vector<1x32xf32>, vector<1x32xf32>, vector<1x32xf32>, vector<1x32xf32>, vector<1x32xf32>, vector<1x32xf32>, vector<1x32xf32>, vector<1x32xf32>, vector<1x32xf32>, vector<1x32xf32>, vector<1x32xf32> -> vector<1x512xf32>
    %72 = vector.broadcast %69 : vector<1x512xf32> to vector<32x512xf32>
    %73 = arith.mulf %34, %72 : vector<32x512xf32>
    %74 = vector.broadcast %71 : vector<1x512xf32> to vector<32x512xf32>
    %75 = arith.mulf %34, %74 : vector<32x512xf32>
    %cst_28 = arith.constant dense<0.000000e+00> : vector<32xf32>
    %76 = vector.multi_reduction <add>, %75, %cst_28 [1] : vector<32x512xf32> to vector<32xf32>
    %77 = vector.shape_cast %76 : vector<32xf32> to vector<32x1xf32>
    %78 = arith.addf %35, %77 : vector<32x1xf32>
    %79 = arith.truncf %73 : vector<32x512xf32> to vector<32x512xbf16>
    %80 = arith.truncf %17 : vector<32x696xf32> to vector<32x696xbf16>
    %81 = vector.extract_strided_slice %80 {offsets = [0, 0], sizes = [32, 576], strides = [1, 1]} : vector<32x696xbf16> to vector<32x576xbf16>
    %82 = vector.extract_strided_slice %80 {offsets = [0, 8], sizes = [32, 576], strides = [1, 1]} : vector<32x696xbf16> to vector<32x576xbf16>
    %83 = vector.extract_strided_slice %80 {offsets = [0, 16], sizes = [32, 576], strides = [1, 1]} : vector<32x696xbf16> to vector<32x576xbf16>
    %84 = vector.extract_strided_slice %80 {offsets = [0, 24], sizes = [32, 576], strides = [1, 1]} : vector<32x696xbf16> to vector<32x576xbf16>
    %85 = vector.extract_strided_slice %80 {offsets = [0, 32], sizes = [32, 576], strides = [1, 1]} : vector<32x696xbf16> to vector<32x576xbf16>
    %86 = vector.extract_strided_slice %80 {offsets = [0, 40], sizes = [32, 576], strides = [1, 1]} : vector<32x696xbf16> to vector<32x576xbf16>
    %87 = vector.extract_strided_slice %80 {offsets = [0, 48], sizes = [32, 576], strides = [1, 1]} : vector<32x696xbf16> to vector<32x576xbf16>
    %88 = vector.extract_strided_slice %80 {offsets = [0, 56], sizes = [32, 576], strides = [1, 1]} : vector<32x696xbf16> to vector<32x576xbf16>
    %89 = vector.extract_strided_slice %80 {offsets = [0, 64], sizes = [32, 576], strides = [1, 1]} : vector<32x696xbf16> to vector<32x576xbf16>
    %90 = vector.extract_strided_slice %80 {offsets = [0, 72], sizes = [32, 576], strides = [1, 1]} : vector<32x696xbf16> to vector<32x576xbf16>
    %91 = vector.extract_strided_slice %80 {offsets = [0, 80], sizes = [32, 576], strides = [1, 1]} : vector<32x696xbf16> to vector<32x576xbf16>
    %92 = vector.extract_strided_slice %80 {offsets = [0, 88], sizes = [32, 576], strides = [1, 1]} : vector<32x696xbf16> to vector<32x576xbf16>
    %93 = vector.extract_strided_slice %80 {offsets = [0, 96], sizes = [32, 576], strides = [1, 1]} : vector<32x696xbf16> to vector<32x576xbf16>
    %94 = vector.extract_strided_slice %80 {offsets = [0, 104], sizes = [32, 576], strides = [1, 1]} : vector<32x696xbf16> to vector<32x576xbf16>
    %95 = vector.extract_strided_slice %80 {offsets = [0, 112], sizes = [32, 576], strides = [1, 1]} : vector<32x696xbf16> to vector<32x576xbf16>
    %96 = vector.extract_strided_slice %80 {offsets = [0, 120], sizes = [32, 576], strides = [1, 1]} : vector<32x696xbf16> to vector<32x576xbf16>
    %97 = tpu.concatenate %81, %82, %83, %84, %85, %86, %87, %88, %89, %90, %91, %92, %93, %94, %95, %96 in 0 : vector<32x576xbf16>, vector<32x576xbf16>, vector<32x576xbf16>, vector<32x576xbf16>, vector<32x576xbf16>, vector<32x576xbf16>, vector<32x576xbf16>, vector<32x576xbf16>, vector<32x576xbf16>, vector<32x576xbf16>, vector<32x576xbf16>, vector<32x576xbf16>, vector<32x576xbf16>, vector<32x576xbf16>, vector<32x576xbf16>, vector<32x576xbf16> -> vector<512x576xbf16>
    %cst_29 = arith.constant dense<0.000000e+00> : vector<32x576xf32>
    %98 = tpu.matmul %79, %97, %cst_29 {dimension_numbers = #tpu.dot_dimension_numbers<[1], [0], [0], [1], [0, 0, 1, 1], [], []>} : vector<32x512xbf16>, vector<512x576xbf16>, vector<32x576xf32> -> vector<32x576xf32>
    %99 = vector.broadcast %78 : vector<32x1xf32> to vector<32x576xf32>
    %100 = arith.addf %98, %99 : vector<32x576xf32>
    %101 = arith.truncf %33 : vector<32x696xf32> to vector<32x696xbf16>
    %102 = vector.extract_strided_slice %101 {offsets = [0, 0], sizes = [32, 576], strides = [1, 1]} : vector<32x696xbf16> to vector<32x576xbf16>
    %103 = vector.extract_strided_slice %101 {offsets = [0, 8], sizes = [32, 576], strides = [1, 1]} : vector<32x696xbf16> to vector<32x576xbf16>
    %104 = vector.extract_strided_slice %101 {offsets = [0, 16], sizes = [32, 576], strides = [1, 1]} : vector<32x696xbf16> to vector<32x576xbf16>
    %105 = vector.extract_strided_slice %101 {offsets = [0, 24], sizes = [32, 576], strides = [1, 1]} : vector<32x696xbf16> to vector<32x576xbf16>
    %106 = vector.extract_strided_slice %101 {offsets = [0, 32], sizes = [32, 576], strides = [1, 1]} : vector<32x696xbf16> to vector<32x576xbf16>
    %107 = vector.extract_strided_slice %101 {offsets = [0, 40], sizes = [32, 576], strides = [1, 1]} : vector<32x696xbf16> to vector<32x576xbf16>
    %108 = vector.extract_strided_slice %101 {offsets = [0, 48], sizes = [32, 576], strides = [1, 1]} : vector<32x696xbf16> to vector<32x576xbf16>
    %109 = vector.extract_strided_slice %101 {offsets = [0, 56], sizes = [32, 576], strides = [1, 1]} : vector<32x696xbf16> to vector<32x576xbf16>
    %110 = vector.extract_strided_slice %101 {offsets = [0, 64], sizes = [32, 576], strides = [1, 1]} : vector<32x696xbf16> to vector<32x576xbf16>
    %111 = vector.extract_strided_slice %101 {offsets = [0, 72], sizes = [32, 576], strides = [1, 1]} : vector<32x696xbf16> to vector<32x576xbf16>
    %112 = vector.extract_strided_slice %101 {offsets = [0, 80], sizes = [32, 576], strides = [1, 1]} : vector<32x696xbf16> to vector<32x576xbf16>
    %113 = vector.extract_strided_slice %101 {offsets = [0, 88], sizes = [32, 576], strides = [1, 1]} : vector<32x696xbf16> to vector<32x576xbf16>
    %114 = vector.extract_strided_slice %101 {offsets = [0, 96], sizes = [32, 576], strides = [1, 1]} : vector<32x696xbf16> to vector<32x576xbf16>
    %115 = vector.extract_strided_slice %101 {offsets = [0, 104], sizes = [32, 576], strides = [1, 1]} : vector<32x696xbf16> to vector<32x576xbf16>
    %116 = vector.extract_strided_slice %101 {offsets = [0, 112], sizes = [32, 576], strides = [1, 1]} : vector<32x696xbf16> to vector<32x576xbf16>
    %117 = vector.extract_strided_slice %101 {offsets = [0, 120], sizes = [32, 576], strides = [1, 1]} : vector<32x696xbf16> to vector<32x576xbf16>
    %118 = tpu.concatenate %102, %103, %104, %105, %106, %107, %108, %109, %110, %111, %112, %113, %114, %115, %116, %117 in 0 : vector<32x576xbf16>, vector<32x576xbf16>, vector<32x576xbf16>, vector<32x576xbf16>, vector<32x576xbf16>, vector<32x576xbf16>, vector<32x576xbf16>, vector<32x576xbf16>, vector<32x576xbf16>, vector<32x576xbf16>, vector<32x576xbf16>, vector<32x576xbf16>, vector<32x576xbf16>, vector<32x576xbf16>, vector<32x576xbf16>, vector<32x576xbf16> -> vector<512x576xbf16>
    %cst_30 = arith.constant dense<0.000000e+00> : vector<32x576xf32>
    %119 = tpu.matmul %79, %118, %cst_30 {dimension_numbers = #tpu.dot_dimension_numbers<[1], [0], [0], [1], [0, 0, 1, 1], [], []>} : vector<32x512xbf16>, vector<512x576xbf16>, vector<32x576xf32> -> vector<32x576xf32>
    %120 = vector.broadcast %78 : vector<32x1xf32> to vector<32x576xf32>
    %121 = arith.addf %119, %120 : vector<32x576xf32>
    %c0_31 = arith.constant 0 : index
    %c0_32 = arith.constant 0 : index
    %122 = vector.load %arg9[%c0_31, %c0_32] : memref<16x256xf32, #tpu.memory_space<vmem>>, vector<16x256xf32>
    %c0_33 = arith.constant 0 : index
    %c0_34 = arith.constant 0 : index
    %123 = vector.load %arg10[%c0_33, %c0_34] : memref<16x1xf32, #tpu.memory_space<vmem>>, vector<16x1xf32>
    %c0_35 = arith.constant 0 : index
    %c0_36 = arith.constant 0 : index
    %124 = vector.load %arg7[%c0_35, %c0_36] : memref<32x1xf32, #tpu.memory_space<vmem>>, vector<32x1xf32>
    %c0_37 = arith.constant 0 : index
    %c0_38 = arith.constant 0 : index
    %125 = vector.load %arg8[%c0_37, %c0_38] : memref<32x1xf32, #tpu.memory_space<vmem>>, vector<32x1xf32>
    %cst_39 = arith.constant dense<0.000000e+00> : vector<32xf32>
    %126 = vector.multi_reduction <add>, %100, %cst_39 [1] : vector<32x576xf32> to vector<32xf32>
    %127 = vector.shape_cast %126 : vector<32xf32> to vector<32x1xf32>
    %cst_40 = arith.constant 0.000000e+00 : f32
    %128 = vector.broadcast %cst_40 : f32 to vector<32x1xf32>
    %129 = arith.addf %128, %127 : vector<32x1xf32>
    %cst_41 = arith.constant dense<0.000000e+00> : vector<32xf32>
    %130 = vector.multi_reduction <add>, %121, %cst_41 [1] : vector<32x576xf32> to vector<32xf32>
    %131 = vector.shape_cast %130 : vector<32xf32> to vector<32x1xf32>
    %132 = arith.addf %129, %131 : vector<32x1xf32>
    %cst_42 = arith.constant 1.152000e+03 : f32
    %133 = vector.broadcast %cst_42 : f32 to vector<32x1xf32>
    %134 = arith.divf %132, %133 : vector<32x1xf32>
    %135 = vector.broadcast %134 : vector<32x1xf32> to vector<32x576xf32>
    %136 = arith.subf %100, %135 : vector<32x576xf32>
    %137 = arith.mulf %136, %136 : vector<32x576xf32>
    %cst_43 = arith.constant dense<0.000000e+00> : vector<32xf32>
    %138 = vector.multi_reduction <add>, %137, %cst_43 [1] : vector<32x576xf32> to vector<32xf32>
    %139 = vector.shape_cast %138 : vector<32xf32> to vector<32x1xf32>
    %cst_44 = arith.constant 0.000000e+00 : f32
    %140 = vector.broadcast %cst_44 : f32 to vector<32x1xf32>
    %141 = arith.addf %140, %139 : vector<32x1xf32>
    %142 = vector.broadcast %134 : vector<32x1xf32> to vector<32x576xf32>
    %143 = arith.subf %121, %142 : vector<32x576xf32>
    %144 = arith.mulf %143, %143 : vector<32x576xf32>
    %cst_45 = arith.constant dense<0.000000e+00> : vector<32xf32>
    %145 = vector.multi_reduction <add>, %144, %cst_45 [1] : vector<32x576xf32> to vector<32xf32>
    %146 = vector.shape_cast %145 : vector<32xf32> to vector<32x1xf32>
    %147 = arith.addf %141, %146 : vector<32x1xf32>
    %cst_46 = arith.constant 1.152000e+03 : f32
    %148 = vector.broadcast %cst_46 : f32 to vector<32x1xf32>
    %149 = arith.divf %147, %148 : vector<32x1xf32>
    %cst_47 = arith.constant 9.99999974E-6 : f32
    %150 = vector.broadcast %cst_47 : f32 to vector<32x1xf32>
    %151 = arith.addf %149, %150 : vector<32x1xf32>
    %152 = math.rsqrt %151 : vector<32x1xf32>
    %153 = arith.mulf %124, %152 : vector<32x1xf32>
    %154 = arith.mulf %134, %153 : vector<32x1xf32>
    %155 = arith.subf %125, %154 : vector<32x1xf32>
    %156 = tpu.transpose %153, [1, 0] : vector<32x1xf32> -> vector<1x32xf32>
    %157 = tpu.concatenate %156, %156, %156, %156, %156, %156, %156, %156 in 1 : vector<1x32xf32>, vector<1x32xf32>, vector<1x32xf32>, vector<1x32xf32>, vector<1x32xf32>, vector<1x32xf32>, vector<1x32xf32>, vector<1x32xf32> -> vector<1x256xf32>
    %158 = tpu.transpose %155, [1, 0] : vector<32x1xf32> -> vector<1x32xf32>
    %159 = tpu.concatenate %158, %158, %158, %158, %158, %158, %158, %158 in 1 : vector<1x32xf32>, vector<1x32xf32>, vector<1x32xf32>, vector<1x32xf32>, vector<1x32xf32>, vector<1x32xf32>, vector<1x32xf32>, vector<1x32xf32> -> vector<1x256xf32>
    %160 = vector.broadcast %157 : vector<1x256xf32> to vector<16x256xf32>
    %161 = arith.mulf %122, %160 : vector<16x256xf32>
    %162 = vector.broadcast %159 : vector<1x256xf32> to vector<16x256xf32>
    %163 = arith.mulf %122, %162 : vector<16x256xf32>
    %cst_48 = arith.constant dense<0.000000e+00> : vector<16xf32>
    %164 = vector.multi_reduction <add>, %163, %cst_48 [1] : vector<16x256xf32> to vector<16xf32>
    %165 = vector.shape_cast %164 : vector<16xf32> to vector<16x1xf32>
    %166 = arith.addf %123, %165 : vector<16x1xf32>
    %167 = arith.truncf %161 : vector<16x256xf32> to vector<16x256xbf16>
    %168 = arith.truncf %100 : vector<32x576xf32> to vector<32x576xbf16>
    %169 = vector.extract_strided_slice %168 {offsets = [0, 0], sizes = [32, 520], strides = [1, 1]} : vector<32x576xbf16> to vector<32x520xbf16>
    %170 = vector.extract_strided_slice %168 {offsets = [0, 8], sizes = [32, 520], strides = [1, 1]} : vector<32x576xbf16> to vector<32x520xbf16>
    %171 = vector.extract_strided_slice %168 {offsets = [0, 16], sizes = [32, 520], strides = [1, 1]} : vector<32x576xbf16> to vector<32x520xbf16>
    %172 = vector.extract_strided_slice %168 {offsets = [0, 24], sizes = [32, 520], strides = [1, 1]} : vector<32x576xbf16> to vector<32x520xbf16>
    %173 = vector.extract_strided_slice %168 {offsets = [0, 32], sizes = [32, 520], strides = [1, 1]} : vector<32x576xbf16> to vector<32x520xbf16>
    %174 = vector.extract_strided_slice %168 {offsets = [0, 40], sizes = [32, 520], strides = [1, 1]} : vector<32x576xbf16> to vector<32x520xbf16>
    %175 = vector.extract_strided_slice %168 {offsets = [0, 48], sizes = [32, 520], strides = [1, 1]} : vector<32x576xbf16> to vector<32x520xbf16>
    %176 = vector.extract_strided_slice %168 {offsets = [0, 56], sizes = [32, 520], strides = [1, 1]} : vector<32x576xbf16> to vector<32x520xbf16>
    %177 = tpu.concatenate %169, %170, %171, %172, %173, %174, %175, %176 in 0 : vector<32x520xbf16>, vector<32x520xbf16>, vector<32x520xbf16>, vector<32x520xbf16>, vector<32x520xbf16>, vector<32x520xbf16>, vector<32x520xbf16>, vector<32x520xbf16> -> vector<256x520xbf16>
    %cst_49 = arith.constant dense<0.000000e+00> : vector<16x520xf32>
    %178 = tpu.matmul %167, %177, %cst_49 {dimension_numbers = #tpu.dot_dimension_numbers<[1], [0], [0], [1], [0, 0, 1, 1], [], []>} : vector<16x256xbf16>, vector<256x520xbf16>, vector<16x520xf32> -> vector<16x520xf32>
    %179 = vector.broadcast %166 : vector<16x1xf32> to vector<16x520xf32>
    %180 = arith.addf %178, %179 : vector<16x520xf32>
    %181 = arith.truncf %121 : vector<32x576xf32> to vector<32x576xbf16>
    %182 = vector.extract_strided_slice %181 {offsets = [0, 0], sizes = [32, 520], strides = [1, 1]} : vector<32x576xbf16> to vector<32x520xbf16>
    %183 = vector.extract_strided_slice %181 {offsets = [0, 8], sizes = [32, 520], strides = [1, 1]} : vector<32x576xbf16> to vector<32x520xbf16>
    %184 = vector.extract_strided_slice %181 {offsets = [0, 16], sizes = [32, 520], strides = [1, 1]} : vector<32x576xbf16> to vector<32x520xbf16>
    %185 = vector.extract_strided_slice %181 {offsets = [0, 24], sizes = [32, 520], strides = [1, 1]} : vector<32x576xbf16> to vector<32x520xbf16>
    %186 = vector.extract_strided_slice %181 {offsets = [0, 32], sizes = [32, 520], strides = [1, 1]} : vector<32x576xbf16> to vector<32x520xbf16>
    %187 = vector.extract_strided_slice %181 {offsets = [0, 40], sizes = [32, 520], strides = [1, 1]} : vector<32x576xbf16> to vector<32x520xbf16>
    %188 = vector.extract_strided_slice %181 {offsets = [0, 48], sizes = [32, 520], strides = [1, 1]} : vector<32x576xbf16> to vector<32x520xbf16>
    %189 = vector.extract_strided_slice %181 {offsets = [0, 56], sizes = [32, 520], strides = [1, 1]} : vector<32x576xbf16> to vector<32x520xbf16>
    %190 = tpu.concatenate %182, %183, %184, %185, %186, %187, %188, %189 in 0 : vector<32x520xbf16>, vector<32x520xbf16>, vector<32x520xbf16>, vector<32x520xbf16>, vector<32x520xbf16>, vector<32x520xbf16>, vector<32x520xbf16>, vector<32x520xbf16> -> vector<256x520xbf16>
    %cst_50 = arith.constant dense<0.000000e+00> : vector<16x520xf32>
    %191 = tpu.matmul %167, %190, %cst_50 {dimension_numbers = #tpu.dot_dimension_numbers<[1], [0], [0], [1], [0, 0, 1, 1], [], []>} : vector<16x256xbf16>, vector<256x520xbf16>, vector<16x520xf32> -> vector<16x520xf32>
    %192 = vector.broadcast %166 : vector<16x1xf32> to vector<16x520xf32>
    %193 = arith.addf %191, %192 : vector<16x520xf32>
    %c0_51 = arith.constant 0 : index
    %c0_52 = arith.constant 0 : index
    %194 = vector.load %arg11[%c0_51, %c0_52] : memref<16x1xf32, #tpu.memory_space<vmem>>, vector<16x1xf32>
    %c0_53 = arith.constant 0 : index
    %c0_54 = arith.constant 0 : index
    %195 = vector.load %arg12[%c0_53, %c0_54] : memref<16x1xf32, #tpu.memory_space<vmem>>, vector<16x1xf32>
    %cst_55 = arith.constant dense<0.000000e+00> : vector<16xf32>
    %196 = vector.multi_reduction <add>, %180, %cst_55 [1] : vector<16x520xf32> to vector<16xf32>
    %197 = vector.shape_cast %196 : vector<16xf32> to vector<16x1xf32>
    %cst_56 = arith.constant 0.000000e+00 : f32
    %198 = vector.broadcast %cst_56 : f32 to vector<16x1xf32>
    %199 = arith.addf %198, %197 : vector<16x1xf32>
    %cst_57 = arith.constant dense<0.000000e+00> : vector<16xf32>
    %200 = vector.multi_reduction <add>, %193, %cst_57 [1] : vector<16x520xf32> to vector<16xf32>
    %201 = vector.shape_cast %200 : vector<16xf32> to vector<16x1xf32>
    %202 = arith.addf %199, %201 : vector<16x1xf32>
    %cst_58 = arith.constant 1.040000e+03 : f32
    %203 = vector.broadcast %cst_58 : f32 to vector<16x1xf32>
    %204 = arith.divf %202, %203 : vector<16x1xf32>
    %205 = vector.broadcast %204 : vector<16x1xf32> to vector<16x520xf32>
    %206 = arith.subf %180, %205 : vector<16x520xf32>
    %207 = arith.mulf %206, %206 : vector<16x520xf32>
    %cst_59 = arith.constant dense<0.000000e+00> : vector<16xf32>
    %208 = vector.multi_reduction <add>, %207, %cst_59 [1] : vector<16x520xf32> to vector<16xf32>
    %209 = vector.shape_cast %208 : vector<16xf32> to vector<16x1xf32>
    %cst_60 = arith.constant 0.000000e+00 : f32
    %210 = vector.broadcast %cst_60 : f32 to vector<16x1xf32>
    %211 = arith.addf %210, %209 : vector<16x1xf32>
    %212 = vector.broadcast %204 : vector<16x1xf32> to vector<16x520xf32>
    %213 = arith.subf %193, %212 : vector<16x520xf32>
    %214 = arith.mulf %213, %213 : vector<16x520xf32>
    %cst_61 = arith.constant dense<0.000000e+00> : vector<16xf32>
    %215 = vector.multi_reduction <add>, %214, %cst_61 [1] : vector<16x520xf32> to vector<16xf32>
    %216 = vector.shape_cast %215 : vector<16xf32> to vector<16x1xf32>
    %217 = arith.addf %211, %216 : vector<16x1xf32>
    %cst_62 = arith.constant 1.040000e+03 : f32
    %218 = vector.broadcast %cst_62 : f32 to vector<16x1xf32>
    %219 = arith.divf %217, %218 : vector<16x1xf32>
    %cst_63 = arith.constant 9.99999974E-6 : f32
    %220 = vector.broadcast %cst_63 : f32 to vector<16x1xf32>
    %221 = arith.addf %219, %220 : vector<16x1xf32>
    %222 = math.rsqrt %221 : vector<16x1xf32>
    %223 = arith.mulf %194, %222 : vector<16x1xf32>
    %224 = arith.mulf %204, %223 : vector<16x1xf32>
    %225 = arith.subf %195, %224 : vector<16x1xf32>
    %226 = vector.broadcast %223 : vector<16x1xf32> to vector<16x520xf32>
    %227 = arith.mulf %180, %226 : vector<16x520xf32>
    %228 = vector.broadcast %225 : vector<16x1xf32> to vector<16x520xf32>
    %229 = arith.addf %227, %228 : vector<16x520xf32>
    %230 = vector.extract_strided_slice %229 {offsets = [0, 0], sizes = [16, 8], strides = [1, 1]} : vector<16x520xf32> to vector<16x8xf32>
    %231 = vector.extract_strided_slice %229 {offsets = [0, 8], sizes = [16, 8], strides = [1, 1]} : vector<16x520xf32> to vector<16x8xf32>
    %232 = arith.maximumf %230, %231 : vector<16x8xf32>
    %233 = vector.extract_strided_slice %229 {offsets = [0, 16], sizes = [16, 8], strides = [1, 1]} : vector<16x520xf32> to vector<16x8xf32>
    %234 = arith.maximumf %232, %233 : vector<16x8xf32>
    %235 = vector.extract_strided_slice %229 {offsets = [0, 24], sizes = [16, 8], strides = [1, 1]} : vector<16x520xf32> to vector<16x8xf32>
    %236 = arith.maximumf %234, %235 : vector<16x8xf32>
    %237 = vector.extract_strided_slice %229 {offsets = [0, 32], sizes = [16, 8], strides = [1, 1]} : vector<16x520xf32> to vector<16x8xf32>
    %238 = arith.maximumf %236, %237 : vector<16x8xf32>
    %239 = vector.extract_strided_slice %229 {offsets = [0, 40], sizes = [16, 8], strides = [1, 1]} : vector<16x520xf32> to vector<16x8xf32>
    %240 = arith.maximumf %238, %239 : vector<16x8xf32>
    %241 = vector.extract_strided_slice %229 {offsets = [0, 48], sizes = [16, 8], strides = [1, 1]} : vector<16x520xf32> to vector<16x8xf32>
    %242 = arith.maximumf %240, %241 : vector<16x8xf32>
    %243 = vector.extract_strided_slice %229 {offsets = [0, 56], sizes = [16, 8], strides = [1, 1]} : vector<16x520xf32> to vector<16x8xf32>
    %244 = arith.maximumf %242, %243 : vector<16x8xf32>
    %245 = vector.extract_strided_slice %229 {offsets = [0, 64], sizes = [16, 8], strides = [1, 1]} : vector<16x520xf32> to vector<16x8xf32>
    %246 = vector.extract_strided_slice %229 {offsets = [0, 72], sizes = [16, 8], strides = [1, 1]} : vector<16x520xf32> to vector<16x8xf32>
    %247 = arith.maximumf %245, %246 : vector<16x8xf32>
    %248 = vector.extract_strided_slice %229 {offsets = [0, 80], sizes = [16, 8], strides = [1, 1]} : vector<16x520xf32> to vector<16x8xf32>
    %249 = arith.maximumf %247, %248 : vector<16x8xf32>
    %250 = vector.extract_strided_slice %229 {offsets = [0, 88], sizes = [16, 8], strides = [1, 1]} : vector<16x520xf32> to vector<16x8xf32>
    %251 = arith.maximumf %249, %250 : vector<16x8xf32>
    %252 = vector.extract_strided_slice %229 {offsets = [0, 96], sizes = [16, 8], strides = [1, 1]} : vector<16x520xf32> to vector<16x8xf32>
    %253 = arith.maximumf %251, %252 : vector<16x8xf32>
    %254 = vector.extract_strided_slice %229 {offsets = [0, 104], sizes = [16, 8], strides = [1, 1]} : vector<16x520xf32> to vector<16x8xf32>
    %255 = arith.maximumf %253, %254 : vector<16x8xf32>
    %256 = vector.extract_strided_slice %229 {offsets = [0, 112], sizes = [16, 8], strides = [1, 1]} : vector<16x520xf32> to vector<16x8xf32>
    %257 = arith.maximumf %255, %256 : vector<16x8xf32>
    %258 = vector.extract_strided_slice %229 {offsets = [0, 120], sizes = [16, 8], strides = [1, 1]} : vector<16x520xf32> to vector<16x8xf32>
    %259 = arith.maximumf %257, %258 : vector<16x8xf32>
    %260 = vector.extract_strided_slice %229 {offsets = [0, 128], sizes = [16, 8], strides = [1, 1]} : vector<16x520xf32> to vector<16x8xf32>
    %261 = vector.extract_strided_slice %229 {offsets = [0, 136], sizes = [16, 8], strides = [1, 1]} : vector<16x520xf32> to vector<16x8xf32>
    %262 = arith.maximumf %260, %261 : vector<16x8xf32>
    %263 = vector.extract_strided_slice %229 {offsets = [0, 144], sizes = [16, 8], strides = [1, 1]} : vector<16x520xf32> to vector<16x8xf32>
    %264 = arith.maximumf %262, %263 : vector<16x8xf32>
    %265 = vector.extract_strided_slice %229 {offsets = [0, 152], sizes = [16, 8], strides = [1, 1]} : vector<16x520xf32> to vector<16x8xf32>
    %266 = arith.maximumf %264, %265 : vector<16x8xf32>
    %267 = vector.extract_strided_slice %229 {offsets = [0, 160], sizes = [16, 8], strides = [1, 1]} : vector<16x520xf32> to vector<16x8xf32>
    %268 = arith.maximumf %266, %267 : vector<16x8xf32>
    %269 = vector.extract_strided_slice %229 {offsets = [0, 168], sizes = [16, 8], strides = [1, 1]} : vector<16x520xf32> to vector<16x8xf32>
    %270 = arith.maximumf %268, %269 : vector<16x8xf32>
    %271 = vector.extract_strided_slice %229 {offsets = [0, 176], sizes = [16, 8], strides = [1, 1]} : vector<16x520xf32> to vector<16x8xf32>
    %272 = arith.maximumf %270, %271 : vector<16x8xf32>
    %273 = vector.extract_strided_slice %229 {offsets = [0, 184], sizes = [16, 8], strides = [1, 1]} : vector<16x520xf32> to vector<16x8xf32>
    %274 = arith.maximumf %272, %273 : vector<16x8xf32>
    %275 = vector.extract_strided_slice %229 {offsets = [0, 192], sizes = [16, 8], strides = [1, 1]} : vector<16x520xf32> to vector<16x8xf32>
    %276 = vector.extract_strided_slice %229 {offsets = [0, 200], sizes = [16, 8], strides = [1, 1]} : vector<16x520xf32> to vector<16x8xf32>
    %277 = arith.maximumf %275, %276 : vector<16x8xf32>
    %278 = vector.extract_strided_slice %229 {offsets = [0, 208], sizes = [16, 8], strides = [1, 1]} : vector<16x520xf32> to vector<16x8xf32>
    %279 = arith.maximumf %277, %278 : vector<16x8xf32>
    %280 = vector.extract_strided_slice %229 {offsets = [0, 216], sizes = [16, 8], strides = [1, 1]} : vector<16x520xf32> to vector<16x8xf32>
    %281 = arith.maximumf %279, %280 : vector<16x8xf32>
    %282 = vector.extract_strided_slice %229 {offsets = [0, 224], sizes = [16, 8], strides = [1, 1]} : vector<16x520xf32> to vector<16x8xf32>
    %283 = arith.maximumf %281, %282 : vector<16x8xf32>
    %284 = vector.extract_strided_slice %229 {offsets = [0, 232], sizes = [16, 8], strides = [1, 1]} : vector<16x520xf32> to vector<16x8xf32>
    %285 = arith.maximumf %283, %284 : vector<16x8xf32>
    %286 = vector.extract_strided_slice %229 {offsets = [0, 240], sizes = [16, 8], strides = [1, 1]} : vector<16x520xf32> to vector<16x8xf32>
    %287 = arith.maximumf %285, %286 : vector<16x8xf32>
    %288 = vector.extract_strided_slice %229 {offsets = [0, 248], sizes = [16, 8], strides = [1, 1]} : vector<16x520xf32> to vector<16x8xf32>
    %289 = arith.maximumf %287, %288 : vector<16x8xf32>
    %290 = vector.extract_strided_slice %229 {offsets = [0, 256], sizes = [16, 8], strides = [1, 1]} : vector<16x520xf32> to vector<16x8xf32>
    %291 = vector.extract_strided_slice %229 {offsets = [0, 264], sizes = [16, 8], strides = [1, 1]} : vector<16x520xf32> to vector<16x8xf32>
    %292 = arith.maximumf %290, %291 : vector<16x8xf32>
    %293 = vector.extract_strided_slice %229 {offsets = [0, 272], sizes = [16, 8], strides = [1, 1]} : vector<16x520xf32> to vector<16x8xf32>
    %294 = arith.maximumf %292, %293 : vector<16x8xf32>
    %295 = vector.extract_strided_slice %229 {offsets = [0, 280], sizes = [16, 8], strides = [1, 1]} : vector<16x520xf32> to vector<16x8xf32>
    %296 = arith.maximumf %294, %295 : vector<16x8xf32>
    %297 = vector.extract_strided_slice %229 {offsets = [0, 288], sizes = [16, 8], strides = [1, 1]} : vector<16x520xf32> to vector<16x8xf32>
    %298 = arith.maximumf %296, %297 : vector<16x8xf32>
    %299 = vector.extract_strided_slice %229 {offsets = [0, 296], sizes = [16, 8], strides = [1, 1]} : vector<16x520xf32> to vector<16x8xf32>
    %300 = arith.maximumf %298, %299 : vector<16x8xf32>
    %301 = vector.extract_strided_slice %229 {offsets = [0, 304], sizes = [16, 8], strides = [1, 1]} : vector<16x520xf32> to vector<16x8xf32>
    %302 = arith.maximumf %300, %301 : vector<16x8xf32>
    %303 = vector.extract_strided_slice %229 {offsets = [0, 312], sizes = [16, 8], strides = [1, 1]} : vector<16x520xf32> to vector<16x8xf32>
    %304 = arith.maximumf %302, %303 : vector<16x8xf32>
    %305 = vector.extract_strided_slice %229 {offsets = [0, 320], sizes = [16, 8], strides = [1, 1]} : vector<16x520xf32> to vector<16x8xf32>
    %306 = vector.extract_strided_slice %229 {offsets = [0, 328], sizes = [16, 8], strides = [1, 1]} : vector<16x520xf32> to vector<16x8xf32>
    %307 = arith.maximumf %305, %306 : vector<16x8xf32>
    %308 = vector.extract_strided_slice %229 {offsets = [0, 336], sizes = [16, 8], strides = [1, 1]} : vector<16x520xf32> to vector<16x8xf32>
    %309 = arith.maximumf %307, %308 : vector<16x8xf32>
    %310 = vector.extract_strided_slice %229 {offsets = [0, 344], sizes = [16, 8], strides = [1, 1]} : vector<16x520xf32> to vector<16x8xf32>
    %311 = arith.maximumf %309, %310 : vector<16x8xf32>
    %312 = vector.extract_strided_slice %229 {offsets = [0, 352], sizes = [16, 8], strides = [1, 1]} : vector<16x520xf32> to vector<16x8xf32>
    %313 = arith.maximumf %311, %312 : vector<16x8xf32>
    %314 = vector.extract_strided_slice %229 {offsets = [0, 360], sizes = [16, 8], strides = [1, 1]} : vector<16x520xf32> to vector<16x8xf32>
    %315 = arith.maximumf %313, %314 : vector<16x8xf32>
    %316 = vector.extract_strided_slice %229 {offsets = [0, 368], sizes = [16, 8], strides = [1, 1]} : vector<16x520xf32> to vector<16x8xf32>
    %317 = arith.maximumf %315, %316 : vector<16x8xf32>
    %318 = vector.extract_strided_slice %229 {offsets = [0, 376], sizes = [16, 8], strides = [1, 1]} : vector<16x520xf32> to vector<16x8xf32>
    %319 = arith.maximumf %317, %318 : vector<16x8xf32>
    %320 = vector.extract_strided_slice %229 {offsets = [0, 384], sizes = [16, 8], strides = [1, 1]} : vector<16x520xf32> to vector<16x8xf32>
    %321 = vector.extract_strided_slice %229 {offsets = [0, 392], sizes = [16, 8], strides = [1, 1]} : vector<16x520xf32> to vector<16x8xf32>
    %322 = arith.maximumf %320, %321 : vector<16x8xf32>
    %323 = vector.extract_strided_slice %229 {offsets = [0, 400], sizes = [16, 8], strides = [1, 1]} : vector<16x520xf32> to vector<16x8xf32>
    %324 = arith.maximumf %322, %323 : vector<16x8xf32>
    %325 = vector.extract_strided_slice %229 {offsets = [0, 408], sizes = [16, 8], strides = [1, 1]} : vector<16x520xf32> to vector<16x8xf32>
    %326 = arith.maximumf %324, %325 : vector<16x8xf32>
    %327 = vector.extract_strided_slice %229 {offsets = [0, 416], sizes = [16, 8], strides = [1, 1]} : vector<16x520xf32> to vector<16x8xf32>
    %328 = arith.maximumf %326, %327 : vector<16x8xf32>
    %329 = vector.extract_strided_slice %229 {offsets = [0, 424], sizes = [16, 8], strides = [1, 1]} : vector<16x520xf32> to vector<16x8xf32>
    %330 = arith.maximumf %328, %329 : vector<16x8xf32>
    %331 = vector.extract_strided_slice %229 {offsets = [0, 432], sizes = [16, 8], strides = [1, 1]} : vector<16x520xf32> to vector<16x8xf32>
    %332 = arith.maximumf %330, %331 : vector<16x8xf32>
    %333 = vector.extract_strided_slice %229 {offsets = [0, 440], sizes = [16, 8], strides = [1, 1]} : vector<16x520xf32> to vector<16x8xf32>
    %334 = arith.maximumf %332, %333 : vector<16x8xf32>
    %335 = vector.extract_strided_slice %229 {offsets = [0, 448], sizes = [16, 8], strides = [1, 1]} : vector<16x520xf32> to vector<16x8xf32>
    %336 = vector.extract_strided_slice %229 {offsets = [0, 456], sizes = [16, 8], strides = [1, 1]} : vector<16x520xf32> to vector<16x8xf32>
    %337 = arith.maximumf %335, %336 : vector<16x8xf32>
    %338 = vector.extract_strided_slice %229 {offsets = [0, 464], sizes = [16, 8], strides = [1, 1]} : vector<16x520xf32> to vector<16x8xf32>
    %339 = arith.maximumf %337, %338 : vector<16x8xf32>
    %340 = vector.extract_strided_slice %229 {offsets = [0, 472], sizes = [16, 8], strides = [1, 1]} : vector<16x520xf32> to vector<16x8xf32>
    %341 = arith.maximumf %339, %340 : vector<16x8xf32>
    %342 = vector.extract_strided_slice %229 {offsets = [0, 480], sizes = [16, 8], strides = [1, 1]} : vector<16x520xf32> to vector<16x8xf32>
    %343 = arith.maximumf %341, %342 : vector<16x8xf32>
    %344 = vector.extract_strided_slice %229 {offsets = [0, 488], sizes = [16, 8], strides = [1, 1]} : vector<16x520xf32> to vector<16x8xf32>
    %345 = arith.maximumf %343, %344 : vector<16x8xf32>
    %346 = vector.extract_strided_slice %229 {offsets = [0, 496], sizes = [16, 8], strides = [1, 1]} : vector<16x520xf32> to vector<16x8xf32>
    %347 = arith.maximumf %345, %346 : vector<16x8xf32>
    %348 = vector.extract_strided_slice %229 {offsets = [0, 504], sizes = [16, 8], strides = [1, 1]} : vector<16x520xf32> to vector<16x8xf32>
    %349 = arith.maximumf %347, %348 : vector<16x8xf32>
    %350 = tpu.concatenate %244, %259, %274, %289, %304, %319, %334, %349 in 0 : vector<16x8xf32>, vector<16x8xf32>, vector<16x8xf32>, vector<16x8xf32>, vector<16x8xf32>, vector<16x8xf32>, vector<16x8xf32>, vector<16x8xf32> -> vector<128x8xf32>
    %351 = vector.broadcast %223 : vector<16x1xf32> to vector<16x520xf32>
    %352 = arith.mulf %193, %351 : vector<16x520xf32>
    %353 = vector.broadcast %225 : vector<16x1xf32> to vector<16x520xf32>
    %354 = arith.addf %352, %353 : vector<16x520xf32>
    %355 = vector.extract_strided_slice %354 {offsets = [0, 0], sizes = [16, 8], strides = [1, 1]} : vector<16x520xf32> to vector<16x8xf32>
    %356 = vector.extract_strided_slice %354 {offsets = [0, 8], sizes = [16, 8], strides = [1, 1]} : vector<16x520xf32> to vector<16x8xf32>
    %357 = arith.maximumf %355, %356 : vector<16x8xf32>
    %358 = vector.extract_strided_slice %354 {offsets = [0, 16], sizes = [16, 8], strides = [1, 1]} : vector<16x520xf32> to vector<16x8xf32>
    %359 = arith.maximumf %357, %358 : vector<16x8xf32>
    %360 = vector.extract_strided_slice %354 {offsets = [0, 24], sizes = [16, 8], strides = [1, 1]} : vector<16x520xf32> to vector<16x8xf32>
    %361 = arith.maximumf %359, %360 : vector<16x8xf32>
    %362 = vector.extract_strided_slice %354 {offsets = [0, 32], sizes = [16, 8], strides = [1, 1]} : vector<16x520xf32> to vector<16x8xf32>
    %363 = arith.maximumf %361, %362 : vector<16x8xf32>
    %364 = vector.extract_strided_slice %354 {offsets = [0, 40], sizes = [16, 8], strides = [1, 1]} : vector<16x520xf32> to vector<16x8xf32>
    %365 = arith.maximumf %363, %364 : vector<16x8xf32>
    %366 = vector.extract_strided_slice %354 {offsets = [0, 48], sizes = [16, 8], strides = [1, 1]} : vector<16x520xf32> to vector<16x8xf32>
    %367 = arith.maximumf %365, %366 : vector<16x8xf32>
    %368 = vector.extract_strided_slice %354 {offsets = [0, 56], sizes = [16, 8], strides = [1, 1]} : vector<16x520xf32> to vector<16x8xf32>
    %369 = arith.maximumf %367, %368 : vector<16x8xf32>
    %370 = vector.extract_strided_slice %354 {offsets = [0, 64], sizes = [16, 8], strides = [1, 1]} : vector<16x520xf32> to vector<16x8xf32>
    %371 = vector.extract_strided_slice %354 {offsets = [0, 72], sizes = [16, 8], strides = [1, 1]} : vector<16x520xf32> to vector<16x8xf32>
    %372 = arith.maximumf %370, %371 : vector<16x8xf32>
    %373 = vector.extract_strided_slice %354 {offsets = [0, 80], sizes = [16, 8], strides = [1, 1]} : vector<16x520xf32> to vector<16x8xf32>
    %374 = arith.maximumf %372, %373 : vector<16x8xf32>
    %375 = vector.extract_strided_slice %354 {offsets = [0, 88], sizes = [16, 8], strides = [1, 1]} : vector<16x520xf32> to vector<16x8xf32>
    %376 = arith.maximumf %374, %375 : vector<16x8xf32>
    %377 = vector.extract_strided_slice %354 {offsets = [0, 96], sizes = [16, 8], strides = [1, 1]} : vector<16x520xf32> to vector<16x8xf32>
    %378 = arith.maximumf %376, %377 : vector<16x8xf32>
    %379 = vector.extract_strided_slice %354 {offsets = [0, 104], sizes = [16, 8], strides = [1, 1]} : vector<16x520xf32> to vector<16x8xf32>
    %380 = arith.maximumf %378, %379 : vector<16x8xf32>
    %381 = vector.extract_strided_slice %354 {offsets = [0, 112], sizes = [16, 8], strides = [1, 1]} : vector<16x520xf32> to vector<16x8xf32>
    %382 = arith.maximumf %380, %381 : vector<16x8xf32>
    %383 = vector.extract_strided_slice %354 {offsets = [0, 120], sizes = [16, 8], strides = [1, 1]} : vector<16x520xf32> to vector<16x8xf32>
    %384 = arith.maximumf %382, %383 : vector<16x8xf32>
    %385 = vector.extract_strided_slice %354 {offsets = [0, 128], sizes = [16, 8], strides = [1, 1]} : vector<16x520xf32> to vector<16x8xf32>
    %386 = vector.extract_strided_slice %354 {offsets = [0, 136], sizes = [16, 8], strides = [1, 1]} : vector<16x520xf32> to vector<16x8xf32>
    %387 = arith.maximumf %385, %386 : vector<16x8xf32>
    %388 = vector.extract_strided_slice %354 {offsets = [0, 144], sizes = [16, 8], strides = [1, 1]} : vector<16x520xf32> to vector<16x8xf32>
    %389 = arith.maximumf %387, %388 : vector<16x8xf32>
    %390 = vector.extract_strided_slice %354 {offsets = [0, 152], sizes = [16, 8], strides = [1, 1]} : vector<16x520xf32> to vector<16x8xf32>
    %391 = arith.maximumf %389, %390 : vector<16x8xf32>
    %392 = vector.extract_strided_slice %354 {offsets = [0, 160], sizes = [16, 8], strides = [1, 1]} : vector<16x520xf32> to vector<16x8xf32>
    %393 = arith.maximumf %391, %392 : vector<16x8xf32>
    %394 = vector.extract_strided_slice %354 {offsets = [0, 168], sizes = [16, 8], strides = [1, 1]} : vector<16x520xf32> to vector<16x8xf32>
    %395 = arith.maximumf %393, %394 : vector<16x8xf32>
    %396 = vector.extract_strided_slice %354 {offsets = [0, 176], sizes = [16, 8], strides = [1, 1]} : vector<16x520xf32> to vector<16x8xf32>
    %397 = arith.maximumf %395, %396 : vector<16x8xf32>
    %398 = vector.extract_strided_slice %354 {offsets = [0, 184], sizes = [16, 8], strides = [1, 1]} : vector<16x520xf32> to vector<16x8xf32>
    %399 = arith.maximumf %397, %398 : vector<16x8xf32>
    %400 = vector.extract_strided_slice %354 {offsets = [0, 192], sizes = [16, 8], strides = [1, 1]} : vector<16x520xf32> to vector<16x8xf32>
    %401 = vector.extract_strided_slice %354 {offsets = [0, 200], sizes = [16, 8], strides = [1, 1]} : vector<16x520xf32> to vector<16x8xf32>
    %402 = arith.maximumf %400, %401 : vector<16x8xf32>
    %403 = vector.extract_strided_slice %354 {offsets = [0, 208], sizes = [16, 8], strides = [1, 1]} : vector<16x520xf32> to vector<16x8xf32>
    %404 = arith.maximumf %402, %403 : vector<16x8xf32>
    %405 = vector.extract_strided_slice %354 {offsets = [0, 216], sizes = [16, 8], strides = [1, 1]} : vector<16x520xf32> to vector<16x8xf32>
    %406 = arith.maximumf %404, %405 : vector<16x8xf32>
    %407 = vector.extract_strided_slice %354 {offsets = [0, 224], sizes = [16, 8], strides = [1, 1]} : vector<16x520xf32> to vector<16x8xf32>
    %408 = arith.maximumf %406, %407 : vector<16x8xf32>
    %409 = vector.extract_strided_slice %354 {offsets = [0, 232], sizes = [16, 8], strides = [1, 1]} : vector<16x520xf32> to vector<16x8xf32>
    %410 = arith.maximumf %408, %409 : vector<16x8xf32>
    %411 = vector.extract_strided_slice %354 {offsets = [0, 240], sizes = [16, 8], strides = [1, 1]} : vector<16x520xf32> to vector<16x8xf32>
    %412 = arith.maximumf %410, %411 : vector<16x8xf32>
    %413 = vector.extract_strided_slice %354 {offsets = [0, 248], sizes = [16, 8], strides = [1, 1]} : vector<16x520xf32> to vector<16x8xf32>
    %414 = arith.maximumf %412, %413 : vector<16x8xf32>
    %415 = vector.extract_strided_slice %354 {offsets = [0, 256], sizes = [16, 8], strides = [1, 1]} : vector<16x520xf32> to vector<16x8xf32>
    %416 = vector.extract_strided_slice %354 {offsets = [0, 264], sizes = [16, 8], strides = [1, 1]} : vector<16x520xf32> to vector<16x8xf32>
    %417 = arith.maximumf %415, %416 : vector<16x8xf32>
    %418 = vector.extract_strided_slice %354 {offsets = [0, 272], sizes = [16, 8], strides = [1, 1]} : vector<16x520xf32> to vector<16x8xf32>
    %419 = arith.maximumf %417, %418 : vector<16x8xf32>
    %420 = vector.extract_strided_slice %354 {offsets = [0, 280], sizes = [16, 8], strides = [1, 1]} : vector<16x520xf32> to vector<16x8xf32>
    %421 = arith.maximumf %419, %420 : vector<16x8xf32>
    %422 = vector.extract_strided_slice %354 {offsets = [0, 288], sizes = [16, 8], strides = [1, 1]} : vector<16x520xf32> to vector<16x8xf32>
    %423 = arith.maximumf %421, %422 : vector<16x8xf32>
    %424 = vector.extract_strided_slice %354 {offsets = [0, 296], sizes = [16, 8], strides = [1, 1]} : vector<16x520xf32> to vector<16x8xf32>
    %425 = arith.maximumf %423, %424 : vector<16x8xf32>
    %426 = vector.extract_strided_slice %354 {offsets = [0, 304], sizes = [16, 8], strides = [1, 1]} : vector<16x520xf32> to vector<16x8xf32>
    %427 = arith.maximumf %425, %426 : vector<16x8xf32>
    %428 = vector.extract_strided_slice %354 {offsets = [0, 312], sizes = [16, 8], strides = [1, 1]} : vector<16x520xf32> to vector<16x8xf32>
    %429 = arith.maximumf %427, %428 : vector<16x8xf32>
    %430 = vector.extract_strided_slice %354 {offsets = [0, 320], sizes = [16, 8], strides = [1, 1]} : vector<16x520xf32> to vector<16x8xf32>
    %431 = vector.extract_strided_slice %354 {offsets = [0, 328], sizes = [16, 8], strides = [1, 1]} : vector<16x520xf32> to vector<16x8xf32>
    %432 = arith.maximumf %430, %431 : vector<16x8xf32>
    %433 = vector.extract_strided_slice %354 {offsets = [0, 336], sizes = [16, 8], strides = [1, 1]} : vector<16x520xf32> to vector<16x8xf32>
    %434 = arith.maximumf %432, %433 : vector<16x8xf32>
    %435 = vector.extract_strided_slice %354 {offsets = [0, 344], sizes = [16, 8], strides = [1, 1]} : vector<16x520xf32> to vector<16x8xf32>
    %436 = arith.maximumf %434, %435 : vector<16x8xf32>
    %437 = vector.extract_strided_slice %354 {offsets = [0, 352], sizes = [16, 8], strides = [1, 1]} : vector<16x520xf32> to vector<16x8xf32>
    %438 = arith.maximumf %436, %437 : vector<16x8xf32>
    %439 = vector.extract_strided_slice %354 {offsets = [0, 360], sizes = [16, 8], strides = [1, 1]} : vector<16x520xf32> to vector<16x8xf32>
    %440 = arith.maximumf %438, %439 : vector<16x8xf32>
    %441 = vector.extract_strided_slice %354 {offsets = [0, 368], sizes = [16, 8], strides = [1, 1]} : vector<16x520xf32> to vector<16x8xf32>
    %442 = arith.maximumf %440, %441 : vector<16x8xf32>
    %443 = vector.extract_strided_slice %354 {offsets = [0, 376], sizes = [16, 8], strides = [1, 1]} : vector<16x520xf32> to vector<16x8xf32>
    %444 = arith.maximumf %442, %443 : vector<16x8xf32>
    %445 = vector.extract_strided_slice %354 {offsets = [0, 384], sizes = [16, 8], strides = [1, 1]} : vector<16x520xf32> to vector<16x8xf32>
    %446 = vector.extract_strided_slice %354 {offsets = [0, 392], sizes = [16, 8], strides = [1, 1]} : vector<16x520xf32> to vector<16x8xf32>
    %447 = arith.maximumf %445, %446 : vector<16x8xf32>
    %448 = vector.extract_strided_slice %354 {offsets = [0, 400], sizes = [16, 8], strides = [1, 1]} : vector<16x520xf32> to vector<16x8xf32>
    %449 = arith.maximumf %447, %448 : vector<16x8xf32>
    %450 = vector.extract_strided_slice %354 {offsets = [0, 408], sizes = [16, 8], strides = [1, 1]} : vector<16x520xf32> to vector<16x8xf32>
    %451 = arith.maximumf %449, %450 : vector<16x8xf32>
    %452 = vector.extract_strided_slice %354 {offsets = [0, 416], sizes = [16, 8], strides = [1, 1]} : vector<16x520xf32> to vector<16x8xf32>
    %453 = arith.maximumf %451, %452 : vector<16x8xf32>
    %454 = vector.extract_strided_slice %354 {offsets = [0, 424], sizes = [16, 8], strides = [1, 1]} : vector<16x520xf32> to vector<16x8xf32>
    %455 = arith.maximumf %453, %454 : vector<16x8xf32>
    %456 = vector.extract_strided_slice %354 {offsets = [0, 432], sizes = [16, 8], strides = [1, 1]} : vector<16x520xf32> to vector<16x8xf32>
    %457 = arith.maximumf %455, %456 : vector<16x8xf32>
    %458 = vector.extract_strided_slice %354 {offsets = [0, 440], sizes = [16, 8], strides = [1, 1]} : vector<16x520xf32> to vector<16x8xf32>
    %459 = arith.maximumf %457, %458 : vector<16x8xf32>
    %460 = vector.extract_strided_slice %354 {offsets = [0, 448], sizes = [16, 8], strides = [1, 1]} : vector<16x520xf32> to vector<16x8xf32>
    %461 = vector.extract_strided_slice %354 {offsets = [0, 456], sizes = [16, 8], strides = [1, 1]} : vector<16x520xf32> to vector<16x8xf32>
    %462 = arith.maximumf %460, %461 : vector<16x8xf32>
    %463 = vector.extract_strided_slice %354 {offsets = [0, 464], sizes = [16, 8], strides = [1, 1]} : vector<16x520xf32> to vector<16x8xf32>
    %464 = arith.maximumf %462, %463 : vector<16x8xf32>
    %465 = vector.extract_strided_slice %354 {offsets = [0, 472], sizes = [16, 8], strides = [1, 1]} : vector<16x520xf32> to vector<16x8xf32>
    %466 = arith.maximumf %464, %465 : vector<16x8xf32>
    %467 = vector.extract_strided_slice %354 {offsets = [0, 480], sizes = [16, 8], strides = [1, 1]} : vector<16x520xf32> to vector<16x8xf32>
    %468 = arith.maximumf %466, %467 : vector<16x8xf32>
    %469 = vector.extract_strided_slice %354 {offsets = [0, 488], sizes = [16, 8], strides = [1, 1]} : vector<16x520xf32> to vector<16x8xf32>
    %470 = arith.maximumf %468, %469 : vector<16x8xf32>
    %471 = vector.extract_strided_slice %354 {offsets = [0, 496], sizes = [16, 8], strides = [1, 1]} : vector<16x520xf32> to vector<16x8xf32>
    %472 = arith.maximumf %470, %471 : vector<16x8xf32>
    %473 = vector.extract_strided_slice %354 {offsets = [0, 504], sizes = [16, 8], strides = [1, 1]} : vector<16x520xf32> to vector<16x8xf32>
    %474 = arith.maximumf %472, %473 : vector<16x8xf32>
    %475 = tpu.concatenate %369, %384, %399, %414, %429, %444, %459, %474 in 0 : vector<16x8xf32>, vector<16x8xf32>, vector<16x8xf32>, vector<16x8xf32>, vector<16x8xf32>, vector<16x8xf32>, vector<16x8xf32>, vector<16x8xf32> -> vector<128x8xf32>
    %476 = tpu.concatenate %350, %475 in 1 : vector<128x8xf32>, vector<128x8xf32> -> vector<128x16xf32>
    %477 = vector.extract_strided_slice %476 {offsets = [127, 0], sizes = [1, 1], strides = [1, 1]} : vector<128x16xf32> to vector<1x1xf32>
    %478 = vector.broadcast %477 : vector<1x1xf32> to vector<128x16xf32>
    %479 = arith.cmpf oeq, %476, %478 : vector<128x16xf32>
    %480 = arith.extui %479 : vector<128x16xi1> to vector<128x16xi32>
    %481 = arith.sitofp %480 : vector<128x16xi32> to vector<128x16xf32>
    %cst_64 = arith.constant dense<0.000000e+00> : vector<128xf32>
    %482 = vector.multi_reduction <add>, %481, %cst_64 [1] : vector<128x16xf32> to vector<128xf32>
    %483 = vector.shape_cast %482 : vector<128xf32> to vector<128x1xf32>
    %cst_65 = arith.constant dense<0.000000e+00> : vector<1xf32>
    %484 = vector.multi_reduction <add>, %483, %cst_65 [0] : vector<128x1xf32> to vector<1xf32>
    %485 = vector.shape_cast %484 : vector<1xf32> to vector<1x1xf32>
    %cst_66 = arith.constant 8.000000e+00 : f32
    %486 = vector.broadcast %cst_66 : f32 to vector<1x1xf32>
    %487 = arith.cmpf ogt, %485, %486 : vector<1x1xf32>
    %488 = vector.broadcast %487 : vector<1x1xi1> to vector<128x16xi1>
    %489 = arith.andi %488, %479 : vector<128x16xi1>
    %cst_67 = arith.constant 0.000000e+00 : f32
    %490 = vector.broadcast %cst_67 : f32 to vector<128x16xf32>
    %491 = arith.select %489, %490, %476 : vector<128x16xi1>, vector<128x16xf32>
    %c0_68 = arith.constant 0 : index
    %c0_69 = arith.constant 0 : index
    %492 = vector.load %arg13[%c0_68, %c0_69] : memref<32x128xf32, #tpu.memory_space<vmem>>, vector<32x128xf32>
    %493 = arith.truncf %492 : vector<32x128xf32> to vector<32x128xbf16>
    %494 = arith.truncf %491 : vector<128x16xf32> to vector<128x16xbf16>
    %cst_70 = arith.constant dense<0.000000e+00> : vector<32x16xf32>
    %495 = tpu.matmul %493, %494, %cst_70 {dimension_numbers = #tpu.dot_dimension_numbers<[1], [0], [0], [1], [0, 0, 1, 1], [], []>} : vector<32x128xbf16>, vector<128x16xbf16>, vector<32x16xf32> -> vector<32x16xf32>
    %c0_71 = arith.constant 0 : index
    %c0_72 = arith.constant 0 : index
    %496 = vector.load %arg14[%c0_71, %c0_72] : memref<32x1xf32, #tpu.memory_space<vmem>>, vector<32x1xf32>
    %497 = vector.broadcast %496 : vector<32x1xf32> to vector<32x16xf32>
    %498 = arith.addf %495, %497 : vector<32x16xf32>
    %cst_73 = arith.constant 0.000000e+00 : f32
    %499 = vector.broadcast %cst_73 : f32 to vector<32x16xf32>
    %500 = arith.cmpf oge, %498, %499 : vector<32x16xf32>
    %cst_74 = arith.constant 2.000000e-01 : f32
    %501 = vector.broadcast %cst_74 : f32 to vector<32x16xf32>
    %502 = arith.mulf %501, %498 : vector<32x16xf32>
    %503 = arith.select %500, %498, %502 : vector<32x16xi1>, vector<32x16xf32>
    %c0_75 = arith.constant 0 : index
    %c0_76 = arith.constant 0 : index
    %504 = vector.load %arg15[%c0_75, %c0_76] : memref<8x32xf32, #tpu.memory_space<vmem>>, vector<8x32xf32>
    %505 = arith.truncf %504 : vector<8x32xf32> to vector<8x32xbf16>
    %506 = arith.truncf %503 : vector<32x16xf32> to vector<32x16xbf16>
    %cst_77 = arith.constant dense<0.000000e+00> : vector<8x16xf32>
    %507 = tpu.matmul %505, %506, %cst_77 {dimension_numbers = #tpu.dot_dimension_numbers<[1], [0], [0], [1], [0, 0, 1, 1], [], []>} : vector<8x32xbf16>, vector<32x16xbf16>, vector<8x16xf32> -> vector<8x16xf32>
    %c0_78 = arith.constant 0 : index
    %c0_79 = arith.constant 0 : index
    %508 = vector.load %arg16[%c0_78, %c0_79] : memref<8x1xf32, #tpu.memory_space<vmem>>, vector<8x1xf32>
    %509 = vector.broadcast %508 : vector<8x1xf32> to vector<8x16xf32>
    %510 = arith.addf %507, %509 : vector<8x16xf32>
    %511 = tpu.transpose %510, [1, 0] : vector<8x16xf32> -> vector<16x8xf32>
    %512 = vector.shape_cast %511 : vector<16x8xf32> to vector<2x8x8xf32>
    %c0_80 = arith.constant 0 : index
    %c0_81 = arith.constant 0 : index
    %c0_82 = arith.constant 0 : index
    %513 = vector.load %arg17[%c0_80, %c0_81, %c0_82] : memref<2x8x8xf32, #tpu.memory_space<vmem>>, vector<2x8x8xf32>
    tpu.vector_store %arg17[%c0_80, %c0_81, %c0_82], %512 {strides = array<i32>} : memref<2x8x8xf32, #tpu.memory_space<vmem>>, vector<2x8x8xf32>,
    return
  }
}

</mosaic_0001>

<llo_original>
// kernel: conv_k_region_forward.2
$region0: #{conv_k_region_forward.2}
  #allocation0 [shape = 'u32[]', space=smem, size = 0x4, offset = 0x4, fixed_abs, tag = 'smem constant byte address 0x4 - core index']
  #allocation1 [shape = 'u32[144,128]{1,0:T(1,128)}', space=vmem, size = 0x12000, scoped, tag = 'internal scratch']
  %s0 = inlined_call_operand.vmem [shape: f32[2,90,16], index: 0, kind: input, shape index: {}]
  %s1 = inlined_call_operand.vmem [shape: f32[2,2,90,8], index: 1, kind: output, shape index: {}]
  %s2 = sld [smem:[#allocation0]]
  $region37: #{conv_k_region_forward.2} parent=0
    _
  %s4 = ssub.s32 1, %s2
  %s5 = scalar_select 0, %s4, %s2
  loop: start=0, step=1, limit=4
  $region2: #{conv_k_region_forward.2} parent=0 // loop_pre_header
    _
  $region3: #{conv_k_region_forward.2} parent=0 // loop_header
    %s7 = sphi 0, %s11
    %p8 = scmp.ge.s32.totalorder %s7, 4
    %s17 = sphi 0, %s19
    %s20 = sphi 0, %s17
    %s21 = sphi 0, %s20
    %s37 = sphi 0, %s21
    %s43 = sphi 0, %s45
    %s46 = sphi 0, %s43
    %s47 = sphi 0, %s46
    %s63 = sphi 0, %s47
  $region4: #{conv_k_region_forward.2} parent=0 // loop_header_branch
    %10 = sbr.rel (%p8) target = $region8
  $region5: #{conv_k_region_forward.2} parent=0 // loop_body
    %s12 = ssub.s32 %s7, 1
    %s13 = ssub.s32 %s7, 2
    %s14 = sadd.s32 %s7, 1
    %s15 = ssub.s32 %s7, %s14
    %p16 = scmp.eq.s32.totalorder %s15, 0
    %s18 = sadd.s32 %s17, 1
    %s19 = scalar_select %p16, %s17, %s18
    %p22 = pneg %p16
    %p23 = scmp.eq.s32.totalorder %s7, 1
    %p24 = por %p22, %p23
    %p25 = scmp.ne.s32.totalorder %s17, %s20
    %p26 = scmp.eq.s32.totalorder %s7, 0
    %p27 = por %p25, %p26
    %p28 = scmp.ne.s32.totalorder %s17, %s20
    %p29 = scmp.eq.s32.totalorder %s12, 1
    %p30 = por %p28, %p29
    %p31 = scmp.ne.s32.totalorder %s20, %s21
    %p32 = scmp.eq.s32.totalorder %s12, 0
    %p33 = por %p31, %p32
    %p34 = scmp.ne.s32.totalorder %s20, %s21
    %p35 = scmp.eq.s32.totalorder %s13, 1
    %p36 = por %p34, %p35
    %p38 = scmp.ne.s32.totalorder %s21, %s37
    %p39 = scmp.eq.s32.totalorder %s13, 0
    %p40 = por %p38, %p39
    %s41 = ssub.s32 %s7, %s14
    %p42 = scmp.eq.s32.totalorder %s41, 0
    %s44 = sadd.s32 %s43, 1
    %s45 = scalar_select %p42, %s43, %s44
    %p48 = pneg %p42
    %p49 = scmp.eq.s32.totalorder %s7, 1
    %p50 = por %p48, %p49
    %p51 = scmp.ne.s32.totalorder %s43, %s46
    %p52 = scmp.eq.s32.totalorder %s7, 0
    %p53 = por %p51, %p52
    %p54 = scmp.ne.s32.totalorder %s43, %s46
    %p55 = scmp.eq.s32.totalorder %s12, 1
    %p56 = por %p54, %p55
    %p57 = scmp.ne.s32.totalorder %s46, %s47
    %p58 = scmp.eq.s32.totalorder %s12, 0
    %p59 = por %p57, %p58
    %p60 = scmp.ne.s32.totalorder %s46, %s47
    %p61 = scmp.eq.s32.totalorder %s13, 1
    %p62 = por %p60, %p61
    %p64 = scmp.ne.s32.totalorder %s47, %s63
    %p65 = scmp.eq.s32.totalorder %s13, 0
    %p66 = por %p64, %p65
    %p67 = scmp.le.s32.totalorder 1, %s7
    %p68 = scmp.lt.s32.totalorder %s7, 3
    %p69 = pnand %p67, %p68
    %p70 = pneg %p69
    // Predicated region
    $region9: #{conv_k_region_forward.2} parent=5 // pred_check
      _
    $region10: #{conv_k_region_forward.2} parent=5 // pred_check_branch
      %72 = sbr.rel (%p69) target = $region12
    $region11: #{conv_k_region_forward.2} parent=5 // pred_region
      %s73 = ssub.s32 %s7, 1
    $region12: #{conv_k_region_forward.2} parent=5 // pred_fallthru
      _
    %p74 = scmp.lt.s32.totalorder %s7, 2
    // Predicated region
    $region13: #{conv_k_region_forward.2} parent=5 // pred_check
      %p75 = pneg %p74
    $region14: #{conv_k_region_forward.2} parent=5 // pred_check_branch
      %77 = sbr.rel (%p75) target = $region16
    $region15: #{conv_k_region_forward.2} parent=5 // pred_region
      // Predicated region
      $region17: #{conv_k_region_forward.2} parent=15 // pred_check
        %p78 = pneg %p27
      $region18: #{conv_k_region_forward.2} parent=15 // pred_check_branch
        %80 = sbr.rel (%p78) target = $region20
      $region19: #{conv_k_region_forward.2} parent=15 // pred_region
        %p81 = scmp.lt.s32.totalorder %s7, 1
        %s82 = scalar_select %p81, %s7, 1
        %s83 = smul.addr %s82, 12
        %s84 = smul.addr %s83, 8
        %s85 = scalar_lea.vmem %s0, %s84
      $region20: #{conv_k_region_forward.2} parent=15 // pred_fallthru
        _
    $region16: #{conv_k_region_forward.2} parent=5 // pred_fallthru
      _
    %p86 = scmp.le.s32.totalorder 1, %s7
    %p87 = scmp.lt.s32.totalorder %s7, 3
    %p88 = pnand %p86, %p87
    %p89 = pneg %p88
    // Predicated region
    $region21: #{conv_k_region_forward.2} parent=5 // pred_check
      _
    $region22: #{conv_k_region_forward.2} parent=5 // pred_check_branch
      %91 = sbr.rel (%p88) target = $region24
    $region23: #{conv_k_region_forward.2} parent=5 // pred_region
      %s92 = ssub.s32 %s7, 1
      %p93 = scmp.lt.s32.totalorder %s12, 1
      %s94 = scalar_select %p93, %s12, 1
      %s95 = smul.addr %s94, 12
      %s96 = smul.addr %s95, 8
      %s97 = scalar_lea.vmem %s0, %s96
      %p98 = pneg %p33
      %p99 = pneg %p30
      %p100 = pneg %p59
      %p101 = pneg %p56
      %p102 = scmp.lt.s32.totalorder %s12, 1
      %s103 = scalar_select %p102, %s12, 1
      %s104 = smul.addr %s103, 24
      %s105 = smul.addr %s104, 8
      %s106 = scalar_lea.vmem %s1, %s105
      %p107 = scmp.lt.s32.totalorder %s12, 1
      %s108 = scalar_select %p107, %s12, 1
      %s109 = smul.addr %s108, 12
      %s110 = smul.addr %s109, 8
      %s111 = scalar_lea.vmem %s0, %s110
      %p112 = scmp.lt.s32.totalorder %s12, 1
      %s113 = scalar_select %p112, %s12, 1
      %s114 = smul.addr %s113, 24
      %s115 = smul.addr %s114, 8
      %s116 = scalar_lea.vmem %s1, %s115
      %v117 = vld [vmem:[%s111] sm:$0xff]
      %v118 = vld [vmem:[%s111 + $0x8] sm:$0xff]
      %v119 = vld [vmem:[%s111 + $0x10] sm:$0xff]
      %v120 = vld [vmem:[%s111 + $0x18] sm:$0xff]
      %v121 = vld [vmem:[%s111 + $0x20] sm:$0xff]
      %v122 = vld [vmem:[%s111 + $0x28] sm:$0xff]
      %v123 = vld [vmem:[%s111 + $0x30] sm:$0xff]
      %v124 = vld [vmem:[%s111 + $0x38] sm:$0xff]
      %v125 = vld [vmem:[%s111 + $0x40] sm:$0xff]
      %v126 = vld [vmem:[%s111 + $0x48] sm:$0xff]
      %v127 = vld [vmem:[%s111 + $0x50] sm:$0xff]
      %v128 = vld [vmem:[%s111 + $0x58] sm:$0x3]
      %vm129 = vcmask 64512
      %v130 = vsel %vm129, %v117, 0.0
      %131 = vadd.xlane.f32.xlu0 %v130
      %v132 = vpop.xlane.xlu0 %131
      %v133 = vsel %vm129, %v118, 0.0
      %134 = vadd.xlane.f32.xlu0 %v133
      %v135 = vpop.xlane.xlu0 %134
      %v136 = vsel %vm129, %v119, 0.0
      %137 = vadd.xlane.f32.xlu0 %v136
      %v138 = vpop.xlane.xlu0 %137
      %v139 = vsel %vm129, %v120, 0.0
      %140 = vadd.xlane.f32.xlu0 %v139
      %v141 = vpop.xlane.xlu0 %140
      %v142 = vsel %vm129, %v121, 0.0
      %143 = vadd.xlane.f32.xlu0 %v142
      %v144 = vpop.xlane.xlu0 %143
      %v145 = vsel %vm129, %v122, 0.0
      %146 = vadd.xlane.f32.xlu0 %v145
      %v147 = vpop.xlane.xlu0 %146
      %v148 = vsel %vm129, %v123, 0.0
      %149 = vadd.xlane.f32.xlu0 %v148
      %v150 = vpop.xlane.xlu0 %149
      %v151 = vsel %vm129, %v124, 0.0
      %152 = vadd.xlane.f32.xlu0 %v151
      %v153 = vpop.xlane.xlu0 %152
      %v154 = vsel %vm129, %v125, 0.0
      %155 = vadd.xlane.f32.xlu0 %v154
      %v156 = vpop.xlane.xlu0 %155
      %v157 = vsel %vm129, %v126, 0.0
      %158 = vadd.xlane.f32.xlu0 %v157
      %v159 = vpop.xlane.xlu0 %158
      %v160 = vsel %vm129, %v127, 0.0
      %161 = vadd.xlane.f32.xlu0 %v160
      %v162 = vpop.xlane.xlu0 %161
      %vm163 = vcmask 58368
      %v164 = vsel %vm163, %v128, 0.0
      %165 = vadd.xlane.f32.xlu0 %v164
      %v166 = vpop.xlane.xlu0 %165
      %v167 = vrcp.pop 8.0
      %v168 = vmul.f32 %v132, %v167
      %v169 = vmul.f32 %v135, %v167
      %v170 = vmul.f32 %v138, %v167
      %v171 = vmul.f32 %v141, %v167
      %v172 = vmul.f32 %v144, %v167
      %v173 = vmul.f32 %v147, %v167
      %v174 = vmul.f32 %v150, %v167
      %v175 = vmul.f32 %v153, %v167
      %v176 = vmul.f32 %v156, %v167
      %v177 = vmul.f32 %v159, %v167
      %v178 = vmul.f32 %v162, %v167
      %v179 = vmul.f32 %v166, %v167
      %v180 = vsub.f32 %v117, %v168
      %v181 = vsub.f32 %v118, %v169
      %v182 = vsub.f32 %v119, %v170
      %v183 = vsub.f32 %v120, %v171
      %v184 = vsub.f32 %v121, %v172
      %v185 = vsub.f32 %v122, %v173
      %v186 = vsub.f32 %v123, %v174
      %v187 = vsub.f32 %v124, %v175
      %v188 = vsub.f32 %v125, %v176
      %v189 = vsub.f32 %v126, %v177
      %v190 = vsub.f32 %v127, %v178
      %v191 = vsub.f32 %v128, %v179
      %v192 = vmul.f32 %v180, %v180
      %v193 = vmul.f32 %v181, %v181
      %v194 = vmul.f32 %v182, %v182
      %v195 = vmul.f32 %v183, %v183
      %v196 = vmul.f32 %v184, %v184
      %v197 = vmul.f32 %v185, %v185
      %v198 = vmul.f32 %v186, %v186
      %v199 = vmul.f32 %v187, %v187
      %v200 = vmul.f32 %v188, %v188
      %v201 = vmul.f32 %v189, %v189
      %v202 = vmul.f32 %v190, %v190
      %v203 = vmul.f32 %v191, %v191
      %v204 = vsel %vm129, %v192, 0.0
      %205 = vadd.xlane.f32.xlu0 %v204
      %v206 = vpop.xlane.xlu0 %205
      %v207 = vsel %vm129, %v193, 0.0
      %208 = vadd.xlane.f32.xlu0 %v207
      %v209 = vpop.xlane.xlu0 %208
      %v210 = vsel %vm129, %v194, 0.0
      %211 = vadd.xlane.f32.xlu0 %v210
      %v212 = vpop.xlane.xlu0 %211
      %v213 = vsel %vm129, %v195, 0.0
      %214 = vadd.xlane.f32.xlu0 %v213
      %v215 = vpop.xlane.xlu0 %214
      %v216 = vsel %vm129, %v196, 0.0
      %217 = vadd.xlane.f32.xlu0 %v216
      %v218 = vpop.xlane.xlu0 %217
      %v219 = vsel %vm129, %v197, 0.0
      %220 = vadd.xlane.f32.xlu0 %v219
      %v221 = vpop.xlane.xlu0 %220
      %v222 = vsel %vm129, %v198, 0.0
      %223 = vadd.xlane.f32.xlu0 %v222
      %v224 = vpop.xlane.xlu0 %223
      %v225 = vsel %vm129, %v199, 0.0
      %226 = vadd.xlane.f32.xlu0 %v225
      %v227 = vpop.xlane.xlu0 %226
      %v228 = vsel %vm129, %v200, 0.0
      %229 = vadd.xlane.f32.xlu0 %v228
      %v230 = vpop.xlane.xlu0 %229
      %v231 = vsel %vm129, %v201, 0.0
      %232 = vadd.xlane.f32.xlu0 %v231
      %v233 = vpop.xlane.xlu0 %232
      %v234 = vsel %vm129, %v202, 0.0
      %235 = vadd.xlane.f32.xlu0 %v234
      %v236 = vpop.xlane.xlu0 %235
      %v237 = vsel %vm163, %v203, 0.0
      %238 = vadd.xlane.f32.xlu0 %v237
      %v239 = vpop.xlane.xlu0 %238
      %v240 = vmul.f32 %v206, %v167
      %v241 = vmul.f32 %v209, %v167
      %v242 = vmul.f32 %v212, %v167
      %v243 = vmul.f32 %v215, %v167
      %v244 = vmul.f32 %v218, %v167
      %v245 = vmul.f32 %v221, %v167
      %v246 = vmul.f32 %v224, %v167
      %v247 = vmul.f32 %v227, %v167
      %v248 = vmul.f32 %v230, %v167
      %v249 = vmul.f32 %v233, %v167
      %v250 = vmul.f32 %v236, %v167
      %v251 = vmul.f32 %v239, %v167
      %v252 = vadd.f32 %v240, 1e-05
      %v253 = vadd.f32 %v241, 1e-05
      %v254 = vadd.f32 %v242, 1e-05
      %v255 = vadd.f32 %v243, 1e-05
      %v256 = vadd.f32 %v244, 1e-05
      %v257 = vadd.f32 %v245, 1e-05
      %v258 = vadd.f32 %v246, 1e-05
      %v259 = vadd.f32 %v247, 1e-05
      %v260 = vadd.f32 %v248, 1e-05
      %v261 = vadd.f32 %v249, 1e-05
      %v262 = vadd.f32 %v250, 1e-05
      %v263 = vadd.f32 %v251, 1e-05
      %v264 = vrsqrt.pop %v252
      %v265 = vrsqrt.pop %v253
      %v266 = vrsqrt.pop %v254
      %v267 = vrsqrt.pop %v255
      %v268 = vrsqrt.pop %v256
      %v269 = vrsqrt.pop %v257
      %v270 = vrsqrt.pop %v258
      %v271 = vrsqrt.pop %v259
      %v272 = vrsqrt.pop %v260
      %v273 = vrsqrt.pop %v261
      %v274 = vrsqrt.pop %v262
      %v275 = vrsqrt.pop %v263
      %v276 = vmul.f32 %v180, %v264
      %v277 = vmul.f32 %v181, %v265
      %v278 = vmul.f32 %v182, %v266
      %v279 = vmul.f32 %v183, %v267
      %v280 = vmul.f32 %v184, %v268
      %v281 = vmul.f32 %v185, %v269
      %v282 = vmul.f32 %v186, %v270
      %v283 = vmul.f32 %v187, %v271
      %v284 = vmul.f32 %v188, %v272
      %v285 = vmul.f32 %v189, %v273
      %v286 = vmul.f32 %v190, %v274
      %v287 = vmul.f32 %v191, %v275
      %288 = vst.msk [vmem:[%s116] sm:$0xff] %vm129, %v276
      %289 = vst.msk [vmem:[%s116 + $0x8] sm:$0xff] %vm129, %v277
      %290 = vst.msk [vmem:[%s116 + $0x10] sm:$0xff] %vm129, %v278
      %291 = vst.msk [vmem:[%s116 + $0x18] sm:$0xff] %vm129, %v279
      %292 = vst.msk [vmem:[%s116 + $0x20] sm:$0xff] %vm129, %v280
      %293 = vst.msk [vmem:[%s116 + $0x28] sm:$0xff] %vm129, %v281
      %294 = vst.msk [vmem:[%s116 + $0x30] sm:$0xff] %vm129, %v282
      %295 = vst.msk [vmem:[%s116 + $0x38] sm:$0xff] %vm129, %v283
      %296 = vst.msk [vmem:[%s116 + $0x40] sm:$0xff] %vm129, %v284
      %297 = vst.msk [vmem:[%s116 + $0x48] sm:$0xff] %vm129, %v285
      %298 = vst.msk [vmem:[%s116 + $0x50] sm:$0xff] %vm129, %v286
      %299 = vst.msk [vmem:[%s116 + $0x58] sm:$0x3] %vm163, %v287
      %312 = vrot.lane.b32.xlu0 %v117, 120
      %v313 = vpop.permute.xlu0 %312
      %314 = vrot.lane.b32.xlu0 %v118, 120
      %v315 = vpop.permute.xlu0 %314
      %316 = vrot.lane.b32.xlu0 %v119, 120
      %v317 = vpop.permute.xlu0 %316
      %318 = vrot.lane.b32.xlu0 %v120, 120
      %v319 = vpop.permute.xlu0 %318
      %320 = vrot.lane.b32.xlu0 %v121, 120
      %v321 = vpop.permute.xlu0 %320
      %322 = vrot.lane.b32.xlu0 %v122, 120
      %v323 = vpop.permute.xlu0 %322
      %324 = vrot.lane.b32.xlu0 %v123, 120
      %v325 = vpop.permute.xlu0 %324
      %326 = vrot.lane.b32.xlu0 %v124, 120
      %v327 = vpop.permute.xlu0 %326
      %328 = vrot.lane.b32.xlu0 %v125, 120
      %v329 = vpop.permute.xlu0 %328
      %330 = vrot.lane.b32.xlu0 %v126, 120
      %v331 = vpop.permute.xlu0 %330
      %332 = vrot.lane.b32.xlu0 %v127, 120
      %v333 = vpop.permute.xlu0 %332
      %334 = vrot.lane.b32.xlu0 %v128, 120
      %v335 = vpop.permute.xlu0 %334
      %v348 = vsel %vm129, %v313, 0.0
      %349 = vadd.xlane.f32.xlu0 %v348
      %v350 = vpop.xlane.xlu0 %349
      %v351 = vsel %vm129, %v315, 0.0
      %352 = vadd.xlane.f32.xlu0 %v351
      %v353 = vpop.xlane.xlu0 %352
      %v354 = vsel %vm129, %v317, 0.0
      %355 = vadd.xlane.f32.xlu0 %v354
      %v356 = vpop.xlane.xlu0 %355
      %v357 = vsel %vm129, %v319, 0.0
      %358 = vadd.xlane.f32.xlu0 %v357
      %v359 = vpop.xlane.xlu0 %358
      %v360 = vsel %vm129, %v321, 0.0
      %361 = vadd.xlane.f32.xlu0 %v360
      %v362 = vpop.xlane.xlu0 %361
      %v363 = vsel %vm129, %v323, 0.0
      %364 = vadd.xlane.f32.xlu0 %v363
      %v365 = vpop.xlane.xlu0 %364
      %v366 = vsel %vm129, %v325, 0.0
      %367 = vadd.xlane.f32.xlu0 %v366
      %v368 = vpop.xlane.xlu0 %367
      %v369 = vsel %vm129, %v327, 0.0
      %370 = vadd.xlane.f32.xlu0 %v369
      %v371 = vpop.xlane.xlu0 %370
      %v372 = vsel %vm129, %v329, 0.0
      %373 = vadd.xlane.f32.xlu0 %v372
      %v374 = vpop.xlane.xlu0 %373
      %v375 = vsel %vm129, %v331, 0.0
      %376 = vadd.xlane.f32.xlu0 %v375
      %v377 = vpop.xlane.xlu0 %376
      %v378 = vsel %vm129, %v333, 0.0
      %379 = vadd.xlane.f32.xlu0 %v378
      %v380 = vpop.xlane.xlu0 %379
      %v381 = vsel %vm163, %v335, 0.0
      %382 = vadd.xlane.f32.xlu0 %v381
      %v383 = vpop.xlane.xlu0 %382
      %v384 = vmul.f32 %v350, %v167
      %v385 = vmul.f32 %v353, %v167
      %v386 = vmul.f32 %v356, %v167
      %v387 = vmul.f32 %v359, %v167
      %v388 = vmul.f32 %v362, %v167
      %v389 = vmul.f32 %v365, %v167
      %v390 = vmul.f32 %v368, %v167
      %v391 = vmul.f32 %v371, %v167
      %v392 = vmul.f32 %v374, %v167
      %v393 = vmul.f32 %v377, %v167
      %v394 = vmul.f32 %v380, %v167
      %v395 = vmul.f32 %v383, %v167
      %v396 = vsub.f32 %v117, %v384
      %v397 = vsub.f32 %v118, %v385
      %v398 = vsub.f32 %v119, %v386
      %v399 = vsub.f32 %v120, %v387
      %v400 = vsub.f32 %v121, %v388
      %v401 = vsub.f32 %v122, %v389
      %v402 = vsub.f32 %v123, %v390
      %v403 = vsub.f32 %v124, %v391
      %v404 = vsub.f32 %v125, %v392
      %v405 = vsub.f32 %v126, %v393
      %v406 = vsub.f32 %v127, %v394
      %v407 = vsub.f32 %v128, %v395
      %v408 = vmul.f32 %v396, %v396
      %v409 = vmul.f32 %v397, %v397
      %v410 = vmul.f32 %v398, %v398
      %v411 = vmul.f32 %v399, %v399
      %v412 = vmul.f32 %v400, %v400
      %v413 = vmul.f32 %v401, %v401
      %v414 = vmul.f32 %v402, %v402
      %v415 = vmul.f32 %v403, %v403
      %v416 = vmul.f32 %v404, %v404
      %v417 = vmul.f32 %v405, %v405
      %v418 = vmul.f32 %v406, %v406
      %v419 = vmul.f32 %v407, %v407
      %432 = vrot.lane.b32.xlu0 %v408, 120
      %v433 = vpop.permute.xlu0 %432
      %434 = vrot.lane.b32.xlu0 %v409, 120
      %v435 = vpop.permute.xlu0 %434
      %436 = vrot.lane.b32.xlu0 %v410, 120
      %v437 = vpop.permute.xlu0 %436
      %438 = vrot.lane.b32.xlu0 %v411, 120
      %v439 = vpop.permute.xlu0 %438
      %440 = vrot.lane.b32.xlu0 %v412, 120
      %v441 = vpop.permute.xlu0 %440
      %442 = vrot.lane.b32.xlu0 %v413, 120
      %v443 = vpop.permute.xlu0 %442
      %444 = vrot.lane.b32.xlu0 %v414, 120
      %v445 = vpop.permute.xlu0 %444
      %446 = vrot.lane.b32.xlu0 %v415, 120
      %v447 = vpop.permute.xlu0 %446
      %448 = vrot.lane.b32.xlu0 %v416, 120
      %v449 = vpop.permute.xlu0 %448
      %450 = vrot.lane.b32.xlu0 %v417, 120
      %v451 = vpop.permute.xlu0 %450
      %452 = vrot.lane.b32.xlu0 %v418, 120
      %v453 = vpop.permute.xlu0 %452
      %454 = vrot.lane.b32.xlu0 %v419, 120
      %v455 = vpop.permute.xlu0 %454
      %v468 = vsel %vm129, %v433, 0.0
      %469 = vadd.xlane.f32.xlu0 %v468
      %v470 = vpop.xlane.xlu0 %469
      %v471 = vsel %vm129, %v435, 0.0
      %472 = vadd.xlane.f32.xlu0 %v471
      %v473 = vpop.xlane.xlu0 %472
      %v474 = vsel %vm129, %v437, 0.0
      %475 = vadd.xlane.f32.xlu0 %v474
      %v476 = vpop.xlane.xlu0 %475
      %v477 = vsel %vm129, %v439, 0.0
      %478 = vadd.xlane.f32.xlu0 %v477
      %v479 = vpop.xlane.xlu0 %478
      %v480 = vsel %vm129, %v441, 0.0
      %481 = vadd.xlane.f32.xlu0 %v480
      %v482 = vpop.xlane.xlu0 %481
      %v483 = vsel %vm129, %v443, 0.0
      %484 = vadd.xlane.f32.xlu0 %v483
      %v485 = vpop.xlane.xlu0 %484
      %v486 = vsel %vm129, %v445, 0.0
      %487 = vadd.xlane.f32.xlu0 %v486
      %v488 = vpop.xlane.xlu0 %487
      %v489 = vsel %vm129, %v447, 0.0
      %490 = vadd.xlane.f32.xlu0 %v489
      %v491 = vpop.xlane.xlu0 %490
      %v492 = vsel %vm129, %v449, 0.0
      %493 = vadd.xlane.f32.xlu0 %v492
      %v494 = vpop.xlane.xlu0 %493
      %v495 = vsel %vm129, %v451, 0.0
      %496 = vadd.xlane.f32.xlu0 %v495
      %v497 = vpop.xlane.xlu0 %496
      %v498 = vsel %vm129, %v453, 0.0
      %499 = vadd.xlane.f32.xlu0 %v498
      %v500 = vpop.xlane.xlu0 %499
      %v501 = vsel %vm163, %v455, 0.0
      %502 = vadd.xlane.f32.xlu0 %v501
      %v503 = vpop.xlane.xlu0 %502
      %v504 = vmul.f32 %v470, %v167
      %v505 = vmul.f32 %v473, %v167
      %v506 = vmul.f32 %v476, %v167
      %v507 = vmul.f32 %v479, %v167
      %v508 = vmul.f32 %v482, %v167
      %v509 = vmul.f32 %v485, %v167
      %v510 = vmul.f32 %v488, %v167
      %v511 = vmul.f32 %v491, %v167
      %v512 = vmul.f32 %v494, %v167
      %v513 = vmul.f32 %v497, %v167
      %v514 = vmul.f32 %v500, %v167
      %v515 = vmul.f32 %v503, %v167
      %v516 = vadd.f32 %v504, 1e-05
      %v517 = vadd.f32 %v505, 1e-05
      %v518 = vadd.f32 %v506, 1e-05
      %v519 = vadd.f32 %v507, 1e-05
      %v520 = vadd.f32 %v508, 1e-05
      %v521 = vadd.f32 %v509, 1e-05
      %v522 = vadd.f32 %v510, 1e-05
      %v523 = vadd.f32 %v511, 1e-05
      %v524 = vadd.f32 %v512, 1e-05
      %v525 = vadd.f32 %v513, 1e-05
      %v526 = vadd.f32 %v514, 1e-05
      %v527 = vadd.f32 %v515, 1e-05
      %v528 = vrsqrt.pop %v516
      %v529 = vrsqrt.pop %v517
      %v530 = vrsqrt.pop %v518
      %v531 = vrsqrt.pop %v519
      %v532 = vrsqrt.pop %v520
      %v533 = vrsqrt.pop %v521
      %v534 = vrsqrt.pop %v522
      %v535 = vrsqrt.pop %v523
      %v536 = vrsqrt.pop %v524
      %v537 = vrsqrt.pop %v525
      %v538 = vrsqrt.pop %v526
      %v539 = vrsqrt.pop %v527
      %v540 = vmul.f32 %v396, %v528
      %v541 = vmul.f32 %v397, %v529
      %v542 = vmul.f32 %v398, %v530
      %v543 = vmul.f32 %v399, %v531
      %v544 = vmul.f32 %v400, %v532
      %v545 = vmul.f32 %v401, %v533
      %v546 = vmul.f32 %v402, %v534
      %v547 = vmul.f32 %v403, %v535
      %v548 = vmul.f32 %v404, %v536
      %v549 = vmul.f32 %v405, %v537
      %v550 = vmul.f32 %v406, %v538
      %v551 = vmul.f32 %v407, %v539
      %564 = vrot.lane.b32.xlu0 %v540, 120
      %v565 = vpop.permute.xlu0 %564
      %566 = vrot.lane.b32.xlu0 %v541, 120
      %v567 = vpop.permute.xlu0 %566
      %568 = vrot.lane.b32.xlu0 %v542, 120
      %v569 = vpop.permute.xlu0 %568
      %570 = vrot.lane.b32.xlu0 %v543, 120
      %v571 = vpop.permute.xlu0 %570
      %572 = vrot.lane.b32.xlu0 %v544, 120
      %v573 = vpop.permute.xlu0 %572
      %574 = vrot.lane.b32.xlu0 %v545, 120
      %v575 = vpop.permute.xlu0 %574
      %576 = vrot.lane.b32.xlu0 %v546, 120
      %v577 = vpop.permute.xlu0 %576
      %578 = vrot.lane.b32.xlu0 %v547, 120
      %v579 = vpop.permute.xlu0 %578
      %580 = vrot.lane.b32.xlu0 %v548, 120
      %v581 = vpop.permute.xlu0 %580
      %582 = vrot.lane.b32.xlu0 %v549, 120
      %v583 = vpop.permute.xlu0 %582
      %584 = vrot.lane.b32.xlu0 %v550, 120
      %v585 = vpop.permute.xlu0 %584
      %586 = vrot.lane.b32.xlu0 %v551, 120
      %v587 = vpop.permute.xlu0 %586
      %s600 = scalar_lea.vmem %s116, 96
      %601 = vst.msk [vmem:[%s600] sm:$0xff] %vm129, %v565
      %602 = vst.msk [vmem:[%s600 + $0x8] sm:$0xff] %vm129, %v567
      %603 = vst.msk [vmem:[%s600 + $0x10] sm:$0xff] %vm129, %v569
      %604 = vst.msk [vmem:[%s600 + $0x18] sm:$0xff] %vm129, %v571
      %605 = vst.msk [vmem:[%s600 + $0x20] sm:$0xff] %vm129, %v573
      %606 = vst.msk [vmem:[%s600 + $0x28] sm:$0xff] %vm129, %v575
      %607 = vst.msk [vmem:[%s600 + $0x30] sm:$0xff] %vm129, %v577
      %608 = vst.msk [vmem:[%s600 + $0x38] sm:$0xff] %vm129, %v579
      %609 = vst.msk [vmem:[%s600 + $0x40] sm:$0xff] %vm129, %v581
      %610 = vst.msk [vmem:[%s600 + $0x48] sm:$0xff] %vm129, %v583
      %611 = vst.msk [vmem:[%s600 + $0x50] sm:$0xff] %vm129, %v585
      %612 = vst.msk [vmem:[%s600 + $0x58] sm:$0x3] %vm163, %v587
      %p613 = scmp.lt.s32.totalorder %s12, 1
      %s614 = scalar_select %p613, %s12, 1
      %s615 = smul.addr %s614, 24
      %s616 = smul.addr %s615, 8
      %s617 = scalar_lea.vmem %s1, %s616
      // Predicated region
      $region25: #{conv_k_region_forward.2} parent=23 // pred_check
        %p618 = pneg %p56
      $region26: #{conv_k_region_forward.2} parent=23 // pred_check_branch
        %620 = sbr.rel (%p618) target = $region28
      $region27: #{conv_k_region_forward.2} parent=23 // pred_region
        _
      $region28: #{conv_k_region_forward.2} parent=23 // pred_fallthru
        _
    $region24: #{conv_k_region_forward.2} parent=5 // pred_fallthru
      _
    %p621 = scmp.le.s32.totalorder 2, %s7
    // Predicated region
    $region29: #{conv_k_region_forward.2} parent=5 // pred_check
      %p622 = pneg %p621
    $region30: #{conv_k_region_forward.2} parent=5 // pred_check_branch
      %624 = sbr.rel (%p622) target = $region32
    $region31: #{conv_k_region_forward.2} parent=5 // pred_region
      %s625 = ssub.s32 %s7, 2
      // Predicated region
      $region33: #{conv_k_region_forward.2} parent=31 // pred_check
        %p626 = pneg %p62
      $region34: #{conv_k_region_forward.2} parent=31 // pred_check_branch
        %628 = sbr.rel (%p626) target = $region36
      $region35: #{conv_k_region_forward.2} parent=31 // pred_region
        %p629 = scmp.lt.s32.totalorder %s13, 1
        %s630 = scalar_select %p629, %s13, 1
        %s631 = smul.addr %s630, 24
        %s632 = smul.addr %s631, 8
        %s633 = scalar_lea.vmem %s1, %s632
      $region36: #{conv_k_region_forward.2} parent=31 // pred_fallthru
        _
    $region32: #{conv_k_region_forward.2} parent=5 // pred_fallthru
      _
  $region6: #{conv_k_region_forward.2} parent=0 // loop_footer
    %s11 = sadd.s32 1, %s7
  $region7: #{conv_k_region_forward.2} parent=0 // loop_footer_branch
    %6 = sbr.rel target = $region3
  $region8: #{conv_k_region_forward.2} parent=0 // loop_exit
    _

// kernel: conv_k_region_forward.3
$region0: #{conv_k_region_forward.3}
  #allocation0 [shape = 'u32[]', space=smem, size = 0x4, offset = 0x4, fixed_abs, tag = 'smem constant byte address 0x4 - core index']
  #allocation1 [shape = 'u32[144,128]{1,0:T(1,128)}', space=vmem, size = 0x12000, scoped, tag = 'internal scratch']
  %s0 = inlined_call_operand.vmem [shape: f32[2,2,720], index: 0, kind: input, shape index: {}]
  %s1 = inlined_call_operand.vmem [shape: f32[32,8], index: 1, kind: input, shape index: {}]
  %s2 = inlined_call_operand.vmem [shape: f32[32,1], index: 2, kind: input, shape index: {}]
  %s3 = inlined_call_operand.vmem [shape: f32[32,1], index: 3, kind: input, shape index: {}]
  %s4 = inlined_call_operand.vmem [shape: f32[32,1], index: 4, kind: input, shape index: {}]
  %s5 = inlined_call_operand.vmem [shape: f32[32,512], index: 5, kind: input, shape index: {}]
  %s6 = inlined_call_operand.vmem [shape: f32[32,1], index: 6, kind: input, shape index: {}]
  %s7 = inlined_call_operand.vmem [shape: f32[32,1], index: 7, kind: input, shape index: {}]
  %s8 = inlined_call_operand.vmem [shape: f32[32,1], index: 8, kind: input, shape index: {}]
  %s9 = inlined_call_operand.vmem [shape: f32[16,256], index: 9, kind: input, shape index: {}]
  %s10 = inlined_call_operand.vmem [shape: f32[16,1], index: 10, kind: input, shape index: {}]
  %s11 = inlined_call_operand.vmem [shape: f32[16,1], index: 11, kind: input, shape index: {}]
  %s12 = inlined_call_operand.vmem [shape: f32[16,1], index: 12, kind: input, shape index: {}]
  %s13 = inlined_call_operand.vmem [shape: f32[32,128], index: 13, kind: input, shape index: {}]
  %s14 = inlined_call_operand.vmem [shape: f32[32,1], index: 14, kind: input, shape index: {}]
  %s15 = inlined_call_operand.vmem [shape: f32[8,32], index: 15, kind: input, shape index: {}]
  %s16 = inlined_call_operand.vmem [shape: f32[8,1], index: 16, kind: input, shape index: {}]
  %s17 = inlined_call_operand.hbm [shape: f32[2,8,8], index: 17, kind: output, shape index: {}]
  %s18 = sld [smem:[#allocation0]]
  $region78: #{conv_k_region_forward.3} parent=0
    _
  %s20 = ssub.s32 1, %s18
  %s21 = scalar_select 0, %s20, %s18
  $region1: #{conv_k_region_forward.3} parent=0
    #allocation2 [shape = 'u8[8192]{0}', space=vmem, size = 0x2000, scoped, tag = 'output window, operand 0, single buffered']
    #allocation3 [shape = 's32[1]{0}', space=sflag, size = 0x4, scoped, tag = 'scoped memory for conv_k_region_forward.3']
    %22 = vsyncpa [#allocation3], 0
    // Predicated region
    $region2: #{conv_k_region_forward.3} parent=1 // pred_check
      _
    $region3: #{conv_k_region_forward.3} parent=1 // pred_check_branch
      %24 = sbr.rel (0) target = $region5
    $region4: #{conv_k_region_forward.3} parent=1 // pred_region
      _
    $region5: #{conv_k_region_forward.3} parent=1 // pred_fallthru
      _
    // Predicated region
    $region6: #{conv_k_region_forward.3} parent=1 // pred_check
      _
    $region7: #{conv_k_region_forward.3} parent=1 // pred_check_branch
      %26 = sbr.rel (0) target = $region9
    $region8: #{conv_k_region_forward.3} parent=1 // pred_region
      _
    $region9: #{conv_k_region_forward.3} parent=1 // pred_fallthru
      _
    // Predicated region
    $region10: #{conv_k_region_forward.3} parent=1 // pred_check
      _
    $region11: #{conv_k_region_forward.3} parent=1 // pred_check_branch
      %28 = sbr.rel (0) target = $region13
    $region12: #{conv_k_region_forward.3} parent=1 // pred_region
      _
    $region13: #{conv_k_region_forward.3} parent=1 // pred_fallthru
      _
    // Predicated region
    $region14: #{conv_k_region_forward.3} parent=1 // pred_check
      _
    $region15: #{conv_k_region_forward.3} parent=1 // pred_check_branch
      %30 = sbr.rel (0) target = $region17
    $region16: #{conv_k_region_forward.3} parent=1 // pred_region
      _
    $region17: #{conv_k_region_forward.3} parent=1 // pred_fallthru
      _
    // Predicated region
    $region18: #{conv_k_region_forward.3} parent=1 // pred_check
      _
    $region19: #{conv_k_region_forward.3} parent=1 // pred_check_branch
      %32 = sbr.rel (0) target = $region21
    $region20: #{conv_k_region_forward.3} parent=1 // pred_region
      _
    $region21: #{conv_k_region_forward.3} parent=1 // pred_fallthru
      _
    // Predicated region
    $region22: #{conv_k_region_forward.3} parent=1 // pred_check
      _
    $region23: #{conv_k_region_forward.3} parent=1 // pred_check_branch
      %34 = sbr.rel (0) target = $region25
    $region24: #{conv_k_region_forward.3} parent=1 // pred_region
      _
    $region25: #{conv_k_region_forward.3} parent=1 // pred_fallthru
      _
    // Predicated region
    $region26: #{conv_k_region_forward.3} parent=1 // pred_check
      _
    $region27: #{conv_k_region_forward.3} parent=1 // pred_check_branch
      %36 = sbr.rel (0) target = $region29
    $region28: #{conv_k_region_forward.3} parent=1 // pred_region
      _
    $region29: #{conv_k_region_forward.3} parent=1 // pred_fallthru
      _
    // Predicated region
    $region30: #{conv_k_region_forward.3} parent=1 // pred_check
      _
    $region31: #{conv_k_region_forward.3} parent=1 // pred_check_branch
      %38 = sbr.rel (0) target = $region33
    $region32: #{conv_k_region_forward.3} parent=1 // pred_region
      _
    $region33: #{conv_k_region_forward.3} parent=1 // pred_fallthru
      _
    // Predicated region
    $region34: #{conv_k_region_forward.3} parent=1 // pred_check
      _
    $region35: #{conv_k_region_forward.3} parent=1 // pred_check_branch
      %40 = sbr.rel (0) target = $region37
    $region36: #{conv_k_region_forward.3} parent=1 // pred_region
      _
    $region37: #{conv_k_region_forward.3} parent=1 // pred_fallthru
      _
    // Predicated region
    $region38: #{conv_k_region_forward.3} parent=1 // pred_check
      _
    $region39: #{conv_k_region_forward.3} parent=1 // pred_check_branch
      %42 = sbr.rel (0) target = $region41
    $region40: #{conv_k_region_forward.3} parent=1 // pred_region
      _
    $region41: #{conv_k_region_forward.3} parent=1 // pred_fallthru
      _
    // Predicated region
    $region42: #{conv_k_region_forward.3} parent=1 // pred_check
      _
    $region43: #{conv_k_region_forward.3} parent=1 // pred_check_branch
      %44 = sbr.rel (0) target = $region45
    $region44: #{conv_k_region_forward.3} parent=1 // pred_region
      _
    $region45: #{conv_k_region_forward.3} parent=1 // pred_fallthru
      _
    // Predicated region
    $region46: #{conv_k_region_forward.3} parent=1 // pred_check
      _
    $region47: #{conv_k_region_forward.3} parent=1 // pred_check_branch
      %46 = sbr.rel (0) target = $region49
    $region48: #{conv_k_region_forward.3} parent=1 // pred_region
      _
    $region49: #{conv_k_region_forward.3} parent=1 // pred_fallthru
      _
    // Predicated region
    $region50: #{conv_k_region_forward.3} parent=1 // pred_check
      _
    $region51: #{conv_k_region_forward.3} parent=1 // pred_check_branch
      %48 = sbr.rel (0) target = $region53
    $region52: #{conv_k_region_forward.3} parent=1 // pred_region
      _
    $region53: #{conv_k_region_forward.3} parent=1 // pred_fallthru
      _
    // Predicated region
    $region54: #{conv_k_region_forward.3} parent=1 // pred_check
      _
    $region55: #{conv_k_region_forward.3} parent=1 // pred_check_branch
      %50 = sbr.rel (0) target = $region57
    $region56: #{conv_k_region_forward.3} parent=1 // pred_region
      _
    $region57: #{conv_k_region_forward.3} parent=1 // pred_fallthru
      _
    // Predicated region
    $region58: #{conv_k_region_forward.3} parent=1 // pred_check
      _
    $region59: #{conv_k_region_forward.3} parent=1 // pred_check_branch
      %52 = sbr.rel (0) target = $region61
    $region60: #{conv_k_region_forward.3} parent=1 // pred_region
      _
    $region61: #{conv_k_region_forward.3} parent=1 // pred_fallthru
      _
    // Predicated region
    $region62: #{conv_k_region_forward.3} parent=1 // pred_check
      _
    $region63: #{conv_k_region_forward.3} parent=1 // pred_check_branch
      %54 = sbr.rel (0) target = $region65
    $region64: #{conv_k_region_forward.3} parent=1 // pred_region
      _
    $region65: #{conv_k_region_forward.3} parent=1 // pred_fallthru
      _
    // Predicated region
    $region66: #{conv_k_region_forward.3} parent=1 // pred_check
      _
    $region67: #{conv_k_region_forward.3} parent=1 // pred_check_branch
      %56 = sbr.rel (0) target = $region69
    $region68: #{conv_k_region_forward.3} parent=1 // pred_region
      _
    $region69: #{conv_k_region_forward.3} parent=1 // pred_fallthru
      _
    %v58 = vld [vmem:[%s1] sm:$0xff]
    %v59 = vld [vmem:[%s1 + $0x8] sm:$0xff]
    %v60 = vld [vmem:[%s1 + $0x10] sm:$0xff]
    %v61 = vld [vmem:[%s1 + $0x18] sm:$0xff]
    %v62 = vpack.c.bf16 %v59, %v58
    %v63 = vpack.c.bf16 %v61, %v60
    %v64 = vld [vmem:[%s0] sm:$0xff]
    %v65 = vld [vmem:[%s0 + $0x8] sm:$0xf]
    %v68 = vlaneseq
    %v69 = vshrl.u32 %v68, 7
    %v70 = vsub.s32 0, %v69
    %v71 = vrot.slane %v64, %v70
    %v72 = vlaneseq
    %v73 = vshrl.u32 %v72, 7
    %v74 = vsub.s32 2, %v73
    %v75 = vrot.slane %v64, %v74
    %v76 = vlaneseq
    %v77 = vshrl.u32 %v76, 7
    %v78 = vsub.s32 4, %v77
    %v79 = vrot.slane %v64, %v78
    %v80 = vlaneseq
    %v81 = vshrl.u32 %v80, 7
    %v82 = vsub.s32 6, %v81
    %v83 = vrot.slane %v64, %v82
    %v84 = vlaneseq
    %v85 = vshrl.u32 %v84, 7
    %v86 = vsub.s32 0, %v85
    %v87 = vrot.slane %v65, %v86
    %v88 = vlaneseq
    %v89 = vshrl.u32 %v88, 7
    %v90 = vsub.s32 2, %v89
    %v91 = vrot.slane %v65, %v90
    %v98 = vlaneseq
    %v99 = vshrl.u32 %v98, 7
    %v100 = vsub.s32 1, %v99
    %v101 = vrot.slane %v64, %v100
    %v102 = vlaneseq
    %v103 = vshrl.u32 %v102, 7
    %v104 = vsub.s32 3, %v103
    %v105 = vrot.slane %v64, %v104
    %v106 = vlaneseq
    %v107 = vshrl.u32 %v106, 7
    %v108 = vsub.s32 5, %v107
    %v109 = vrot.slane %v64, %v108
    %v110 = vlaneseq
    %v111 = vshrl.u32 %v110, 7
    %v112 = vsub.s32 7, %v111
    %v113 = vrot.slane %v64, %v112
    %v114 = vlaneseq
    %v115 = vshrl.u32 %v114, 7
    %v116 = vsub.s32 1, %v115
    %v117 = vrot.slane %v65, %v116
    %v118 = vlaneseq
    %v119 = vshrl.u32 %v118, 7
    %v120 = vsub.s32 3, %v119
    %v121 = vrot.slane %v65, %v120
    %128 = vrot.lane.b32.xlu0 %v71, 120
    %v129 = vpop.permute.xlu0 %128
    %130 = vrot.lane.b32.xlu0 %v75, 120
    %v131 = vpop.permute.xlu0 %130
    %132 = vrot.lane.b32.xlu0 %v79, 120
    %v133 = vpop.permute.xlu0 %132
    %134 = vrot.lane.b32.xlu0 %v83, 120
    %v135 = vpop.permute.xlu0 %134
    %136 = vrot.lane.b32.xlu0 %v87, 120
    %v137 = vpop.permute.xlu0 %136
    %138 = vrot.lane.b32.xlu0 %v91, 120
    %v139 = vpop.permute.xlu0 %138
    %vm140 = vcmask 982016
    %v141 = vsel %vm140, %v129, %v131
    %v142 = vsel %vm140, %v131, %v133
    %v143 = vsel %vm140, %v133, %v135
    %v144 = vsel %vm140, %v135, %v137
    %v145 = vsel %vm140, %v137, %v139
    %152 = vrot.lane.b32.xlu0 %v101, 120
    %v153 = vpop.permute.xlu0 %152
    %154 = vrot.lane.b32.xlu0 %v105, 120
    %v155 = vpop.permute.xlu0 %154
    %156 = vrot.lane.b32.xlu0 %v109, 120
    %v157 = vpop.permute.xlu0 %156
    %158 = vrot.lane.b32.xlu0 %v113, 120
    %v159 = vpop.permute.xlu0 %158
    %160 = vrot.lane.b32.xlu0 %v117, 120
    %v161 = vpop.permute.xlu0 %160
    %162 = vrot.lane.b32.xlu0 %v121, 120
    %v163 = vpop.permute.xlu0 %162
    %v164 = vsel %vm140, %v153, %v155
    %v165 = vsel %vm140, %v155, %v157
    %v166 = vsel %vm140, %v157, %v159
    %v167 = vsel %vm140, %v159, %v161
    %v168 = vsel %vm140, %v161, %v163
    %175 = vrot.lane.b32.xlu0 %v71, 112
    %v176 = vpop.permute.xlu0 %175
    %177 = vrot.lane.b32.xlu0 %v75, 112
    %v178 = vpop.permute.xlu0 %177
    %179 = vrot.lane.b32.xlu0 %v79, 112
    %v180 = vpop.permute.xlu0 %179
    %181 = vrot.lane.b32.xlu0 %v83, 112
    %v182 = vpop.permute.xlu0 %181
    %183 = vrot.lane.b32.xlu0 %v87, 112
    %v184 = vpop.permute.xlu0 %183
    %185 = vrot.lane.b32.xlu0 %v91, 112
    %v186 = vpop.permute.xlu0 %185
    %vm187 = vcmask 916480
    %v188 = vsel %vm187, %v176, %v178
    %v189 = vsel %vm187, %v178, %v180
    %v190 = vsel %vm187, %v180, %v182
    %v191 = vsel %vm187, %v182, %v184
    %v192 = vsel %vm187, %v184, %v186
    %199 = vrot.lane.b32.xlu0 %v101, 112
    %v200 = vpop.permute.xlu0 %199
    %201 = vrot.lane.b32.xlu0 %v105, 112
    %v202 = vpop.permute.xlu0 %201
    %203 = vrot.lane.b32.xlu0 %v109, 112
    %v204 = vpop.permute.xlu0 %203
    %205 = vrot.lane.b32.xlu0 %v113, 112
    %v206 = vpop.permute.xlu0 %205
    %207 = vrot.lane.b32.xlu0 %v117, 112
    %v208 = vpop.permute.xlu0 %207
    %209 = vrot.lane.b32.xlu0 %v121, 112
    %v210 = vpop.permute.xlu0 %209
    %v211 = vsel %vm187, %v200, %v202
    %v212 = vsel %vm187, %v202, %v204
    %v213 = vsel %vm187, %v204, %v206
    %v214 = vsel %vm187, %v206, %v208
    %v215 = vsel %vm187, %v208, %v210
    %222 = vrot.lane.b32.xlu0 %v71, 104
    %v223 = vpop.permute.xlu0 %222
    %224 = vrot.lane.b32.xlu0 %v75, 104
    %v225 = vpop.permute.xlu0 %224
    %226 = vrot.lane.b32.xlu0 %v79, 104
    %v227 = vpop.permute.xlu0 %226
    %228 = vrot.lane.b32.xlu0 %v83, 104
    %v229 = vpop.permute.xlu0 %228
    %230 = vrot.lane.b32.xlu0 %v87, 104
    %v231 = vpop.permute.xlu0 %230
    %232 = vrot.lane.b32.xlu0 %v91, 104
    %v233 = vpop.permute.xlu0 %232
    %vm234 = vcmask 850944
    %v235 = vsel %vm234, %v223, %v225
    %v236 = vsel %vm234, %v225, %v227
    %v237 = vsel %vm234, %v227, %v229
    %v238 = vsel %vm234, %v229, %v231
    %v239 = vsel %vm234, %v231, %v233
    %246 = vrot.lane.b32.xlu0 %v101, 104
    %v247 = vpop.permute.xlu0 %246
    %248 = vrot.lane.b32.xlu0 %v105, 104
    %v249 = vpop.permute.xlu0 %248
    %250 = vrot.lane.b32.xlu0 %v109, 104
    %v251 = vpop.permute.xlu0 %250
    %252 = vrot.lane.b32.xlu0 %v113, 104
    %v253 = vpop.permute.xlu0 %252
    %254 = vrot.lane.b32.xlu0 %v117, 104
    %v255 = vpop.permute.xlu0 %254
    %256 = vrot.lane.b32.xlu0 %v121, 104
    %v257 = vpop.permute.xlu0 %256
    %v258 = vsel %vm234, %v247, %v249
    %v259 = vsel %vm234, %v249, %v251
    %v260 = vsel %vm234, %v251, %v253
    %v261 = vsel %vm234, %v253, %v255
    %v262 = vsel %vm234, %v255, %v257
    %vm269 = vcmask 1040384
    %v270 = vsel %vm269, %v71, %v101
    %v271 = vsel %vm269, %v75, %v105
    %v272 = vsel %vm269, %v79, %v109
    %v273 = vsel %vm269, %v83, %v113
    %v274 = vsel %vm269, %v87, %v117
    %v275 = vsel %vm269, %v91, %v121
    %vm276 = vcmask 1041408
    %v277 = vsel %vm276, %v270, %v141
    %v278 = vsel %vm276, %v271, %v142
    %v279 = vsel %vm276, %v272, %v143
    %v280 = vsel %vm276, %v273, %v144
    %v281 = vsel %vm276, %v274, %v145
    %v282 = vsel %vm276, %v275, %v139
    %vm283 = vcmask 1042432
    %v284 = vsel %vm283, %v277, %v164
    %v285 = vsel %vm283, %v278, %v165
    %v286 = vsel %vm283, %v279, %v166
    %v287 = vsel %vm283, %v280, %v167
    %v288 = vsel %vm283, %v281, %v168
    %v289 = vsel %vm283, %v282, %v163
    %vm290 = vcmask 1043456
    %v291 = vsel %vm290, %v284, %v188
    %v292 = vsel %vm290, %v285, %v189
    %v293 = vsel %vm290, %v286, %v190
    %v294 = vsel %vm290, %v287, %v191
    %v295 = vsel %vm290, %v288, %v192
    %v296 = vsel %vm290, %v289, %v186
    %vm297 = vcmask 1044480
    %v298 = vsel %vm297, %v291, %v211
    %v299 = vsel %vm297, %v292, %v212
    %v300 = vsel %vm297, %v293, %v213
    %v301 = vsel %vm297, %v294, %v214
    %v302 = vsel %vm297, %v295, %v215
    %v303 = vsel %vm297, %v296, %v210
    %vm304 = vcmask 1045504
    %v305 = vsel %vm304, %v298, %v235
    %v306 = vsel %vm304, %v299, %v236
    %v307 = vsel %vm304, %v300, %v237
    %v308 = vsel %vm304, %v301, %v238
    %v309 = vsel %vm304, %v302, %v239
    %v310 = vsel %vm304, %v303, %v233
    %vm311 = vcmask 1046528
    %v312 = vsel %vm311, %v305, %v258
    %v313 = vsel %vm311, %v306, %v259
    %v314 = vsel %vm311, %v307, %v260
    %v315 = vsel %vm311, %v308, %v261
    %v316 = vsel %vm311, %v309, %v262
    %v317 = vsel %vm311, %v310, %v257
    %v318 = vpack.c.bf16 %v312, %v312
    %v319 = vpack.c.bf16 %v313, %v313
    %v320 = vpack.c.bf16 %v314, %v314
    %v321 = vpack.c.bf16 %v315, %v315
    %v322 = vpack.c.bf16 %v316, %v316
    %v323 = vpack.c.bf16 %v317, %v317
    %v324 = vld [vmem:[%s2] sm:$0xff]
    %v325 = vld [vmem:[%s2 + $0x8] sm:$0xff]
    %v326 = vld [vmem:[%s2 + $0x10] sm:$0xff]
    %v327 = vld [vmem:[%s2 + $0x18] sm:$0xff]
    %329 = vset.pattern.permute.xlu0 0
    %330 = vperm.xlu0 %329, %v324
    %v331 = vpop.permute.xlu0 %330
    %334 = vset.pattern.permute.xlu0 0
    %335 = vperm.xlu0 %334, %v325
    %v336 = vpop.permute.xlu0 %335
    %339 = vset.pattern.permute.xlu0 0
    %340 = vperm.xlu0 %339, %v326
    %v341 = vpop.permute.xlu0 %340
    %344 = vset.pattern.permute.xlu0 0
    %345 = vperm.xlu0 %344, %v327
    %v346 = vpop.permute.xlu0 %345
    %vm348 = vcmask 64512
    %v350 = vsel %vm348, %v62, 0
    %v353 = vsel %vm348, %v63, 0
    %v356 = vsel %vm290, %v318, 0
    %v359 = vsel %vm290, %v319, 0
    %v362 = vsel %vm290, %v320, 0
    %v365 = vsel %vm290, %v321, 0
    %v368 = vsel %vm290, %v322, 0
    %v371 = vsel %vm290, %v323, 0
    %373 = vmatprep.subr.bf16.mxu0 %v359
    %374 = vmatpush1.bf16.msra.mxu0 %v356
    %375 = vmatprep.subr.bf16.mxu0 0
    %376 = vmatpush1.bf16.msra.mxu0 0
    %377 = vmatprep.subr.bf16.mxu0 0
    %378 = vmatpush1.bf16.msra.mxu0 0
    %379 = vmatprep.subr.bf16.mxu0 0
    %380 = vmatpush1.bf16.msra.mxu0 0
    %381 = vmatprep.subr.bf16.mxu0 0
    %382 = vmatpush1.bf16.msra.mxu0 0
    %383 = vmatprep.subr.bf16.mxu0 0
    %384 = vmatpush1.bf16.msra.mxu0 0
    %385 = vmatprep.subr.bf16.mxu0 0
    %386 = vmatpush1.bf16.msra.mxu0 0
    %387 = vmatprep.subr.bf16.mxu0 0
    %388 = vmatpush1.bf16.msra.mxu0 0
    %389 = vmatprep.subr.bf16.mxu0 0
    %390 = vmatpush1.bf16.msra.mxu0 0
    %391 = vmatprep.subr.bf16.mxu0 0
    %392 = vmatpush1.bf16.msra.mxu0 0
    %393 = vmatprep.subr.bf16.mxu0 0
    %394 = vmatpush1.bf16.msra.mxu0 0
    %395 = vmatprep.subr.bf16.mxu0 0
    %396 = vmatpush1.bf16.msra.mxu0 0
    %397 = vmatprep.subr.bf16.mxu0 0
    %398 = vmatpush1.bf16.msra.mxu0 0
    %399 = vmatprep.subr.bf16.mxu0 0
    %400 = vmatpush1.bf16.msra.mxu0 0
    %401 = vmatprep.subr.bf16.mxu0 0
    %402 = vmatpush1.bf16.msra.mxu0 0
    %403 = vmatprep.subr.bf16.mxu0 0
    %404 = vmatpush1.bf16.msra.mxu0 0
    %405 = vmatprep.mubr.bf16.mxu0 0
    %406 = vmatmul.mubr.bf16.gmra.mrb[0].mxu0 %v350
    %v407 = vpop.f32.mrb[0].mxu0
    %v408 = vadd.f32 %v331, %v407
    %v409 = vpop.f32.mrb[0].mxu0
    %v410 = vadd.f32 %v331, %v409
    %v411 = vpop.f32.mrb[0].mxu0
    %v412 = vadd.f32 %v336, %v411
    %v413 = vpop.f32.mrb[0].mxu0
    %v414 = vadd.f32 %v336, %v413
    %415 = vmatprep.mubr.bf16.mxu0 0
    %416 = vmatmul.mubr.bf16.gmra.mrb[0].mxu0 %v353
    %v417 = vpop.f32.mrb[0].mxu0
    %v418 = vadd.f32 %v341, %v417
    %v419 = vpop.f32.mrb[0].mxu0
    %v420 = vadd.f32 %v341, %v419
    %v421 = vpop.f32.mrb[0].mxu0
    %v422 = vadd.f32 %v346, %v421
    %v423 = vpop.f32.mrb[0].mxu0
    %v424 = vadd.f32 %v346, %v423
    %425 = vdwg.mxu0
    %426 = vmatprep.subr.bf16.mxu0 %v365
    %427 = vmatpush1.bf16.msra.mxu0 %v362
    %428 = vmatprep.subr.bf16.mxu0 0
    %429 = vmatpush1.bf16.msra.mxu0 0
    %430 = vmatprep.subr.bf16.mxu0 0
    %431 = vmatpush1.bf16.msra.mxu0 0
    %432 = vmatprep.subr.bf16.mxu0 0
    %433 = vmatpush1.bf16.msra.mxu0 0
    %434 = vmatprep.subr.bf16.mxu0 0
    %435 = vmatpush1.bf16.msra.mxu0 0
    %436 = vmatprep.subr.bf16.mxu0 0
    %437 = vmatpush1.bf16.msra.mxu0 0
    %438 = vmatprep.subr.bf16.mxu0 0
    %439 = vmatpush1.bf16.msra.mxu0 0
    %440 = vmatprep.subr.bf16.mxu0 0
    %441 = vmatpush1.bf16.msra.mxu0 0
    %442 = vmatprep.subr.bf16.mxu0 0
    %443 = vmatpush1.bf16.msra.mxu0 0
    %444 = vmatprep.subr.bf16.mxu0 0
    %445 = vmatpush1.bf16.msra.mxu0 0
    %446 = vmatprep.subr.bf16.mxu0 0
    %447 = vmatpush1.bf16.msra.mxu0 0
    %448 = vmatprep.subr.bf16.mxu0 0
    %449 = vmatpush1.bf16.msra.mxu0 0
    %450 = vmatprep.subr.bf16.mxu0 0
    %451 = vmatpush1.bf16.msra.mxu0 0
    %452 = vmatprep.subr.bf16.mxu0 0
    %453 = vmatpush1.bf16.msra.mxu0 0
    %454 = vmatprep.subr.bf16.mxu0 0
    %455 = vmatpush1.bf16.msra.mxu0 0
    %456 = vmatprep.subr.bf16.mxu0 0
    %457 = vmatpush1.bf16.msra.mxu0 0
    %458 = vmatprep.mubr.bf16.mxu0 0
    %459 = vmatmul.mubr.bf16.gmra.mrb[0].mxu0 %v350
    %v460 = vpop.f32.mrb[0].mxu0
    %v461 = vadd.f32 %v331, %v460
    %v462 = vpop.f32.mrb[0].mxu0
    %v463 = vadd.f32 %v331, %v462
    %v464 = vpop.f32.mrb[0].mxu0
    %v465 = vadd.f32 %v336, %v464
    %v466 = vpop.f32.mrb[0].mxu0
    %v467 = vadd.f32 %v336, %v466
    %468 = vmatprep.mubr.bf16.mxu0 0
    %469 = vmatmul.mubr.bf16.gmra.mrb[0].mxu0 %v353
    %v470 = vpop.f32.mrb[0].mxu0
    %v471 = vadd.f32 %v341, %v470
    %v472 = vpop.f32.mrb[0].mxu0
    %v473 = vadd.f32 %v341, %v472
    %v474 = vpop.f32.mrb[0].mxu0
    %v475 = vadd.f32 %v346, %v474
    %v476 = vpop.f32.mrb[0].mxu0
    %v477 = vadd.f32 %v346, %v476
    %478 = vdwg.mxu0
    %479 = vmatprep.subr.bf16.mxu0 %v371
    %480 = vmatpush1.bf16.msra.mxu0 %v368
    %481 = vmatprep.subr.bf16.mxu0 0
    %482 = vmatpush1.bf16.msra.mxu0 0
    %483 = vmatprep.subr.bf16.mxu0 0
    %484 = vmatpush1.bf16.msra.mxu0 0
    %485 = vmatprep.subr.bf16.mxu0 0
    %486 = vmatpush1.bf16.msra.mxu0 0
    %487 = vmatprep.subr.bf16.mxu0 0
    %488 = vmatpush1.bf16.msra.mxu0 0
    %489 = vmatprep.subr.bf16.mxu0 0
    %490 = vmatpush1.bf16.msra.mxu0 0
    %491 = vmatprep.subr.bf16.mxu0 0
    %492 = vmatpush1.bf16.msra.mxu0 0
    %493 = vmatprep.subr.bf16.mxu0 0
    %494 = vmatpush1.bf16.msra.mxu0 0
    %495 = vmatprep.subr.bf16.mxu0 0
    %496 = vmatpush1.bf16.msra.mxu0 0
    %497 = vmatprep.subr.bf16.mxu0 0
    %498 = vmatpush1.bf16.msra.mxu0 0
    %499 = vmatprep.subr.bf16.mxu0 0
    %500 = vmatpush1.bf16.msra.mxu0 0
    %501 = vmatprep.subr.bf16.mxu0 0
    %502 = vmatpush1.bf16.msra.mxu0 0
    %503 = vmatprep.subr.bf16.mxu0 0
    %504 = vmatpush1.bf16.msra.mxu0 0
    %505 = vmatprep.subr.bf16.mxu0 0
    %506 = vmatpush1.bf16.msra.mxu0 0
    %507 = vmatprep.subr.bf16.mxu0 0
    %508 = vmatpush1.bf16.msra.mxu0 0
    %509 = vmatprep.subr.bf16.mxu0 0
    %510 = vmatpush1.bf16.msra.mxu0 0
    %511 = vmatprep.mubr.bf16.mxu0 0
    %512 = vmatmul.mubr.bf16.gmra.mrb[0].mxu0 %v350
    %v513 = vpop.f32.mrb[0].mxu0
    %v514 = vadd.f32 %v331, %v513
    %v515 = vpop.f32.mrb[0].mxu0
    %v516 = vadd.f32 %v331, %v515
    %v517 = vpop.f32.mrb[0].mxu0
    %v518 = vadd.f32 %v336, %v517
    %v519 = vpop.f32.mrb[0].mxu0
    %v520 = vadd.f32 %v336, %v519
    %521 = vmatprep.mubr.bf16.mxu0 0
    %522 = vmatmul.mubr.bf16.gmra.mrb[0].mxu0 %v353
    %v523 = vpop.f32.mrb[0].mxu0
    %v524 = vadd.f32 %v341, %v523
    %v525 = vpop.f32.mrb[0].mxu0
    %v526 = vadd.f32 %v341, %v525
    %v527 = vpop.f32.mrb[0].mxu0
    %v528 = vadd.f32 %v346, %v527
    %v529 = vpop.f32.mrb[0].mxu0
    %v530 = vadd.f32 %v346, %v529
    %531 = vdwg.mxu0
    %s532 = scalar_lea.vmem %s0, 12
    %v533 = vld [vmem:[%s532] sm:$0xff]
    %v534 = vld [vmem:[%s532 + $0x8] sm:$0xf]
    %v537 = vlaneseq
    %v538 = vshrl.u32 %v537, 7
    %v539 = vsub.s32 0, %v538
    %v540 = vrot.slane %v533, %v539
    %v541 = vlaneseq
    %v542 = vshrl.u32 %v541, 7
    %v543 = vsub.s32 2, %v542
    %v544 = vrot.slane %v533, %v543
    %v545 = vlaneseq
    %v546 = vshrl.u32 %v545, 7
    %v547 = vsub.s32 4, %v546
    %v548 = vrot.slane %v533, %v547
    %v549 = vlaneseq
    %v550 = vshrl.u32 %v549, 7
    %v551 = vsub.s32 6, %v550
    %v552 = vrot.slane %v533, %v551
    %v553 = vlaneseq
    %v554 = vshrl.u32 %v553, 7
    %v555 = vsub.s32 0, %v554
    %v556 = vrot.slane %v534, %v555
    %v557 = vlaneseq
    %v558 = vshrl.u32 %v557, 7
    %v559 = vsub.s32 2, %v558
    %v560 = vrot.slane %v534, %v559
    %v567 = vlaneseq
    %v568 = vshrl.u32 %v567, 7
    %v569 = vsub.s32 1, %v568
    %v570 = vrot.slane %v533, %v569
    %v571 = vlaneseq
    %v572 = vshrl.u32 %v571, 7
    %v573 = vsub.s32 3, %v572
    %v574 = vrot.slane %v533, %v573
    %v575 = vlaneseq
    %v576 = vshrl.u32 %v575, 7
    %v577 = vsub.s32 5, %v576
    %v578 = vrot.slane %v533, %v577
    %v579 = vlaneseq
    %v580 = vshrl.u32 %v579, 7
    %v581 = vsub.s32 7, %v580
    %v582 = vrot.slane %v533, %v581
    %v583 = vlaneseq
    %v584 = vshrl.u32 %v583, 7
    %v585 = vsub.s32 1, %v584
    %v586 = vrot.slane %v534, %v585
    %v587 = vlaneseq
    %v588 = vshrl.u32 %v587, 7
    %v589 = vsub.s32 3, %v588
    %v590 = vrot.slane %v534, %v589
    %597 = vrot.lane.b32.xlu0 %v540, 120
    %v598 = vpop.permute.xlu0 %597
    %599 = vrot.lane.b32.xlu0 %v544, 120
    %v600 = vpop.permute.xlu0 %599
    %601 = vrot.lane.b32.xlu0 %v548, 120
    %v602 = vpop.permute.xlu0 %601
    %603 = vrot.lane.b32.xlu0 %v552, 120
    %v604 = vpop.permute.xlu0 %603
    %605 = vrot.lane.b32.xlu0 %v556, 120
    %v606 = vpop.permute.xlu0 %605
    %607 = vrot.lane.b32.xlu0 %v560, 120
    %v608 = vpop.permute.xlu0 %607
    %v609 = vsel %vm140, %v598, %v600
    %v610 = vsel %vm140, %v600, %v602
    %v611 = vsel %vm140, %v602, %v604
    %v612 = vsel %vm140, %v604, %v606
    %v613 = vsel %vm140, %v606, %v608
    %620 = vrot.lane.b32.xlu0 %v570, 120
    %v621 = vpop.permute.xlu0 %620
    %622 = vrot.lane.b32.xlu0 %v574, 120
    %v623 = vpop.permute.xlu0 %622
    %624 = vrot.lane.b32.xlu0 %v578, 120
    %v625 = vpop.permute.xlu0 %624
    %626 = vrot.lane.b32.xlu0 %v582, 120
    %v627 = vpop.permute.xlu0 %626
    %628 = vrot.lane.b32.xlu0 %v586, 120
    %v629 = vpop.permute.xlu0 %628
    %630 = vrot.lane.b32.xlu0 %v590, 120
    %v631 = vpop.permute.xlu0 %630
    %v632 = vsel %vm140, %v621, %v623
    %v633 = vsel %vm140, %v623, %v625
    %v634 = vsel %vm140, %v625, %v627
    %v635 = vsel %vm140, %v627, %v629
    %v636 = vsel %vm140, %v629, %v631
    %643 = vrot.lane.b32.xlu0 %v540, 112
    %v644 = vpop.permute.xlu0 %643
    %645 = vrot.lane.b32.xlu0 %v544, 112
    %v646 = vpop.permute.xlu0 %645
    %647 = vrot.lane.b32.xlu0 %v548, 112
    %v648 = vpop.permute.xlu0 %647
    %649 = vrot.lane.b32.xlu0 %v552, 112
    %v650 = vpop.permute.xlu0 %649
    %651 = vrot.lane.b32.xlu0 %v556, 112
    %v652 = vpop.permute.xlu0 %651
    %653 = vrot.lane.b32.xlu0 %v560, 112
    %v654 = vpop.permute.xlu0 %653
    %v655 = vsel %vm187, %v644, %v646
    %v656 = vsel %vm187, %v646, %v648
    %v657 = vsel %vm187, %v648, %v650
    %v658 = vsel %vm187, %v650, %v652
    %v659 = vsel %vm187, %v652, %v654
    %666 = vrot.lane.b32.xlu0 %v570, 112
    %v667 = vpop.permute.xlu0 %666
    %668 = vrot.lane.b32.xlu0 %v574, 112
    %v669 = vpop.permute.xlu0 %668
    %670 = vrot.lane.b32.xlu0 %v578, 112
    %v671 = vpop.permute.xlu0 %670
    %672 = vrot.lane.b32.xlu0 %v582, 112
    %v673 = vpop.permute.xlu0 %672
    %674 = vrot.lane.b32.xlu0 %v586, 112
    %v675 = vpop.permute.xlu0 %674
    %676 = vrot.lane.b32.xlu0 %v590, 112
    %v677 = vpop.permute.xlu0 %676
    %v678 = vsel %vm187, %v667, %v669
    %v679 = vsel %vm187, %v669, %v671
    %v680 = vsel %vm187, %v671, %v673
    %v681 = vsel %vm187, %v673, %v675
    %v682 = vsel %vm187, %v675, %v677
    %689 = vrot.lane.b32.xlu0 %v540, 104
    %v690 = vpop.permute.xlu0 %689
    %691 = vrot.lane.b32.xlu0 %v544, 104
    %v692 = vpop.permute.xlu0 %691
    %693 = vrot.lane.b32.xlu0 %v548, 104
    %v694 = vpop.permute.xlu0 %693
    %695 = vrot.lane.b32.xlu0 %v552, 104
    %v696 = vpop.permute.xlu0 %695
    %697 = vrot.lane.b32.xlu0 %v556, 104
    %v698 = vpop.permute.xlu0 %697
    %699 = vrot.lane.b32.xlu0 %v560, 104
    %v700 = vpop.permute.xlu0 %699
    %v701 = vsel %vm234, %v690, %v692
    %v702 = vsel %vm234, %v692, %v694
    %v703 = vsel %vm234, %v694, %v696
    %v704 = vsel %vm234, %v696, %v698
    %v705 = vsel %vm234, %v698, %v700
    %712 = vrot.lane.b32.xlu0 %v570, 104
    %v713 = vpop.permute.xlu0 %712
    %714 = vrot.lane.b32.xlu0 %v574, 104
    %v715 = vpop.permute.xlu0 %714
    %716 = vrot.lane.b32.xlu0 %v578, 104
    %v717 = vpop.permute.xlu0 %716
    %718 = vrot.lane.b32.xlu0 %v582, 104
    %v719 = vpop.permute.xlu0 %718
    %720 = vrot.lane.b32.xlu0 %v586, 104
    %v721 = vpop.permute.xlu0 %720
    %722 = vrot.lane.b32.xlu0 %v590, 104
    %v723 = vpop.permute.xlu0 %722
    %v724 = vsel %vm234, %v713, %v715
    %v725 = vsel %vm234, %v715, %v717
    %v726 = vsel %vm234, %v717, %v719
    %v727 = vsel %vm234, %v719, %v721
    %v728 = vsel %vm234, %v721, %v723
    %v735 = vsel %vm269, %v540, %v570
    %v736 = vsel %vm269, %v544, %v574
    %v737 = vsel %vm269, %v548, %v578
    %v738 = vsel %vm269, %v552, %v582
    %v739 = vsel %vm269, %v556, %v586
    %v740 = vsel %vm269, %v560, %v590
    %v741 = vsel %vm276, %v735, %v609
    %v742 = vsel %vm276, %v736, %v610
    %v743 = vsel %vm276, %v737, %v611
    %v744 = vsel %vm276, %v738, %v612
    %v745 = vsel %vm276, %v739, %v613
    %v746 = vsel %vm276, %v740, %v608
    %v747 = vsel %vm283, %v741, %v632
    %v748 = vsel %vm283, %v742, %v633
    %v749 = vsel %vm283, %v743, %v634
    %v750 = vsel %vm283, %v744, %v635
    %v751 = vsel %vm283, %v745, %v636
    %v752 = vsel %vm283, %v746, %v631
    %v753 = vsel %vm290, %v747, %v655
    %v754 = vsel %vm290, %v748, %v656
    %v755 = vsel %vm290, %v749, %v657
    %v756 = vsel %vm290, %v750, %v658
    %v757 = vsel %vm290, %v751, %v659
    %v758 = vsel %vm290, %v752, %v654
    %v759 = vsel %vm297, %v753, %v678
    %v760 = vsel %vm297, %v754, %v679
    %v761 = vsel %vm297, %v755, %v680
    %v762 = vsel %vm297, %v756, %v681
    %v763 = vsel %vm297, %v757, %v682
    %v764 = vsel %vm297, %v758, %v677
    %v765 = vsel %vm304, %v759, %v701
    %v766 = vsel %vm304, %v760, %v702
    %v767 = vsel %vm304, %v761, %v703
    %v768 = vsel %vm304, %v762, %v704
    %v769 = vsel %vm304, %v763, %v705
    %v770 = vsel %vm304, %v764, %v700
    %v771 = vsel %vm311, %v765, %v724
    %v772 = vsel %vm311, %v766, %v725
    %v773 = vsel %vm311, %v767, %v726
    %v774 = vsel %vm311, %v768, %v727
    %v775 = vsel %vm311, %v769, %v728
    %v776 = vsel %vm311, %v770, %v723
    %v777 = vpack.c.bf16 %v771, %v771
    %v778 = vpack.c.bf16 %v772, %v772
    %v779 = vpack.c.bf16 %v773, %v773
    %v780 = vpack.c.bf16 %v774, %v774
    %v781 = vpack.c.bf16 %v775, %v775
    %v782 = vpack.c.bf16 %v776, %v776
    %v784 = vsel %vm290, %v777, 0
    %v787 = vsel %vm290, %v778, 0
    %v790 = vsel %vm290, %v779, 0
    %v793 = vsel %vm290, %v780, 0
    %v796 = vsel %vm290, %v781, 0
    %v799 = vsel %vm290, %v782, 0
    %801 = vmatprep.subr.bf16.mxu0 %v787
    %802 = vmatpush1.bf16.msra.mxu0 %v784
    %803 = vmatprep.subr.bf16.mxu0 0
    %804 = vmatpush1.bf16.msra.mxu0 0
    %805 = vmatprep.subr.bf16.mxu0 0
    %806 = vmatpush1.bf16.msra.mxu0 0
    %807 = vmatprep.subr.bf16.mxu0 0
    %808 = vmatpush1.bf16.msra.mxu0 0
    %809 = vmatprep.subr.bf16.mxu0 0
    %810 = vmatpush1.bf16.msra.mxu0 0
    %811 = vmatprep.subr.bf16.mxu0 0
    %812 = vmatpush1.bf16.msra.mxu0 0
    %813 = vmatprep.subr.bf16.mxu0 0
    %814 = vmatpush1.bf16.msra.mxu0 0
    %815 = vmatprep.subr.bf16.mxu0 0
    %816 = vmatpush1.bf16.msra.mxu0 0
    %817 = vmatprep.subr.bf16.mxu0 0
    %818 = vmatpush1.bf16.msra.mxu0 0
    %819 = vmatprep.subr.bf16.mxu0 0
    %820 = vmatpush1.bf16.msra.mxu0 0
    %821 = vmatprep.subr.bf16.mxu0 0
    %822 = vmatpush1.bf16.msra.mxu0 0
    %823 = vmatprep.subr.bf16.mxu0 0
    %824 = vmatpush1.bf16.msra.mxu0 0
    %825 = vmatprep.subr.bf16.mxu0 0
    %826 = vmatpush1.bf16.msra.mxu0 0
    %827 = vmatprep.subr.bf16.mxu0 0
    %828 = vmatpush1.bf16.msra.mxu0 0
    %829 = vmatprep.subr.bf16.mxu0 0
    %830 = vmatpush1.bf16.msra.mxu0 0
    %831 = vmatprep.subr.bf16.mxu0 0
    %832 = vmatpush1.bf16.msra.mxu0 0
    %833 = vmatprep.mubr.bf16.mxu0 0
    %834 = vmatmul.mubr.bf16.gmra.mrb[0].mxu0 %v350
    %v835 = vpop.f32.mrb[0].mxu0
    %v836 = vadd.f32 %v331, %v835
    %v837 = vpop.f32.mrb[0].mxu0
    %v838 = vadd.f32 %v331, %v837
    %v839 = vpop.f32.mrb[0].mxu0
    %v840 = vadd.f32 %v336, %v839
    %v841 = vpop.f32.mrb[0].mxu0
    %v842 = vadd.f32 %v336, %v841
    %843 = vmatprep.mubr.bf16.mxu0 0
    %844 = vmatmul.mubr.bf16.gmra.mrb[0].mxu0 %v353
    %v845 = vpop.f32.mrb[0].mxu0
    %v846 = vadd.f32 %v341, %v845
    %v847 = vpop.f32.mrb[0].mxu0
    %v848 = vadd.f32 %v341, %v847
    %v849 = vpop.f32.mrb[0].mxu0
    %v850 = vadd.f32 %v346, %v849
    %v851 = vpop.f32.mrb[0].mxu0
    %v852 = vadd.f32 %v346, %v851
    %853 = vdwg.mxu0
    %854 = vmatprep.subr.bf16.mxu0 %v793
    %855 = vmatpush1.bf16.msra.mxu0 %v790
    %856 = vmatprep.subr.bf16.mxu0 0
    %857 = vmatpush1.bf16.msra.mxu0 0
    %858 = vmatprep.subr.bf16.mxu0 0
    %859 = vmatpush1.bf16.msra.mxu0 0
    %860 = vmatprep.subr.bf16.mxu0 0
    %861 = vmatpush1.bf16.msra.mxu0 0
    %862 = vmatprep.subr.bf16.mxu0 0
    %863 = vmatpush1.bf16.msra.mxu0 0
    %864 = vmatprep.subr.bf16.mxu0 0
    %865 = vmatpush1.bf16.msra.mxu0 0
    %866 = vmatprep.subr.bf16.mxu0 0
    %867 = vmatpush1.bf16.msra.mxu0 0
    %868 = vmatprep.subr.bf16.mxu0 0
    %869 = vmatpush1.bf16.msra.mxu0 0
    %870 = vmatprep.subr.bf16.mxu0 0
    %871 = vmatpush1.bf16.msra.mxu0 0
    %872 = vmatprep.subr.bf16.mxu0 0
    %873 = vmatpush1.bf16.msra.mxu0 0
    %874 = vmatprep.subr.bf16.mxu0 0
    %875 = vmatpush1.bf16.msra.mxu0 0
    %876 = vmatprep.subr.bf16.mxu0 0
    %877 = vmatpush1.bf16.msra.mxu0 0
    %878 = vmatprep.subr.bf16.mxu0 0
    %879 = vmatpush1.bf16.msra.mxu0 0
    %880 = vmatprep.subr.bf16.mxu0 0
    %881 = vmatpush1.bf16.msra.mxu0 0
    %882 = vmatprep.subr.bf16.mxu0 0
    %883 = vmatpush1.bf16.msra.mxu0 0
    %884 = vmatprep.subr.bf16.mxu0 0
    %885 = vmatpush1.bf16.msra.mxu0 0
    %886 = vmatprep.mubr.bf16.mxu0 0
    %887 = vmatmul.mubr.bf16.gmra.mrb[0].mxu0 %v350
    %v888 = vpop.f32.mrb[0].mxu0
    %v889 = vadd.f32 %v331, %v888
    %v890 = vpop.f32.mrb[0].mxu0
    %v891 = vadd.f32 %v331, %v890
    %v892 = vpop.f32.mrb[0].mxu0
    %v893 = vadd.f32 %v336, %v892
    %v894 = vpop.f32.mrb[0].mxu0
    %v895 = vadd.f32 %v336, %v894
    %896 = vmatprep.mubr.bf16.mxu0 0
    %897 = vmatmul.mubr.bf16.gmra.mrb[0].mxu0 %v353
    %v898 = vpop.f32.mrb[0].mxu0
    %v899 = vadd.f32 %v341, %v898
    %v900 = vpop.f32.mrb[0].mxu0
    %v901 = vadd.f32 %v341, %v900
    %v902 = vpop.f32.mrb[0].mxu0
    %v903 = vadd.f32 %v346, %v902
    %v904 = vpop.f32.mrb[0].mxu0
    %v905 = vadd.f32 %v346, %v904
    %906 = vdwg.mxu0
    %907 = vmatprep.subr.bf16.mxu0 %v799
    %908 = vmatpush1.bf16.msra.mxu0 %v796
    %909 = vmatprep.subr.bf16.mxu0 0
    %910 = vmatpush1.bf16.msra.mxu0 0
    %911 = vmatprep.subr.bf16.mxu0 0
    %912 = vmatpush1.bf16.msra.mxu0 0
    %913 = vmatprep.subr.bf16.mxu0 0
    %914 = vmatpush1.bf16.msra.mxu0 0
    %915 = vmatprep.subr.bf16.mxu0 0
    %916 = vmatpush1.bf16.msra.mxu0 0
    %917 = vmatprep.subr.bf16.mxu0 0
    %918 = vmatpush1.bf16.msra.mxu0 0
    %919 = vmatprep.subr.bf16.mxu0 0
    %920 = vmatpush1.bf16.msra.mxu0 0
    %921 = vmatprep.subr.bf16.mxu0 0
    %922 = vmatpush1.bf16.msra.mxu0 0
    %923 = vmatprep.subr.bf16.mxu0 0
    %924 = vmatpush1.bf16.msra.mxu0 0
    %925 = vmatprep.subr.bf16.mxu0 0
    %926 = vmatpush1.bf16.msra.mxu0 0
    %927 = vmatprep.subr.bf16.mxu0 0
    %928 = vmatpush1.bf16.msra.mxu0 0
    %929 = vmatprep.subr.bf16.mxu0 0
    %930 = vmatpush1.bf16.msra.mxu0 0
    %931 = vmatprep.subr.bf16.mxu0 0
    %932 = vmatpush1.bf16.msra.mxu0 0
    %933 = vmatprep.subr.bf16.mxu0 0
    %934 = vmatpush1.bf16.msra.mxu0 0
    %935 = vmatprep.subr.bf16.mxu0 0
    %936 = vmatpush1.bf16.msra.mxu0 0
    %937 = vmatprep.subr.bf16.mxu0 0
    %938 = vmatpush1.bf16.msra.mxu0 0
    %939 = vmatprep.mubr.bf16.mxu0 0
    %940 = vmatmul.mubr.bf16.gmra.mrb[0].mxu0 %v350
    %v941 = vpop.f32.mrb[0].mxu0
    %v942 = vadd.f32 %v331, %v941
    %v943 = vpop.f32.mrb[0].mxu0
    %v944 = vadd.f32 %v331, %v943
    %v945 = vpop.f32.mrb[0].mxu0
    %v946 = vadd.f32 %v336, %v945
    %v947 = vpop.f32.mrb[0].mxu0
    %v948 = vadd.f32 %v336, %v947
    %949 = vmatprep.mubr.bf16.mxu0 0
    %950 = vmatmul.mubr.bf16.gmra.mrb[0].mxu0 %v353
    %v951 = vpop.f32.mrb[0].mxu0
    %v952 = vadd.f32 %v341, %v951
    %v953 = vpop.f32.mrb[0].mxu0
    %v954 = vadd.f32 %v341, %v953
    %v955 = vpop.f32.mrb[0].mxu0
    %v956 = vadd.f32 %v346, %v955
    %v957 = vpop.f32.mrb[0].mxu0
    %v958 = vadd.f32 %v346, %v957
    %959 = vdwg.mxu0
    %v960 = vld [vmem:[%s5] sm:$0xff]
    %v961 = vld [vmem:[%s5 + $0x8] sm:$0xff]
    %v962 = vld [vmem:[%s5 + $0x10] sm:$0xff]
    %v963 = vld [vmem:[%s5 + $0x18] sm:$0xff]
    %v964 = vld [vmem:[%s5 + $0x20] sm:$0xff]
    %v965 = vld [vmem:[%s5 + $0x28] sm:$0xff]
    %v966 = vld [vmem:[%s5 + $0x30] sm:$0xff]
    %v967 = vld [vmem:[%s5 + $0x38] sm:$0xff]
    %v968 = vld [vmem:[%s5 + $0x40] sm:$0xff]
    %v969 = vld [vmem:[%s5 + $0x48] sm:$0xff]
    %v970 = vld [vmem:[%s5 + $0x50] sm:$0xff]
    %v971 = vld [vmem:[%s5 + $0x58] sm:$0xff]
    %v972 = vld [vmem:[%s5 + $0x60] sm:$0xff]
    %v973 = vld [vmem:[%s5 + $0x68] sm:$0xff]
    %v974 = vld [vmem:[%s5 + $0x70] sm:$0xff]
    %v975 = vld [vmem:[%s5 + $0x78] sm:$0xff]
    %v976 = vld [vmem:[%s6] sm:$0xff]
    %v977 = vld [vmem:[%s6 + $0x8] sm:$0xff]
    %v978 = vld [vmem:[%s6 + $0x10] sm:$0xff]
    %v979 = vld [vmem:[%s6 + $0x18] sm:$0xff]
    %v980 = vld [vmem:[%s3] sm:$0xff]
    %v981 = vld [vmem:[%s3 + $0x8] sm:$0xff]
    %v982 = vld [vmem:[%s3 + $0x10] sm:$0xff]
    %v983 = vld [vmem:[%s3 + $0x18] sm:$0xff]
    %v984 = vld [vmem:[%s4] sm:$0xff]
    %v985 = vld [vmem:[%s4 + $0x8] sm:$0xff]
    %v986 = vld [vmem:[%s4 + $0x10] sm:$0xff]
    %v987 = vld [vmem:[%s4 + $0x18] sm:$0xff]
    %v988 = vadd.f32 %v408, %v410
    %v989 = vadd.f32 %v988, %v461
    %v990 = vadd.f32 %v989, %v463
    %v991 = vadd.f32 %v990, %v514
    %vm992 = vcmask 457728
    %v993 = vsel %vm992, %v516, 0.0
    %v994 = vadd.f32 %v991, %v993
    %995 = vadd.xlane.f32.xlu0 %v994
    %v996 = vpop.xlane.xlu0 %995
    %v997 = vadd.f32 %v412, %v414
    %v998 = vadd.f32 %v997, %v465
    %v999 = vadd.f32 %v998, %v467
    %v1000 = vadd.f32 %v999, %v518
    %v1001 = vsel %vm992, %v520, 0.0
    %v1002 = vadd.f32 %v1000, %v1001
    %1003 = vadd.xlane.f32.xlu0 %v1002
    %v1004 = vpop.xlane.xlu0 %1003
    %v1005 = vadd.f32 %v418, %v420
    %v1006 = vadd.f32 %v1005, %v471
    %v1007 = vadd.f32 %v1006, %v473
    %v1008 = vadd.f32 %v1007, %v524
    %v1009 = vsel %vm992, %v526, 0.0
    %v1010 = vadd.f32 %v1008, %v1009
    %1011 = vadd.xlane.f32.xlu0 %v1010
    %v1012 = vpop.xlane.xlu0 %1011
    %v1013 = vadd.f32 %v422, %v424
    %v1014 = vadd.f32 %v1013, %v475
    %v1015 = vadd.f32 %v1014, %v477
    %v1016 = vadd.f32 %v1015, %v528
    %v1017 = vsel %vm992, %v530, 0.0
    %v1018 = vadd.f32 %v1016, %v1017
    %1019 = vadd.xlane.f32.xlu0 %v1018
    %v1020 = vpop.xlane.xlu0 %1019
    %v1021 = vadd.f32 %v996, 0.0
    %v1022 = vadd.f32 %v1004, 0.0
    %v1023 = vadd.f32 %v1012, 0.0
    %v1024 = vadd.f32 %v1020, 0.0
    %v1025 = vadd.f32 %v836, %v838
    %v1026 = vadd.f32 %v1025, %v889
    %v1027 = vadd.f32 %v1026, %v891
    %v1028 = vadd.f32 %v1027, %v942
    %v1029 = vsel %vm992, %v944, 0.0
    %v1030 = vadd.f32 %v1028, %v1029
    %1031 = vadd.xlane.f32.xlu0 %v1030
    %v1032 = vpop.xlane.xlu0 %1031
    %v1033 = vadd.f32 %v840, %v842
    %v1034 = vadd.f32 %v1033, %v893
    %v1035 = vadd.f32 %v1034, %v895
    %v1036 = vadd.f32 %v1035, %v946
    %v1037 = vsel %vm992, %v948, 0.0
    %v1038 = vadd.f32 %v1036, %v1037
    %1039 = vadd.xlane.f32.xlu0 %v1038
    %v1040 = vpop.xlane.xlu0 %1039
    %v1041 = vadd.f32 %v846, %v848
    %v1042 = vadd.f32 %v1041, %v899
    %v1043 = vadd.f32 %v1042, %v901
    %v1044 = vadd.f32 %v1043, %v952
    %v1045 = vsel %vm992, %v954, 0.0
    %v1046 = vadd.f32 %v1044, %v1045
    %1047 = vadd.xlane.f32.xlu0 %v1046
    %v1048 = vpop.xlane.xlu0 %1047
    %v1049 = vadd.f32 %v850, %v852
    %v1050 = vadd.f32 %v1049, %v903
    %v1051 = vadd.f32 %v1050, %v905
    %v1052 = vadd.f32 %v1051, %v956
    %v1053 = vsel %vm992, %v958, 0.0
    %v1054 = vadd.f32 %v1052, %v1053
    %1055 = vadd.xlane.f32.xlu0 %v1054
    %v1056 = vpop.xlane.xlu0 %1055
    %v1057 = vadd.f32 %v1021, %v1032
    %v1058 = vadd.f32 %v1022, %v1040
    %v1059 = vadd.f32 %v1023, %v1048
    %v1060 = vadd.f32 %v1024, %v1056
    %v1061 = vrcp.pop 1392.0
    %v1062 = vmul.f32 %v1057, %v1061
    %v1063 = vmul.f32 %v1058, %v1061
    %v1064 = vmul.f32 %v1059, %v1061
    %v1065 = vmul.f32 %v1060, %v1061
    %v1066 = vsub.f32 %v408, %v1062
    %v1067 = vsub.f32 %v410, %v1062
    %v1068 = vsub.f32 %v461, %v1062
    %v1069 = vsub.f32 %v463, %v1062
    %v1070 = vsub.f32 %v514, %v1062
    %v1071 = vsub.f32 %v516, %v1062
    %v1072 = vsub.f32 %v412, %v1063
    %v1073 = vsub.f32 %v414, %v1063
    %v1074 = vsub.f32 %v465, %v1063
    %v1075 = vsub.f32 %v467, %v1063
    %v1076 = vsub.f32 %v518, %v1063
    %v1077 = vsub.f32 %v520, %v1063
    %v1078 = vsub.f32 %v418, %v1064
    %v1079 = vsub.f32 %v420, %v1064
    %v1080 = vsub.f32 %v471, %v1064
    %v1081 = vsub.f32 %v473, %v1064
    %v1082 = vsub.f32 %v524, %v1064
    %v1083 = vsub.f32 %v526, %v1064
    %v1084 = vsub.f32 %v422, %v1065
    %v1085 = vsub.f32 %v424, %v1065
    %v1086 = vsub.f32 %v475, %v1065
    %v1087 = vsub.f32 %v477, %v1065
    %v1088 = vsub.f32 %v528, %v1065
    %v1089 = vsub.f32 %v530, %v1065
    %v1090 = vmul.f32 %v1066, %v1066
    %v1091 = vmul.f32 %v1067, %v1067
    %v1092 = vmul.f32 %v1068, %v1068
    %v1093 = vmul.f32 %v1069, %v1069
    %v1094 = vmul.f32 %v1070, %v1070
    %v1095 = vmul.f32 %v1071, %v1071
    %v1096 = vmul.f32 %v1072, %v1072
    %v1097 = vmul.f32 %v1073, %v1073
    %v1098 = vmul.f32 %v1074, %v1074
    %v1099 = vmul.f32 %v1075, %v1075
    %v1100 = vmul.f32 %v1076, %v1076
    %v1101 = vmul.f32 %v1077, %v1077
    %v1102 = vmul.f32 %v1078, %v1078
    %v1103 = vmul.f32 %v1079, %v1079
    %v1104 = vmul.f32 %v1080, %v1080
    %v1105 = vmul.f32 %v1081, %v1081
    %v1106 = vmul.f32 %v1082, %v1082
    %v1107 = vmul.f32 %v1083, %v1083
    %v1108 = vmul.f32 %v1084, %v1084
    %v1109 = vmul.f32 %v1085, %v1085
    %v1110 = vmul.f32 %v1086, %v1086
    %v1111 = vmul.f32 %v1087, %v1087
    %v1112 = vmul.f32 %v1088, %v1088
    %v1113 = vmul.f32 %v1089, %v1089
    %v1114 = vadd.f32 %v1090, %v1091
    %v1115 = vadd.f32 %v1114, %v1092
    %v1116 = vadd.f32 %v1115, %v1093
    %v1117 = vadd.f32 %v1116, %v1094
    %v1118 = vsel %vm992, %v1095, 0.0
    %v1119 = vadd.f32 %v1117, %v1118
    %1120 = vadd.xlane.f32.xlu0 %v1119
    %v1121 = vpop.xlane.xlu0 %1120
    %v1122 = vadd.f32 %v1096, %v1097
    %v1123 = vadd.f32 %v1122, %v1098
    %v1124 = vadd.f32 %v1123, %v1099
    %v1125 = vadd.f32 %v1124, %v1100
    %v1126 = vsel %vm992, %v1101, 0.0
    %v1127 = vadd.f32 %v1125, %v1126
    %1128 = vadd.xlane.f32.xlu0 %v1127
    %v1129 = vpop.xlane.xlu0 %1128
    %v1130 = vadd.f32 %v1102, %v1103
    %v1131 = vadd.f32 %v1130, %v1104
    %v1132 = vadd.f32 %v1131, %v1105
    %v1133 = vadd.f32 %v1132, %v1106
    %v1134 = vsel %vm992, %v1107, 0.0
    %v1135 = vadd.f32 %v1133, %v1134
    %1136 = vadd.xlane.f32.xlu0 %v1135
    %v1137 = vpop.xlane.xlu0 %1136
    %v1138 = vadd.f32 %v1108, %v1109
    %v1139 = vadd.f32 %v1138, %v1110
    %v1140 = vadd.f32 %v1139, %v1111
    %v1141 = vadd.f32 %v1140, %v1112
    %v1142 = vsel %vm992, %v1113, 0.0
    %v1143 = vadd.f32 %v1141, %v1142
    %1144 = vadd.xlane.f32.xlu0 %v1143
    %v1145 = vpop.xlane.xlu0 %1144
    %v1146 = vadd.f32 %v1121, 0.0
    %v1147 = vadd.f32 %v1129, 0.0
    %v1148 = vadd.f32 %v1137, 0.0
    %v1149 = vadd.f32 %v1145, 0.0
    %v1150 = vsub.f32 %v836, %v1062
    %v1151 = vsub.f32 %v838, %v1062
    %v1152 = vsub.f32 %v889, %v1062
    %v1153 = vsub.f32 %v891, %v1062
    %v1154 = vsub.f32 %v942, %v1062
    %v1155 = vsub.f32 %v944, %v1062
    %v1156 = vsub.f32 %v840, %v1063
    %v1157 = vsub.f32 %v842, %v1063
    %v1158 = vsub.f32 %v893, %v1063
    %v1159 = vsub.f32 %v895, %v1063
    %v1160 = vsub.f32 %v946, %v1063
    %v1161 = vsub.f32 %v948, %v1063
    %v1162 = vsub.f32 %v846, %v1064
    %v1163 = vsub.f32 %v848, %v1064
    %v1164 = vsub.f32 %v899, %v1064
    %v1165 = vsub.f32 %v901, %v1064
    %v1166 = vsub.f32 %v952, %v1064
    %v1167 = vsub.f32 %v954, %v1064
    %v1168 = vsub.f32 %v850, %v1065
    %v1169 = vsub.f32 %v852, %v1065
    %v1170 = vsub.f32 %v903, %v1065
    %v1171 = vsub.f32 %v905, %v1065
    %v1172 = vsub.f32 %v956, %v1065
    %v1173 = vsub.f32 %v958, %v1065
    %v1174 = vmul.f32 %v1150, %v1150
    %v1175 = vmul.f32 %v1151, %v1151
    %v1176 = vmul.f32 %v1152, %v1152
    %v1177 = vmul.f32 %v1153, %v1153
    %v1178 = vmul.f32 %v1154, %v1154
    %v1179 = vmul.f32 %v1155, %v1155
    %v1180 = vmul.f32 %v1156, %v1156
    %v1181 = vmul.f32 %v1157, %v1157
    %v1182 = vmul.f32 %v1158, %v1158
    %v1183 = vmul.f32 %v1159, %v1159
    %v1184 = vmul.f32 %v1160, %v1160
    %v1185 = vmul.f32 %v1161, %v1161
    %v1186 = vmul.f32 %v1162, %v1162
    %v1187 = vmul.f32 %v1163, %v1163
    %v1188 = vmul.f32 %v1164, %v1164
    %v1189 = vmul.f32 %v1165, %v1165
    %v1190 = vmul.f32 %v1166, %v1166
    %v1191 = vmul.f32 %v1167, %v1167
    %v1192 = vmul.f32 %v1168, %v1168
    %v1193 = vmul.f32 %v1169, %v1169
    %v1194 = vmul.f32 %v1170, %v1170
    %v1195 = vmul.f32 %v1171, %v1171
    %v1196 = vmul.f32 %v1172, %v1172
    %v1197 = vmul.f32 %v1173, %v1173
    %v1198 = vadd.f32 %v1174, %v1175
    %v1199 = vadd.f32 %v1198, %v1176
    %v1200 = vadd.f32 %v1199, %v1177
    %v1201 = vadd.f32 %v1200, %v1178
    %v1202 = vsel %vm992, %v1179, 0.0
    %v1203 = vadd.f32 %v1201, %v1202
    %1204 = vadd.xlane.f32.xlu0 %v1203
    %v1205 = vpop.xlane.xlu0 %1204
    %v1206 = vadd.f32 %v1180, %v1181
    %v1207 = vadd.f32 %v1206, %v1182
    %v1208 = vadd.f32 %v1207, %v1183
    %v1209 = vadd.f32 %v1208, %v1184
    %v1210 = vsel %vm992, %v1185, 0.0
    %v1211 = vadd.f32 %v1209, %v1210
    %1212 = vadd.xlane.f32.xlu0 %v1211
    %v1213 = vpop.xlane.xlu0 %1212
    %v1214 = vadd.f32 %v1186, %v1187
    %v1215 = vadd.f32 %v1214, %v1188
    %v1216 = vadd.f32 %v1215, %v1189
    %v1217 = vadd.f32 %v1216, %v1190
    %v1218 = vsel %vm992, %v1191, 0.0
    %v1219 = vadd.f32 %v1217, %v1218
    %1220 = vadd.xlane.f32.xlu0 %v1219
    %v1221 = vpop.xlane.xlu0 %1220
    %v1222 = vadd.f32 %v1192, %v1193
    %v1223 = vadd.f32 %v1222, %v1194
    %v1224 = vadd.f32 %v1223, %v1195
    %v1225 = vadd.f32 %v1224, %v1196
    %v1226 = vsel %vm992, %v1197, 0.0
    %v1227 = vadd.f32 %v1225, %v1226
    %1228 = vadd.xlane.f32.xlu0 %v1227
    %v1229 = vpop.xlane.xlu0 %1228
    %v1230 = vadd.f32 %v1146, %v1205
    %v1231 = vadd.f32 %v1147, %v1213
    %v1232 = vadd.f32 %v1148, %v1221
    %v1233 = vadd.f32 %v1149, %v1229
    %v1234 = vmul.f32 %v1230, %v1061
    %v1235 = vmul.f32 %v1231, %v1061
    %v1236 = vmul.f32 %v1232, %v1061
    %v1237 = vmul.f32 %v1233, %v1061
    %v1238 = vadd.f32 %v1234, 1e-05
    %v1239 = vadd.f32 %v1235, 1e-05
    %v1240 = vadd.f32 %v1236, 1e-05
    %v1241 = vadd.f32 %v1237, 1e-05
    %v1242 = vrsqrt.pop %v1238
    %v1243 = vrsqrt.pop %v1239
    %v1244 = vrsqrt.pop %v1240
    %v1245 = vrsqrt.pop %v1241
    %v1246 = vmul.f32 %v980, %v1242
    %v1247 = vmul.f32 %v981, %v1243
    %v1248 = vmul.f32 %v982, %v1244
    %v1249 = vmul.f32 %v983, %v1245
    %v1250 = vmul.f32 %v1062, %v1246
    %v1251 = vmul.f32 %v1063, %v1247
    %v1252 = vmul.f32 %v1064, %v1248
    %v1253 = vmul.f32 %v1065, %v1249
    %v1254 = vsub.f32 %v984, %v1250
    %v1255 = vsub.f32 %v985, %v1251
    %v1256 = vsub.f32 %v986, %v1252
    %v1257 = vsub.f32 %v987, %v1253
    %1258 = vxpose.xlu0.b32.start [1/16] %v1246, 128
    %1259 = vxpose.xlu0.b32.cont [2/16] %v1247, 128
    %1260 = vxpose.xlu0.b32.cont [3/16] %v1248, 128
    %1261 = vxpose.xlu0.b32.cont [4/16] %v1249, 128
    %1262 = vxpose.xlu0.b32.cont [5/16] 0.0, 128
    %1263 = vxpose.xlu0.b32.cont [6/16] 0.0, 128
    %1264 = vxpose.xlu0.b32.cont [7/16] 0.0, 128
    %1265 = vxpose.xlu0.b32.cont [8/16] 0.0, 128
    %1266 = vxpose.xlu0.b32.cont [9/16] 0.0, 128
    %1267 = vxpose.xlu0.b32.cont [10/16] 0.0, 128
    %1268 = vxpose.xlu0.b32.cont [11/16] 0.0, 128
    %1269 = vxpose.xlu0.b32.cont [12/16] 0.0, 128
    %1270 = vxpose.xlu0.b32.cont [13/16] 0.0, 128
    %1271 = vxpose.xlu0.b32.cont [14/16] 0.0, 128
    %1272 = vxpose.xlu0.b32.cont [15/16] 0.0, 128
    %1273 = vxpose.xlu0.b32.end [16/16] 0.0, 128
    %v1274 = vpop.trf.xlu0
    %v1275 = vpop.trf.xlu0
    %v1276 = vpop.trf.xlu0
    %v1277 = vpop.trf.xlu0
    %v1278 = vpop.trf.xlu0
    %v1279 = vpop.trf.xlu0
    %v1280 = vpop.trf.xlu0
    %v1281 = vpop.trf.xlu0
    %v1282 = vpop.trf.xlu0
    %v1283 = vpop.trf.xlu0
    %v1284 = vpop.trf.xlu0
    %v1285 = vpop.trf.xlu0
    %v1286 = vpop.trf.xlu0
    %v1287 = vpop.trf.xlu0
    %v1288 = vpop.trf.xlu0
    %v1289 = vpop.trf.xlu0
    %1291 = vrot.lane.b32.xlu0 %v1274, 32
    %v1292 = vpop.permute.xlu0 %1291
    %1294 = vrot.lane.b32.xlu0 %v1274, 64
    %v1295 = vpop.permute.xlu0 %1294
    %1297 = vrot.lane.b32.xlu0 %v1274, 96
    %v1298 = vpop.permute.xlu0 %1297
    %vm1300 = vcmask 261120
    %v1301 = vsel %vm1300, %v1274, %v1292
    %vm1302 = vcmask 523264
    %v1303 = vsel %vm1302, %v1301, %v1295
    %vm1304 = vcmask 785408
    %v1305 = vsel %vm1304, %v1303, %v1298
    %1306 = vxpose.xlu0.b32.start [1/16] %v1254, 128
    %1307 = vxpose.xlu0.b32.cont [2/16] %v1255, 128
    %1308 = vxpose.xlu0.b32.cont [3/16] %v1256, 128
    %1309 = vxpose.xlu0.b32.cont [4/16] %v1257, 128
    %1310 = vxpose.xlu0.b32.cont [5/16] 0.0, 128
    %1311 = vxpose.xlu0.b32.cont [6/16] 0.0, 128
    %1312 = vxpose.xlu0.b32.cont [7/16] 0.0, 128
    %1313 = vxpose.xlu0.b32.cont [8/16] 0.0, 128
    %1314 = vxpose.xlu0.b32.cont [9/16] 0.0, 128
    %1315 = vxpose.xlu0.b32.cont [10/16] 0.0, 128
    %1316 = vxpose.xlu0.b32.cont [11/16] 0.0, 128
    %1317 = vxpose.xlu0.b32.cont [12/16] 0.0, 128
    %1318 = vxpose.xlu0.b32.cont [13/16] 0.0, 128
    %1319 = vxpose.xlu0.b32.cont [14/16] 0.0, 128
    %1320 = vxpose.xlu0.b32.cont [15/16] 0.0, 128
    %1321 = vxpose.xlu0.b32.end [16/16] 0.0, 128
    %v1322 = vpop.trf.xlu0
    %v1323 = vpop.trf.xlu0
    %v1324 = vpop.trf.xlu0
    %v1325 = vpop.trf.xlu0
    %v1326 = vpop.trf.xlu0
    %v1327 = vpop.trf.xlu0
    %v1328 = vpop.trf.xlu0
    %v1329 = vpop.trf.xlu0
    %v1330 = vpop.trf.xlu0
    %v1331 = vpop.trf.xlu0
    %v1332 = vpop.trf.xlu0
    %v1333 = vpop.trf.xlu0
    %v1334 = vpop.trf.xlu0
    %v1335 = vpop.trf.xlu0
    %v1336 = vpop.trf.xlu0
    %v1337 = vpop.trf.xlu0
    %1339 = vrot.lane.b32.xlu0 %v1322, 32
    %v1340 = vpop.permute.xlu0 %1339
    %1342 = vrot.lane.b32.xlu0 %v1322, 64
    %v1343 = vpop.permute.xlu0 %1342
    %1345 = vrot.lane.b32.xlu0 %v1322, 96
    %v1346 = vpop.permute.xlu0 %1345
    %v1348 = vsel %vm1300, %v1322, %v1340
    %v1349 = vsel %vm1302, %v1348, %v1343
    %v1350 = vsel %vm1304, %v1349, %v1346
    %v1351 = vlaneseq
    %v1352 = vshrl.u32 %v1351, 7
    %v1353 = vsub.s32 0, %v1352
    %v1354 = vrot.slane %v1305, %v1353
    %v1355 = vmul.f32 %v960, %v1354
    %v1356 = vmul.f32 %v961, %v1354
    %v1357 = vmul.f32 %v962, %v1354
    %v1358 = vmul.f32 %v963, %v1354
    %v1359 = vmul.f32 %v964, %v1354
    %v1360 = vmul.f32 %v965, %v1354
    %v1361 = vmul.f32 %v966, %v1354
    %v1362 = vmul.f32 %v967, %v1354
    %v1363 = vmul.f32 %v968, %v1354
    %v1364 = vmul.f32 %v969, %v1354
    %v1365 = vmul.f32 %v970, %v1354
    %v1366 = vmul.f32 %v971, %v1354
    %v1367 = vmul.f32 %v972, %v1354
    %v1368 = vmul.f32 %v973, %v1354
    %v1369 = vmul.f32 %v974, %v1354
    %v1370 = vmul.f32 %v975, %v1354
    %v1371 = vlaneseq
    %v1372 = vshrl.u32 %v1371, 7
    %v1373 = vsub.s32 0, %v1372
    %v1374 = vrot.slane %v1350, %v1373
    %v1375 = vmul.f32 %v960, %v1374
    %v1376 = vmul.f32 %v961, %v1374
    %v1377 = vmul.f32 %v962, %v1374
    %v1378 = vmul.f32 %v963, %v1374
    %v1379 = vmul.f32 %v964, %v1374
    %v1380 = vmul.f32 %v965, %v1374
    %v1381 = vmul.f32 %v966, %v1374
    %v1382 = vmul.f32 %v967, %v1374
    %v1383 = vmul.f32 %v968, %v1374
    %v1384 = vmul.f32 %v969, %v1374
    %v1385 = vmul.f32 %v970, %v1374
    %v1386 = vmul.f32 %v971, %v1374
    %v1387 = vmul.f32 %v972, %v1374
    %v1388 = vmul.f32 %v973, %v1374
    %v1389 = vmul.f32 %v974, %v1374
    %v1390 = vmul.f32 %v975, %v1374
    %v1391 = vadd.f32 %v1375, %v1376
    %v1392 = vadd.f32 %v1391, %v1377
    %v1393 = vadd.f32 %v1392, %v1378
    %1394 = vadd.xlane.f32.xlu0 %v1393
    %v1395 = vpop.xlane.xlu0 %1394
    %v1396 = vadd.f32 %v1379, %v1380
    %v1397 = vadd.f32 %v1396, %v1381
    %v1398 = vadd.f32 %v1397, %v1382
    %1399 = vadd.xlane.f32.xlu0 %v1398
    %v1400 = vpop.xlane.xlu0 %1399
    %v1401 = vadd.f32 %v1383, %v1384
    %v1402 = vadd.f32 %v1401, %v1385
    %v1403 = vadd.f32 %v1402, %v1386
    %1404 = vadd.xlane.f32.xlu0 %v1403
    %v1405 = vpop.xlane.xlu0 %1404
    %v1406 = vadd.f32 %v1387, %v1388
    %v1407 = vadd.f32 %v1406, %v1389
    %v1408 = vadd.f32 %v1407, %v1390
    %1409 = vadd.xlane.f32.xlu0 %v1408
    %v1410 = vpop.xlane.xlu0 %1409
    %v1411 = vadd.f32 %v976, %v1395
    %v1412 = vadd.f32 %v977, %v1400
    %v1413 = vadd.f32 %v978, %v1405
    %v1414 = vadd.f32 %v979, %v1410
    %v1415 = vpack.c.bf16 %v1359, %v1355
    %v1416 = vpack.c.bf16 %v1360, %v1356
    %v1417 = vpack.c.bf16 %v1361, %v1357
    %v1418 = vpack.c.bf16 %v1362, %v1358
    %v1419 = vpack.c.bf16 %v1367, %v1363
    %v1420 = vpack.c.bf16 %v1368, %v1364
    %v1421 = vpack.c.bf16 %v1369, %v1365
    %v1422 = vpack.c.bf16 %v1370, %v1366
    %v1423 = vpack.c.bf16 %v412, %v408
    %v1424 = vpack.c.bf16 %v414, %v410
    %v1425 = vpack.c.bf16 %v465, %v461
    %v1426 = vpack.c.bf16 %v467, %v463
    %v1427 = vpack.c.bf16 %v518, %v514
    %v1428 = vpack.c.bf16 %v520, %v516
    %v1429 = vpack.c.bf16 %v422, %v418
    %v1430 = vpack.c.bf16 %v424, %v420
    %v1431 = vpack.c.bf16 %v475, %v471
    %v1432 = vpack.c.bf16 %v477, %v473
    %v1433 = vpack.c.bf16 %v528, %v524
    %v1434 = vpack.c.bf16 %v530, %v526
    %1445 = vrot.lane.b32.xlu0 %v1423, 120
    %v1446 = vpop.permute.xlu0 %1445
    %1447 = vrot.lane.b32.xlu0 %v1424, 120
    %v1448 = vpop.permute.xlu0 %1447
    %1449 = vrot.lane.b32.xlu0 %v1425, 120
    %v1450 = vpop.permute.xlu0 %1449
    %1451 = vrot.lane.b32.xlu0 %v1426, 120
    %v1452 = vpop.permute.xlu0 %1451
    %1453 = vrot.lane.b32.xlu0 %v1427, 120
    %v1454 = vpop.permute.xlu0 %1453
    %1455 = vrot.lane.b32.xlu0 %v1429, 120
    %v1456 = vpop.permute.xlu0 %1455
    %1457 = vrot.lane.b32.xlu0 %v1430, 120
    %v1458 = vpop.permute.xlu0 %1457
    %1459 = vrot.lane.b32.xlu0 %v1431, 120
    %v1460 = vpop.permute.xlu0 %1459
    %1461 = vrot.lane.b32.xlu0 %v1432, 120
    %v1462 = vpop.permute.xlu0 %1461
    %1463 = vrot.lane.b32.xlu0 %v1433, 120
    %v1464 = vpop.permute.xlu0 %1463
    %vm1465 = vcmask 982016
    %v1466 = vsel %vm1465, %v1446, %v1448
    %v1467 = vsel %vm1465, %v1448, %v1450
    %v1468 = vsel %vm1465, %v1450, %v1452
    %v1469 = vsel %vm1465, %v1452, %v1454
    %v1470 = vsel %vm1465, %v1456, %v1458
    %v1471 = vsel %vm1465, %v1458, %v1460
    %v1472 = vsel %vm1465, %v1460, %v1462
    %v1473 = vsel %vm1465, %v1462, %v1464
    %1484 = vrot.lane.b32.xlu0 %v1423, 112
    %v1485 = vpop.permute.xlu0 %1484
    %1486 = vrot.lane.b32.xlu0 %v1424, 112
    %v1487 = vpop.permute.xlu0 %1486
    %1488 = vrot.lane.b32.xlu0 %v1425, 112
    %v1489 = vpop.permute.xlu0 %1488
    %1490 = vrot.lane.b32.xlu0 %v1426, 112
    %v1491 = vpop.permute.xlu0 %1490
    %1492 = vrot.lane.b32.xlu0 %v1427, 112
    %v1493 = vpop.permute.xlu0 %1492
    %1494 = vrot.lane.b32.xlu0 %v1429, 112
    %v1495 = vpop.permute.xlu0 %1494
    %1496 = vrot.lane.b32.xlu0 %v1430, 112
    %v1497 = vpop.permute.xlu0 %1496
    %1498 = vrot.lane.b32.xlu0 %v1431, 112
    %v1499 = vpop.permute.xlu0 %1498
    %1500 = vrot.lane.b32.xlu0 %v1432, 112
    %v1501 = vpop.permute.xlu0 %1500
    %1502 = vrot.lane.b32.xlu0 %v1433, 112
    %v1503 = vpop.permute.xlu0 %1502
    %vm1504 = vcmask 916480
    %v1505 = vsel %vm1504, %v1485, %v1487
    %v1506 = vsel %vm1504, %v1487, %v1489
    %v1507 = vsel %vm1504, %v1489, %v1491
    %v1508 = vsel %vm1504, %v1491, %v1493
    %v1509 = vsel %vm1504, %v1495, %v1497
    %v1510 = vsel %vm1504, %v1497, %v1499
    %v1511 = vsel %vm1504, %v1499, %v1501
    %v1512 = vsel %vm1504, %v1501, %v1503
    %1523 = vrot.lane.b32.xlu0 %v1423, 104
    %v1524 = vpop.permute.xlu0 %1523
    %1525 = vrot.lane.b32.xlu0 %v1424, 104
    %v1526 = vpop.permute.xlu0 %1525
    %1527 = vrot.lane.b32.xlu0 %v1425, 104
    %v1528 = vpop.permute.xlu0 %1527
    %1529 = vrot.lane.b32.xlu0 %v1426, 104
    %v1530 = vpop.permute.xlu0 %1529
    %1531 = vrot.lane.b32.xlu0 %v1427, 104
    %v1532 = vpop.permute.xlu0 %1531
    %1533 = vrot.lane.b32.xlu0 %v1429, 104
    %v1534 = vpop.permute.xlu0 %1533
    %1535 = vrot.lane.b32.xlu0 %v1430, 104
    %v1536 = vpop.permute.xlu0 %1535
    %1537 = vrot.lane.b32.xlu0 %v1431, 104
    %v1538 = vpop.permute.xlu0 %1537
    %1539 = vrot.lane.b32.xlu0 %v1432, 104
    %v1540 = vpop.permute.xlu0 %1539
    %1541 = vrot.lane.b32.xlu0 %v1433, 104
    %v1542 = vpop.permute.xlu0 %1541
    %vm1543 = vcmask 850944
    %v1544 = vsel %vm1543, %v1524, %v1526
    %v1545 = vsel %vm1543, %v1526, %v1528
    %v1546 = vsel %vm1543, %v1528, %v1530
    %v1547 = vsel %vm1543, %v1530, %v1532
    %v1548 = vsel %vm1543, %v1534, %v1536
    %v1549 = vsel %vm1543, %v1536, %v1538
    %v1550 = vsel %vm1543, %v1538, %v1540
    %v1551 = vsel %vm1543, %v1540, %v1542
    %1562 = vrot.lane.b32.xlu0 %v1423, 96
    %v1563 = vpop.permute.xlu0 %1562
    %1564 = vrot.lane.b32.xlu0 %v1424, 96
    %v1565 = vpop.permute.xlu0 %1564
    %1566 = vrot.lane.b32.xlu0 %v1425, 96
    %v1567 = vpop.permute.xlu0 %1566
    %1568 = vrot.lane.b32.xlu0 %v1426, 96
    %v1569 = vpop.permute.xlu0 %1568
    %1570 = vrot.lane.b32.xlu0 %v1427, 96
    %v1571 = vpop.permute.xlu0 %1570
    %1572 = vrot.lane.b32.xlu0 %v1429, 96
    %v1573 = vpop.permute.xlu0 %1572
    %1574 = vrot.lane.b32.xlu0 %v1430, 96
    %v1575 = vpop.permute.xlu0 %1574
    %1576 = vrot.lane.b32.xlu0 %v1431, 96
    %v1577 = vpop.permute.xlu0 %1576
    %1578 = vrot.lane.b32.xlu0 %v1432, 96
    %v1579 = vpop.permute.xlu0 %1578
    %1580 = vrot.lane.b32.xlu0 %v1433, 96
    %v1581 = vpop.permute.xlu0 %1580
    %vm1582 = vcmask 785408
    %v1583 = vsel %vm1582, %v1563, %v1565
    %v1584 = vsel %vm1582, %v1565, %v1567
    %v1585 = vsel %vm1582, %v1567, %v1569
    %v1586 = vsel %vm1582, %v1569, %v1571
    %v1587 = vsel %vm1582, %v1573, %v1575
    %v1588 = vsel %vm1582, %v1575, %v1577
    %v1589 = vsel %vm1582, %v1577, %v1579
    %v1590 = vsel %vm1582, %v1579, %v1581
    %1601 = vrot.lane.b32.xlu0 %v1423, 88
    %v1602 = vpop.permute.xlu0 %1601
    %1603 = vrot.lane.b32.xlu0 %v1424, 88
    %v1604 = vpop.permute.xlu0 %1603
    %1605 = vrot.lane.b32.xlu0 %v1425, 88
    %v1606 = vpop.permute.xlu0 %1605
    %1607 = vrot.lane.b32.xlu0 %v1426, 88
    %v1608 = vpop.permute.xlu0 %1607
    %1609 = vrot.lane.b32.xlu0 %v1427, 88
    %v1610 = vpop.permute.xlu0 %1609
    %1611 = vrot.lane.b32.xlu0 %v1429, 88
    %v1612 = vpop.permute.xlu0 %1611
    %1613 = vrot.lane.b32.xlu0 %v1430, 88
    %v1614 = vpop.permute.xlu0 %1613
    %1615 = vrot.lane.b32.xlu0 %v1431, 88
    %v1616 = vpop.permute.xlu0 %1615
    %1617 = vrot.lane.b32.xlu0 %v1432, 88
    %v1618 = vpop.permute.xlu0 %1617
    %1619 = vrot.lane.b32.xlu0 %v1433, 88
    %v1620 = vpop.permute.xlu0 %1619
    %vm1621 = vcmask 719872
    %v1622 = vsel %vm1621, %v1602, %v1604
    %v1623 = vsel %vm1621, %v1604, %v1606
    %v1624 = vsel %vm1621, %v1606, %v1608
    %v1625 = vsel %vm1621, %v1608, %v1610
    %v1626 = vsel %vm1621, %v1612, %v1614
    %v1627 = vsel %vm1621, %v1614, %v1616
    %v1628 = vsel %vm1621, %v1616, %v1618
    %v1629 = vsel %vm1621, %v1618, %v1620
    %1640 = vrot.lane.b32.xlu0 %v1423, 80
    %v1641 = vpop.permute.xlu0 %1640
    %1642 = vrot.lane.b32.xlu0 %v1424, 80
    %v1643 = vpop.permute.xlu0 %1642
    %1644 = vrot.lane.b32.xlu0 %v1425, 80
    %v1645 = vpop.permute.xlu0 %1644
    %1646 = vrot.lane.b32.xlu0 %v1426, 80
    %v1647 = vpop.permute.xlu0 %1646
    %1648 = vrot.lane.b32.xlu0 %v1427, 80
    %v1649 = vpop.permute.xlu0 %1648
    %1650 = vrot.lane.b32.xlu0 %v1429, 80
    %v1651 = vpop.permute.xlu0 %1650
    %1652 = vrot.lane.b32.xlu0 %v1430, 80
    %v1653 = vpop.permute.xlu0 %1652
    %1654 = vrot.lane.b32.xlu0 %v1431, 80
    %v1655 = vpop.permute.xlu0 %1654
    %1656 = vrot.lane.b32.xlu0 %v1432, 80
    %v1657 = vpop.permute.xlu0 %1656
    %1658 = vrot.lane.b32.xlu0 %v1433, 80
    %v1659 = vpop.permute.xlu0 %1658
    %vm1660 = vcmask 654336
    %v1661 = vsel %vm1660, %v1641, %v1643
    %v1662 = vsel %vm1660, %v1643, %v1645
    %v1663 = vsel %vm1660, %v1645, %v1647
    %v1664 = vsel %vm1660, %v1647, %v1649
    %v1665 = vsel %vm1660, %v1651, %v1653
    %v1666 = vsel %vm1660, %v1653, %v1655
    %v1667 = vsel %vm1660, %v1655, %v1657
    %v1668 = vsel %vm1660, %v1657, %v1659
    %1679 = vrot.lane.b32.xlu0 %v1423, 72
    %v1680 = vpop.permute.xlu0 %1679
    %1681 = vrot.lane.b32.xlu0 %v1424, 72
    %v1682 = vpop.permute.xlu0 %1681
    %1683 = vrot.lane.b32.xlu0 %v1425, 72
    %v1684 = vpop.permute.xlu0 %1683
    %1685 = vrot.lane.b32.xlu0 %v1426, 72
    %v1686 = vpop.permute.xlu0 %1685
    %1687 = vrot.lane.b32.xlu0 %v1427, 72
    %v1688 = vpop.permute.xlu0 %1687
    %1689 = vrot.lane.b32.xlu0 %v1429, 72
    %v1690 = vpop.permute.xlu0 %1689
    %1691 = vrot.lane.b32.xlu0 %v1430, 72
    %v1692 = vpop.permute.xlu0 %1691
    %1693 = vrot.lane.b32.xlu0 %v1431, 72
    %v1694 = vpop.permute.xlu0 %1693
    %1695 = vrot.lane.b32.xlu0 %v1432, 72
    %v1696 = vpop.permute.xlu0 %1695
    %1697 = vrot.lane.b32.xlu0 %v1433, 72
    %v1698 = vpop.permute.xlu0 %1697
    %vm1699 = vcmask 588800
    %v1700 = vsel %vm1699, %v1680, %v1682
    %v1701 = vsel %vm1699, %v1682, %v1684
    %v1702 = vsel %vm1699, %v1684, %v1686
    %v1703 = vsel %vm1699, %v1686, %v1688
    %v1704 = vsel %vm1699, %v1690, %v1692
    %v1705 = vsel %vm1699, %v1692, %v1694
    %v1706 = vsel %vm1699, %v1694, %v1696
    %v1707 = vsel %vm1699, %v1696, %v1698
    %1718 = vrot.lane.b32.xlu0 %v1423, 64
    %v1719 = vpop.permute.xlu0 %1718
    %1720 = vrot.lane.b32.xlu0 %v1424, 64
    %v1721 = vpop.permute.xlu0 %1720
    %1722 = vrot.lane.b32.xlu0 %v1425, 64
    %v1723 = vpop.permute.xlu0 %1722
    %1724 = vrot.lane.b32.xlu0 %v1426, 64
    %v1725 = vpop.permute.xlu0 %1724
    %1726 = vrot.lane.b32.xlu0 %v1427, 64
    %v1727 = vpop.permute.xlu0 %1726
    %1728 = vrot.lane.b32.xlu0 %v1429, 64
    %v1729 = vpop.permute.xlu0 %1728
    %1730 = vrot.lane.b32.xlu0 %v1430, 64
    %v1731 = vpop.permute.xlu0 %1730
    %1732 = vrot.lane.b32.xlu0 %v1431, 64
    %v1733 = vpop.permute.xlu0 %1732
    %1734 = vrot.lane.b32.xlu0 %v1432, 64
    %v1735 = vpop.permute.xlu0 %1734
    %1736 = vrot.lane.b32.xlu0 %v1433, 64
    %v1737 = vpop.permute.xlu0 %1736
    %vm1738 = vcmask 523264
    %v1739 = vsel %vm1738, %v1719, %v1721
    %v1740 = vsel %vm1738, %v1721, %v1723
    %v1741 = vsel %vm1738, %v1723, %v1725
    %v1742 = vsel %vm1738, %v1725, %v1727
    %v1743 = vsel %vm1738, %v1729, %v1731
    %v1744 = vsel %vm1738, %v1731, %v1733
    %v1745 = vsel %vm1738, %v1733, %v1735
    %v1746 = vsel %vm1738, %v1735, %v1737
    %1759 = vrot.lane.b32.xlu0 %v1423, 56
    %v1760 = vpop.permute.xlu0 %1759
    %1761 = vrot.lane.b32.xlu0 %v1424, 56
    %v1762 = vpop.permute.xlu0 %1761
    %1763 = vrot.lane.b32.xlu0 %v1425, 56
    %v1764 = vpop.permute.xlu0 %1763
    %1765 = vrot.lane.b32.xlu0 %v1426, 56
    %v1766 = vpop.permute.xlu0 %1765
    %1767 = vrot.lane.b32.xlu0 %v1427, 56
    %v1768 = vpop.permute.xlu0 %1767
    %1769 = vrot.lane.b32.xlu0 %v1428, 56
    %v1770 = vpop.permute.xlu0 %1769
    %1771 = vrot.lane.b32.xlu0 %v1429, 56
    %v1772 = vpop.permute.xlu0 %1771
    %1773 = vrot.lane.b32.xlu0 %v1430, 56
    %v1774 = vpop.permute.xlu0 %1773
    %1775 = vrot.lane.b32.xlu0 %v1431, 56
    %v1776 = vpop.permute.xlu0 %1775
    %1777 = vrot.lane.b32.xlu0 %v1432, 56
    %v1778 = vpop.permute.xlu0 %1777
    %1779 = vrot.lane.b32.xlu0 %v1433, 56
    %v1780 = vpop.permute.xlu0 %1779
    %1781 = vrot.lane.b32.xlu0 %v1434, 56
    %v1782 = vpop.permute.xlu0 %1781
    %vm1783 = vcmask 457728
    %v1784 = vsel %vm1783, %v1760, %v1762
    %v1785 = vsel %vm1783, %v1762, %v1764
    %v1786 = vsel %vm1783, %v1764, %v1766
    %v1787 = vsel %vm1783, %v1766, %v1768
    %v1788 = vsel %vm1783, %v1768, %v1770
    %v1789 = vsel %vm1783, %v1772, %v1774
    %v1790 = vsel %vm1783, %v1774, %v1776
    %v1791 = vsel %vm1783, %v1776, %v1778
    %v1792 = vsel %vm1783, %v1778, %v1780
    %v1793 = vsel %vm1783, %v1780, %v1782
    %1804 = vrot.lane.b32.xlu0 %v1423, 48
    %v1805 = vpop.permute.xlu0 %1804
    %1806 = vrot.lane.b32.xlu0 %v1424, 48
    %v1807 = vpop.permute.xlu0 %1806
    %1808 = vrot.lane.b32.xlu0 %v1425, 48
    %v1809 = vpop.permute.xlu0 %1808
    %1810 = vrot.lane.b32.xlu0 %v1426, 48
    %v1811 = vpop.permute.xlu0 %1810
    %1812 = vrot.lane.b32.xlu0 %v1427, 48
    %v1813 = vpop.permute.xlu0 %1812
    %1814 = vrot.lane.b32.xlu0 %v1428, 48
    %v1815 = vpop.permute.xlu0 %1814
    %1816 = vrot.lane.b32.xlu0 %v1429, 48
    %v1817 = vpop.permute.xlu0 %1816
    %1818 = vrot.lane.b32.xlu0 %v1430, 48
    %v1819 = vpop.permute.xlu0 %1818
    %1820 = vrot.lane.b32.xlu0 %v1431, 48
    %v1821 = vpop.permute.xlu0 %1820
    %1822 = vrot.lane.b32.xlu0 %v1432, 48
    %v1823 = vpop.permute.xlu0 %1822
    %1824 = vrot.lane.b32.xlu0 %v1433, 48
    %v1825 = vpop.permute.xlu0 %1824
    %1826 = vrot.lane.b32.xlu0 %v1434, 48
    %v1827 = vpop.permute.xlu0 %1826
    %vm1828 = vcmask 392192
    %v1829 = vsel %vm1828, %v1805, %v1807
    %v1830 = vsel %vm1828, %v1807, %v1809
    %v1831 = vsel %vm1828, %v1809, %v1811
    %v1832 = vsel %vm1828, %v1811, %v1813
    %v1833 = vsel %vm1828, %v1813, %v1815
    %v1834 = vsel %vm1828, %v1817, %v1819
    %v1835 = vsel %vm1828, %v1819, %v1821
    %v1836 = vsel %vm1828, %v1821, %v1823
    %v1837 = vsel %vm1828, %v1823, %v1825
    %v1838 = vsel %vm1828, %v1825, %v1827
    %1849 = vrot.lane.b32.xlu0 %v1423, 40
    %v1850 = vpop.permute.xlu0 %1849
    %1851 = vrot.lane.b32.xlu0 %v1424, 40
    %v1852 = vpop.permute.xlu0 %1851
    %1853 = vrot.lane.b32.xlu0 %v1425, 40
    %v1854 = vpop.permute.xlu0 %1853
    %1855 = vrot.lane.b32.xlu0 %v1426, 40
    %v1856 = vpop.permute.xlu0 %1855
    %1857 = vrot.lane.b32.xlu0 %v1427, 40
    %v1858 = vpop.permute.xlu0 %1857
    %1859 = vrot.lane.b32.xlu0 %v1428, 40
    %v1860 = vpop.permute.xlu0 %1859
    %1861 = vrot.lane.b32.xlu0 %v1429, 40
    %v1862 = vpop.permute.xlu0 %1861
    %1863 = vrot.lane.b32.xlu0 %v1430, 40
    %v1864 = vpop.permute.xlu0 %1863
    %1865 = vrot.lane.b32.xlu0 %v1431, 40
    %v1866 = vpop.permute.xlu0 %1865
    %1867 = vrot.lane.b32.xlu0 %v1432, 40
    %v1868 = vpop.permute.xlu0 %1867
    %1869 = vrot.lane.b32.xlu0 %v1433, 40
    %v1870 = vpop.permute.xlu0 %1869
    %1871 = vrot.lane.b32.xlu0 %v1434, 40
    %v1872 = vpop.permute.xlu0 %1871
    %vm1873 = vcmask 326656
    %v1874 = vsel %vm1873, %v1850, %v1852
    %v1875 = vsel %vm1873, %v1852, %v1854
    %v1876 = vsel %vm1873, %v1854, %v1856
    %v1877 = vsel %vm1873, %v1856, %v1858
    %v1878 = vsel %vm1873, %v1858, %v1860
    %v1879 = vsel %vm1873, %v1862, %v1864
    %v1880 = vsel %vm1873, %v1864, %v1866
    %v1881 = vsel %vm1873, %v1866, %v1868
    %v1882 = vsel %vm1873, %v1868, %v1870
    %v1883 = vsel %vm1873, %v1870, %v1872
    %1894 = vrot.lane.b32.xlu0 %v1423, 32
    %v1895 = vpop.permute.xlu0 %1894
    %1896 = vrot.lane.b32.xlu0 %v1424, 32
    %v1897 = vpop.permute.xlu0 %1896
    %1898 = vrot.lane.b32.xlu0 %v1425, 32
    %v1899 = vpop.permute.xlu0 %1898
    %1900 = vrot.lane.b32.xlu0 %v1426, 32
    %v1901 = vpop.permute.xlu0 %1900
    %1902 = vrot.lane.b32.xlu0 %v1427, 32
    %v1903 = vpop.permute.xlu0 %1902
    %1904 = vrot.lane.b32.xlu0 %v1428, 32
    %v1905 = vpop.permute.xlu0 %1904
    %1906 = vrot.lane.b32.xlu0 %v1429, 32
    %v1907 = vpop.permute.xlu0 %1906
    %1908 = vrot.lane.b32.xlu0 %v1430, 32
    %v1909 = vpop.permute.xlu0 %1908
    %1910 = vrot.lane.b32.xlu0 %v1431, 32
    %v1911 = vpop.permute.xlu0 %1910
    %1912 = vrot.lane.b32.xlu0 %v1432, 32
    %v1913 = vpop.permute.xlu0 %1912
    %1914 = vrot.lane.b32.xlu0 %v1433, 32
    %v1915 = vpop.permute.xlu0 %1914
    %1916 = vrot.lane.b32.xlu0 %v1434, 32
    %v1917 = vpop.permute.xlu0 %1916
    %vm1918 = vcmask 261120
    %v1919 = vsel %vm1918, %v1895, %v1897
    %v1920 = vsel %vm1918, %v1897, %v1899
    %v1921 = vsel %vm1918, %v1899, %v1901
    %v1922 = vsel %vm1918, %v1901, %v1903
    %v1923 = vsel %vm1918, %v1903, %v1905
    %v1924 = vsel %vm1918, %v1907, %v1909
    %v1925 = vsel %vm1918, %v1909, %v1911
    %v1926 = vsel %vm1918, %v1911, %v1913
    %v1927 = vsel %vm1918, %v1913, %v1915
    %v1928 = vsel %vm1918, %v1915, %v1917
    %1939 = vrot.lane.b32.xlu0 %v1423, 24
    %v1940 = vpop.permute.xlu0 %1939
    %1941 = vrot.lane.b32.xlu0 %v1424, 24
    %v1942 = vpop.permute.xlu0 %1941
    %1943 = vrot.lane.b32.xlu0 %v1425, 24
    %v1944 = vpop.permute.xlu0 %1943
    %1945 = vrot.lane.b32.xlu0 %v1426, 24
    %v1946 = vpop.permute.xlu0 %1945
    %1947 = vrot.lane.b32.xlu0 %v1427, 24
    %v1948 = vpop.permute.xlu0 %1947
    %1949 = vrot.lane.b32.xlu0 %v1428, 24
    %v1950 = vpop.permute.xlu0 %1949
    %1951 = vrot.lane.b32.xlu0 %v1429, 24
    %v1952 = vpop.permute.xlu0 %1951
    %1953 = vrot.lane.b32.xlu0 %v1430, 24
    %v1954 = vpop.permute.xlu0 %1953
    %1955 = vrot.lane.b32.xlu0 %v1431, 24
    %v1956 = vpop.permute.xlu0 %1955
    %1957 = vrot.lane.b32.xlu0 %v1432, 24
    %v1958 = vpop.permute.xlu0 %1957
    %1959 = vrot.lane.b32.xlu0 %v1433, 24
    %v1960 = vpop.permute.xlu0 %1959
    %1961 = vrot.lane.b32.xlu0 %v1434, 24
    %v1962 = vpop.permute.xlu0 %1961
    %vm1963 = vcmask 195584
    %v1964 = vsel %vm1963, %v1940, %v1942
    %v1965 = vsel %vm1963, %v1942, %v1944
    %v1966 = vsel %vm1963, %v1944, %v1946
    %v1967 = vsel %vm1963, %v1946, %v1948
    %v1968 = vsel %vm1963, %v1948, %v1950
    %v1969 = vsel %vm1963, %v1952, %v1954
    %v1970 = vsel %vm1963, %v1954, %v1956
    %v1971 = vsel %vm1963, %v1956, %v1958
    %v1972 = vsel %vm1963, %v1958, %v1960
    %v1973 = vsel %vm1963, %v1960, %v1962
    %1984 = vrot.lane.b32.xlu0 %v1423, 16
    %v1985 = vpop.permute.xlu0 %1984
    %1986 = vrot.lane.b32.xlu0 %v1424, 16
    %v1987 = vpop.permute.xlu0 %1986
    %1988 = vrot.lane.b32.xlu0 %v1425, 16
    %v1989 = vpop.permute.xlu0 %1988
    %1990 = vrot.lane.b32.xlu0 %v1426, 16
    %v1991 = vpop.permute.xlu0 %1990
    %1992 = vrot.lane.b32.xlu0 %v1427, 16
    %v1993 = vpop.permute.xlu0 %1992
    %1994 = vrot.lane.b32.xlu0 %v1428, 16
    %v1995 = vpop.permute.xlu0 %1994
    %1996 = vrot.lane.b32.xlu0 %v1429, 16
    %v1997 = vpop.permute.xlu0 %1996
    %1998 = vrot.lane.b32.xlu0 %v1430, 16
    %v1999 = vpop.permute.xlu0 %1998
    %2000 = vrot.lane.b32.xlu0 %v1431, 16
    %v2001 = vpop.permute.xlu0 %2000
    %2002 = vrot.lane.b32.xlu0 %v1432, 16
    %v2003 = vpop.permute.xlu0 %2002
    %2004 = vrot.lane.b32.xlu0 %v1433, 16
    %v2005 = vpop.permute.xlu0 %2004
    %2006 = vrot.lane.b32.xlu0 %v1434, 16
    %v2007 = vpop.permute.xlu0 %2006
    %vm2008 = vcmask 130048
    %v2009 = vsel %vm2008, %v1985, %v1987
    %v2010 = vsel %vm2008, %v1987, %v1989
    %v2011 = vsel %vm2008, %v1989, %v1991
    %v2012 = vsel %vm2008, %v1991, %v1993
    %v2013 = vsel %vm2008, %v1993, %v1995
    %v2014 = vsel %vm2008, %v1997, %v1999
    %v2015 = vsel %vm2008, %v1999, %v2001
    %v2016 = vsel %vm2008, %v2001, %v2003
    %v2017 = vsel %vm2008, %v2003, %v2005
    %v2018 = vsel %vm2008, %v2005, %v2007
    %2029 = vrot.lane.b32.xlu0 %v1423, 8
    %v2030 = vpop.permute.xlu0 %2029
    %2031 = vrot.lane.b32.xlu0 %v1424, 8
    %v2032 = vpop.permute.xlu0 %2031
    %2033 = vrot.lane.b32.xlu0 %v1425, 8
    %v2034 = vpop.permute.xlu0 %2033
    %2035 = vrot.lane.b32.xlu0 %v1426, 8
    %v2036 = vpop.permute.xlu0 %2035
    %2037 = vrot.lane.b32.xlu0 %v1427, 8
    %v2038 = vpop.permute.xlu0 %2037
    %2039 = vrot.lane.b32.xlu0 %v1428, 8
    %v2040 = vpop.permute.xlu0 %2039
    %2041 = vrot.lane.b32.xlu0 %v1429, 8
    %v2042 = vpop.permute.xlu0 %2041
    %2043 = vrot.lane.b32.xlu0 %v1430, 8
    %v2044 = vpop.permute.xlu0 %2043
    %2045 = vrot.lane.b32.xlu0 %v1431, 8
    %v2046 = vpop.permute.xlu0 %2045
    %2047 = vrot.lane.b32.xlu0 %v1432, 8
    %v2048 = vpop.permute.xlu0 %2047
    %2049 = vrot.lane.b32.xlu0 %v1433, 8
    %v2050 = vpop.permute.xlu0 %2049
    %2051 = vrot.lane.b32.xlu0 %v1434, 8
    %v2052 = vpop.permute.xlu0 %2051
    %vm2053 = vcmask 64512
    %v2054 = vsel %vm2053, %v2030, %v2032
    %v2055 = vsel %vm2053, %v2032, %v2034
    %v2056 = vsel %vm2053, %v2034, %v2036
    %v2057 = vsel %vm2053, %v2036, %v2038
    %v2058 = vsel %vm2053, %v2038, %v2040
    %v2059 = vsel %vm2053, %v2042, %v2044
    %v2060 = vsel %vm2053, %v2044, %v2046
    %v2061 = vsel %vm2053, %v2046, %v2048
    %v2062 = vsel %vm2053, %v2048, %v2050
    %v2063 = vsel %vm2053, %v2050, %v2052
    %2075 = vset.pattern.permute.xlu0 0
    %2076 = vperm.xlu0 %2075, %v1411
    %v2077 = vpop.permute.xlu0 %2076
    %2080 = vset.pattern.permute.xlu0 0
    %2081 = vperm.xlu0 %2080, %v1412
    %v2082 = vpop.permute.xlu0 %2081
    %2085 = vset.pattern.permute.xlu0 0
    %2086 = vperm.xlu0 %2085, %v1413
    %v2087 = vpop.permute.xlu0 %2086
    %2090 = vset.pattern.permute.xlu0 0
    %2091 = vperm.xlu0 %2090, %v1414
    %v2092 = vpop.permute.xlu0 %2091
    %2094 = vmatprep.subr.bf16.mxu0 %v1424
    %2095 = vmatpush1.bf16.msra.mxu0 %v1423
    %2096 = vmatprep.subr.bf16.mxu0 %v1430
    %2097 = vmatpush1.bf16.msra.mxu0 %v1429
    %2098 = vmatprep.subr.bf16.mxu0 %v1467
    %2099 = vmatpush1.bf16.msra.mxu0 %v1466
    %2100 = vmatprep.subr.bf16.mxu0 %v1471
    %2101 = vmatpush1.bf16.msra.mxu0 %v1470
    %2102 = vmatprep.subr.bf16.mxu0 %v1506
    %2103 = vmatpush1.bf16.msra.mxu0 %v1505
    %2104 = vmatprep.subr.bf16.mxu0 %v1510
    %2105 = vmatpush1.bf16.msra.mxu0 %v1509
    %2106 = vmatprep.subr.bf16.mxu0 %v1545
    %2107 = vmatpush1.bf16.msra.mxu0 %v1544
    %2108 = vmatprep.subr.bf16.mxu0 %v1549
    %2109 = vmatpush1.bf16.msra.mxu0 %v1548
    %2110 = vmatprep.subr.bf16.mxu0 %v1584
    %2111 = vmatpush1.bf16.msra.mxu0 %v1583
    %2112 = vmatprep.subr.bf16.mxu0 %v1588
    %2113 = vmatpush1.bf16.msra.mxu0 %v1587
    %2114 = vmatprep.subr.bf16.mxu0 %v1623
    %2115 = vmatpush1.bf16.msra.mxu0 %v1622
    %2116 = vmatprep.subr.bf16.mxu0 %v1627
    %2117 = vmatpush1.bf16.msra.mxu0 %v1626
    %2118 = vmatprep.subr.bf16.mxu0 %v1662
    %2119 = vmatpush1.bf16.msra.mxu0 %v1661
    %2120 = vmatprep.subr.bf16.mxu0 %v1666
    %2121 = vmatpush1.bf16.msra.mxu0 %v1665
    %2122 = vmatprep.subr.bf16.mxu0 %v1701
    %2123 = vmatpush1.bf16.msra.mxu0 %v1700
    %2124 = vmatprep.subr.bf16.mxu0 %v1705
    %2125 = vmatpush1.bf16.msra.mxu0 %v1704
    %2126 = vmatprep.mubr.bf16.mxu0 %v1416
    %2127 = vmatmul.mubr.bf16.gmra.mrb[0].mxu0 %v1415
    %v2128 = vpop.f32.mrb[0].mxu0
    %v2129 = vadd.f32 %v2077, %v2128
    %v2130 = vpop.f32.mrb[0].mxu0
    %v2131 = vadd.f32 %v2077, %v2130
    %v2132 = vpop.f32.mrb[0].mxu0
    %v2133 = vadd.f32 %v2082, %v2132
    %v2134 = vpop.f32.mrb[0].mxu0
    %v2135 = vadd.f32 %v2082, %v2134
    %2136 = vmatprep.mubr.bf16.mxu0 %v1420
    %2137 = vmatmul.mubr.bf16.gmra.mrb[0].mxu0 %v1419
    %v2138 = vpop.f32.mrb[0].mxu0
    %v2139 = vadd.f32 %v2087, %v2138
    %v2140 = vpop.f32.mrb[0].mxu0
    %v2141 = vadd.f32 %v2087, %v2140
    %v2142 = vpop.f32.mrb[0].mxu0
    %v2143 = vadd.f32 %v2092, %v2142
    %v2144 = vpop.f32.mrb[0].mxu0
    %v2145 = vadd.f32 %v2092, %v2144
    %2146 = vdwg.mxu0
    %2147 = vmatprep.subr.bf16.mxu0 %v1740
    %2148 = vmatpush1.bf16.msra.mxu0 %v1739
    %2149 = vmatprep.subr.bf16.mxu0 %v1744
    %2150 = vmatpush1.bf16.msra.mxu0 %v1743
    %2151 = vmatprep.subr.bf16.mxu0 %v1785
    %2152 = vmatpush1.bf16.msra.mxu0 %v1784
    %2153 = vmatprep.subr.bf16.mxu0 %v1790
    %2154 = vmatpush1.bf16.msra.mxu0 %v1789
    %2155 = vmatprep.subr.bf16.mxu0 %v1830
    %2156 = vmatpush1.bf16.msra.mxu0 %v1829
    %2157 = vmatprep.subr.bf16.mxu0 %v1835
    %2158 = vmatpush1.bf16.msra.mxu0 %v1834
    %2159 = vmatprep.subr.bf16.mxu0 %v1875
    %2160 = vmatpush1.bf16.msra.mxu0 %v1874
    %2161 = vmatprep.subr.bf16.mxu0 %v1880
    %2162 = vmatpush1.bf16.msra.mxu0 %v1879
    %2163 = vmatprep.subr.bf16.mxu0 %v1920
    %2164 = vmatpush1.bf16.msra.mxu0 %v1919
    %2165 = vmatprep.subr.bf16.mxu0 %v1925
    %2166 = vmatpush1.bf16.msra.mxu0 %v1924
    %2167 = vmatprep.subr.bf16.mxu0 %v1965
    %2168 = vmatpush1.bf16.msra.mxu0 %v1964
    %2169 = vmatprep.subr.bf16.mxu0 %v1970
    %2170 = vmatpush1.bf16.msra.mxu0 %v1969
    %2171 = vmatprep.subr.bf16.mxu0 %v2010
    %2172 = vmatpush1.bf16.msra.mxu0 %v2009
    %2173 = vmatprep.subr.bf16.mxu0 %v2015
    %2174 = vmatpush1.bf16.msra.mxu0 %v2014
    %2175 = vmatprep.subr.bf16.mxu0 %v2055
    %2176 = vmatpush1.bf16.msra.mxu0 %v2054
    %2177 = vmatprep.subr.bf16.mxu0 %v2060
    %2178 = vmatpush1.bf16.msra.mxu0 %v2059
    %2179 = vmatprep.mubr.bf16.mxu0 %v1418
    %2180 = vmatmul.mubr.bf16.gmra.mrb[0].mxu0 %v1417
    %v2181 = vpop.f32.mrb[0].mxu0
    %v2182 = vadd.f32 %v2129, %v2181
    %v2183 = vpop.f32.mrb[0].mxu0
    %v2184 = vadd.f32 %v2131, %v2183
    %v2185 = vpop.f32.mrb[0].mxu0
    %v2186 = vadd.f32 %v2133, %v2185
    %v2187 = vpop.f32.mrb[0].mxu0
    %v2188 = vadd.f32 %v2135, %v2187
    %2189 = vmatprep.mubr.bf16.mxu0 %v1422
    %2190 = vmatmul.mubr.bf16.gmra.mrb[0].mxu0 %v1421
    %v2191 = vpop.f32.mrb[0].mxu0
    %v2192 = vadd.f32 %v2139, %v2191
    %v2193 = vpop.f32.mrb[0].mxu0
    %v2194 = vadd.f32 %v2141, %v2193
    %v2195 = vpop.f32.mrb[0].mxu0
    %v2196 = vadd.f32 %v2143, %v2195
    %v2197 = vpop.f32.mrb[0].mxu0
    %v2198 = vadd.f32 %v2145, %v2197
    %2199 = vdwg.mxu0
    %2200 = vmatprep.subr.bf16.mxu0 %v1426
    %2201 = vmatpush1.bf16.msra.mxu0 %v1425
    %2202 = vmatprep.subr.bf16.mxu0 %v1432
    %2203 = vmatpush1.bf16.msra.mxu0 %v1431
    %2204 = vmatprep.subr.bf16.mxu0 %v1469
    %2205 = vmatpush1.bf16.msra.mxu0 %v1468
    %2206 = vmatprep.subr.bf16.mxu0 %v1473
    %2207 = vmatpush1.bf16.msra.mxu0 %v1472
    %2208 = vmatprep.subr.bf16.mxu0 %v1508
    %2209 = vmatpush1.bf16.msra.mxu0 %v1507
    %2210 = vmatprep.subr.bf16.mxu0 %v1512
    %2211 = vmatpush1.bf16.msra.mxu0 %v1511
    %2212 = vmatprep.subr.bf16.mxu0 %v1547
    %2213 = vmatpush1.bf16.msra.mxu0 %v1546
    %2214 = vmatprep.subr.bf16.mxu0 %v1551
    %2215 = vmatpush1.bf16.msra.mxu0 %v1550
    %2216 = vmatprep.subr.bf16.mxu0 %v1586
    %2217 = vmatpush1.bf16.msra.mxu0 %v1585
    %2218 = vmatprep.subr.bf16.mxu0 %v1590
    %2219 = vmatpush1.bf16.msra.mxu0 %v1589
    %2220 = vmatprep.subr.bf16.mxu0 %v1625
    %2221 = vmatpush1.bf16.msra.mxu0 %v1624
    %2222 = vmatprep.subr.bf16.mxu0 %v1629
    %2223 = vmatpush1.bf16.msra.mxu0 %v1628
    %2224 = vmatprep.subr.bf16.mxu0 %v1664
    %2225 = vmatpush1.bf16.msra.mxu0 %v1663
    %2226 = vmatprep.subr.bf16.mxu0 %v1668
    %2227 = vmatpush1.bf16.msra.mxu0 %v1667
    %2228 = vmatprep.subr.bf16.mxu0 %v1703
    %2229 = vmatpush1.bf16.msra.mxu0 %v1702
    %2230 = vmatprep.subr.bf16.mxu0 %v1707
    %2231 = vmatpush1.bf16.msra.mxu0 %v1706
    %2232 = vmatprep.mubr.bf16.mxu0 %v1416
    %2233 = vmatmul.mubr.bf16.gmra.mrb[0].mxu0 %v1415
    %v2234 = vpop.f32.mrb[0].mxu0
    %v2235 = vadd.f32 %v2077, %v2234
    %v2236 = vpop.f32.mrb[0].mxu0
    %v2237 = vadd.f32 %v2077, %v2236
    %v2238 = vpop.f32.mrb[0].mxu0
    %v2239 = vadd.f32 %v2082, %v2238
    %v2240 = vpop.f32.mrb[0].mxu0
    %v2241 = vadd.f32 %v2082, %v2240
    %2242 = vmatprep.mubr.bf16.mxu0 %v1420
    %2243 = vmatmul.mubr.bf16.gmra.mrb[0].mxu0 %v1419
    %v2244 = vpop.f32.mrb[0].mxu0
    %v2245 = vadd.f32 %v2087, %v2244
    %v2246 = vpop.f32.mrb[0].mxu0
    %v2247 = vadd.f32 %v2087, %v2246
    %v2248 = vpop.f32.mrb[0].mxu0
    %v2249 = vadd.f32 %v2092, %v2248
    %v2250 = vpop.f32.mrb[0].mxu0
    %v2251 = vadd.f32 %v2092, %v2250
    %2252 = vdwg.mxu0
    %2253 = vmatprep.subr.bf16.mxu0 %v1742
    %2254 = vmatpush1.bf16.msra.mxu0 %v1741
    %2255 = vmatprep.subr.bf16.mxu0 %v1746
    %2256 = vmatpush1.bf16.msra.mxu0 %v1745
    %2257 = vmatprep.subr.bf16.mxu0 %v1787
    %2258 = vmatpush1.bf16.msra.mxu0 %v1786
    %2259 = vmatprep.subr.bf16.mxu0 %v1792
    %2260 = vmatpush1.bf16.msra.mxu0 %v1791
    %2261 = vmatprep.subr.bf16.mxu0 %v1832
    %2262 = vmatpush1.bf16.msra.mxu0 %v1831
    %2263 = vmatprep.subr.bf16.mxu0 %v1837
    %2264 = vmatpush1.bf16.msra.mxu0 %v1836
    %2265 = vmatprep.subr.bf16.mxu0 %v1877
    %2266 = vmatpush1.bf16.msra.mxu0 %v1876
    %2267 = vmatprep.subr.bf16.mxu0 %v1882
    %2268 = vmatpush1.bf16.msra.mxu0 %v1881
    %2269 = vmatprep.subr.bf16.mxu0 %v1922
    %2270 = vmatpush1.bf16.msra.mxu0 %v1921
    %2271 = vmatprep.subr.bf16.mxu0 %v1927
    %2272 = vmatpush1.bf16.msra.mxu0 %v1926
    %2273 = vmatprep.subr.bf16.mxu0 %v1967
    %2274 = vmatpush1.bf16.msra.mxu0 %v1966
    %2275 = vmatprep.subr.bf16.mxu0 %v1972
    %2276 = vmatpush1.bf16.msra.mxu0 %v1971
    %2277 = vmatprep.subr.bf16.mxu0 %v2012
    %2278 = vmatpush1.bf16.msra.mxu0 %v2011
    %2279 = vmatprep.subr.bf16.mxu0 %v2017
    %2280 = vmatpush1.bf16.msra.mxu0 %v2016
    %2281 = vmatprep.subr.bf16.mxu0 %v2057
    %2282 = vmatpush1.bf16.msra.mxu0 %v2056
    %2283 = vmatprep.subr.bf16.mxu0 %v2062
    %2284 = vmatpush1.bf16.msra.mxu0 %v2061
    %2285 = vmatprep.mubr.bf16.mxu0 %v1418
    %2286 = vmatmul.mubr.bf16.gmra.mrb[0].mxu0 %v1417
    %v2287 = vpop.f32.mrb[0].mxu0
    %v2288 = vadd.f32 %v2235, %v2287
    %v2289 = vpop.f32.mrb[0].mxu0
    %v2290 = vadd.f32 %v2237, %v2289
    %v2291 = vpop.f32.mrb[0].mxu0
    %v2292 = vadd.f32 %v2239, %v2291
    %v2293 = vpop.f32.mrb[0].mxu0
    %v2294 = vadd.f32 %v2241, %v2293
    %2295 = vmatprep.mubr.bf16.mxu0 %v1422
    %2296 = vmatmul.mubr.bf16.gmra.mrb[0].mxu0 %v1421
    %v2297 = vpop.f32.mrb[0].mxu0
    %v2298 = vadd.f32 %v2245, %v2297
    %v2299 = vpop.f32.mrb[0].mxu0
    %v2300 = vadd.f32 %v2247, %v2299
    %v2301 = vpop.f32.mrb[0].mxu0
    %v2302 = vadd.f32 %v2249, %v2301
    %v2303 = vpop.f32.mrb[0].mxu0
    %v2304 = vadd.f32 %v2251, %v2303
    %2305 = vdwg.mxu0
    %2306 = vmatprep.subr.bf16.mxu0 0
    %2307 = vmatpush1.bf16.msra.mxu0 %v1427
    %2308 = vmatprep.subr.bf16.mxu0 0
    %2309 = vmatpush1.bf16.msra.mxu0 %v1433
    %2310 = vmatprep.subr.bf16.mxu0 0
    %2311 = vmatpush1.bf16.msra.mxu0 %v1454
    %2312 = vmatprep.subr.bf16.mxu0 0
    %2313 = vmatpush1.bf16.msra.mxu0 %v1464
    %2314 = vmatprep.subr.bf16.mxu0 0
    %2315 = vmatpush1.bf16.msra.mxu0 %v1493
    %2316 = vmatprep.subr.bf16.mxu0 0
    %2317 = vmatpush1.bf16.msra.mxu0 %v1503
    %2318 = vmatprep.subr.bf16.mxu0 0
    %2319 = vmatpush1.bf16.msra.mxu0 %v1532
    %2320 = vmatprep.subr.bf16.mxu0 0
    %2321 = vmatpush1.bf16.msra.mxu0 %v1542
    %2322 = vmatprep.subr.bf16.mxu0 0
    %2323 = vmatpush1.bf16.msra.mxu0 %v1571
    %2324 = vmatprep.subr.bf16.mxu0 0
    %2325 = vmatpush1.bf16.msra.mxu0 %v1581
    %2326 = vmatprep.subr.bf16.mxu0 0
    %2327 = vmatpush1.bf16.msra.mxu0 %v1610
    %2328 = vmatprep.subr.bf16.mxu0 0
    %2329 = vmatpush1.bf16.msra.mxu0 %v1620
    %2330 = vmatprep.subr.bf16.mxu0 0
    %2331 = vmatpush1.bf16.msra.mxu0 %v1649
    %2332 = vmatprep.subr.bf16.mxu0 0
    %2333 = vmatpush1.bf16.msra.mxu0 %v1659
    %2334 = vmatprep.subr.bf16.mxu0 0
    %2335 = vmatpush1.bf16.msra.mxu0 %v1688
    %2336 = vmatprep.subr.bf16.mxu0 0
    %2337 = vmatpush1.bf16.msra.mxu0 %v1698
    %2338 = vmatprep.mubr.bf16.mxu0 %v1416
    %2339 = vmatmul.mubr.bf16.gmra.mrb[0].mxu0 %v1415
    %v2340 = vpop.f32.mrb[0].mxu0
    %v2341 = vadd.f32 %v2077, %v2340
    %v2342 = vpop.f32.mrb[0].mxu0
    %v2343 = vpop.f32.mrb[0].mxu0
    %v2344 = vadd.f32 %v2082, %v2343
    %v2345 = vpop.f32.mrb[0].mxu0
    %2346 = vmatprep.mubr.bf16.mxu0 %v1420
    %2347 = vmatmul.mubr.bf16.gmra.mrb[0].mxu0 %v1419
    %v2348 = vpop.f32.mrb[0].mxu0
    %v2349 = vadd.f32 %v2087, %v2348
    %v2350 = vpop.f32.mrb[0].mxu0
    %v2351 = vpop.f32.mrb[0].mxu0
    %v2352 = vadd.f32 %v2092, %v2351
    %v2353 = vpop.f32.mrb[0].mxu0
    %2354 = vdwg.mxu0
    %2355 = vmatprep.subr.bf16.mxu0 0
    %2356 = vmatpush1.bf16.msra.mxu0 %v1727
    %2357 = vmatprep.subr.bf16.mxu0 0
    %2358 = vmatpush1.bf16.msra.mxu0 %v1737
    %2359 = vmatprep.subr.bf16.mxu0 0
    %2360 = vmatpush1.bf16.msra.mxu0 %v1788
    %2361 = vmatprep.subr.bf16.mxu0 0
    %2362 = vmatpush1.bf16.msra.mxu0 %v1793
    %2363 = vmatprep.subr.bf16.mxu0 0
    %2364 = vmatpush1.bf16.msra.mxu0 %v1833
    %2365 = vmatprep.subr.bf16.mxu0 0
    %2366 = vmatpush1.bf16.msra.mxu0 %v1838
    %2367 = vmatprep.subr.bf16.mxu0 0
    %2368 = vmatpush1.bf16.msra.mxu0 %v1878
    %2369 = vmatprep.subr.bf16.mxu0 0
    %2370 = vmatpush1.bf16.msra.mxu0 %v1883
    %2371 = vmatprep.subr.bf16.mxu0 0
    %2372 = vmatpush1.bf16.msra.mxu0 %v1923
    %2373 = vmatprep.subr.bf16.mxu0 0
    %2374 = vmatpush1.bf16.msra.mxu0 %v1928
    %2375 = vmatprep.subr.bf16.mxu0 0
    %2376 = vmatpush1.bf16.msra.mxu0 %v1968
    %2377 = vmatprep.subr.bf16.mxu0 0
    %2378 = vmatpush1.bf16.msra.mxu0 %v1973
    %2379 = vmatprep.subr.bf16.mxu0 0
    %2380 = vmatpush1.bf16.msra.mxu0 %v2013
    %2381 = vmatprep.subr.bf16.mxu0 0
    %2382 = vmatpush1.bf16.msra.mxu0 %v2018
    %2383 = vmatprep.subr.bf16.mxu0 0
    %2384 = vmatpush1.bf16.msra.mxu0 %v2058
    %2385 = vmatprep.subr.bf16.mxu0 0
    %2386 = vmatpush1.bf16.msra.mxu0 %v2063
    %2387 = vmatprep.mubr.bf16.mxu0 %v1418
    %2388 = vmatmul.mubr.bf16.gmra.mrb[0].mxu0 %v1417
    %v2389 = vpop.f32.mrb[0].mxu0
    %v2390 = vadd.f32 %v2341, %v2389
    %v2391 = vpop.f32.mrb[0].mxu0
    %v2392 = vpop.f32.mrb[0].mxu0
    %v2393 = vadd.f32 %v2344, %v2392
    %v2394 = vpop.f32.mrb[0].mxu0
    %2395 = vmatprep.mubr.bf16.mxu0 %v1422
    %2396 = vmatmul.mubr.bf16.gmra.mrb[0].mxu0 %v1421
    %v2397 = vpop.f32.mrb[0].mxu0
    %v2398 = vadd.f32 %v2349, %v2397
    %v2399 = vpop.f32.mrb[0].mxu0
    %v2400 = vpop.f32.mrb[0].mxu0
    %v2401 = vadd.f32 %v2352, %v2400
    %v2402 = vpop.f32.mrb[0].mxu0
    %2403 = vdwg.mxu0
    %v2404 = vpack.c.bf16 %v840, %v836
    %v2405 = vpack.c.bf16 %v842, %v838
    %v2406 = vpack.c.bf16 %v893, %v889
    %v2407 = vpack.c.bf16 %v895, %v891
    %v2408 = vpack.c.bf16 %v946, %v942
    %v2409 = vpack.c.bf16 %v948, %v944
    %v2410 = vpack.c.bf16 %v850, %v846
    %v2411 = vpack.c.bf16 %v852, %v848
    %v2412 = vpack.c.bf16 %v903, %v899
    %v2413 = vpack.c.bf16 %v905, %v901
    %v2414 = vpack.c.bf16 %v956, %v952
    %v2415 = vpack.c.bf16 %v958, %v954
    %2426 = vrot.lane.b32.xlu0 %v2404, 120
    %v2427 = vpop.permute.xlu0 %2426
    %2428 = vrot.lane.b32.xlu0 %v2405, 120
    %v2429 = vpop.permute.xlu0 %2428
    %2430 = vrot.lane.b32.xlu0 %v2406, 120
    %v2431 = vpop.permute.xlu0 %2430
    %2432 = vrot.lane.b32.xlu0 %v2407, 120
    %v2433 = vpop.permute.xlu0 %2432
    %2434 = vrot.lane.b32.xlu0 %v2408, 120
    %v2435 = vpop.permute.xlu0 %2434
    %2436 = vrot.lane.b32.xlu0 %v2410, 120
    %v2437 = vpop.permute.xlu0 %2436
    %2438 = vrot.lane.b32.xlu0 %v2411, 120
    %v2439 = vpop.permute.xlu0 %2438
    %2440 = vrot.lane.b32.xlu0 %v2412, 120
    %v2441 = vpop.permute.xlu0 %2440
    %2442 = vrot.lane.b32.xlu0 %v2413, 120
    %v2443 = vpop.permute.xlu0 %2442
    %2444 = vrot.lane.b32.xlu0 %v2414, 120
    %v2445 = vpop.permute.xlu0 %2444
    %v2446 = vsel %vm1465, %v2427, %v2429
    %v2447 = vsel %vm1465, %v2429, %v2431
    %v2448 = vsel %vm1465, %v2431, %v2433
    %v2449 = vsel %vm1465, %v2433, %v2435
    %v2450 = vsel %vm1465, %v2437, %v2439
    %v2451 = vsel %vm1465, %v2439, %v2441
    %v2452 = vsel %vm1465, %v2441, %v2443
    %v2453 = vsel %vm1465, %v2443, %v2445
    %2464 = vrot.lane.b32.xlu0 %v2404, 112
    %v2465 = vpop.permute.xlu0 %2464
    %2466 = vrot.lane.b32.xlu0 %v2405, 112
    %v2467 = vpop.permute.xlu0 %2466
    %2468 = vrot.lane.b32.xlu0 %v2406, 112
    %v2469 = vpop.permute.xlu0 %2468
    %2470 = vrot.lane.b32.xlu0 %v2407, 112
    %v2471 = vpop.permute.xlu0 %2470
    %2472 = vrot.lane.b32.xlu0 %v2408, 112
    %v2473 = vpop.permute.xlu0 %2472
    %2474 = vrot.lane.b32.xlu0 %v2410, 112
    %v2475 = vpop.permute.xlu0 %2474
    %2476 = vrot.lane.b32.xlu0 %v2411, 112
    %v2477 = vpop.permute.xlu0 %2476
    %2478 = vrot.lane.b32.xlu0 %v2412, 112
    %v2479 = vpop.permute.xlu0 %2478
    %2480 = vrot.lane.b32.xlu0 %v2413, 112
    %v2481 = vpop.permute.xlu0 %2480
    %2482 = vrot.lane.b32.xlu0 %v2414, 112
    %v2483 = vpop.permute.xlu0 %2482
    %v2484 = vsel %vm1504, %v2465, %v2467
    %v2485 = vsel %vm1504, %v2467, %v2469
    %v2486 = vsel %vm1504, %v2469, %v2471
    %v2487 = vsel %vm1504, %v2471, %v2473
    %v2488 = vsel %vm1504, %v2475, %v2477
    %v2489 = vsel %vm1504, %v2477, %v2479
    %v2490 = vsel %vm1504, %v2479, %v2481
    %v2491 = vsel %vm1504, %v2481, %v2483
    %2502 = vrot.lane.b32.xlu0 %v2404, 104
    %v2503 = vpop.permute.xlu0 %2502
    %2504 = vrot.lane.b32.xlu0 %v2405, 104
    %v2505 = vpop.permute.xlu0 %2504
    %2506 = vrot.lane.b32.xlu0 %v2406, 104
    %v2507 = vpop.permute.xlu0 %2506
    %2508 = vrot.lane.b32.xlu0 %v2407, 104
    %v2509 = vpop.permute.xlu0 %2508
    %2510 = vrot.lane.b32.xlu0 %v2408, 104
    %v2511 = vpop.permute.xlu0 %2510
    %2512 = vrot.lane.b32.xlu0 %v2410, 104
    %v2513 = vpop.permute.xlu0 %2512
    %2514 = vrot.lane.b32.xlu0 %v2411, 104
    %v2515 = vpop.permute.xlu0 %2514
    %2516 = vrot.lane.b32.xlu0 %v2412, 104
    %v2517 = vpop.permute.xlu0 %2516
    %2518 = vrot.lane.b32.xlu0 %v2413, 104
    %v2519 = vpop.permute.xlu0 %2518
    %2520 = vrot.lane.b32.xlu0 %v2414, 104
    %v2521 = vpop.permute.xlu0 %2520
    %v2522 = vsel %vm1543, %v2503, %v2505
    %v2523 = vsel %vm1543, %v2505, %v2507
    %v2524 = vsel %vm1543, %v2507, %v2509
    %v2525 = vsel %vm1543, %v2509, %v2511
    %v2526 = vsel %vm1543, %v2513, %v2515
    %v2527 = vsel %vm1543, %v2515, %v2517
    %v2528 = vsel %vm1543, %v2517, %v2519
    %v2529 = vsel %vm1543, %v2519, %v2521
    %2540 = vrot.lane.b32.xlu0 %v2404, 96
    %v2541 = vpop.permute.xlu0 %2540
    %2542 = vrot.lane.b32.xlu0 %v2405, 96
    %v2543 = vpop.permute.xlu0 %2542
    %2544 = vrot.lane.b32.xlu0 %v2406, 96
    %v2545 = vpop.permute.xlu0 %2544
    %2546 = vrot.lane.b32.xlu0 %v2407, 96
    %v2547 = vpop.permute.xlu0 %2546
    %2548 = vrot.lane.b32.xlu0 %v2408, 96
    %v2549 = vpop.permute.xlu0 %2548
    %2550 = vrot.lane.b32.xlu0 %v2410, 96
    %v2551 = vpop.permute.xlu0 %2550
    %2552 = vrot.lane.b32.xlu0 %v2411, 96
    %v2553 = vpop.permute.xlu0 %2552
    %2554 = vrot.lane.b32.xlu0 %v2412, 96
    %v2555 = vpop.permute.xlu0 %2554
    %2556 = vrot.lane.b32.xlu0 %v2413, 96
    %v2557 = vpop.permute.xlu0 %2556
    %2558 = vrot.lane.b32.xlu0 %v2414, 96
    %v2559 = vpop.permute.xlu0 %2558
    %v2560 = vsel %vm1582, %v2541, %v2543
    %v2561 = vsel %vm1582, %v2543, %v2545
    %v2562 = vsel %vm1582, %v2545, %v2547
    %v2563 = vsel %vm1582, %v2547, %v2549
    %v2564 = vsel %vm1582, %v2551, %v2553
    %v2565 = vsel %vm1582, %v2553, %v2555
    %v2566 = vsel %vm1582, %v2555, %v2557
    %v2567 = vsel %vm1582, %v2557, %v2559
    %2578 = vrot.lane.b32.xlu0 %v2404, 88
    %v2579 = vpop.permute.xlu0 %2578
    %2580 = vrot.lane.b32.xlu0 %v2405, 88
    %v2581 = vpop.permute.xlu0 %2580
    %2582 = vrot.lane.b32.xlu0 %v2406, 88
    %v2583 = vpop.permute.xlu0 %2582
    %2584 = vrot.lane.b32.xlu0 %v2407, 88
    %v2585 = vpop.permute.xlu0 %2584
    %2586 = vrot.lane.b32.xlu0 %v2408, 88
    %v2587 = vpop.permute.xlu0 %2586
    %2588 = vrot.lane.b32.xlu0 %v2410, 88
    %v2589 = vpop.permute.xlu0 %2588
    %2590 = vrot.lane.b32.xlu0 %v2411, 88
    %v2591 = vpop.permute.xlu0 %2590
    %2592 = vrot.lane.b32.xlu0 %v2412, 88
    %v2593 = vpop.permute.xlu0 %2592
    %2594 = vrot.lane.b32.xlu0 %v2413, 88
    %v2595 = vpop.permute.xlu0 %2594
    %2596 = vrot.lane.b32.xlu0 %v2414, 88
    %v2597 = vpop.permute.xlu0 %2596
    %v2598 = vsel %vm1621, %v2579, %v2581
    %v2599 = vsel %vm1621, %v2581, %v2583
    %v2600 = vsel %vm1621, %v2583, %v2585
    %v2601 = vsel %vm1621, %v2585, %v2587
    %v2602 = vsel %vm1621, %v2589, %v2591
    %v2603 = vsel %vm1621, %v2591, %v2593
    %v2604 = vsel %vm1621, %v2593, %v2595
    %v2605 = vsel %vm1621, %v2595, %v2597
    %2616 = vrot.lane.b32.xlu0 %v2404, 80
    %v2617 = vpop.permute.xlu0 %2616
    %2618 = vrot.lane.b32.xlu0 %v2405, 80
    %v2619 = vpop.permute.xlu0 %2618
    %2620 = vrot.lane.b32.xlu0 %v2406, 80
    %v2621 = vpop.permute.xlu0 %2620
    %2622 = vrot.lane.b32.xlu0 %v2407, 80
    %v2623 = vpop.permute.xlu0 %2622
    %2624 = vrot.lane.b32.xlu0 %v2408, 80
    %v2625 = vpop.permute.xlu0 %2624
    %2626 = vrot.lane.b32.xlu0 %v2410, 80
    %v2627 = vpop.permute.xlu0 %2626
    %2628 = vrot.lane.b32.xlu0 %v2411, 80
    %v2629 = vpop.permute.xlu0 %2628
    %2630 = vrot.lane.b32.xlu0 %v2412, 80
    %v2631 = vpop.permute.xlu0 %2630
    %2632 = vrot.lane.b32.xlu0 %v2413, 80
    %v2633 = vpop.permute.xlu0 %2632
    %2634 = vrot.lane.b32.xlu0 %v2414, 80
    %v2635 = vpop.permute.xlu0 %2634
    %v2636 = vsel %vm1660, %v2617, %v2619
    %v2637 = vsel %vm1660, %v2619, %v2621
    %v2638 = vsel %vm1660, %v2621, %v2623
    %v2639 = vsel %vm1660, %v2623, %v2625
    %v2640 = vsel %vm1660, %v2627, %v2629
    %v2641 = vsel %vm1660, %v2629, %v2631
    %v2642 = vsel %vm1660, %v2631, %v2633
    %v2643 = vsel %vm1660, %v2633, %v2635
    %2654 = vrot.lane.b32.xlu0 %v2404, 72
    %v2655 = vpop.permute.xlu0 %2654
    %2656 = vrot.lane.b32.xlu0 %v2405, 72
    %v2657 = vpop.permute.xlu0 %2656
    %2658 = vrot.lane.b32.xlu0 %v2406, 72
    %v2659 = vpop.permute.xlu0 %2658
    %2660 = vrot.lane.b32.xlu0 %v2407, 72
    %v2661 = vpop.permute.xlu0 %2660
    %2662 = vrot.lane.b32.xlu0 %v2408, 72
    %v2663 = vpop.permute.xlu0 %2662
    %2664 = vrot.lane.b32.xlu0 %v2410, 72
    %v2665 = vpop.permute.xlu0 %2664
    %2666 = vrot.lane.b32.xlu0 %v2411, 72
    %v2667 = vpop.permute.xlu0 %2666
    %2668 = vrot.lane.b32.xlu0 %v2412, 72
    %v2669 = vpop.permute.xlu0 %2668
    %2670 = vrot.lane.b32.xlu0 %v2413, 72
    %v2671 = vpop.permute.xlu0 %2670
    %2672 = vrot.lane.b32.xlu0 %v2414, 72
    %v2673 = vpop.permute.xlu0 %2672
    %v2674 = vsel %vm1699, %v2655, %v2657
    %v2675 = vsel %vm1699, %v2657, %v2659
    %v2676 = vsel %vm1699, %v2659, %v2661
    %v2677 = vsel %vm1699, %v2661, %v2663
    %v2678 = vsel %vm1699, %v2665, %v2667
    %v2679 = vsel %vm1699, %v2667, %v2669
    %v2680 = vsel %vm1699, %v2669, %v2671
    %v2681 = vsel %vm1699, %v2671, %v2673
    %2692 = vrot.lane.b32.xlu0 %v2404, 64
    %v2693 = vpop.permute.xlu0 %2692
    %2694 = vrot.lane.b32.xlu0 %v2405, 64
    %v2695 = vpop.permute.xlu0 %2694
    %2696 = vrot.lane.b32.xlu0 %v2406, 64
    %v2697 = vpop.permute.xlu0 %2696
    %2698 = vrot.lane.b32.xlu0 %v2407, 64
    %v2699 = vpop.permute.xlu0 %2698
    %2700 = vrot.lane.b32.xlu0 %v2408, 64
    %v2701 = vpop.permute.xlu0 %2700
    %2702 = vrot.lane.b32.xlu0 %v2410, 64
    %v2703 = vpop.permute.xlu0 %2702
    %2704 = vrot.lane.b32.xlu0 %v2411, 64
    %v2705 = vpop.permute.xlu0 %2704
    %2706 = vrot.lane.b32.xlu0 %v2412, 64
    %v2707 = vpop.permute.xlu0 %2706
    %2708 = vrot.lane.b32.xlu0 %v2413, 64
    %v2709 = vpop.permute.xlu0 %2708
    %2710 = vrot.lane.b32.xlu0 %v2414, 64
    %v2711 = vpop.permute.xlu0 %2710
    %v2712 = vsel %vm1738, %v2693, %v2695
    %v2713 = vsel %vm1738, %v2695, %v2697
    %v2714 = vsel %vm1738, %v2697, %v2699
    %v2715 = vsel %vm1738, %v2699, %v2701
    %v2716 = vsel %vm1738, %v2703, %v2705
    %v2717 = vsel %vm1738, %v2705, %v2707
    %v2718 = vsel %vm1738, %v2707, %v2709
    %v2719 = vsel %vm1738, %v2709, %v2711
    %2732 = vrot.lane.b32.xlu0 %v2404, 56
    %v2733 = vpop.permute.xlu0 %2732
    %2734 = vrot.lane.b32.xlu0 %v2405, 56
    %v2735 = vpop.permute.xlu0 %2734
    %2736 = vrot.lane.b32.xlu0 %v2406, 56
    %v2737 = vpop.permute.xlu0 %2736
    %2738 = vrot.lane.b32.xlu0 %v2407, 56
    %v2739 = vpop.permute.xlu0 %2738
    %2740 = vrot.lane.b32.xlu0 %v2408, 56
    %v2741 = vpop.permute.xlu0 %2740
    %2742 = vrot.lane.b32.xlu0 %v2409, 56
    %v2743 = vpop.permute.xlu0 %2742
    %2744 = vrot.lane.b32.xlu0 %v2410, 56
    %v2745 = vpop.permute.xlu0 %2744
    %2746 = vrot.lane.b32.xlu0 %v2411, 56
    %v2747 = vpop.permute.xlu0 %2746
    %2748 = vrot.lane.b32.xlu0 %v2412, 56
    %v2749 = vpop.permute.xlu0 %2748
    %2750 = vrot.lane.b32.xlu0 %v2413, 56
    %v2751 = vpop.permute.xlu0 %2750
    %2752 = vrot.lane.b32.xlu0 %v2414, 56
    %v2753 = vpop.permute.xlu0 %2752
    %2754 = vrot.lane.b32.xlu0 %v2415, 56
    %v2755 = vpop.permute.xlu0 %2754
    %v2756 = vsel %vm1783, %v2733, %v2735
    %v2757 = vsel %vm1783, %v2735, %v2737
    %v2758 = vsel %vm1783, %v2737, %v2739
    %v2759 = vsel %vm1783, %v2739, %v2741
    %v2760 = vsel %vm1783, %v2741, %v2743
    %v2761 = vsel %vm1783, %v2745, %v2747
    %v2762 = vsel %vm1783, %v2747, %v2749
    %v2763 = vsel %vm1783, %v2749, %v2751
    %v2764 = vsel %vm1783, %v2751, %v2753
    %v2765 = vsel %vm1783, %v2753, %v2755
    %2776 = vrot.lane.b32.xlu0 %v2404, 48
    %v2777 = vpop.permute.xlu0 %2776
    %2778 = vrot.lane.b32.xlu0 %v2405, 48
    %v2779 = vpop.permute.xlu0 %2778
    %2780 = vrot.lane.b32.xlu0 %v2406, 48
    %v2781 = vpop.permute.xlu0 %2780
    %2782 = vrot.lane.b32.xlu0 %v2407, 48
    %v2783 = vpop.permute.xlu0 %2782
    %2784 = vrot.lane.b32.xlu0 %v2408, 48
    %v2785 = vpop.permute.xlu0 %2784
    %2786 = vrot.lane.b32.xlu0 %v2409, 48
    %v2787 = vpop.permute.xlu0 %2786
    %2788 = vrot.lane.b32.xlu0 %v2410, 48
    %v2789 = vpop.permute.xlu0 %2788
    %2790 = vrot.lane.b32.xlu0 %v2411, 48
    %v2791 = vpop.permute.xlu0 %2790
    %2792 = vrot.lane.b32.xlu0 %v2412, 48
    %v2793 = vpop.permute.xlu0 %2792
    %2794 = vrot.lane.b32.xlu0 %v2413, 48
    %v2795 = vpop.permute.xlu0 %2794
    %2796 = vrot.lane.b32.xlu0 %v2414, 48
    %v2797 = vpop.permute.xlu0 %2796
    %2798 = vrot.lane.b32.xlu0 %v2415, 48
    %v2799 = vpop.permute.xlu0 %2798
    %v2800 = vsel %vm1828, %v2777, %v2779
    %v2801 = vsel %vm1828, %v2779, %v2781
    %v2802 = vsel %vm1828, %v2781, %v2783
    %v2803 = vsel %vm1828, %v2783, %v2785
    %v2804 = vsel %vm1828, %v2785, %v2787
    %v2805 = vsel %vm1828, %v2789, %v2791
    %v2806 = vsel %vm1828, %v2791, %v2793
    %v2807 = vsel %vm1828, %v2793, %v2795
    %v2808 = vsel %vm1828, %v2795, %v2797
    %v2809 = vsel %vm1828, %v2797, %v2799
    %2820 = vrot.lane.b32.xlu0 %v2404, 40
    %v2821 = vpop.permute.xlu0 %2820
    %2822 = vrot.lane.b32.xlu0 %v2405, 40
    %v2823 = vpop.permute.xlu0 %2822
    %2824 = vrot.lane.b32.xlu0 %v2406, 40
    %v2825 = vpop.permute.xlu0 %2824
    %2826 = vrot.lane.b32.xlu0 %v2407, 40
    %v2827 = vpop.permute.xlu0 %2826
    %2828 = vrot.lane.b32.xlu0 %v2408, 40
    %v2829 = vpop.permute.xlu0 %2828
    %2830 = vrot.lane.b32.xlu0 %v2409, 40
    %v2831 = vpop.permute.xlu0 %2830
    %2832 = vrot.lane.b32.xlu0 %v2410, 40
    %v2833 = vpop.permute.xlu0 %2832
    %2834 = vrot.lane.b32.xlu0 %v2411, 40
    %v2835 = vpop.permute.xlu0 %2834
    %2836 = vrot.lane.b32.xlu0 %v2412, 40
    %v2837 = vpop.permute.xlu0 %2836
    %2838 = vrot.lane.b32.xlu0 %v2413, 40
    %v2839 = vpop.permute.xlu0 %2838
    %2840 = vrot.lane.b32.xlu0 %v2414, 40
    %v2841 = vpop.permute.xlu0 %2840
    %2842 = vrot.lane.b32.xlu0 %v2415, 40
    %v2843 = vpop.permute.xlu0 %2842
    %v2844 = vsel %vm1873, %v2821, %v2823
    %v2845 = vsel %vm1873, %v2823, %v2825
    %v2846 = vsel %vm1873, %v2825, %v2827
    %v2847 = vsel %vm1873, %v2827, %v2829
    %v2848 = vsel %vm1873, %v2829, %v2831
    %v2849 = vsel %vm1873, %v2833, %v2835
    %v2850 = vsel %vm1873, %v2835, %v2837
    %v2851 = vsel %vm1873, %v2837, %v2839
    %v2852 = vsel %vm1873, %v2839, %v2841
    %v2853 = vsel %vm1873, %v2841, %v2843
    %2864 = vrot.lane.b32.xlu0 %v2404, 32
    %v2865 = vpop.permute.xlu0 %2864
    %2866 = vrot.lane.b32.xlu0 %v2405, 32
    %v2867 = vpop.permute.xlu0 %2866
    %2868 = vrot.lane.b32.xlu0 %v2406, 32
    %v2869 = vpop.permute.xlu0 %2868
    %2870 = vrot.lane.b32.xlu0 %v2407, 32
    %v2871 = vpop.permute.xlu0 %2870
    %2872 = vrot.lane.b32.xlu0 %v2408, 32
    %v2873 = vpop.permute.xlu0 %2872
    %2874 = vrot.lane.b32.xlu0 %v2409, 32
    %v2875 = vpop.permute.xlu0 %2874
    %2876 = vrot.lane.b32.xlu0 %v2410, 32
    %v2877 = vpop.permute.xlu0 %2876
    %2878 = vrot.lane.b32.xlu0 %v2411, 32
    %v2879 = vpop.permute.xlu0 %2878
    %2880 = vrot.lane.b32.xlu0 %v2412, 32
    %v2881 = vpop.permute.xlu0 %2880
    %2882 = vrot.lane.b32.xlu0 %v2413, 32
    %v2883 = vpop.permute.xlu0 %2882
    %2884 = vrot.lane.b32.xlu0 %v2414, 32
    %v2885 = vpop.permute.xlu0 %2884
    %2886 = vrot.lane.b32.xlu0 %v2415, 32
    %v2887 = vpop.permute.xlu0 %2886
    %v2888 = vsel %vm1918, %v2865, %v2867
    %v2889 = vsel %vm1918, %v2867, %v2869
    %v2890 = vsel %vm1918, %v2869, %v2871
    %v2891 = vsel %vm1918, %v2871, %v2873
    %v2892 = vsel %vm1918, %v2873, %v2875
    %v2893 = vsel %vm1918, %v2877, %v2879
    %v2894 = vsel %vm1918, %v2879, %v2881
    %v2895 = vsel %vm1918, %v2881, %v2883
    %v2896 = vsel %vm1918, %v2883, %v2885
    %v2897 = vsel %vm1918, %v2885, %v2887
    %2908 = vrot.lane.b32.xlu0 %v2404, 24
    %v2909 = vpop.permute.xlu0 %2908
    %2910 = vrot.lane.b32.xlu0 %v2405, 24
    %v2911 = vpop.permute.xlu0 %2910
    %2912 = vrot.lane.b32.xlu0 %v2406, 24
    %v2913 = vpop.permute.xlu0 %2912
    %2914 = vrot.lane.b32.xlu0 %v2407, 24
    %v2915 = vpop.permute.xlu0 %2914
    %2916 = vrot.lane.b32.xlu0 %v2408, 24
    %v2917 = vpop.permute.xlu0 %2916
    %2918 = vrot.lane.b32.xlu0 %v2409, 24
    %v2919 = vpop.permute.xlu0 %2918
    %2920 = vrot.lane.b32.xlu0 %v2410, 24
    %v2921 = vpop.permute.xlu0 %2920
    %2922 = vrot.lane.b32.xlu0 %v2411, 24
    %v2923 = vpop.permute.xlu0 %2922
    %2924 = vrot.lane.b32.xlu0 %v2412, 24
    %v2925 = vpop.permute.xlu0 %2924
    %2926 = vrot.lane.b32.xlu0 %v2413, 24
    %v2927 = vpop.permute.xlu0 %2926
    %2928 = vrot.lane.b32.xlu0 %v2414, 24
    %v2929 = vpop.permute.xlu0 %2928
    %2930 = vrot.lane.b32.xlu0 %v2415, 24
    %v2931 = vpop.permute.xlu0 %2930
    %v2932 = vsel %vm1963, %v2909, %v2911
    %v2933 = vsel %vm1963, %v2911, %v2913
    %v2934 = vsel %vm1963, %v2913, %v2915
    %v2935 = vsel %vm1963, %v2915, %v2917
    %v2936 = vsel %vm1963, %v2917, %v2919
    %v2937 = vsel %vm1963, %v2921, %v2923
    %v2938 = vsel %vm1963, %v2923, %v2925
    %v2939 = vsel %vm1963, %v2925, %v2927
    %v2940 = vsel %vm1963, %v2927, %v2929
    %v2941 = vsel %vm1963, %v2929, %v2931
    %2952 = vrot.lane.b32.xlu0 %v2404, 16
    %v2953 = vpop.permute.xlu0 %2952
    %2954 = vrot.lane.b32.xlu0 %v2405, 16
    %v2955 = vpop.permute.xlu0 %2954
    %2956 = vrot.lane.b32.xlu0 %v2406, 16
    %v2957 = vpop.permute.xlu0 %2956
    %2958 = vrot.lane.b32.xlu0 %v2407, 16
    %v2959 = vpop.permute.xlu0 %2958
    %2960 = vrot.lane.b32.xlu0 %v2408, 16
    %v2961 = vpop.permute.xlu0 %2960
    %2962 = vrot.lane.b32.xlu0 %v2409, 16
    %v2963 = vpop.permute.xlu0 %2962
    %2964 = vrot.lane.b32.xlu0 %v2410, 16
    %v2965 = vpop.permute.xlu0 %2964
    %2966 = vrot.lane.b32.xlu0 %v2411, 16
    %v2967 = vpop.permute.xlu0 %2966
    %2968 = vrot.lane.b32.xlu0 %v2412, 16
    %v2969 = vpop.permute.xlu0 %2968
    %2970 = vrot.lane.b32.xlu0 %v2413, 16
    %v2971 = vpop.permute.xlu0 %2970
    %2972 = vrot.lane.b32.xlu0 %v2414, 16
    %v2973 = vpop.permute.xlu0 %2972
    %2974 = vrot.lane.b32.xlu0 %v2415, 16
    %v2975 = vpop.permute.xlu0 %2974
    %v2976 = vsel %vm2008, %v2953, %v2955
    %v2977 = vsel %vm2008, %v2955, %v2957
    %v2978 = vsel %vm2008, %v2957, %v2959
    %v2979 = vsel %vm2008, %v2959, %v2961
    %v2980 = vsel %vm2008, %v2961, %v2963
    %v2981 = vsel %vm2008, %v2965, %v2967
    %v2982 = vsel %vm2008, %v2967, %v2969
    %v2983 = vsel %vm2008, %v2969, %v2971
    %v2984 = vsel %vm2008, %v2971, %v2973
    %v2985 = vsel %vm2008, %v2973, %v2975
    %2996 = vrot.lane.b32.xlu0 %v2404, 8
    %v2997 = vpop.permute.xlu0 %2996
    %2998 = vrot.lane.b32.xlu0 %v2405, 8
    %v2999 = vpop.permute.xlu0 %2998
    %3000 = vrot.lane.b32.xlu0 %v2406, 8
    %v3001 = vpop.permute.xlu0 %3000
    %3002 = vrot.lane.b32.xlu0 %v2407, 8
    %v3003 = vpop.permute.xlu0 %3002
    %3004 = vrot.lane.b32.xlu0 %v2408, 8
    %v3005 = vpop.permute.xlu0 %3004
    %3006 = vrot.lane.b32.xlu0 %v2409, 8
    %v3007 = vpop.permute.xlu0 %3006
    %3008 = vrot.lane.b32.xlu0 %v2410, 8
    %v3009 = vpop.permute.xlu0 %3008
    %3010 = vrot.lane.b32.xlu0 %v2411, 8
    %v3011 = vpop.permute.xlu0 %3010
    %3012 = vrot.lane.b32.xlu0 %v2412, 8
    %v3013 = vpop.permute.xlu0 %3012
    %3014 = vrot.lane.b32.xlu0 %v2413, 8
    %v3015 = vpop.permute.xlu0 %3014
    %3016 = vrot.lane.b32.xlu0 %v2414, 8
    %v3017 = vpop.permute.xlu0 %3016
    %3018 = vrot.lane.b32.xlu0 %v2415, 8
    %v3019 = vpop.permute.xlu0 %3018
    %v3020 = vsel %vm2053, %v2997, %v2999
    %v3021 = vsel %vm2053, %v2999, %v3001
    %v3022 = vsel %vm2053, %v3001, %v3003
    %v3023 = vsel %vm2053, %v3003, %v3005
    %v3024 = vsel %vm2053, %v3005, %v3007
    %v3025 = vsel %vm2053, %v3009, %v3011
    %v3026 = vsel %vm2053, %v3011, %v3013
    %v3027 = vsel %vm2053, %v3013, %v3015
    %v3028 = vsel %vm2053, %v3015, %v3017
    %v3029 = vsel %vm2053, %v3017, %v3019
    %3040 = vmatprep.subr.bf16.mxu0 %v2405
    %3041 = vmatpush1.bf16.msra.mxu0 %v2404
    %3042 = vmatprep.subr.bf16.mxu0 %v2411
    %3043 = vmatpush1.bf16.msra.mxu0 %v2410
    %3044 = vmatprep.subr.bf16.mxu0 %v2447
    %3045 = vmatpush1.bf16.msra.mxu0 %v2446
    %3046 = vmatprep.subr.bf16.mxu0 %v2451
    %3047 = vmatpush1.bf16.msra.mxu0 %v2450
    %3048 = vmatprep.subr.bf16.mxu0 %v2485
    %3049 = vmatpush1.bf16.msra.mxu0 %v2484
    %3050 = vmatprep.subr.bf16.mxu0 %v2489
    %3051 = vmatpush1.bf16.msra.mxu0 %v2488
    %3052 = vmatprep.subr.bf16.mxu0 %v2523
    %3053 = vmatpush1.bf16.msra.mxu0 %v2522
    %3054 = vmatprep.subr.bf16.mxu0 %v2527
    %3055 = vmatpush1.bf16.msra.mxu0 %v2526
    %3056 = vmatprep.subr.bf16.mxu0 %v2561
    %3057 = vmatpush1.bf16.msra.mxu0 %v2560
    %3058 = vmatprep.subr.bf16.mxu0 %v2565
    %3059 = vmatpush1.bf16.msra.mxu0 %v2564
    %3060 = vmatprep.subr.bf16.mxu0 %v2599
    %3061 = vmatpush1.bf16.msra.mxu0 %v2598
    %3062 = vmatprep.subr.bf16.mxu0 %v2603
    %3063 = vmatpush1.bf16.msra.mxu0 %v2602
    %3064 = vmatprep.subr.bf16.mxu0 %v2637
    %3065 = vmatpush1.bf16.msra.mxu0 %v2636
    %3066 = vmatprep.subr.bf16.mxu0 %v2641
    %3067 = vmatpush1.bf16.msra.mxu0 %v2640
    %3068 = vmatprep.subr.bf16.mxu0 %v2675
    %3069 = vmatpush1.bf16.msra.mxu0 %v2674
    %3070 = vmatprep.subr.bf16.mxu0 %v2679
    %3071 = vmatpush1.bf16.msra.mxu0 %v2678
    %3072 = vmatprep.mubr.bf16.mxu0 %v1416
    %3073 = vmatmul.mubr.bf16.gmra.mrb[0].mxu0 %v1415
    %v3074 = vpop.f32.mrb[0].mxu0
    %v3075 = vadd.f32 %v2077, %v3074
    %v3076 = vpop.f32.mrb[0].mxu0
    %v3077 = vadd.f32 %v2077, %v3076
    %v3078 = vpop.f32.mrb[0].mxu0
    %v3079 = vadd.f32 %v2082, %v3078
    %v3080 = vpop.f32.mrb[0].mxu0
    %v3081 = vadd.f32 %v2082, %v3080
    %3082 = vmatprep.mubr.bf16.mxu0 %v1420
    %3083 = vmatmul.mubr.bf16.gmra.mrb[0].mxu0 %v1419
    %v3084 = vpop.f32.mrb[0].mxu0
    %v3085 = vadd.f32 %v2087, %v3084
    %v3086 = vpop.f32.mrb[0].mxu0
    %v3087 = vadd.f32 %v2087, %v3086
    %v3088 = vpop.f32.mrb[0].mxu0
    %v3089 = vadd.f32 %v2092, %v3088
    %v3090 = vpop.f32.mrb[0].mxu0
    %v3091 = vadd.f32 %v2092, %v3090
    %3092 = vdwg.mxu0
    %3093 = vmatprep.subr.bf16.mxu0 %v2713
    %3094 = vmatpush1.bf16.msra.mxu0 %v2712
    %3095 = vmatprep.subr.bf16.mxu0 %v2717
    %3096 = vmatpush1.bf16.msra.mxu0 %v2716
    %3097 = vmatprep.subr.bf16.mxu0 %v2757
    %3098 = vmatpush1.bf16.msra.mxu0 %v2756
    %3099 = vmatprep.subr.bf16.mxu0 %v2762
    %3100 = vmatpush1.bf16.msra.mxu0 %v2761
    %3101 = vmatprep.subr.bf16.mxu0 %v2801
    %3102 = vmatpush1.bf16.msra.mxu0 %v2800
    %3103 = vmatprep.subr.bf16.mxu0 %v2806
    %3104 = vmatpush1.bf16.msra.mxu0 %v2805
    %3105 = vmatprep.subr.bf16.mxu0 %v2845
    %3106 = vmatpush1.bf16.msra.mxu0 %v2844
    %3107 = vmatprep.subr.bf16.mxu0 %v2850
    %3108 = vmatpush1.bf16.msra.mxu0 %v2849
    %3109 = vmatprep.subr.bf16.mxu0 %v2889
    %3110 = vmatpush1.bf16.msra.mxu0 %v2888
    %3111 = vmatprep.subr.bf16.mxu0 %v2894
    %3112 = vmatpush1.bf16.msra.mxu0 %v2893
    %3113 = vmatprep.subr.bf16.mxu0 %v2933
    %3114 = vmatpush1.bf16.msra.mxu0 %v2932
    %3115 = vmatprep.subr.bf16.mxu0 %v2938
    %3116 = vmatpush1.bf16.msra.mxu0 %v2937
    %3117 = vmatprep.subr.bf16.mxu0 %v2977
    %3118 = vmatpush1.bf16.msra.mxu0 %v2976
    %3119 = vmatprep.subr.bf16.mxu0 %v2982
    %3120 = vmatpush1.bf16.msra.mxu0 %v2981
    %3121 = vmatprep.subr.bf16.mxu0 %v3021
    %3122 = vmatpush1.bf16.msra.mxu0 %v3020
    %3123 = vmatprep.subr.bf16.mxu0 %v3026
    %3124 = vmatpush1.bf16.msra.mxu0 %v3025
    %3125 = vmatprep.mubr.bf16.mxu0 %v1418
    %3126 = vmatmul.mubr.bf16.gmra.mrb[0].mxu0 %v1417
    %v3127 = vpop.f32.mrb[0].mxu0
    %v3128 = vadd.f32 %v3075, %v3127
    %v3129 = vpop.f32.mrb[0].mxu0
    %v3130 = vadd.f32 %v3077, %v3129
    %v3131 = vpop.f32.mrb[0].mxu0
    %v3132 = vadd.f32 %v3079, %v3131
    %v3133 = vpop.f32.mrb[0].mxu0
    %v3134 = vadd.f32 %v3081, %v3133
    %3135 = vmatprep.mubr.bf16.mxu0 %v1422
    %3136 = vmatmul.mubr.bf16.gmra.mrb[0].mxu0 %v1421
    %v3137 = vpop.f32.mrb[0].mxu0
    %v3138 = vadd.f32 %v3085, %v3137
    %v3139 = vpop.f32.mrb[0].mxu0
    %v3140 = vadd.f32 %v3087, %v3139
    %v3141 = vpop.f32.mrb[0].mxu0
    %v3142 = vadd.f32 %v3089, %v3141
    %v3143 = vpop.f32.mrb[0].mxu0
    %v3144 = vadd.f32 %v3091, %v3143
    %3145 = vdwg.mxu0
    %3146 = vmatprep.subr.bf16.mxu0 %v2407
    %3147 = vmatpush1.bf16.msra.mxu0 %v2406
    %3148 = vmatprep.subr.bf16.mxu0 %v2413
    %3149 = vmatpush1.bf16.msra.mxu0 %v2412
    %3150 = vmatprep.subr.bf16.mxu0 %v2449
    %3151 = vmatpush1.bf16.msra.mxu0 %v2448
    %3152 = vmatprep.subr.bf16.mxu0 %v2453
    %3153 = vmatpush1.bf16.msra.mxu0 %v2452
    %3154 = vmatprep.subr.bf16.mxu0 %v2487
    %3155 = vmatpush1.bf16.msra.mxu0 %v2486
    %3156 = vmatprep.subr.bf16.mxu0 %v2491
    %3157 = vmatpush1.bf16.msra.mxu0 %v2490
    %3158 = vmatprep.subr.bf16.mxu0 %v2525
    %3159 = vmatpush1.bf16.msra.mxu0 %v2524
    %3160 = vmatprep.subr.bf16.mxu0 %v2529
    %3161 = vmatpush1.bf16.msra.mxu0 %v2528
    %3162 = vmatprep.subr.bf16.mxu0 %v2563
    %3163 = vmatpush1.bf16.msra.mxu0 %v2562
    %3164 = vmatprep.subr.bf16.mxu0 %v2567
    %3165 = vmatpush1.bf16.msra.mxu0 %v2566
    %3166 = vmatprep.subr.bf16.mxu0 %v2601
    %3167 = vmatpush1.bf16.msra.mxu0 %v2600
    %3168 = vmatprep.subr.bf16.mxu0 %v2605
    %3169 = vmatpush1.bf16.msra.mxu0 %v2604
    %3170 = vmatprep.subr.bf16.mxu0 %v2639
    %3171 = vmatpush1.bf16.msra.mxu0 %v2638
    %3172 = vmatprep.subr.bf16.mxu0 %v2643
    %3173 = vmatpush1.bf16.msra.mxu0 %v2642
    %3174 = vmatprep.subr.bf16.mxu0 %v2677
    %3175 = vmatpush1.bf16.msra.mxu0 %v2676
    %3176 = vmatprep.subr.bf16.mxu0 %v2681
    %3177 = vmatpush1.bf16.msra.mxu0 %v2680
    %3178 = vmatprep.mubr.bf16.mxu0 %v1416
    %3179 = vmatmul.mubr.bf16.gmra.mrb[0].mxu0 %v1415
    %v3180 = vpop.f32.mrb[0].mxu0
    %v3181 = vadd.f32 %v2077, %v3180
    %v3182 = vpop.f32.mrb[0].mxu0
    %v3183 = vadd.f32 %v2077, %v3182
    %v3184 = vpop.f32.mrb[0].mxu0
    %v3185 = vadd.f32 %v2082, %v3184
    %v3186 = vpop.f32.mrb[0].mxu0
    %v3187 = vadd.f32 %v2082, %v3186
    %3188 = vmatprep.mubr.bf16.mxu0 %v1420
    %3189 = vmatmul.mubr.bf16.gmra.mrb[0].mxu0 %v1419
    %v3190 = vpop.f32.mrb[0].mxu0
    %v3191 = vadd.f32 %v2087, %v3190
    %v3192 = vpop.f32.mrb[0].mxu0
    %v3193 = vadd.f32 %v2087, %v3192
    %v3194 = vpop.f32.mrb[0].mxu0
    %v3195 = vadd.f32 %v2092, %v3194
    %v3196 = vpop.f32.mrb[0].mxu0
    %v3197 = vadd.f32 %v2092, %v3196
    %3198 = vdwg.mxu0
    %3199 = vmatprep.subr.bf16.mxu0 %v2715
    %3200 = vmatpush1.bf16.msra.mxu0 %v2714
    %3201 = vmatprep.subr.bf16.mxu0 %v2719
    %3202 = vmatpush1.bf16.msra.mxu0 %v2718
    %3203 = vmatprep.subr.bf16.mxu0 %v2759
    %3204 = vmatpush1.bf16.msra.mxu0 %v2758
    %3205 = vmatprep.subr.bf16.mxu0 %v2764
    %3206 = vmatpush1.bf16.msra.mxu0 %v2763
    %3207 = vmatprep.subr.bf16.mxu0 %v2803
    %3208 = vmatpush1.bf16.msra.mxu0 %v2802
    %3209 = vmatprep.subr.bf16.mxu0 %v2808
    %3210 = vmatpush1.bf16.msra.mxu0 %v2807
    %3211 = vmatprep.subr.bf16.mxu0 %v2847
    %3212 = vmatpush1.bf16.msra.mxu0 %v2846
    %3213 = vmatprep.subr.bf16.mxu0 %v2852
    %3214 = vmatpush1.bf16.msra.mxu0 %v2851
    %3215 = vmatprep.subr.bf16.mxu0 %v2891
    %3216 = vmatpush1.bf16.msra.mxu0 %v2890
    %3217 = vmatprep.subr.bf16.mxu0 %v2896
    %3218 = vmatpush1.bf16.msra.mxu0 %v2895
    %3219 = vmatprep.subr.bf16.mxu0 %v2935
    %3220 = vmatpush1.bf16.msra.mxu0 %v2934
    %3221 = vmatprep.subr.bf16.mxu0 %v2940
    %3222 = vmatpush1.bf16.msra.mxu0 %v2939
    %3223 = vmatprep.subr.bf16.mxu0 %v2979
    %3224 = vmatpush1.bf16.msra.mxu0 %v2978
    %3225 = vmatprep.subr.bf16.mxu0 %v2984
    %3226 = vmatpush1.bf16.msra.mxu0 %v2983
    %3227 = vmatprep.subr.bf16.mxu0 %v3023
    %3228 = vmatpush1.bf16.msra.mxu0 %v3022
    %3229 = vmatprep.subr.bf16.mxu0 %v3028
    %3230 = vmatpush1.bf16.msra.mxu0 %v3027
    %3231 = vmatprep.mubr.bf16.mxu0 %v1418
    %3232 = vmatmul.mubr.bf16.gmra.mrb[0].mxu0 %v1417
    %v3233 = vpop.f32.mrb[0].mxu0
    %v3234 = vadd.f32 %v3181, %v3233
    %v3235 = vpop.f32.mrb[0].mxu0
    %v3236 = vadd.f32 %v3183, %v3235
    %v3237 = vpop.f32.mrb[0].mxu0
    %v3238 = vadd.f32 %v3185, %v3237
    %v3239 = vpop.f32.mrb[0].mxu0
    %v3240 = vadd.f32 %v3187, %v3239
    %3241 = vmatprep.mubr.bf16.mxu0 %v1422
    %3242 = vmatmul.mubr.bf16.gmra.mrb[0].mxu0 %v1421
    %v3243 = vpop.f32.mrb[0].mxu0
    %v3244 = vadd.f32 %v3191, %v3243
    %v3245 = vpop.f32.mrb[0].mxu0
    %v3246 = vadd.f32 %v3193, %v3245
    %v3247 = vpop.f32.mrb[0].mxu0
    %v3248 = vadd.f32 %v3195, %v3247
    %v3249 = vpop.f32.mrb[0].mxu0
    %v3250 = vadd.f32 %v3197, %v3249
    %3251 = vdwg.mxu0
    %3252 = vmatprep.subr.bf16.mxu0 0
    %3253 = vmatpush1.bf16.msra.mxu0 %v2408
    %3254 = vmatprep.subr.bf16.mxu0 0
    %3255 = vmatpush1.bf16.msra.mxu0 %v2414
    %3256 = vmatprep.subr.bf16.mxu0 0
    %3257 = vmatpush1.bf16.msra.mxu0 %v2435
    %3258 = vmatprep.subr.bf16.mxu0 0
    %3259 = vmatpush1.bf16.msra.mxu0 %v2445
    %3260 = vmatprep.subr.bf16.mxu0 0
    %3261 = vmatpush1.bf16.msra.mxu0 %v2473
    %3262 = vmatprep.subr.bf16.mxu0 0
    %3263 = vmatpush1.bf16.msra.mxu0 %v2483
    %3264 = vmatprep.subr.bf16.mxu0 0
    %3265 = vmatpush1.bf16.msra.mxu0 %v2511
    %3266 = vmatprep.subr.bf16.mxu0 0
    %3267 = vmatpush1.bf16.msra.mxu0 %v2521
    %3268 = vmatprep.subr.bf16.mxu0 0
    %3269 = vmatpush1.bf16.msra.mxu0 %v2549
    %3270 = vmatprep.subr.bf16.mxu0 0
    %3271 = vmatpush1.bf16.msra.mxu0 %v2559
    %3272 = vmatprep.subr.bf16.mxu0 0
    %3273 = vmatpush1.bf16.msra.mxu0 %v2587
    %3274 = vmatprep.subr.bf16.mxu0 0
    %3275 = vmatpush1.bf16.msra.mxu0 %v2597
    %3276 = vmatprep.subr.bf16.mxu0 0
    %3277 = vmatpush1.bf16.msra.mxu0 %v2625
    %3278 = vmatprep.subr.bf16.mxu0 0
    %3279 = vmatpush1.bf16.msra.mxu0 %v2635
    %3280 = vmatprep.subr.bf16.mxu0 0
    %3281 = vmatpush1.bf16.msra.mxu0 %v2663
    %3282 = vmatprep.subr.bf16.mxu0 0
    %3283 = vmatpush1.bf16.msra.mxu0 %v2673
    %3284 = vmatprep.mubr.bf16.mxu0 %v1416
    %3285 = vmatmul.mubr.bf16.gmra.mrb[0].mxu0 %v1415
    %v3286 = vpop.f32.mrb[0].mxu0
    %v3287 = vadd.f32 %v2077, %v3286
    %v3288 = vpop.f32.mrb[0].mxu0
    %v3289 = vpop.f32.mrb[0].mxu0
    %v3290 = vadd.f32 %v2082, %v3289
    %v3291 = vpop.f32.mrb[0].mxu0
    %3292 = vmatprep.mubr.bf16.mxu0 %v1420
    %3293 = vmatmul.mubr.bf16.gmra.mrb[0].mxu0 %v1419
    %v3294 = vpop.f32.mrb[0].mxu0
    %v3295 = vadd.f32 %v2087, %v3294
    %v3296 = vpop.f32.mrb[0].mxu0
    %v3297 = vpop.f32.mrb[0].mxu0
    %v3298 = vadd.f32 %v2092, %v3297
    %v3299 = vpop.f32.mrb[0].mxu0
    %3300 = vdwg.mxu0
    %3301 = vmatprep.subr.bf16.mxu0 0
    %3302 = vmatpush1.bf16.msra.mxu0 %v2701
    %3303 = vmatprep.subr.bf16.mxu0 0
    %3304 = vmatpush1.bf16.msra.mxu0 %v2711
    %3305 = vmatprep.subr.bf16.mxu0 0
    %3306 = vmatpush1.bf16.msra.mxu0 %v2760
    %3307 = vmatprep.subr.bf16.mxu0 0
    %3308 = vmatpush1.bf16.msra.mxu0 %v2765
    %3309 = vmatprep.subr.bf16.mxu0 0
    %3310 = vmatpush1.bf16.msra.mxu0 %v2804
    %3311 = vmatprep.subr.bf16.mxu0 0
    %3312 = vmatpush1.bf16.msra.mxu0 %v2809
    %3313 = vmatprep.subr.bf16.mxu0 0
    %3314 = vmatpush1.bf16.msra.mxu0 %v2848
    %3315 = vmatprep.subr.bf16.mxu0 0
    %3316 = vmatpush1.bf16.msra.mxu0 %v2853
    %3317 = vmatprep.subr.bf16.mxu0 0
    %3318 = vmatpush1.bf16.msra.mxu0 %v2892
    %3319 = vmatprep.subr.bf16.mxu0 0
    %3320 = vmatpush1.bf16.msra.mxu0 %v2897
    %3321 = vmatprep.subr.bf16.mxu0 0
    %3322 = vmatpush1.bf16.msra.mxu0 %v2936
    %3323 = vmatprep.subr.bf16.mxu0 0
    %3324 = vmatpush1.bf16.msra.mxu0 %v2941
    %3325 = vmatprep.subr.bf16.mxu0 0
    %3326 = vmatpush1.bf16.msra.mxu0 %v2980
    %3327 = vmatprep.subr.bf16.mxu0 0
    %3328 = vmatpush1.bf16.msra.mxu0 %v2985
    %3329 = vmatprep.subr.bf16.mxu0 0
    %3330 = vmatpush1.bf16.msra.mxu0 %v3024
    %3331 = vmatprep.subr.bf16.mxu0 0
    %3332 = vmatpush1.bf16.msra.mxu0 %v3029
    %3333 = vmatprep.mubr.bf16.mxu0 %v1418
    %3334 = vmatmul.mubr.bf16.gmra.mrb[0].mxu0 %v1417
    %v3335 = vpop.f32.mrb[0].mxu0
    %v3336 = vadd.f32 %v3287, %v3335
    %v3337 = vpop.f32.mrb[0].mxu0
    %v3338 = vpop.f32.mrb[0].mxu0
    %v3339 = vadd.f32 %v3290, %v3338
    %v3340 = vpop.f32.mrb[0].mxu0
    %3341 = vmatprep.mubr.bf16.mxu0 %v1422
    %3342 = vmatmul.mubr.bf16.gmra.mrb[0].mxu0 %v1421
    %v3343 = vpop.f32.mrb[0].mxu0
    %v3344 = vadd.f32 %v3295, %v3343
    %v3345 = vpop.f32.mrb[0].mxu0
    %v3346 = vpop.f32.mrb[0].mxu0
    %v3347 = vadd.f32 %v3298, %v3346
    %v3348 = vpop.f32.mrb[0].mxu0
    %3349 = vdwg.mxu0
    %v3350 = vld [vmem:[%s9] sm:$0xff]
    %v3351 = vld [vmem:[%s9 + $0x8] sm:$0xff]
    %v3352 = vld [vmem:[%s9 + $0x10] sm:$0xff]
    %v3353 = vld [vmem:[%s9 + $0x18] sm:$0xff]
    %v3354 = vld [vmem:[%s10] sm:$0xff]
    %v3355 = vld [vmem:[%s10 + $0x8] sm:$0xff]
    %v3356 = vld [vmem:[%s7] sm:$0xff]
    %v3357 = vld [vmem:[%s7 + $0x8] sm:$0xff]
    %v3358 = vld [vmem:[%s7 + $0x10] sm:$0xff]
    %v3359 = vld [vmem:[%s7 + $0x18] sm:$0xff]
    %v3360 = vld [vmem:[%s8] sm:$0xff]
    %v3361 = vld [vmem:[%s8 + $0x8] sm:$0xff]
    %v3362 = vld [vmem:[%s8 + $0x10] sm:$0xff]
    %v3363 = vld [vmem:[%s8 + $0x18] sm:$0xff]
    %v3364 = vadd.f32 %v2182, %v2184
    %v3365 = vadd.f32 %v3364, %v2288
    %v3366 = vadd.f32 %v3365, %v2290
    %v3367 = vsel %vm1302, %v2390, 0.0
    %v3368 = vadd.f32 %v3366, %v3367
    %3369 = vadd.xlane.f32.xlu0 %v3368
    %v3370 = vpop.xlane.xlu0 %3369
    %v3371 = vadd.f32 %v2186, %v2188
    %v3372 = vadd.f32 %v3371, %v2292
    %v3373 = vadd.f32 %v3372, %v2294
    %v3374 = vsel %vm1302, %v2393, 0.0
    %v3375 = vadd.f32 %v3373, %v3374
    %3376 = vadd.xlane.f32.xlu0 %v3375
    %v3377 = vpop.xlane.xlu0 %3376
    %v3378 = vadd.f32 %v2192, %v2194
    %v3379 = vadd.f32 %v3378, %v2298
    %v3380 = vadd.f32 %v3379, %v2300
    %v3381 = vsel %vm1302, %v2398, 0.0
    %v3382 = vadd.f32 %v3380, %v3381
    %3383 = vadd.xlane.f32.xlu0 %v3382
    %v3384 = vpop.xlane.xlu0 %3383
    %v3385 = vadd.f32 %v2196, %v2198
    %v3386 = vadd.f32 %v3385, %v2302
    %v3387 = vadd.f32 %v3386, %v2304
    %v3388 = vsel %vm1302, %v2401, 0.0
    %v3389 = vadd.f32 %v3387, %v3388
    %3390 = vadd.xlane.f32.xlu0 %v3389
    %v3391 = vpop.xlane.xlu0 %3390
    %v3392 = vadd.f32 %v3370, 0.0
    %v3393 = vadd.f32 %v3377, 0.0
    %v3394 = vadd.f32 %v3384, 0.0
    %v3395 = vadd.f32 %v3391, 0.0
    %v3396 = vadd.f32 %v3128, %v3130
    %v3397 = vadd.f32 %v3396, %v3234
    %v3398 = vadd.f32 %v3397, %v3236
    %v3399 = vsel %vm1302, %v3336, 0.0
    %v3400 = vadd.f32 %v3398, %v3399
    %3401 = vadd.xlane.f32.xlu0 %v3400
    %v3402 = vpop.xlane.xlu0 %3401
    %v3403 = vadd.f32 %v3132, %v3134
    %v3404 = vadd.f32 %v3403, %v3238
    %v3405 = vadd.f32 %v3404, %v3240
    %v3406 = vsel %vm1302, %v3339, 0.0
    %v3407 = vadd.f32 %v3405, %v3406
    %3408 = vadd.xlane.f32.xlu0 %v3407
    %v3409 = vpop.xlane.xlu0 %3408
    %v3410 = vadd.f32 %v3138, %v3140
    %v3411 = vadd.f32 %v3410, %v3244
    %v3412 = vadd.f32 %v3411, %v3246
    %v3413 = vsel %vm1302, %v3344, 0.0
    %v3414 = vadd.f32 %v3412, %v3413
    %3415 = vadd.xlane.f32.xlu0 %v3414
    %v3416 = vpop.xlane.xlu0 %3415
    %v3417 = vadd.f32 %v3142, %v3144
    %v3418 = vadd.f32 %v3417, %v3248
    %v3419 = vadd.f32 %v3418, %v3250
    %v3420 = vsel %vm1302, %v3347, 0.0
    %v3421 = vadd.f32 %v3419, %v3420
    %3422 = vadd.xlane.f32.xlu0 %v3421
    %v3423 = vpop.xlane.xlu0 %3422
    %v3424 = vadd.f32 %v3392, %v3402
    %v3425 = vadd.f32 %v3393, %v3409
    %v3426 = vadd.f32 %v3394, %v3416
    %v3427 = vadd.f32 %v3395, %v3423
    %v3428 = vrcp.pop 1152.0
    %v3429 = vmul.f32 %v3424, %v3428
    %v3430 = vmul.f32 %v3425, %v3428
    %v3431 = vmul.f32 %v3426, %v3428
    %v3432 = vmul.f32 %v3427, %v3428
    %v3433 = vsub.f32 %v2182, %v3429
    %v3434 = vsub.f32 %v2184, %v3429
    %v3435 = vsub.f32 %v2288, %v3429
    %v3436 = vsub.f32 %v2290, %v3429
    %v3437 = vsub.f32 %v2390, %v3429
    %v3438 = vsub.f32 %v2186, %v3430
    %v3439 = vsub.f32 %v2188, %v3430
    %v3440 = vsub.f32 %v2292, %v3430
    %v3441 = vsub.f32 %v2294, %v3430
    %v3442 = vsub.f32 %v2393, %v3430
    %v3443 = vsub.f32 %v2192, %v3431
    %v3444 = vsub.f32 %v2194, %v3431
    %v3445 = vsub.f32 %v2298, %v3431
    %v3446 = vsub.f32 %v2300, %v3431
    %v3447 = vsub.f32 %v2398, %v3431
    %v3448 = vsub.f32 %v2196, %v3432
    %v3449 = vsub.f32 %v2198, %v3432
    %v3450 = vsub.f32 %v2302, %v3432
    %v3451 = vsub.f32 %v2304, %v3432
    %v3452 = vsub.f32 %v2401, %v3432
    %v3453 = vmul.f32 %v3433, %v3433
    %v3454 = vmul.f32 %v3434, %v3434
    %v3455 = vmul.f32 %v3435, %v3435
    %v3456 = vmul.f32 %v3436, %v3436
    %v3457 = vmul.f32 %v3437, %v3437
    %v3458 = vmul.f32 %v3438, %v3438
    %v3459 = vmul.f32 %v3439, %v3439
    %v3460 = vmul.f32 %v3440, %v3440
    %v3461 = vmul.f32 %v3441, %v3441
    %v3462 = vmul.f32 %v3442, %v3442
    %v3463 = vmul.f32 %v3443, %v3443
    %v3464 = vmul.f32 %v3444, %v3444
    %v3465 = vmul.f32 %v3445, %v3445
    %v3466 = vmul.f32 %v3446, %v3446
    %v3467 = vmul.f32 %v3447, %v3447
    %v3468 = vmul.f32 %v3448, %v3448
    %v3469 = vmul.f32 %v3449, %v3449
    %v3470 = vmul.f32 %v3450, %v3450
    %v3471 = vmul.f32 %v3451, %v3451
    %v3472 = vmul.f32 %v3452, %v3452
    %v3473 = vadd.f32 %v3453, %v3454
    %v3474 = vadd.f32 %v3473, %v3455
    %v3475 = vadd.f32 %v3474, %v3456
    %v3476 = vsel %vm1302, %v3457, 0.0
    %v3477 = vadd.f32 %v3475, %v3476
    %3478 = vadd.xlane.f32.xlu0 %v3477
    %v3479 = vpop.xlane.xlu0 %3478
    %v3480 = vadd.f32 %v3458, %v3459
    %v3481 = vadd.f32 %v3480, %v3460
    %v3482 = vadd.f32 %v3481, %v3461
    %v3483 = vsel %vm1302, %v3462, 0.0
    %v3484 = vadd.f32 %v3482, %v3483
    %3485 = vadd.xlane.f32.xlu0 %v3484
    %v3486 = vpop.xlane.xlu0 %3485
    %v3487 = vadd.f32 %v3463, %v3464
    %v3488 = vadd.f32 %v3487, %v3465
    %v3489 = vadd.f32 %v3488, %v3466
    %v3490 = vsel %vm1302, %v3467, 0.0
    %v3491 = vadd.f32 %v3489, %v3490
    %3492 = vadd.xlane.f32.xlu0 %v3491
    %v3493 = vpop.xlane.xlu0 %3492
    %v3494 = vadd.f32 %v3468, %v3469
    %v3495 = vadd.f32 %v3494, %v3470
    %v3496 = vadd.f32 %v3495, %v3471
    %v3497 = vsel %vm1302, %v3472, 0.0
    %v3498 = vadd.f32 %v3496, %v3497
    %3499 = vadd.xlane.f32.xlu0 %v3498
    %v3500 = vpop.xlane.xlu0 %3499
    %v3501 = vadd.f32 %v3479, 0.0
    %v3502 = vadd.f32 %v3486, 0.0
    %v3503 = vadd.f32 %v3493, 0.0
    %v3504 = vadd.f32 %v3500, 0.0
    %v3505 = vsub.f32 %v3128, %v3429
    %v3506 = vsub.f32 %v3130, %v3429
    %v3507 = vsub.f32 %v3234, %v3429
    %v3508 = vsub.f32 %v3236, %v3429
    %v3509 = vsub.f32 %v3336, %v3429
    %v3510 = vsub.f32 %v3132, %v3430
    %v3511 = vsub.f32 %v3134, %v3430
    %v3512 = vsub.f32 %v3238, %v3430
    %v3513 = vsub.f32 %v3240, %v3430
    %v3514 = vsub.f32 %v3339, %v3430
    %v3515 = vsub.f32 %v3138, %v3431
    %v3516 = vsub.f32 %v3140, %v3431
    %v3517 = vsub.f32 %v3244, %v3431
    %v3518 = vsub.f32 %v3246, %v3431
    %v3519 = vsub.f32 %v3344, %v3431
    %v3520 = vsub.f32 %v3142, %v3432
    %v3521 = vsub.f32 %v3144, %v3432
    %v3522 = vsub.f32 %v3248, %v3432
    %v3523 = vsub.f32 %v3250, %v3432
    %v3524 = vsub.f32 %v3347, %v3432
    %v3525 = vmul.f32 %v3505, %v3505
    %v3526 = vmul.f32 %v3506, %v3506
    %v3527 = vmul.f32 %v3507, %v3507
    %v3528 = vmul.f32 %v3508, %v3508
    %v3529 = vmul.f32 %v3509, %v3509
    %v3530 = vmul.f32 %v3510, %v3510
    %v3531 = vmul.f32 %v3511, %v3511
    %v3532 = vmul.f32 %v3512, %v3512
    %v3533 = vmul.f32 %v3513, %v3513
    %v3534 = vmul.f32 %v3514, %v3514
    %v3535 = vmul.f32 %v3515, %v3515
    %v3536 = vmul.f32 %v3516, %v3516
    %v3537 = vmul.f32 %v3517, %v3517
    %v3538 = vmul.f32 %v3518, %v3518
    %v3539 = vmul.f32 %v3519, %v3519
    %v3540 = vmul.f32 %v3520, %v3520
    %v3541 = vmul.f32 %v3521, %v3521
    %v3542 = vmul.f32 %v3522, %v3522
    %v3543 = vmul.f32 %v3523, %v3523
    %v3544 = vmul.f32 %v3524, %v3524
    %v3545 = vadd.f32 %v3525, %v3526
    %v3546 = vadd.f32 %v3545, %v3527
    %v3547 = vadd.f32 %v3546, %v3528
    %v3548 = vsel %vm1302, %v3529, 0.0
    %v3549 = vadd.f32 %v3547, %v3548
    %3550 = vadd.xlane.f32.xlu0 %v3549
    %v3551 = vpop.xlane.xlu0 %3550
    %v3552 = vadd.f32 %v3530, %v3531
    %v3553 = vadd.f32 %v3552, %v3532
    %v3554 = vadd.f32 %v3553, %v3533
    %v3555 = vsel %vm1302, %v3534, 0.0
    %v3556 = vadd.f32 %v3554, %v3555
    %3557 = vadd.xlane.f32.xlu0 %v3556
    %v3558 = vpop.xlane.xlu0 %3557
    %v3559 = vadd.f32 %v3535, %v3536
    %v3560 = vadd.f32 %v3559, %v3537
    %v3561 = vadd.f32 %v3560, %v3538
    %v3562 = vsel %vm1302, %v3539, 0.0
    %v3563 = vadd.f32 %v3561, %v3562
    %3564 = vadd.xlane.f32.xlu0 %v3563
    %v3565 = vpop.xlane.xlu0 %3564
    %v3566 = vadd.f32 %v3540, %v3541
    %v3567 = vadd.f32 %v3566, %v3542
    %v3568 = vadd.f32 %v3567, %v3543
    %v3569 = vsel %vm1302, %v3544, 0.0
    %v3570 = vadd.f32 %v3568, %v3569
    %3571 = vadd.xlane.f32.xlu0 %v3570
    %v3572 = vpop.xlane.xlu0 %3571
    %v3573 = vadd.f32 %v3501, %v3551
    %v3574 = vadd.f32 %v3502, %v3558
    %v3575 = vadd.f32 %v3503, %v3565
    %v3576 = vadd.f32 %v3504, %v3572
    %v3577 = vmul.f32 %v3573, %v3428
    %v3578 = vmul.f32 %v3574, %v3428
    %v3579 = vmul.f32 %v3575, %v3428
    %v3580 = vmul.f32 %v3576, %v3428
    %v3581 = vadd.f32 %v3577, 1e-05
    %v3582 = vadd.f32 %v3578, 1e-05
    %v3583 = vadd.f32 %v3579, 1e-05
    %v3584 = vadd.f32 %v3580, 1e-05
    %v3585 = vrsqrt.pop %v3581
    %v3586 = vrsqrt.pop %v3582
    %v3587 = vrsqrt.pop %v3583
    %v3588 = vrsqrt.pop %v3584
    %v3589 = vmul.f32 %v3356, %v3585
    %v3590 = vmul.f32 %v3357, %v3586
    %v3591 = vmul.f32 %v3358, %v3587
    %v3592 = vmul.f32 %v3359, %v3588
    %v3593 = vmul.f32 %v3429, %v3589
    %v3594 = vmul.f32 %v3430, %v3590
    %v3595 = vmul.f32 %v3431, %v3591
    %v3596 = vmul.f32 %v3432, %v3592
    %v3597 = vsub.f32 %v3360, %v3593
    %v3598 = vsub.f32 %v3361, %v3594
    %v3599 = vsub.f32 %v3362, %v3595
    %v3600 = vsub.f32 %v3363, %v3596
    %3601 = vxpose.xlu0.b32.start [1/16] %v3589, 128
    %3602 = vxpose.xlu0.b32.cont [2/16] %v3590, 128
    %3603 = vxpose.xlu0.b32.cont [3/16] %v3591, 128
    %3604 = vxpose.xlu0.b32.cont [4/16] %v3592, 128
    %3605 = vxpose.xlu0.b32.cont [5/16] 0.0, 128
    %3606 = vxpose.xlu0.b32.cont [6/16] 0.0, 128
    %3607 = vxpose.xlu0.b32.cont [7/16] 0.0, 128
    %3608 = vxpose.xlu0.b32.cont [8/16] 0.0, 128
    %3609 = vxpose.xlu0.b32.cont [9/16] 0.0, 128
    %3610 = vxpose.xlu0.b32.cont [10/16] 0.0, 128
    %3611 = vxpose.xlu0.b32.cont [11/16] 0.0, 128
    %3612 = vxpose.xlu0.b32.cont [12/16] 0.0, 128
    %3613 = vxpose.xlu0.b32.cont [13/16] 0.0, 128
    %3614 = vxpose.xlu0.b32.cont [14/16] 0.0, 128
    %3615 = vxpose.xlu0.b32.cont [15/16] 0.0, 128
    %3616 = vxpose.xlu0.b32.end [16/16] 0.0, 128
    %v3617 = vpop.trf.xlu0
    %v3618 = vpop.trf.xlu0
    %v3619 = vpop.trf.xlu0
    %v3620 = vpop.trf.xlu0
    %v3621 = vpop.trf.xlu0
    %v3622 = vpop.trf.xlu0
    %v3623 = vpop.trf.xlu0
    %v3624 = vpop.trf.xlu0
    %v3625 = vpop.trf.xlu0
    %v3626 = vpop.trf.xlu0
    %v3627 = vpop.trf.xlu0
    %v3628 = vpop.trf.xlu0
    %v3629 = vpop.trf.xlu0
    %v3630 = vpop.trf.xlu0
    %v3631 = vpop.trf.xlu0
    %v3632 = vpop.trf.xlu0
    %3634 = vrot.lane.b32.xlu0 %v3617, 32
    %v3635 = vpop.permute.xlu0 %3634
    %3637 = vrot.lane.b32.xlu0 %v3617, 64
    %v3638 = vpop.permute.xlu0 %3637
    %3640 = vrot.lane.b32.xlu0 %v3617, 96
    %v3641 = vpop.permute.xlu0 %3640
    %v3643 = vsel %vm1300, %v3617, %v3635
    %v3644 = vsel %vm1302, %v3643, %v3638
    %v3645 = vsel %vm1304, %v3644, %v3641
    %3646 = vxpose.xlu0.b32.start [1/16] %v3597, 128
    %3647 = vxpose.xlu0.b32.cont [2/16] %v3598, 128
    %3648 = vxpose.xlu0.b32.cont [3/16] %v3599, 128
    %3649 = vxpose.xlu0.b32.cont [4/16] %v3600, 128
    %3650 = vxpose.xlu0.b32.cont [5/16] 0.0, 128
    %3651 = vxpose.xlu0.b32.cont [6/16] 0.0, 128
    %3652 = vxpose.xlu0.b32.cont [7/16] 0.0, 128
    %3653 = vxpose.xlu0.b32.cont [8/16] 0.0, 128
    %3654 = vxpose.xlu0.b32.cont [9/16] 0.0, 128
    %3655 = vxpose.xlu0.b32.cont [10/16] 0.0, 128
    %3656 = vxpose.xlu0.b32.cont [11/16] 0.0, 128
    %3657 = vxpose.xlu0.b32.cont [12/16] 0.0, 128
    %3658 = vxpose.xlu0.b32.cont [13/16] 0.0, 128
    %3659 = vxpose.xlu0.b32.cont [14/16] 0.0, 128
    %3660 = vxpose.xlu0.b32.cont [15/16] 0.0, 128
    %3661 = vxpose.xlu0.b32.end [16/16] 0.0, 128
    %v3662 = vpop.trf.xlu0
    %v3663 = vpop.trf.xlu0
    %v3664 = vpop.trf.xlu0
    %v3665 = vpop.trf.xlu0
    %v3666 = vpop.trf.xlu0
    %v3667 = vpop.trf.xlu0
    %v3668 = vpop.trf.xlu0
    %v3669 = vpop.trf.xlu0
    %v3670 = vpop.trf.xlu0
    %v3671 = vpop.trf.xlu0
    %v3672 = vpop.trf.xlu0
    %v3673 = vpop.trf.xlu0
    %v3674 = vpop.trf.xlu0
    %v3675 = vpop.trf.xlu0
    %v3676 = vpop.trf.xlu0
    %v3677 = vpop.trf.xlu0
    %3679 = vrot.lane.b32.xlu0 %v3662, 32
    %v3680 = vpop.permute.xlu0 %3679
    %3682 = vrot.lane.b32.xlu0 %v3662, 64
    %v3683 = vpop.permute.xlu0 %3682
    %3685 = vrot.lane.b32.xlu0 %v3662, 96
    %v3686 = vpop.permute.xlu0 %3685
    %v3688 = vsel %vm1300, %v3662, %v3680
    %v3689 = vsel %vm1302, %v3688, %v3683
    %v3690 = vsel %vm1304, %v3689, %v3686
    %v3691 = vlaneseq
    %v3692 = vshrl.u32 %v3691, 7
    %v3693 = vsub.s32 0, %v3692
    %v3694 = vrot.slane %v3645, %v3693
    %v3695 = vmul.f32 %v3350, %v3694
    %v3696 = vmul.f32 %v3351, %v3694
    %v3697 = vmul.f32 %v3352, %v3694
    %v3698 = vmul.f32 %v3353, %v3694
    %v3699 = vlaneseq
    %v3700 = vshrl.u32 %v3699, 7
    %v3701 = vsub.s32 0, %v3700
    %v3702 = vrot.slane %v3690, %v3701
    %v3703 = vmul.f32 %v3350, %v3702
    %v3704 = vmul.f32 %v3351, %v3702
    %v3705 = vmul.f32 %v3352, %v3702
    %v3706 = vmul.f32 %v3353, %v3702
    %v3707 = vadd.f32 %v3703, %v3704
    %3708 = vadd.xlane.f32.xlu0 %v3707
    %v3709 = vpop.xlane.xlu0 %3708
    %v3710 = vadd.f32 %v3705, %v3706
    %3711 = vadd.xlane.f32.xlu0 %v3710
    %v3712 = vpop.xlane.xlu0 %3711
    %v3713 = vadd.f32 %v3354, %v3709
    %v3714 = vadd.f32 %v3355, %v3712
    %v3715 = vpack.c.bf16 %v3697, %v3695
    %v3716 = vpack.c.bf16 %v3698, %v3696
    %v3717 = vpack.c.bf16 %v2186, %v2182
    %v3718 = vpack.c.bf16 %v2188, %v2184
    %v3719 = vpack.c.bf16 %v2292, %v2288
    %v3720 = vpack.c.bf16 %v2294, %v2290
    %v3721 = vpack.c.bf16 %v2393, %v2390
    %v3722 = vpack.c.bf16 %v2196, %v2192
    %v3723 = vpack.c.bf16 %v2198, %v2194
    %v3724 = vpack.c.bf16 %v2302, %v2298
    %v3725 = vpack.c.bf16 %v2304, %v2300
    %v3726 = vpack.c.bf16 %v2401, %v2398
    %3737 = vrot.lane.b32.xlu0 %v3717, 120
    %v3738 = vpop.permute.xlu0 %3737
    %3739 = vrot.lane.b32.xlu0 %v3718, 120
    %v3740 = vpop.permute.xlu0 %3739
    %3741 = vrot.lane.b32.xlu0 %v3719, 120
    %v3742 = vpop.permute.xlu0 %3741
    %3743 = vrot.lane.b32.xlu0 %v3720, 120
    %v3744 = vpop.permute.xlu0 %3743
    %3745 = vrot.lane.b32.xlu0 %v3721, 120
    %v3746 = vpop.permute.xlu0 %3745
    %3747 = vrot.lane.b32.xlu0 %v3722, 120
    %v3748 = vpop.permute.xlu0 %3747
    %3749 = vrot.lane.b32.xlu0 %v3723, 120
    %v3750 = vpop.permute.xlu0 %3749
    %3751 = vrot.lane.b32.xlu0 %v3724, 120
    %v3752 = vpop.permute.xlu0 %3751
    %3753 = vrot.lane.b32.xlu0 %v3725, 120
    %v3754 = vpop.permute.xlu0 %3753
    %3755 = vrot.lane.b32.xlu0 %v3726, 120
    %v3756 = vpop.permute.xlu0 %3755
    %v3757 = vsel %vm1465, %v3738, %v3740
    %v3758 = vsel %vm1465, %v3740, %v3742
    %v3759 = vsel %vm1465, %v3742, %v3744
    %v3760 = vsel %vm1465, %v3744, %v3746
    %v3761 = vsel %vm1465, %v3748, %v3750
    %v3762 = vsel %vm1465, %v3750, %v3752
    %v3763 = vsel %vm1465, %v3752, %v3754
    %v3764 = vsel %vm1465, %v3754, %v3756
    %3775 = vrot.lane.b32.xlu0 %v3717, 112
    %v3776 = vpop.permute.xlu0 %3775
    %3777 = vrot.lane.b32.xlu0 %v3718, 112
    %v3778 = vpop.permute.xlu0 %3777
    %3779 = vrot.lane.b32.xlu0 %v3719, 112
    %v3780 = vpop.permute.xlu0 %3779
    %3781 = vrot.lane.b32.xlu0 %v3720, 112
    %v3782 = vpop.permute.xlu0 %3781
    %3783 = vrot.lane.b32.xlu0 %v3721, 112
    %v3784 = vpop.permute.xlu0 %3783
    %3785 = vrot.lane.b32.xlu0 %v3722, 112
    %v3786 = vpop.permute.xlu0 %3785
    %3787 = vrot.lane.b32.xlu0 %v3723, 112
    %v3788 = vpop.permute.xlu0 %3787
    %3789 = vrot.lane.b32.xlu0 %v3724, 112
    %v3790 = vpop.permute.xlu0 %3789
    %3791 = vrot.lane.b32.xlu0 %v3725, 112
    %v3792 = vpop.permute.xlu0 %3791
    %3793 = vrot.lane.b32.xlu0 %v3726, 112
    %v3794 = vpop.permute.xlu0 %3793
    %v3795 = vsel %vm1504, %v3776, %v3778
    %v3796 = vsel %vm1504, %v3778, %v3780
    %v3797 = vsel %vm1504, %v3780, %v3782
    %v3798 = vsel %vm1504, %v3782, %v3784
    %v3799 = vsel %vm1504, %v3786, %v3788
    %v3800 = vsel %vm1504, %v3788, %v3790
    %v3801 = vsel %vm1504, %v3790, %v3792
    %v3802 = vsel %vm1504, %v3792, %v3794
    %3813 = vrot.lane.b32.xlu0 %v3717, 104
    %v3814 = vpop.permute.xlu0 %3813
    %3815 = vrot.lane.b32.xlu0 %v3718, 104
    %v3816 = vpop.permute.xlu0 %3815
    %3817 = vrot.lane.b32.xlu0 %v3719, 104
    %v3818 = vpop.permute.xlu0 %3817
    %3819 = vrot.lane.b32.xlu0 %v3720, 104
    %v3820 = vpop.permute.xlu0 %3819
    %3821 = vrot.lane.b32.xlu0 %v3721, 104
    %v3822 = vpop.permute.xlu0 %3821
    %3823 = vrot.lane.b32.xlu0 %v3722, 104
    %v3824 = vpop.permute.xlu0 %3823
    %3825 = vrot.lane.b32.xlu0 %v3723, 104
    %v3826 = vpop.permute.xlu0 %3825
    %3827 = vrot.lane.b32.xlu0 %v3724, 104
    %v3828 = vpop.permute.xlu0 %3827
    %3829 = vrot.lane.b32.xlu0 %v3725, 104
    %v3830 = vpop.permute.xlu0 %3829
    %3831 = vrot.lane.b32.xlu0 %v3726, 104
    %v3832 = vpop.permute.xlu0 %3831
    %v3833 = vsel %vm1543, %v3814, %v3816
    %v3834 = vsel %vm1543, %v3816, %v3818
    %v3835 = vsel %vm1543, %v3818, %v3820
    %v3836 = vsel %vm1543, %v3820, %v3822
    %v3837 = vsel %vm1543, %v3824, %v3826
    %v3838 = vsel %vm1543, %v3826, %v3828
    %v3839 = vsel %vm1543, %v3828, %v3830
    %v3840 = vsel %vm1543, %v3830, %v3832
    %3851 = vrot.lane.b32.xlu0 %v3717, 96
    %v3852 = vpop.permute.xlu0 %3851
    %3853 = vrot.lane.b32.xlu0 %v3718, 96
    %v3854 = vpop.permute.xlu0 %3853
    %3855 = vrot.lane.b32.xlu0 %v3719, 96
    %v3856 = vpop.permute.xlu0 %3855
    %3857 = vrot.lane.b32.xlu0 %v3720, 96
    %v3858 = vpop.permute.xlu0 %3857
    %3859 = vrot.lane.b32.xlu0 %v3721, 96
    %v3860 = vpop.permute.xlu0 %3859
    %3861 = vrot.lane.b32.xlu0 %v3722, 96
    %v3862 = vpop.permute.xlu0 %3861
    %3863 = vrot.lane.b32.xlu0 %v3723, 96
    %v3864 = vpop.permute.xlu0 %3863
    %3865 = vrot.lane.b32.xlu0 %v3724, 96
    %v3866 = vpop.permute.xlu0 %3865
    %3867 = vrot.lane.b32.xlu0 %v3725, 96
    %v3868 = vpop.permute.xlu0 %3867
    %3869 = vrot.lane.b32.xlu0 %v3726, 96
    %v3870 = vpop.permute.xlu0 %3869
    %v3871 = vsel %vm1582, %v3852, %v3854
    %v3872 = vsel %vm1582, %v3854, %v3856
    %v3873 = vsel %vm1582, %v3856, %v3858
    %v3874 = vsel %vm1582, %v3858, %v3860
    %v3875 = vsel %vm1582, %v3862, %v3864
    %v3876 = vsel %vm1582, %v3864, %v3866
    %v3877 = vsel %vm1582, %v3866, %v3868
    %v3878 = vsel %vm1582, %v3868, %v3870
    %3889 = vrot.lane.b32.xlu0 %v3717, 88
    %v3890 = vpop.permute.xlu0 %3889
    %3891 = vrot.lane.b32.xlu0 %v3718, 88
    %v3892 = vpop.permute.xlu0 %3891
    %3893 = vrot.lane.b32.xlu0 %v3719, 88
    %v3894 = vpop.permute.xlu0 %3893
    %3895 = vrot.lane.b32.xlu0 %v3720, 88
    %v3896 = vpop.permute.xlu0 %3895
    %3897 = vrot.lane.b32.xlu0 %v3721, 88
    %v3898 = vpop.permute.xlu0 %3897
    %3899 = vrot.lane.b32.xlu0 %v3722, 88
    %v3900 = vpop.permute.xlu0 %3899
    %3901 = vrot.lane.b32.xlu0 %v3723, 88
    %v3902 = vpop.permute.xlu0 %3901
    %3903 = vrot.lane.b32.xlu0 %v3724, 88
    %v3904 = vpop.permute.xlu0 %3903
    %3905 = vrot.lane.b32.xlu0 %v3725, 88
    %v3906 = vpop.permute.xlu0 %3905
    %3907 = vrot.lane.b32.xlu0 %v3726, 88
    %v3908 = vpop.permute.xlu0 %3907
    %v3909 = vsel %vm1621, %v3890, %v3892
    %v3910 = vsel %vm1621, %v3892, %v3894
    %v3911 = vsel %vm1621, %v3894, %v3896
    %v3912 = vsel %vm1621, %v3896, %v3898
    %v3913 = vsel %vm1621, %v3900, %v3902
    %v3914 = vsel %vm1621, %v3902, %v3904
    %v3915 = vsel %vm1621, %v3904, %v3906
    %v3916 = vsel %vm1621, %v3906, %v3908
    %3927 = vrot.lane.b32.xlu0 %v3717, 80
    %v3928 = vpop.permute.xlu0 %3927
    %3929 = vrot.lane.b32.xlu0 %v3718, 80
    %v3930 = vpop.permute.xlu0 %3929
    %3931 = vrot.lane.b32.xlu0 %v3719, 80
    %v3932 = vpop.permute.xlu0 %3931
    %3933 = vrot.lane.b32.xlu0 %v3720, 80
    %v3934 = vpop.permute.xlu0 %3933
    %3935 = vrot.lane.b32.xlu0 %v3721, 80
    %v3936 = vpop.permute.xlu0 %3935
    %3937 = vrot.lane.b32.xlu0 %v3722, 80
    %v3938 = vpop.permute.xlu0 %3937
    %3939 = vrot.lane.b32.xlu0 %v3723, 80
    %v3940 = vpop.permute.xlu0 %3939
    %3941 = vrot.lane.b32.xlu0 %v3724, 80
    %v3942 = vpop.permute.xlu0 %3941
    %3943 = vrot.lane.b32.xlu0 %v3725, 80
    %v3944 = vpop.permute.xlu0 %3943
    %3945 = vrot.lane.b32.xlu0 %v3726, 80
    %v3946 = vpop.permute.xlu0 %3945
    %v3947 = vsel %vm1660, %v3928, %v3930
    %v3948 = vsel %vm1660, %v3930, %v3932
    %v3949 = vsel %vm1660, %v3932, %v3934
    %v3950 = vsel %vm1660, %v3934, %v3936
    %v3951 = vsel %vm1660, %v3938, %v3940
    %v3952 = vsel %vm1660, %v3940, %v3942
    %v3953 = vsel %vm1660, %v3942, %v3944
    %v3954 = vsel %vm1660, %v3944, %v3946
    %3965 = vrot.lane.b32.xlu0 %v3717, 72
    %v3966 = vpop.permute.xlu0 %3965
    %3967 = vrot.lane.b32.xlu0 %v3718, 72
    %v3968 = vpop.permute.xlu0 %3967
    %3969 = vrot.lane.b32.xlu0 %v3719, 72
    %v3970 = vpop.permute.xlu0 %3969
    %3971 = vrot.lane.b32.xlu0 %v3720, 72
    %v3972 = vpop.permute.xlu0 %3971
    %3973 = vrot.lane.b32.xlu0 %v3721, 72
    %v3974 = vpop.permute.xlu0 %3973
    %3975 = vrot.lane.b32.xlu0 %v3722, 72
    %v3976 = vpop.permute.xlu0 %3975
    %3977 = vrot.lane.b32.xlu0 %v3723, 72
    %v3978 = vpop.permute.xlu0 %3977
    %3979 = vrot.lane.b32.xlu0 %v3724, 72
    %v3980 = vpop.permute.xlu0 %3979
    %3981 = vrot.lane.b32.xlu0 %v3725, 72
    %v3982 = vpop.permute.xlu0 %3981
    %3983 = vrot.lane.b32.xlu0 %v3726, 72
    %v3984 = vpop.permute.xlu0 %3983
    %v3985 = vsel %vm1699, %v3966, %v3968
    %v3986 = vsel %vm1699, %v3968, %v3970
    %v3987 = vsel %vm1699, %v3970, %v3972
    %v3988 = vsel %vm1699, %v3972, %v3974
    %v3989 = vsel %vm1699, %v3976, %v3978
    %v3990 = vsel %vm1699, %v3978, %v3980
    %v3991 = vsel %vm1699, %v3980, %v3982
    %v3992 = vsel %vm1699, %v3982, %v3984
    %4004 = vset.pattern.permute.xlu0 0
    %4005 = vperm.xlu0 %4004, %v3713
    %v4006 = vpop.permute.xlu0 %4005
    %4009 = vset.pattern.permute.xlu0 0
    %4010 = vperm.xlu0 %4009, %v3714
    %v4011 = vpop.permute.xlu0 %4010
    %4013 = vmatprep.subr.bf16.mxu0 %v3718
    %4014 = vmatpush1.bf16.msra.mxu0 %v3717
    %4015 = vmatprep.subr.bf16.mxu0 %v3723
    %4016 = vmatpush1.bf16.msra.mxu0 %v3722
    %4017 = vmatprep.subr.bf16.mxu0 %v3758
    %4018 = vmatpush1.bf16.msra.mxu0 %v3757
    %4019 = vmatprep.subr.bf16.mxu0 %v3762
    %4020 = vmatpush1.bf16.msra.mxu0 %v3761
    %4021 = vmatprep.subr.bf16.mxu0 %v3796
    %4022 = vmatpush1.bf16.msra.mxu0 %v3795
    %4023 = vmatprep.subr.bf16.mxu0 %v3800
    %4024 = vmatpush1.bf16.msra.mxu0 %v3799
    %4025 = vmatprep.subr.bf16.mxu0 %v3834
    %4026 = vmatpush1.bf16.msra.mxu0 %v3833
    %4027 = vmatprep.subr.bf16.mxu0 %v3838
    %4028 = vmatpush1.bf16.msra.mxu0 %v3837
    %4029 = vmatprep.subr.bf16.mxu0 %v3872
    %4030 = vmatpush1.bf16.msra.mxu0 %v3871
    %4031 = vmatprep.subr.bf16.mxu0 %v3876
    %4032 = vmatpush1.bf16.msra.mxu0 %v3875
    %4033 = vmatprep.subr.bf16.mxu0 %v3910
    %4034 = vmatpush1.bf16.msra.mxu0 %v3909
    %4035 = vmatprep.subr.bf16.mxu0 %v3914
    %4036 = vmatpush1.bf16.msra.mxu0 %v3913
    %4037 = vmatprep.subr.bf16.mxu0 %v3948
    %4038 = vmatpush1.bf16.msra.mxu0 %v3947
    %4039 = vmatprep.subr.bf16.mxu0 %v3952
    %4040 = vmatpush1.bf16.msra.mxu0 %v3951
    %4041 = vmatprep.subr.bf16.mxu0 %v3986
    %4042 = vmatpush1.bf16.msra.mxu0 %v3985
    %4043 = vmatprep.subr.bf16.mxu0 %v3990
    %4044 = vmatpush1.bf16.msra.mxu0 %v3989
    %4045 = vmatprep.mubr.bf16.mxu0 %v3716
    %4046 = vmatmul.mubr.bf16.gmra.mrb[0].mxu0 %v3715
    %v4047 = vpop.f32.mrb[0].mxu0
    %v4048 = vadd.f32 %v4006, %v4047
    %v4049 = vpop.f32.mrb[0].mxu0
    %v4050 = vadd.f32 %v4006, %v4049
    %v4051 = vpop.f32.mrb[0].mxu0
    %v4052 = vadd.f32 %v4011, %v4051
    %v4053 = vpop.f32.mrb[0].mxu0
    %v4054 = vadd.f32 %v4011, %v4053
    %4055 = vdwg.mxu0
    %4056 = vmatprep.subr.bf16.mxu0 %v3720
    %4057 = vmatpush1.bf16.msra.mxu0 %v3719
    %4058 = vmatprep.subr.bf16.mxu0 %v3725
    %4059 = vmatpush1.bf16.msra.mxu0 %v3724
    %4060 = vmatprep.subr.bf16.mxu0 %v3760
    %4061 = vmatpush1.bf16.msra.mxu0 %v3759
    %4062 = vmatprep.subr.bf16.mxu0 %v3764
    %4063 = vmatpush1.bf16.msra.mxu0 %v3763
    %4064 = vmatprep.subr.bf16.mxu0 %v3798
    %4065 = vmatpush1.bf16.msra.mxu0 %v3797
    %4066 = vmatprep.subr.bf16.mxu0 %v3802
    %4067 = vmatpush1.bf16.msra.mxu0 %v3801
    %4068 = vmatprep.subr.bf16.mxu0 %v3836
    %4069 = vmatpush1.bf16.msra.mxu0 %v3835
    %4070 = vmatprep.subr.bf16.mxu0 %v3840
    %4071 = vmatpush1.bf16.msra.mxu0 %v3839
    %4072 = vmatprep.subr.bf16.mxu0 %v3874
    %4073 = vmatpush1.bf16.msra.mxu0 %v3873
    %4074 = vmatprep.subr.bf16.mxu0 %v3878
    %4075 = vmatpush1.bf16.msra.mxu0 %v3877
    %4076 = vmatprep.subr.bf16.mxu0 %v3912
    %4077 = vmatpush1.bf16.msra.mxu0 %v3911
    %4078 = vmatprep.subr.bf16.mxu0 %v3916
    %4079 = vmatpush1.bf16.msra.mxu0 %v3915
    %4080 = vmatprep.subr.bf16.mxu0 %v3950
    %4081 = vmatpush1.bf16.msra.mxu0 %v3949
    %4082 = vmatprep.subr.bf16.mxu0 %v3954
    %4083 = vmatpush1.bf16.msra.mxu0 %v3953
    %4084 = vmatprep.subr.bf16.mxu0 %v3988
    %4085 = vmatpush1.bf16.msra.mxu0 %v3987
    %4086 = vmatprep.subr.bf16.mxu0 %v3992
    %4087 = vmatpush1.bf16.msra.mxu0 %v3991
    %4088 = vmatprep.mubr.bf16.mxu0 %v3716
    %4089 = vmatmul.mubr.bf16.gmra.mrb[0].mxu0 %v3715
    %v4090 = vpop.f32.mrb[0].mxu0
    %v4091 = vadd.f32 %v4006, %v4090
    %v4092 = vpop.f32.mrb[0].mxu0
    %v4093 = vadd.f32 %v4006, %v4092
    %v4094 = vpop.f32.mrb[0].mxu0
    %v4095 = vadd.f32 %v4011, %v4094
    %v4096 = vpop.f32.mrb[0].mxu0
    %v4097 = vadd.f32 %v4011, %v4096
    %4098 = vdwg.mxu0
    %4099 = vmatprep.subr.bf16.mxu0 0
    %4100 = vmatpush1.bf16.msra.mxu0 %v3721
    %4101 = vmatprep.subr.bf16.mxu0 0
    %4102 = vmatpush1.bf16.msra.mxu0 %v3726
    %4103 = vmatprep.subr.bf16.mxu0 0
    %4104 = vmatpush1.bf16.msra.mxu0 %v3746
    %4105 = vmatprep.subr.bf16.mxu0 0
    %4106 = vmatpush1.bf16.msra.mxu0 %v3756
    %4107 = vmatprep.subr.bf16.mxu0 0
    %4108 = vmatpush1.bf16.msra.mxu0 %v3784
    %4109 = vmatprep.subr.bf16.mxu0 0
    %4110 = vmatpush1.bf16.msra.mxu0 %v3794
    %4111 = vmatprep.subr.bf16.mxu0 0
    %4112 = vmatpush1.bf16.msra.mxu0 %v3822
    %4113 = vmatprep.subr.bf16.mxu0 0
    %4114 = vmatpush1.bf16.msra.mxu0 %v3832
    %4115 = vmatprep.subr.bf16.mxu0 0
    %4116 = vmatpush1.bf16.msra.mxu0 %v3860
    %4117 = vmatprep.subr.bf16.mxu0 0
    %4118 = vmatpush1.bf16.msra.mxu0 %v3870
    %4119 = vmatprep.subr.bf16.mxu0 0
    %4120 = vmatpush1.bf16.msra.mxu0 %v3898
    %4121 = vmatprep.subr.bf16.mxu0 0
    %4122 = vmatpush1.bf16.msra.mxu0 %v3908
    %4123 = vmatprep.subr.bf16.mxu0 0
    %4124 = vmatpush1.bf16.msra.mxu0 %v3936
    %4125 = vmatprep.subr.bf16.mxu0 0
    %4126 = vmatpush1.bf16.msra.mxu0 %v3946
    %4127 = vmatprep.subr.bf16.mxu0 0
    %4128 = vmatpush1.bf16.msra.mxu0 %v3974
    %4129 = vmatprep.subr.bf16.mxu0 0
    %4130 = vmatpush1.bf16.msra.mxu0 %v3984
    %4131 = vmatprep.mubr.bf16.mxu0 %v3716
    %4132 = vmatmul.mubr.bf16.gmra.mrb[0].mxu0 %v3715
    %v4133 = vpop.f32.mrb[0].mxu0
    %v4134 = vadd.f32 %v4006, %v4133
    %v4135 = vpop.f32.mrb[0].mxu0
    %v4136 = vpop.f32.mrb[0].mxu0
    %v4137 = vadd.f32 %v4011, %v4136
    %v4138 = vpop.f32.mrb[0].mxu0
    %4139 = vdwg.mxu0
    %v4140 = vpack.c.bf16 %v3132, %v3128
    %v4141 = vpack.c.bf16 %v3134, %v3130
    %v4142 = vpack.c.bf16 %v3238, %v3234
    %v4143 = vpack.c.bf16 %v3240, %v3236
    %v4144 = vpack.c.bf16 %v3339, %v3336
    %v4145 = vpack.c.bf16 %v3142, %v3138
    %v4146 = vpack.c.bf16 %v3144, %v3140
    %v4147 = vpack.c.bf16 %v3248, %v3244
    %v4148 = vpack.c.bf16 %v3250, %v3246
    %v4149 = vpack.c.bf16 %v3347, %v3344
    %4160 = vrot.lane.b32.xlu0 %v4140, 120
    %v4161 = vpop.permute.xlu0 %4160
    %4162 = vrot.lane.b32.xlu0 %v4141, 120
    %v4163 = vpop.permute.xlu0 %4162
    %4164 = vrot.lane.b32.xlu0 %v4142, 120
    %v4165 = vpop.permute.xlu0 %4164
    %4166 = vrot.lane.b32.xlu0 %v4143, 120
    %v4167 = vpop.permute.xlu0 %4166
    %4168 = vrot.lane.b32.xlu0 %v4144, 120
    %v4169 = vpop.permute.xlu0 %4168
    %4170 = vrot.lane.b32.xlu0 %v4145, 120
    %v4171 = vpop.permute.xlu0 %4170
    %4172 = vrot.lane.b32.xlu0 %v4146, 120
    %v4173 = vpop.permute.xlu0 %4172
    %4174 = vrot.lane.b32.xlu0 %v4147, 120
    %v4175 = vpop.permute.xlu0 %4174
    %4176 = vrot.lane.b32.xlu0 %v4148, 120
    %v4177 = vpop.permute.xlu0 %4176
    %4178 = vrot.lane.b32.xlu0 %v4149, 120
    %v4179 = vpop.permute.xlu0 %4178
    %v4180 = vsel %vm1465, %v4161, %v4163
    %v4181 = vsel %vm1465, %v4163, %v4165
    %v4182 = vsel %vm1465, %v4165, %v4167
    %v4183 = vsel %vm1465, %v4167, %v4169
    %v4184 = vsel %vm1465, %v4171, %v4173
    %v4185 = vsel %vm1465, %v4173, %v4175
    %v4186 = vsel %vm1465, %v4175, %v4177
    %v4187 = vsel %vm1465, %v4177, %v4179
    %4198 = vrot.lane.b32.xlu0 %v4140, 112
    %v4199 = vpop.permute.xlu0 %4198
    %4200 = vrot.lane.b32.xlu0 %v4141, 112
    %v4201 = vpop.permute.xlu0 %4200
    %4202 = vrot.lane.b32.xlu0 %v4142, 112
    %v4203 = vpop.permute.xlu0 %4202
    %4204 = vrot.lane.b32.xlu0 %v4143, 112
    %v4205 = vpop.permute.xlu0 %4204
    %4206 = vrot.lane.b32.xlu0 %v4144, 112
    %v4207 = vpop.permute.xlu0 %4206
    %4208 = vrot.lane.b32.xlu0 %v4145, 112
    %v4209 = vpop.permute.xlu0 %4208
    %4210 = vrot.lane.b32.xlu0 %v4146, 112
    %v4211 = vpop.permute.xlu0 %4210
    %4212 = vrot.lane.b32.xlu0 %v4147, 112
    %v4213 = vpop.permute.xlu0 %4212
    %4214 = vrot.lane.b32.xlu0 %v4148, 112
    %v4215 = vpop.permute.xlu0 %4214
    %4216 = vrot.lane.b32.xlu0 %v4149, 112
    %v4217 = vpop.permute.xlu0 %4216
    %v4218 = vsel %vm1504, %v4199, %v4201
    %v4219 = vsel %vm1504, %v4201, %v4203
    %v4220 = vsel %vm1504, %v4203, %v4205
    %v4221 = vsel %vm1504, %v4205, %v4207
    %v4222 = vsel %vm1504, %v4209, %v4211
    %v4223 = vsel %vm1504, %v4211, %v4213
    %v4224 = vsel %vm1504, %v4213, %v4215
    %v4225 = vsel %vm1504, %v4215, %v4217
    %4236 = vrot.lane.b32.xlu0 %v4140, 104
    %v4237 = vpop.permute.xlu0 %4236
    %4238 = vrot.lane.b32.xlu0 %v4141, 104
    %v4239 = vpop.permute.xlu0 %4238
    %4240 = vrot.lane.b32.xlu0 %v4142, 104
    %v4241 = vpop.permute.xlu0 %4240
    %4242 = vrot.lane.b32.xlu0 %v4143, 104
    %v4243 = vpop.permute.xlu0 %4242
    %4244 = vrot.lane.b32.xlu0 %v4144, 104
    %v4245 = vpop.permute.xlu0 %4244
    %4246 = vrot.lane.b32.xlu0 %v4145, 104
    %v4247 = vpop.permute.xlu0 %4246
    %4248 = vrot.lane.b32.xlu0 %v4146, 104
    %v4249 = vpop.permute.xlu0 %4248
    %4250 = vrot.lane.b32.xlu0 %v4147, 104
    %v4251 = vpop.permute.xlu0 %4250
    %4252 = vrot.lane.b32.xlu0 %v4148, 104
    %v4253 = vpop.permute.xlu0 %4252
    %4254 = vrot.lane.b32.xlu0 %v4149, 104
    %v4255 = vpop.permute.xlu0 %4254
    %v4256 = vsel %vm1543, %v4237, %v4239
    %v4257 = vsel %vm1543, %v4239, %v4241
    %v4258 = vsel %vm1543, %v4241, %v4243
    %v4259 = vsel %vm1543, %v4243, %v4245
    %v4260 = vsel %vm1543, %v4247, %v4249
    %v4261 = vsel %vm1543, %v4249, %v4251
    %v4262 = vsel %vm1543, %v4251, %v4253
    %v4263 = vsel %vm1543, %v4253, %v4255
    %4274 = vrot.lane.b32.xlu0 %v4140, 96
    %v4275 = vpop.permute.xlu0 %4274
    %4276 = vrot.lane.b32.xlu0 %v4141, 96
    %v4277 = vpop.permute.xlu0 %4276
    %4278 = vrot.lane.b32.xlu0 %v4142, 96
    %v4279 = vpop.permute.xlu0 %4278
    %4280 = vrot.lane.b32.xlu0 %v4143, 96
    %v4281 = vpop.permute.xlu0 %4280
    %4282 = vrot.lane.b32.xlu0 %v4144, 96
    %v4283 = vpop.permute.xlu0 %4282
    %4284 = vrot.lane.b32.xlu0 %v4145, 96
    %v4285 = vpop.permute.xlu0 %4284
    %4286 = vrot.lane.b32.xlu0 %v4146, 96
    %v4287 = vpop.permute.xlu0 %4286
    %4288 = vrot.lane.b32.xlu0 %v4147, 96
    %v4289 = vpop.permute.xlu0 %4288
    %4290 = vrot.lane.b32.xlu0 %v4148, 96
    %v4291 = vpop.permute.xlu0 %4290
    %4292 = vrot.lane.b32.xlu0 %v4149, 96
    %v4293 = vpop.permute.xlu0 %4292
    %v4294 = vsel %vm1582, %v4275, %v4277
    %v4295 = vsel %vm1582, %v4277, %v4279
    %v4296 = vsel %vm1582, %v4279, %v4281
    %v4297 = vsel %vm1582, %v4281, %v4283
    %v4298 = vsel %vm1582, %v4285, %v4287
    %v4299 = vsel %vm1582, %v4287, %v4289
    %v4300 = vsel %vm1582, %v4289, %v4291
    %v4301 = vsel %vm1582, %v4291, %v4293
    %4312 = vrot.lane.b32.xlu0 %v4140, 88
    %v4313 = vpop.permute.xlu0 %4312
    %4314 = vrot.lane.b32.xlu0 %v4141, 88
    %v4315 = vpop.permute.xlu0 %4314
    %4316 = vrot.lane.b32.xlu0 %v4142, 88
    %v4317 = vpop.permute.xlu0 %4316
    %4318 = vrot.lane.b32.xlu0 %v4143, 88
    %v4319 = vpop.permute.xlu0 %4318
    %4320 = vrot.lane.b32.xlu0 %v4144, 88
    %v4321 = vpop.permute.xlu0 %4320
    %4322 = vrot.lane.b32.xlu0 %v4145, 88
    %v4323 = vpop.permute.xlu0 %4322
    %4324 = vrot.lane.b32.xlu0 %v4146, 88
    %v4325 = vpop.permute.xlu0 %4324
    %4326 = vrot.lane.b32.xlu0 %v4147, 88
    %v4327 = vpop.permute.xlu0 %4326
    %4328 = vrot.lane.b32.xlu0 %v4148, 88
    %v4329 = vpop.permute.xlu0 %4328
    %4330 = vrot.lane.b32.xlu0 %v4149, 88
    %v4331 = vpop.permute.xlu0 %4330
    %v4332 = vsel %vm1621, %v4313, %v4315
    %v4333 = vsel %vm1621, %v4315, %v4317
    %v4334 = vsel %vm1621, %v4317, %v4319
    %v4335 = vsel %vm1621, %v4319, %v4321
    %v4336 = vsel %vm1621, %v4323, %v4325
    %v4337 = vsel %vm1621, %v4325, %v4327
    %v4338 = vsel %vm1621, %v4327, %v4329
    %v4339 = vsel %vm1621, %v4329, %v4331
    %4350 = vrot.lane.b32.xlu0 %v4140, 80
    %v4351 = vpop.permute.xlu0 %4350
    %4352 = vrot.lane.b32.xlu0 %v4141, 80
    %v4353 = vpop.permute.xlu0 %4352
    %4354 = vrot.lane.b32.xlu0 %v4142, 80
    %v4355 = vpop.permute.xlu0 %4354
    %4356 = vrot.lane.b32.xlu0 %v4143, 80
    %v4357 = vpop.permute.xlu0 %4356
    %4358 = vrot.lane.b32.xlu0 %v4144, 80
    %v4359 = vpop.permute.xlu0 %4358
    %4360 = vrot.lane.b32.xlu0 %v4145, 80
    %v4361 = vpop.permute.xlu0 %4360
    %4362 = vrot.lane.b32.xlu0 %v4146, 80
    %v4363 = vpop.permute.xlu0 %4362
    %4364 = vrot.lane.b32.xlu0 %v4147, 80
    %v4365 = vpop.permute.xlu0 %4364
    %4366 = vrot.lane.b32.xlu0 %v4148, 80
    %v4367 = vpop.permute.xlu0 %4366
    %4368 = vrot.lane.b32.xlu0 %v4149, 80
    %v4369 = vpop.permute.xlu0 %4368
    %v4370 = vsel %vm1660, %v4351, %v4353
    %v4371 = vsel %vm1660, %v4353, %v4355
    %v4372 = vsel %vm1660, %v4355, %v4357
    %v4373 = vsel %vm1660, %v4357, %v4359
    %v4374 = vsel %vm1660, %v4361, %v4363
    %v4375 = vsel %vm1660, %v4363, %v4365
    %v4376 = vsel %vm1660, %v4365, %v4367
    %v4377 = vsel %vm1660, %v4367, %v4369
    %4388 = vrot.lane.b32.xlu0 %v4140, 72
    %v4389 = vpop.permute.xlu0 %4388
    %4390 = vrot.lane.b32.xlu0 %v4141, 72
    %v4391 = vpop.permute.xlu0 %4390
    %4392 = vrot.lane.b32.xlu0 %v4142, 72
    %v4393 = vpop.permute.xlu0 %4392
    %4394 = vrot.lane.b32.xlu0 %v4143, 72
    %v4395 = vpop.permute.xlu0 %4394
    %4396 = vrot.lane.b32.xlu0 %v4144, 72
    %v4397 = vpop.permute.xlu0 %4396
    %4398 = vrot.lane.b32.xlu0 %v4145, 72
    %v4399 = vpop.permute.xlu0 %4398
    %4400 = vrot.lane.b32.xlu0 %v4146, 72
    %v4401 = vpop.permute.xlu0 %4400
    %4402 = vrot.lane.b32.xlu0 %v4147, 72
    %v4403 = vpop.permute.xlu0 %4402
    %4404 = vrot.lane.b32.xlu0 %v4148, 72
    %v4405 = vpop.permute.xlu0 %4404
    %4406 = vrot.lane.b32.xlu0 %v4149, 72
    %v4407 = vpop.permute.xlu0 %4406
    %v4408 = vsel %vm1699, %v4389, %v4391
    %v4409 = vsel %vm1699, %v4391, %v4393
    %v4410 = vsel %vm1699, %v4393, %v4395
    %v4411 = vsel %vm1699, %v4395, %v4397
    %v4412 = vsel %vm1699, %v4399, %v4401
    %v4413 = vsel %vm1699, %v4401, %v4403
    %v4414 = vsel %vm1699, %v4403, %v4405
    %v4415 = vsel %vm1699, %v4405, %v4407
    %4426 = vmatprep.subr.bf16.mxu0 %v4141
    %4427 = vmatpush1.bf16.msra.mxu0 %v4140
    %4428 = vmatprep.subr.bf16.mxu0 %v4146
    %4429 = vmatpush1.bf16.msra.mxu0 %v4145
    %4430 = vmatprep.subr.bf16.mxu0 %v4181
    %4431 = vmatpush1.bf16.msra.mxu0 %v4180
    %4432 = vmatprep.subr.bf16.mxu0 %v4185
    %4433 = vmatpush1.bf16.msra.mxu0 %v4184
    %4434 = vmatprep.subr.bf16.mxu0 %v4219
    %4435 = vmatpush1.bf16.msra.mxu0 %v4218
    %4436 = vmatprep.subr.bf16.mxu0 %v4223
    %4437 = vmatpush1.bf16.msra.mxu0 %v4222
    %4438 = vmatprep.subr.bf16.mxu0 %v4257
    %4439 = vmatpush1.bf16.msra.mxu0 %v4256
    %4440 = vmatprep.subr.bf16.mxu0 %v4261
    %4441 = vmatpush1.bf16.msra.mxu0 %v4260
    %4442 = vmatprep.subr.bf16.mxu0 %v4295
    %4443 = vmatpush1.bf16.msra.mxu0 %v4294
    %4444 = vmatprep.subr.bf16.mxu0 %v4299
    %4445 = vmatpush1.bf16.msra.mxu0 %v4298
    %4446 = vmatprep.subr.bf16.mxu0 %v4333
    %4447 = vmatpush1.bf16.msra.mxu0 %v4332
    %4448 = vmatprep.subr.bf16.mxu0 %v4337
    %4449 = vmatpush1.bf16.msra.mxu0 %v4336
    %4450 = vmatprep.subr.bf16.mxu0 %v4371
    %4451 = vmatpush1.bf16.msra.mxu0 %v4370
    %4452 = vmatprep.subr.bf16.mxu0 %v4375
    %4453 = vmatpush1.bf16.msra.mxu0 %v4374
    %4454 = vmatprep.subr.bf16.mxu0 %v4409
    %4455 = vmatpush1.bf16.msra.mxu0 %v4408
    %4456 = vmatprep.subr.bf16.mxu0 %v4413
    %4457 = vmatpush1.bf16.msra.mxu0 %v4412
    %4458 = vmatprep.mubr.bf16.mxu0 %v3716
    %4459 = vmatmul.mubr.bf16.gmra.mrb[0].mxu0 %v3715
    %v4460 = vpop.f32.mrb[0].mxu0
    %v4461 = vadd.f32 %v4006, %v4460
    %v4462 = vpop.f32.mrb[0].mxu0
    %v4463 = vadd.f32 %v4006, %v4462
    %v4464 = vpop.f32.mrb[0].mxu0
    %v4465 = vadd.f32 %v4011, %v4464
    %v4466 = vpop.f32.mrb[0].mxu0
    %v4467 = vadd.f32 %v4011, %v4466
    %4468 = vdwg.mxu0
    %4469 = vmatprep.subr.bf16.mxu0 %v4143
    %4470 = vmatpush1.bf16.msra.mxu0 %v4142
    %4471 = vmatprep.subr.bf16.mxu0 %v4148
    %4472 = vmatpush1.bf16.msra.mxu0 %v4147
    %4473 = vmatprep.subr.bf16.mxu0 %v4183
    %4474 = vmatpush1.bf16.msra.mxu0 %v4182
    %4475 = vmatprep.subr.bf16.mxu0 %v4187
    %4476 = vmatpush1.bf16.msra.mxu0 %v4186
    %4477 = vmatprep.subr.bf16.mxu0 %v4221
    %4478 = vmatpush1.bf16.msra.mxu0 %v4220
    %4479 = vmatprep.subr.bf16.mxu0 %v4225
    %4480 = vmatpush1.bf16.msra.mxu0 %v4224
    %4481 = vmatprep.subr.bf16.mxu0 %v4259
    %4482 = vmatpush1.bf16.msra.mxu0 %v4258
    %4483 = vmatprep.subr.bf16.mxu0 %v4263
    %4484 = vmatpush1.bf16.msra.mxu0 %v4262
    %4485 = vmatprep.subr.bf16.mxu0 %v4297
    %4486 = vmatpush1.bf16.msra.mxu0 %v4296
    %4487 = vmatprep.subr.bf16.mxu0 %v4301
    %4488 = vmatpush1.bf16.msra.mxu0 %v4300
    %4489 = vmatprep.subr.bf16.mxu0 %v4335
    %4490 = vmatpush1.bf16.msra.mxu0 %v4334
    %4491 = vmatprep.subr.bf16.mxu0 %v4339
    %4492 = vmatpush1.bf16.msra.mxu0 %v4338
    %4493 = vmatprep.subr.bf16.mxu0 %v4373
    %4494 = vmatpush1.bf16.msra.mxu0 %v4372
    %4495 = vmatprep.subr.bf16.mxu0 %v4377
    %4496 = vmatpush1.bf16.msra.mxu0 %v4376
    %4497 = vmatprep.subr.bf16.mxu0 %v4411
    %4498 = vmatpush1.bf16.msra.mxu0 %v4410
    %4499 = vmatprep.subr.bf16.mxu0 %v4415
    %4500 = vmatpush1.bf16.msra.mxu0 %v4414
    %4501 = vmatprep.mubr.bf16.mxu0 %v3716
    %4502 = vmatmul.mubr.bf16.gmra.mrb[0].mxu0 %v3715
    %v4503 = vpop.f32.mrb[0].mxu0
    %v4504 = vadd.f32 %v4006, %v4503
    %v4505 = vpop.f32.mrb[0].mxu0
    %v4506 = vadd.f32 %v4006, %v4505
    %v4507 = vpop.f32.mrb[0].mxu0
    %v4508 = vadd.f32 %v4011, %v4507
    %v4509 = vpop.f32.mrb[0].mxu0
    %v4510 = vadd.f32 %v4011, %v4509
    %4511 = vdwg.mxu0
    %4512 = vmatprep.subr.bf16.mxu0 0
    %4513 = vmatpush1.bf16.msra.mxu0 %v4144
    %4514 = vmatprep.subr.bf16.mxu0 0
    %4515 = vmatpush1.bf16.msra.mxu0 %v4149
    %4516 = vmatprep.subr.bf16.mxu0 0
    %4517 = vmatpush1.bf16.msra.mxu0 %v4169
    %4518 = vmatprep.subr.bf16.mxu0 0
    %4519 = vmatpush1.bf16.msra.mxu0 %v4179
    %4520 = vmatprep.subr.bf16.mxu0 0
    %4521 = vmatpush1.bf16.msra.mxu0 %v4207
    %4522 = vmatprep.subr.bf16.mxu0 0
    %4523 = vmatpush1.bf16.msra.mxu0 %v4217
    %4524 = vmatprep.subr.bf16.mxu0 0
    %4525 = vmatpush1.bf16.msra.mxu0 %v4245
    %4526 = vmatprep.subr.bf16.mxu0 0
    %4527 = vmatpush1.bf16.msra.mxu0 %v4255
    %4528 = vmatprep.subr.bf16.mxu0 0
    %4529 = vmatpush1.bf16.msra.mxu0 %v4283
    %4530 = vmatprep.subr.bf16.mxu0 0
    %4531 = vmatpush1.bf16.msra.mxu0 %v4293
    %4532 = vmatprep.subr.bf16.mxu0 0
    %4533 = vmatpush1.bf16.msra.mxu0 %v4321
    %4534 = vmatprep.subr.bf16.mxu0 0
    %4535 = vmatpush1.bf16.msra.mxu0 %v4331
    %4536 = vmatprep.subr.bf16.mxu0 0
    %4537 = vmatpush1.bf16.msra.mxu0 %v4359
    %4538 = vmatprep.subr.bf16.mxu0 0
    %4539 = vmatpush1.bf16.msra.mxu0 %v4369
    %4540 = vmatprep.subr.bf16.mxu0 0
    %4541 = vmatpush1.bf16.msra.mxu0 %v4397
    %4542 = vmatprep.subr.bf16.mxu0 0
    %4543 = vmatpush1.bf16.msra.mxu0 %v4407
    %4544 = vmatprep.mubr.bf16.mxu0 %v3716
    %4545 = vmatmul.mubr.bf16.gmra.mrb[0].mxu0 %v3715
    %v4546 = vpop.f32.mrb[0].mxu0
    %v4547 = vadd.f32 %v4006, %v4546
    %v4548 = vpop.f32.mrb[0].mxu0
    %v4549 = vpop.f32.mrb[0].mxu0
    %v4550 = vadd.f32 %v4011, %v4549
    %v4551 = vpop.f32.mrb[0].mxu0
    %4552 = vdwg.mxu0
    %v4553 = vld [vmem:[%s11] sm:$0xff]
    %v4554 = vld [vmem:[%s11 + $0x8] sm:$0xff]
    %v4555 = vld [vmem:[%s12] sm:$0xff]
    %v4556 = vld [vmem:[%s12 + $0x8] sm:$0xff]
    %v4557 = vadd.f32 %v4048, %v4050
    %v4558 = vadd.f32 %v4557, %v4091
    %v4559 = vadd.f32 %v4558, %v4093
    %v4560 = vsel %vm348, %v4134, 0.0
    %v4561 = vadd.f32 %v4559, %v4560
    %4562 = vadd.xlane.f32.xlu0 %v4561
    %v4563 = vpop.xlane.xlu0 %4562
    %v4564 = vadd.f32 %v4052, %v4054
    %v4565 = vadd.f32 %v4564, %v4095
    %v4566 = vadd.f32 %v4565, %v4097
    %v4567 = vsel %vm348, %v4137, 0.0
    %v4568 = vadd.f32 %v4566, %v4567
    %4569 = vadd.xlane.f32.xlu0 %v4568
    %v4570 = vpop.xlane.xlu0 %4569
    %v4571 = vadd.f32 %v4563, 0.0
    %v4572 = vadd.f32 %v4570, 0.0
    %v4573 = vadd.f32 %v4461, %v4463
    %v4574 = vadd.f32 %v4573, %v4504
    %v4575 = vadd.f32 %v4574, %v4506
    %v4576 = vsel %vm348, %v4547, 0.0
    %v4577 = vadd.f32 %v4575, %v4576
    %4578 = vadd.xlane.f32.xlu0 %v4577
    %v4579 = vpop.xlane.xlu0 %4578
    %v4580 = vadd.f32 %v4465, %v4467
    %v4581 = vadd.f32 %v4580, %v4508
    %v4582 = vadd.f32 %v4581, %v4510
    %v4583 = vsel %vm348, %v4550, 0.0
    %v4584 = vadd.f32 %v4582, %v4583
    %4585 = vadd.xlane.f32.xlu0 %v4584
    %v4586 = vpop.xlane.xlu0 %4585
    %v4587 = vadd.f32 %v4571, %v4579
    %v4588 = vadd.f32 %v4572, %v4586
    %v4589 = vrcp.pop 1040.0
    %v4590 = vmul.f32 %v4587, %v4589
    %v4591 = vmul.f32 %v4588, %v4589
    %v4592 = vsub.f32 %v4048, %v4590
    %v4593 = vsub.f32 %v4050, %v4590
    %v4594 = vsub.f32 %v4091, %v4590
    %v4595 = vsub.f32 %v4093, %v4590
    %v4596 = vsub.f32 %v4134, %v4590
    %v4597 = vsub.f32 %v4052, %v4591
    %v4598 = vsub.f32 %v4054, %v4591
    %v4599 = vsub.f32 %v4095, %v4591
    %v4600 = vsub.f32 %v4097, %v4591
    %v4601 = vsub.f32 %v4137, %v4591
    %v4602 = vmul.f32 %v4592, %v4592
    %v4603 = vmul.f32 %v4593, %v4593
    %v4604 = vmul.f32 %v4594, %v4594
    %v4605 = vmul.f32 %v4595, %v4595
    %v4606 = vmul.f32 %v4596, %v4596
    %v4607 = vmul.f32 %v4597, %v4597
    %v4608 = vmul.f32 %v4598, %v4598
    %v4609 = vmul.f32 %v4599, %v4599
    %v4610 = vmul.f32 %v4600, %v4600
    %v4611 = vmul.f32 %v4601, %v4601
    %v4612 = vadd.f32 %v4602, %v4603
    %v4613 = vadd.f32 %v4612, %v4604
    %v4614 = vadd.f32 %v4613, %v4605
    %v4615 = vsel %vm348, %v4606, 0.0
    %v4616 = vadd.f32 %v4614, %v4615
    %4617 = vadd.xlane.f32.xlu0 %v4616
    %v4618 = vpop.xlane.xlu0 %4617
    %v4619 = vadd.f32 %v4607, %v4608
    %v4620 = vadd.f32 %v4619, %v4609
    %v4621 = vadd.f32 %v4620, %v4610
    %v4622 = vsel %vm348, %v4611, 0.0
    %v4623 = vadd.f32 %v4621, %v4622
    %4624 = vadd.xlane.f32.xlu0 %v4623
    %v4625 = vpop.xlane.xlu0 %4624
    %v4626 = vadd.f32 %v4618, 0.0
    %v4627 = vadd.f32 %v4625, 0.0
    %v4628 = vsub.f32 %v4461, %v4590
    %v4629 = vsub.f32 %v4463, %v4590
    %v4630 = vsub.f32 %v4504, %v4590
    %v4631 = vsub.f32 %v4506, %v4590
    %v4632 = vsub.f32 %v4547, %v4590
    %v4633 = vsub.f32 %v4465, %v4591
    %v4634 = vsub.f32 %v4467, %v4591
    %v4635 = vsub.f32 %v4508, %v4591
    %v4636 = vsub.f32 %v4510, %v4591
    %v4637 = vsub.f32 %v4550, %v4591
    %v4638 = vmul.f32 %v4628, %v4628
    %v4639 = vmul.f32 %v4629, %v4629
    %v4640 = vmul.f32 %v4630, %v4630
    %v4641 = vmul.f32 %v4631, %v4631
    %v4642 = vmul.f32 %v4632, %v4632
    %v4643 = vmul.f32 %v4633, %v4633
    %v4644 = vmul.f32 %v4634, %v4634
    %v4645 = vmul.f32 %v4635, %v4635
    %v4646 = vmul.f32 %v4636, %v4636
    %v4647 = vmul.f32 %v4637, %v4637
    %v4648 = vadd.f32 %v4638, %v4639
    %v4649 = vadd.f32 %v4648, %v4640
    %v4650 = vadd.f32 %v4649, %v4641
    %v4651 = vsel %vm348, %v4642, 0.0
    %v4652 = vadd.f32 %v4650, %v4651
    %4653 = vadd.xlane.f32.xlu0 %v4652
    %v4654 = vpop.xlane.xlu0 %4653
    %v4655 = vadd.f32 %v4643, %v4644
    %v4656 = vadd.f32 %v4655, %v4645
    %v4657 = vadd.f32 %v4656, %v4646
    %v4658 = vsel %vm348, %v4647, 0.0
    %v4659 = vadd.f32 %v4657, %v4658
    %4660 = vadd.xlane.f32.xlu0 %v4659
    %v4661 = vpop.xlane.xlu0 %4660
    %v4662 = vadd.f32 %v4626, %v4654
    %v4663 = vadd.f32 %v4627, %v4661
    %v4664 = vmul.f32 %v4662, %v4589
    %v4665 = vmul.f32 %v4663, %v4589
    %v4666 = vadd.f32 %v4664, 1e-05
    %v4667 = vadd.f32 %v4665, 1e-05
    %v4668 = vrsqrt.pop %v4666
    %v4669 = vrsqrt.pop %v4667
    %v4670 = vmul.f32 %v4553, %v4668
    %v4671 = vmul.f32 %v4554, %v4669
    %v4672 = vmul.f32 %v4590, %v4670
    %v4673 = vmul.f32 %v4591, %v4671
    %v4674 = vsub.f32 %v4555, %v4672
    %v4675 = vsub.f32 %v4556, %v4673
    %4677 = vset.pattern.permute.xlu0 0
    %4678 = vperm.xlu0 %4677, %v4670
    %v4679 = vpop.permute.xlu0 %4678
    %4682 = vset.pattern.permute.xlu0 0
    %4683 = vperm.xlu0 %4682, %v4671
    %v4684 = vpop.permute.xlu0 %4683
    %v4686 = vmul.f32 %v4048, %v4679
    %v4687 = vmul.f32 %v4050, %v4679
    %v4688 = vmul.f32 %v4091, %v4679
    %v4689 = vmul.f32 %v4093, %v4679
    %v4690 = vmul.f32 %v4052, %v4684
    %v4691 = vmul.f32 %v4054, %v4684
    %v4692 = vmul.f32 %v4095, %v4684
    %v4693 = vmul.f32 %v4097, %v4684
    %4695 = vset.pattern.permute.xlu0 0
    %4696 = vperm.xlu0 %4695, %v4674
    %v4697 = vpop.permute.xlu0 %4696
    %4700 = vset.pattern.permute.xlu0 0
    %4701 = vperm.xlu0 %4700, %v4675
    %v4702 = vpop.permute.xlu0 %4701
    %v4704 = vadd.f32 %v4686, %v4697
    %v4705 = vadd.f32 %v4687, %v4697
    %v4706 = vadd.f32 %v4688, %v4697
    %v4707 = vadd.f32 %v4689, %v4697
    %v4708 = vadd.f32 %v4690, %v4702
    %v4709 = vadd.f32 %v4691, %v4702
    %v4710 = vadd.f32 %v4692, %v4702
    %v4711 = vadd.f32 %v4693, %v4702
    %4714 = vrot.lane.b32.xlu0 %v4704, 120
    %v4715 = vpop.permute.xlu0 %4714
    %4716 = vrot.lane.b32.xlu0 %v4708, 120
    %v4717 = vpop.permute.xlu0 %4716
    %v4720 = vmax.f32 %v4704, %v4715
    %v4721 = vmax.f32 %v4708, %v4717
    %4722 = vrot.lane.b32.xlu0 %v4704, 112
    %v4723 = vpop.permute.xlu0 %4722
    %4724 = vrot.lane.b32.xlu0 %v4708, 112
    %v4725 = vpop.permute.xlu0 %4724
    %v4728 = vmax.f32 %v4720, %v4723
    %v4729 = vmax.f32 %v4721, %v4725
    %4730 = vrot.lane.b32.xlu0 %v4704, 104
    %v4731 = vpop.permute.xlu0 %4730
    %4732 = vrot.lane.b32.xlu0 %v4708, 104
    %v4733 = vpop.permute.xlu0 %4732
    %v4736 = vmax.f32 %v4728, %v4731
    %v4737 = vmax.f32 %v4729, %v4733
    %4738 = vrot.lane.b32.xlu0 %v4704, 96
    %v4739 = vpop.permute.xlu0 %4738
    %4740 = vrot.lane.b32.xlu0 %v4708, 96
    %v4741 = vpop.permute.xlu0 %4740
    %v4744 = vmax.f32 %v4736, %v4739
    %v4745 = vmax.f32 %v4737, %v4741
    %4746 = vrot.lane.b32.xlu0 %v4704, 88
    %v4747 = vpop.permute.xlu0 %4746
    %4748 = vrot.lane.b32.xlu0 %v4708, 88
    %v4749 = vpop.permute.xlu0 %4748
    %v4752 = vmax.f32 %v4744, %v4747
    %v4753 = vmax.f32 %v4745, %v4749
    %4754 = vrot.lane.b32.xlu0 %v4704, 80
    %v4755 = vpop.permute.xlu0 %4754
    %4756 = vrot.lane.b32.xlu0 %v4708, 80
    %v4757 = vpop.permute.xlu0 %4756
    %v4760 = vmax.f32 %v4752, %v4755
    %v4761 = vmax.f32 %v4753, %v4757
    %4762 = vrot.lane.b32.xlu0 %v4704, 72
    %v4763 = vpop.permute.xlu0 %4762
    %4764 = vrot.lane.b32.xlu0 %v4708, 72
    %v4765 = vpop.permute.xlu0 %4764
    %v4768 = vmax.f32 %v4760, %v4763
    %v4769 = vmax.f32 %v4761, %v4765
    %4772 = vrot.lane.b32.xlu0 %v4705, 120
    %v4773 = vpop.permute.xlu0 %4772
    %4774 = vrot.lane.b32.xlu0 %v4709, 120
    %v4775 = vpop.permute.xlu0 %4774
    %v4778 = vmax.f32 %v4705, %v4773
    %v4779 = vmax.f32 %v4709, %v4775
    %4780 = vrot.lane.b32.xlu0 %v4705, 112
    %v4781 = vpop.permute.xlu0 %4780
    %4782 = vrot.lane.b32.xlu0 %v4709, 112
    %v4783 = vpop.permute.xlu0 %4782
    %v4786 = vmax.f32 %v4778, %v4781
    %v4787 = vmax.f32 %v4779, %v4783
    %4788 = vrot.lane.b32.xlu0 %v4705, 104
    %v4789 = vpop.permute.xlu0 %4788
    %4790 = vrot.lane.b32.xlu0 %v4709, 104
    %v4791 = vpop.permute.xlu0 %4790
    %v4794 = vmax.f32 %v4786, %v4789
    %v4795 = vmax.f32 %v4787, %v4791
    %4796 = vrot.lane.b32.xlu0 %v4705, 96
    %v4797 = vpop.permute.xlu0 %4796
    %4798 = vrot.lane.b32.xlu0 %v4709, 96
    %v4799 = vpop.permute.xlu0 %4798
    %v4802 = vmax.f32 %v4794, %v4797
    %v4803 = vmax.f32 %v4795, %v4799
    %4804 = vrot.lane.b32.xlu0 %v4705, 88
    %v4805 = vpop.permute.xlu0 %4804
    %4806 = vrot.lane.b32.xlu0 %v4709, 88
    %v4807 = vpop.permute.xlu0 %4806
    %v4810 = vmax.f32 %v4802, %v4805
    %v4811 = vmax.f32 %v4803, %v4807
    %4812 = vrot.lane.b32.xlu0 %v4705, 80
    %v4813 = vpop.permute.xlu0 %4812
    %4814 = vrot.lane.b32.xlu0 %v4709, 80
    %v4815 = vpop.permute.xlu0 %4814
    %v4818 = vmax.f32 %v4810, %v4813
    %v4819 = vmax.f32 %v4811, %v4815
    %4820 = vrot.lane.b32.xlu0 %v4705, 72
    %v4821 = vpop.permute.xlu0 %4820
    %4822 = vrot.lane.b32.xlu0 %v4709, 72
    %v4823 = vpop.permute.xlu0 %4822
    %v4826 = vmax.f32 %v4818, %v4821
    %v4827 = vmax.f32 %v4819, %v4823
    %4830 = vrot.lane.b32.xlu0 %v4706, 120
    %v4831 = vpop.permute.xlu0 %4830
    %4832 = vrot.lane.b32.xlu0 %v4710, 120
    %v4833 = vpop.permute.xlu0 %4832
    %v4836 = vmax.f32 %v4706, %v4831
    %v4837 = vmax.f32 %v4710, %v4833
    %4838 = vrot.lane.b32.xlu0 %v4706, 112
    %v4839 = vpop.permute.xlu0 %4838
    %4840 = vrot.lane.b32.xlu0 %v4710, 112
    %v4841 = vpop.permute.xlu0 %4840
    %v4844 = vmax.f32 %v4836, %v4839
    %v4845 = vmax.f32 %v4837, %v4841
    %4846 = vrot.lane.b32.xlu0 %v4706, 104
    %v4847 = vpop.permute.xlu0 %4846
    %4848 = vrot.lane.b32.xlu0 %v4710, 104
    %v4849 = vpop.permute.xlu0 %4848
    %v4852 = vmax.f32 %v4844, %v4847
    %v4853 = vmax.f32 %v4845, %v4849
    %4854 = vrot.lane.b32.xlu0 %v4706, 96
    %v4855 = vpop.permute.xlu0 %4854
    %4856 = vrot.lane.b32.xlu0 %v4710, 96
    %v4857 = vpop.permute.xlu0 %4856
    %v4860 = vmax.f32 %v4852, %v4855
    %v4861 = vmax.f32 %v4853, %v4857
    %4862 = vrot.lane.b32.xlu0 %v4706, 88
    %v4863 = vpop.permute.xlu0 %4862
    %4864 = vrot.lane.b32.xlu0 %v4710, 88
    %v4865 = vpop.permute.xlu0 %4864
    %v4868 = vmax.f32 %v4860, %v4863
    %v4869 = vmax.f32 %v4861, %v4865
    %4870 = vrot.lane.b32.xlu0 %v4706, 80
    %v4871 = vpop.permute.xlu0 %4870
    %4872 = vrot.lane.b32.xlu0 %v4710, 80
    %v4873 = vpop.permute.xlu0 %4872
    %v4876 = vmax.f32 %v4868, %v4871
    %v4877 = vmax.f32 %v4869, %v4873
    %4878 = vrot.lane.b32.xlu0 %v4706, 72
    %v4879 = vpop.permute.xlu0 %4878
    %4880 = vrot.lane.b32.xlu0 %v4710, 72
    %v4881 = vpop.permute.xlu0 %4880
    %v4884 = vmax.f32 %v4876, %v4879
    %v4885 = vmax.f32 %v4877, %v4881
    %4888 = vrot.lane.b32.xlu0 %v4707, 120
    %v4889 = vpop.permute.xlu0 %4888
    %4890 = vrot.lane.b32.xlu0 %v4711, 120
    %v4891 = vpop.permute.xlu0 %4890
    %v4894 = vmax.f32 %v4707, %v4889
    %v4895 = vmax.f32 %v4711, %v4891
    %4896 = vrot.lane.b32.xlu0 %v4707, 112
    %v4897 = vpop.permute.xlu0 %4896
    %4898 = vrot.lane.b32.xlu0 %v4711, 112
    %v4899 = vpop.permute.xlu0 %4898
    %v4902 = vmax.f32 %v4894, %v4897
    %v4903 = vmax.f32 %v4895, %v4899
    %4904 = vrot.lane.b32.xlu0 %v4707, 104
    %v4905 = vpop.permute.xlu0 %4904
    %4906 = vrot.lane.b32.xlu0 %v4711, 104
    %v4907 = vpop.permute.xlu0 %4906
    %v4910 = vmax.f32 %v4902, %v4905
    %v4911 = vmax.f32 %v4903, %v4907
    %4912 = vrot.lane.b32.xlu0 %v4707, 96
    %v4913 = vpop.permute.xlu0 %4912
    %4914 = vrot.lane.b32.xlu0 %v4711, 96
    %v4915 = vpop.permute.xlu0 %4914
    %v4918 = vmax.f32 %v4910, %v4913
    %v4919 = vmax.f32 %v4911, %v4915
    %4920 = vrot.lane.b32.xlu0 %v4707, 88
    %v4921 = vpop.permute.xlu0 %4920
    %4922 = vrot.lane.b32.xlu0 %v4711, 88
    %v4923 = vpop.permute.xlu0 %4922
    %v4926 = vmax.f32 %v4918, %v4921
    %v4927 = vmax.f32 %v4919, %v4923
    %4928 = vrot.lane.b32.xlu0 %v4707, 80
    %v4929 = vpop.permute.xlu0 %4928
    %4930 = vrot.lane.b32.xlu0 %v4711, 80
    %v4931 = vpop.permute.xlu0 %4930
    %v4934 = vmax.f32 %v4926, %v4929
    %v4935 = vmax.f32 %v4927, %v4931
    %4936 = vrot.lane.b32.xlu0 %v4707, 72
    %v4937 = vpop.permute.xlu0 %4936
    %4938 = vrot.lane.b32.xlu0 %v4711, 72
    %v4939 = vpop.permute.xlu0 %4938
    %v4942 = vmax.f32 %v4934, %v4937
    %v4943 = vmax.f32 %v4935, %v4939
    %4946 = vrot.lane.b32.xlu0 %v4768, 64
    %v4947 = vpop.permute.xlu0 %4946
    %4948 = vrot.lane.b32.xlu0 %v4769, 64
    %v4949 = vpop.permute.xlu0 %4948
    %4954 = vrot.lane.b32.xlu0 %v4826, 64
    %v4955 = vpop.permute.xlu0 %4954
    %4956 = vrot.lane.b32.xlu0 %v4827, 64
    %v4957 = vpop.permute.xlu0 %4956
    %4962 = vrot.lane.b32.xlu0 %v4884, 64
    %v4963 = vpop.permute.xlu0 %4962
    %4964 = vrot.lane.b32.xlu0 %v4885, 64
    %v4965 = vpop.permute.xlu0 %4964
    %4970 = vrot.lane.b32.xlu0 %v4942, 64
    %v4971 = vpop.permute.xlu0 %4970
    %4972 = vrot.lane.b32.xlu0 %v4943, 64
    %v4973 = vpop.permute.xlu0 %4972
    %v4976 = vmul.f32 %v4461, %v4679
    %v4977 = vmul.f32 %v4463, %v4679
    %v4978 = vmul.f32 %v4504, %v4679
    %v4979 = vmul.f32 %v4506, %v4679
    %v4980 = vmul.f32 %v4465, %v4684
    %v4981 = vmul.f32 %v4467, %v4684
    %v4982 = vmul.f32 %v4508, %v4684
    %v4983 = vmul.f32 %v4510, %v4684
    %v4984 = vadd.f32 %v4976, %v4697
    %v4985 = vadd.f32 %v4977, %v4697
    %v4986 = vadd.f32 %v4978, %v4697
    %v4987 = vadd.f32 %v4979, %v4697
    %v4988 = vadd.f32 %v4980, %v4702
    %v4989 = vadd.f32 %v4981, %v4702
    %v4990 = vadd.f32 %v4982, %v4702
    %v4991 = vadd.f32 %v4983, %v4702
    %4994 = vrot.lane.b32.xlu0 %v4984, 120
    %v4995 = vpop.permute.xlu0 %4994
    %4996 = vrot.lane.b32.xlu0 %v4988, 120
    %v4997 = vpop.permute.xlu0 %4996
    %v5000 = vmax.f32 %v4984, %v4995
    %v5001 = vmax.f32 %v4988, %v4997
    %5002 = vrot.lane.b32.xlu0 %v4984, 112
    %v5003 = vpop.permute.xlu0 %5002
    %5004 = vrot.lane.b32.xlu0 %v4988, 112
    %v5005 = vpop.permute.xlu0 %5004
    %v5008 = vmax.f32 %v5000, %v5003
    %v5009 = vmax.f32 %v5001, %v5005
    %5010 = vrot.lane.b32.xlu0 %v4984, 104
    %v5011 = vpop.permute.xlu0 %5010
    %5012 = vrot.lane.b32.xlu0 %v4988, 104
    %v5013 = vpop.permute.xlu0 %5012
    %v5016 = vmax.f32 %v5008, %v5011
    %v5017 = vmax.f32 %v5009, %v5013
    %5018 = vrot.lane.b32.xlu0 %v4984, 96
    %v5019 = vpop.permute.xlu0 %5018
    %5020 = vrot.lane.b32.xlu0 %v4988, 96
    %v5021 = vpop.permute.xlu0 %5020
    %v5024 = vmax.f32 %v5016, %v5019
    %v5025 = vmax.f32 %v5017, %v5021
    %5026 = vrot.lane.b32.xlu0 %v4984, 88
    %v5027 = vpop.permute.xlu0 %5026
    %5028 = vrot.lane.b32.xlu0 %v4988, 88
    %v5029 = vpop.permute.xlu0 %5028
    %v5032 = vmax.f32 %v5024, %v5027
    %v5033 = vmax.f32 %v5025, %v5029
    %5034 = vrot.lane.b32.xlu0 %v4984, 80
    %v5035 = vpop.permute.xlu0 %5034
    %5036 = vrot.lane.b32.xlu0 %v4988, 80
    %v5037 = vpop.permute.xlu0 %5036
    %v5040 = vmax.f32 %v5032, %v5035
    %v5041 = vmax.f32 %v5033, %v5037
    %5042 = vrot.lane.b32.xlu0 %v4984, 72
    %v5043 = vpop.permute.xlu0 %5042
    %5044 = vrot.lane.b32.xlu0 %v4988, 72
    %v5045 = vpop.permute.xlu0 %5044
    %v5048 = vmax.f32 %v5040, %v5043
    %v5049 = vmax.f32 %v5041, %v5045
    %5052 = vrot.lane.b32.xlu0 %v4985, 120
    %v5053 = vpop.permute.xlu0 %5052
    %5054 = vrot.lane.b32.xlu0 %v4989, 120
    %v5055 = vpop.permute.xlu0 %5054
    %v5058 = vmax.f32 %v4985, %v5053
    %v5059 = vmax.f32 %v4989, %v5055
    %5060 = vrot.lane.b32.xlu0 %v4985, 112
    %v5061 = vpop.permute.xlu0 %5060
    %5062 = vrot.lane.b32.xlu0 %v4989, 112
    %v5063 = vpop.permute.xlu0 %5062
    %v5066 = vmax.f32 %v5058, %v5061
    %v5067 = vmax.f32 %v5059, %v5063
    %5068 = vrot.lane.b32.xlu0 %v4985, 104
    %v5069 = vpop.permute.xlu0 %5068
    %5070 = vrot.lane.b32.xlu0 %v4989, 104
    %v5071 = vpop.permute.xlu0 %5070
    %v5074 = vmax.f32 %v5066, %v5069
    %v5075 = vmax.f32 %v5067, %v5071
    %5076 = vrot.lane.b32.xlu0 %v4985, 96
    %v5077 = vpop.permute.xlu0 %5076
    %5078 = vrot.lane.b32.xlu0 %v4989, 96
    %v5079 = vpop.permute.xlu0 %5078
    %v5082 = vmax.f32 %v5074, %v5077
    %v5083 = vmax.f32 %v5075, %v5079
    %5084 = vrot.lane.b32.xlu0 %v4985, 88
    %v5085 = vpop.permute.xlu0 %5084
    %5086 = vrot.lane.b32.xlu0 %v4989, 88
    %v5087 = vpop.permute.xlu0 %5086
    %v5090 = vmax.f32 %v5082, %v5085
    %v5091 = vmax.f32 %v5083, %v5087
    %5092 = vrot.lane.b32.xlu0 %v4985, 80
    %v5093 = vpop.permute.xlu0 %5092
    %5094 = vrot.lane.b32.xlu0 %v4989, 80
    %v5095 = vpop.permute.xlu0 %5094
    %v5098 = vmax.f32 %v5090, %v5093
    %v5099 = vmax.f32 %v5091, %v5095
    %5100 = vrot.lane.b32.xlu0 %v4985, 72
    %v5101 = vpop.permute.xlu0 %5100
    %5102 = vrot.lane.b32.xlu0 %v4989, 72
    %v5103 = vpop.permute.xlu0 %5102
    %v5106 = vmax.f32 %v5098, %v5101
    %v5107 = vmax.f32 %v5099, %v5103
    %5110 = vrot.lane.b32.xlu0 %v4986, 120
    %v5111 = vpop.permute.xlu0 %5110
    %5112 = vrot.lane.b32.xlu0 %v4990, 120
    %v5113 = vpop.permute.xlu0 %5112
    %v5116 = vmax.f32 %v4986, %v5111
    %v5117 = vmax.f32 %v4990, %v5113
    %5118 = vrot.lane.b32.xlu0 %v4986, 112
    %v5119 = vpop.permute.xlu0 %5118
    %5120 = vrot.lane.b32.xlu0 %v4990, 112
    %v5121 = vpop.permute.xlu0 %5120
    %v5124 = vmax.f32 %v5116, %v5119
    %v5125 = vmax.f32 %v5117, %v5121
    %5126 = vrot.lane.b32.xlu0 %v4986, 104
    %v5127 = vpop.permute.xlu0 %5126
    %5128 = vrot.lane.b32.xlu0 %v4990, 104
    %v5129 = vpop.permute.xlu0 %5128
    %v5132 = vmax.f32 %v5124, %v5127
    %v5133 = vmax.f32 %v5125, %v5129
    %5134 = vrot.lane.b32.xlu0 %v4986, 96
    %v5135 = vpop.permute.xlu0 %5134
    %5136 = vrot.lane.b32.xlu0 %v4990, 96
    %v5137 = vpop.permute.xlu0 %5136
    %v5140 = vmax.f32 %v5132, %v5135
    %v5141 = vmax.f32 %v5133, %v5137
    %5142 = vrot.lane.b32.xlu0 %v4986, 88
    %v5143 = vpop.permute.xlu0 %5142
    %5144 = vrot.lane.b32.xlu0 %v4990, 88
    %v5145 = vpop.permute.xlu0 %5144
    %v5148 = vmax.f32 %v5140, %v5143
    %v5149 = vmax.f32 %v5141, %v5145
    %5150 = vrot.lane.b32.xlu0 %v4986, 80
    %v5151 = vpop.permute.xlu0 %5150
    %5152 = vrot.lane.b32.xlu0 %v4990, 80
    %v5153 = vpop.permute.xlu0 %5152
    %v5156 = vmax.f32 %v5148, %v5151
    %v5157 = vmax.f32 %v5149, %v5153
    %5158 = vrot.lane.b32.xlu0 %v4986, 72
    %v5159 = vpop.permute.xlu0 %5158
    %5160 = vrot.lane.b32.xlu0 %v4990, 72
    %v5161 = vpop.permute.xlu0 %5160
    %v5164 = vmax.f32 %v5156, %v5159
    %v5165 = vmax.f32 %v5157, %v5161
    %5168 = vrot.lane.b32.xlu0 %v4987, 120
    %v5169 = vpop.permute.xlu0 %5168
    %5170 = vrot.lane.b32.xlu0 %v4991, 120
    %v5171 = vpop.permute.xlu0 %5170
    %v5174 = vmax.f32 %v4987, %v5169
    %v5175 = vmax.f32 %v4991, %v5171
    %5176 = vrot.lane.b32.xlu0 %v4987, 112
    %v5177 = vpop.permute.xlu0 %5176
    %5178 = vrot.lane.b32.xlu0 %v4991, 112
    %v5179 = vpop.permute.xlu0 %5178
    %v5182 = vmax.f32 %v5174, %v5177
    %v5183 = vmax.f32 %v5175, %v5179
    %5184 = vrot.lane.b32.xlu0 %v4987, 104
    %v5185 = vpop.permute.xlu0 %5184
    %5186 = vrot.lane.b32.xlu0 %v4991, 104
    %v5187 = vpop.permute.xlu0 %5186
    %v5190 = vmax.f32 %v5182, %v5185
    %v5191 = vmax.f32 %v5183, %v5187
    %5192 = vrot.lane.b32.xlu0 %v4987, 96
    %v5193 = vpop.permute.xlu0 %5192
    %5194 = vrot.lane.b32.xlu0 %v4991, 96
    %v5195 = vpop.permute.xlu0 %5194
    %v5198 = vmax.f32 %v5190, %v5193
    %v5199 = vmax.f32 %v5191, %v5195
    %5200 = vrot.lane.b32.xlu0 %v4987, 88
    %v5201 = vpop.permute.xlu0 %5200
    %5202 = vrot.lane.b32.xlu0 %v4991, 88
    %v5203 = vpop.permute.xlu0 %5202
    %v5206 = vmax.f32 %v5198, %v5201
    %v5207 = vmax.f32 %v5199, %v5203
    %5208 = vrot.lane.b32.xlu0 %v4987, 80
    %v5209 = vpop.permute.xlu0 %5208
    %5210 = vrot.lane.b32.xlu0 %v4991, 80
    %v5211 = vpop.permute.xlu0 %5210
    %v5214 = vmax.f32 %v5206, %v5209
    %v5215 = vmax.f32 %v5207, %v5211
    %5216 = vrot.lane.b32.xlu0 %v4987, 72
    %v5217 = vpop.permute.xlu0 %5216
    %5218 = vrot.lane.b32.xlu0 %v4991, 72
    %v5219 = vpop.permute.xlu0 %5218
    %v5222 = vmax.f32 %v5214, %v5217
    %v5223 = vmax.f32 %v5215, %v5219
    %5226 = vrot.lane.b32.xlu0 %v5048, 64
    %v5227 = vpop.permute.xlu0 %5226
    %5228 = vrot.lane.b32.xlu0 %v5049, 64
    %v5229 = vpop.permute.xlu0 %5228
    %5232 = vrot.lane.b32.xlu0 %v5106, 64
    %v5233 = vpop.permute.xlu0 %5232
    %5234 = vrot.lane.b32.xlu0 %v5107, 64
    %v5235 = vpop.permute.xlu0 %5234
    %5238 = vrot.lane.b32.xlu0 %v5164, 64
    %v5239 = vpop.permute.xlu0 %5238
    %5240 = vrot.lane.b32.xlu0 %v5165, 64
    %v5241 = vpop.permute.xlu0 %5240
    %5244 = vrot.lane.b32.xlu0 %v5222, 64
    %v5245 = vpop.permute.xlu0 %5244
    %5246 = vrot.lane.b32.xlu0 %v5223, 64
    %v5247 = vpop.permute.xlu0 %5246
    %5248 = vrot.lane.b32.xlu0 %v5048, 8
    %v5249 = vpop.permute.xlu0 %5248
    %5250 = vrot.lane.b32.xlu0 %v5049, 8
    %v5251 = vpop.permute.xlu0 %5250
    %5252 = vrot.lane.b32.xlu0 %v5227, 8
    %v5253 = vpop.permute.xlu0 %5252
    %5254 = vrot.lane.b32.xlu0 %v5229, 8
    %v5255 = vpop.permute.xlu0 %5254
    %5256 = vrot.lane.b32.xlu0 %v5106, 8
    %v5257 = vpop.permute.xlu0 %5256
    %5258 = vrot.lane.b32.xlu0 %v5107, 8
    %v5259 = vpop.permute.xlu0 %5258
    %5260 = vrot.lane.b32.xlu0 %v5233, 8
    %v5261 = vpop.permute.xlu0 %5260
    %5262 = vrot.lane.b32.xlu0 %v5235, 8
    %v5263 = vpop.permute.xlu0 %5262
    %5264 = vrot.lane.b32.xlu0 %v5164, 8
    %v5265 = vpop.permute.xlu0 %5264
    %5266 = vrot.lane.b32.xlu0 %v5165, 8
    %v5267 = vpop.permute.xlu0 %5266
    %5268 = vrot.lane.b32.xlu0 %v5239, 8
    %v5269 = vpop.permute.xlu0 %5268
    %5270 = vrot.lane.b32.xlu0 %v5241, 8
    %v5271 = vpop.permute.xlu0 %5270
    %5272 = vrot.lane.b32.xlu0 %v5222, 8
    %v5273 = vpop.permute.xlu0 %5272
    %5274 = vrot.lane.b32.xlu0 %v5223, 8
    %v5275 = vpop.permute.xlu0 %5274
    %5276 = vrot.lane.b32.xlu0 %v5245, 8
    %v5277 = vpop.permute.xlu0 %5276
    %5278 = vrot.lane.b32.xlu0 %v5247, 8
    %v5279 = vpop.permute.xlu0 %5278
    %v5296 = vsel %vm348, %v4768, %v5249
    %v5297 = vsel %vm348, %v4769, %v5251
    %v5298 = vsel %vm348, %v4947, %v5253
    %v5299 = vsel %vm348, %v4949, %v5255
    %v5300 = vsel %vm348, %v4826, %v5257
    %v5301 = vsel %vm348, %v4827, %v5259
    %v5302 = vsel %vm348, %v4955, %v5261
    %v5303 = vsel %vm348, %v4957, %v5263
    %v5304 = vsel %vm348, %v4884, %v5265
    %v5305 = vsel %vm348, %v4885, %v5267
    %v5306 = vsel %vm348, %v4963, %v5269
    %v5307 = vsel %vm348, %v4965, %v5271
    %v5308 = vsel %vm348, %v4942, %v5273
    %v5309 = vsel %vm348, %v4943, %v5275
    %v5310 = vsel %vm348, %v4971, %v5277
    %v5311 = vsel %vm348, %v4973, %v5279
    %v5313 = vrot.slane %v5311, 7
    %s5314 = vtos %v5313
    %v5315 = vstv %s5314
    %vm5317 = vcmp.eq.f32.partialorder %v5296, %v5315
    %vm5318 = vcmp.eq.f32.partialorder %v5297, %v5315
    %vm5319 = vcmp.eq.f32.partialorder %v5298, %v5315
    %vm5320 = vcmp.eq.f32.partialorder %v5299, %v5315
    %vm5321 = vcmp.eq.f32.partialorder %v5300, %v5315
    %vm5322 = vcmp.eq.f32.partialorder %v5301, %v5315
    %vm5323 = vcmp.eq.f32.partialorder %v5302, %v5315
    %vm5324 = vcmp.eq.f32.partialorder %v5303, %v5315
    %vm5325 = vcmp.eq.f32.partialorder %v5304, %v5315
    %vm5326 = vcmp.eq.f32.partialorder %v5305, %v5315
    %vm5327 = vcmp.eq.f32.partialorder %v5306, %v5315
    %vm5328 = vcmp.eq.f32.partialorder %v5307, %v5315
    %vm5329 = vcmp.eq.f32.partialorder %v5308, %v5315
    %vm5330 = vcmp.eq.f32.partialorder %v5309, %v5315
    %vm5331 = vcmp.eq.f32.partialorder %v5310, %v5315
    %vm5332 = vcmp.eq.f32.partialorder %v5311, %v5315
    %v5333 = vsel %vm5317, 1, 0
    %v5334 = vsel %vm5318, 1, 0
    %v5335 = vsel %vm5319, 1, 0
    %v5336 = vsel %vm5320, 1, 0
    %v5337 = vsel %vm5321, 1, 0
    %v5338 = vsel %vm5322, 1, 0
    %v5339 = vsel %vm5323, 1, 0
    %v5340 = vsel %vm5324, 1, 0
    %v5341 = vsel %vm5325, 1, 0
    %v5342 = vsel %vm5326, 1, 0
    %v5343 = vsel %vm5327, 1, 0
    %v5344 = vsel %vm5328, 1, 0
    %v5345 = vsel %vm5329, 1, 0
    %v5346 = vsel %vm5330, 1, 0
    %v5347 = vsel %vm5331, 1, 0
    %v5348 = vsel %vm5332, 1, 0
    %v5349 = vcvt.s32.f32 %v5333
    %v5350 = vcvt.s32.f32 %v5334
    %v5351 = vcvt.s32.f32 %v5335
    %v5352 = vcvt.s32.f32 %v5336
    %v5353 = vcvt.s32.f32 %v5337
    %v5354 = vcvt.s32.f32 %v5338
    %v5355 = vcvt.s32.f32 %v5339
    %v5356 = vcvt.s32.f32 %v5340
    %v5357 = vcvt.s32.f32 %v5341
    %v5358 = vcvt.s32.f32 %v5342
    %v5359 = vcvt.s32.f32 %v5343
    %v5360 = vcvt.s32.f32 %v5344
    %v5361 = vcvt.s32.f32 %v5345
    %v5362 = vcvt.s32.f32 %v5346
    %v5363 = vcvt.s32.f32 %v5347
    %v5364 = vcvt.s32.f32 %v5348
    %vm5365 = vcmask 130048
    %v5366 = vsel %vm5365, %v5349, 0.0
    %5367 = vadd.xlane.f32.xlu0 %v5366
    %v5368 = vpop.xlane.xlu0 %5367
    %v5369 = vsel %vm5365, %v5350, 0.0
    %5370 = vadd.xlane.f32.xlu0 %v5369
    %v5371 = vpop.xlane.xlu0 %5370
    %v5372 = vsel %vm5365, %v5351, 0.0
    %5373 = vadd.xlane.f32.xlu0 %v5372
    %v5374 = vpop.xlane.xlu0 %5373
    %v5375 = vsel %vm5365, %v5352, 0.0
    %5376 = vadd.xlane.f32.xlu0 %v5375
    %v5377 = vpop.xlane.xlu0 %5376
    %v5378 = vsel %vm5365, %v5353, 0.0
    %5379 = vadd.xlane.f32.xlu0 %v5378
    %v5380 = vpop.xlane.xlu0 %5379
    %v5381 = vsel %vm5365, %v5354, 0.0
    %5382 = vadd.xlane.f32.xlu0 %v5381
    %v5383 = vpop.xlane.xlu0 %5382
    %v5384 = vsel %vm5365, %v5355, 0.0
    %5385 = vadd.xlane.f32.xlu0 %v5384
    %v5386 = vpop.xlane.xlu0 %5385
    %v5387 = vsel %vm5365, %v5356, 0.0
    %5388 = vadd.xlane.f32.xlu0 %v5387
    %v5389 = vpop.xlane.xlu0 %5388
    %v5390 = vsel %vm5365, %v5357, 0.0
    %5391 = vadd.xlane.f32.xlu0 %v5390
    %v5392 = vpop.xlane.xlu0 %5391
    %v5393 = vsel %vm5365, %v5358, 0.0
    %5394 = vadd.xlane.f32.xlu0 %v5393
    %v5395 = vpop.xlane.xlu0 %5394
    %v5396 = vsel %vm5365, %v5359, 0.0
    %5397 = vadd.xlane.f32.xlu0 %v5396
    %v5398 = vpop.xlane.xlu0 %5397
    %v5399 = vsel %vm5365, %v5360, 0.0
    %5400 = vadd.xlane.f32.xlu0 %v5399
    %v5401 = vpop.xlane.xlu0 %5400
    %v5402 = vsel %vm5365, %v5361, 0.0
    %5403 = vadd.xlane.f32.xlu0 %v5402
    %v5404 = vpop.xlane.xlu0 %5403
    %v5405 = vsel %vm5365, %v5362, 0.0
    %5406 = vadd.xlane.f32.xlu0 %v5405
    %v5407 = vpop.xlane.xlu0 %5406
    %v5408 = vsel %vm5365, %v5363, 0.0
    %5409 = vadd.xlane.f32.xlu0 %v5408
    %v5410 = vpop.xlane.xlu0 %5409
    %v5411 = vsel %vm5365, %v5364, 0.0
    %5412 = vadd.xlane.f32.xlu0 %v5411
    %v5413 = vpop.xlane.xlu0 %5412
    %v5414 = vadd.f32 %v5368, %v5371
    %v5415 = vadd.f32 %v5414, %v5374
    %v5416 = vadd.f32 %v5415, %v5377
    %v5417 = vadd.f32 %v5416, %v5380
    %v5418 = vadd.f32 %v5417, %v5383
    %v5419 = vadd.f32 %v5418, %v5386
    %v5420 = vadd.f32 %v5419, %v5389
    %v5421 = vadd.f32 %v5420, %v5392
    %v5422 = vadd.f32 %v5421, %v5395
    %v5423 = vadd.f32 %v5422, %v5398
    %v5424 = vadd.f32 %v5423, %v5401
    %v5425 = vadd.f32 %v5424, %v5404
    %v5426 = vadd.f32 %v5425, %v5407
    %v5427 = vadd.f32 %v5426, %v5410
    %v5428 = vadd.f32 %v5427, %v5413
    %v5429 = vrot.slane %v5428, 4
    %v5430 = vadd.f32 %v5428, %v5429
    %v5431 = vrot.slane %v5430, 2
    %v5432 = vadd.f32 %v5430, %v5431
    %v5433 = vrot.slane %v5432, 1
    %v5434 = vadd.f32 %v5432, %v5433
    %vm5435 = vcmp.gt.f32.partialorder %v5434, 8.0
    %v5436 = vsel %vm5435, 1, 0
    %vm5437 = vcmp.eq.s32.totalorder %v5436, 1
    %vm5438 = vmand %vm5437, %vm5317
    %vm5439 = vmand %vm5437, %vm5318
    %vm5440 = vmand %vm5437, %vm5319
    %vm5441 = vmand %vm5437, %vm5320
    %vm5442 = vmand %vm5437, %vm5321
    %vm5443 = vmand %vm5437, %vm5322
    %vm5444 = vmand %vm5437, %vm5323
    %vm5445 = vmand %vm5437, %vm5324
    %vm5446 = vmand %vm5437, %vm5325
    %vm5447 = vmand %vm5437, %vm5326
    %vm5448 = vmand %vm5437, %vm5327
    %vm5449 = vmand %vm5437, %vm5328
    %vm5450 = vmand %vm5437, %vm5329
    %vm5451 = vmand %vm5437, %vm5330
    %vm5452 = vmand %vm5437, %vm5331
    %vm5453 = vmand %vm5437, %vm5332
    %v5454 = vsel %vm5438, 0.0, %v5296
    %v5455 = vsel %vm5439, 0.0, %v5297
    %v5456 = vsel %vm5440, 0.0, %v5298
    %v5457 = vsel %vm5441, 0.0, %v5299
    %v5458 = vsel %vm5442, 0.0, %v5300
    %v5459 = vsel %vm5443, 0.0, %v5301
    %v5460 = vsel %vm5444, 0.0, %v5302
    %v5461 = vsel %vm5445, 0.0, %v5303
    %v5462 = vsel %vm5446, 0.0, %v5304
    %v5463 = vsel %vm5447, 0.0, %v5305
    %v5464 = vsel %vm5448, 0.0, %v5306
    %v5465 = vsel %vm5449, 0.0, %v5307
    %v5466 = vsel %vm5450, 0.0, %v5308
    %v5467 = vsel %vm5451, 0.0, %v5309
    %v5468 = vsel %vm5452, 0.0, %v5310
    %v5469 = vsel %vm5453, 0.0, %v5311
    %v5470 = vld [vmem:[%s13] sm:$0xff]
    %v5471 = vld [vmem:[%s13 + $0x8] sm:$0xff]
    %v5472 = vld [vmem:[%s13 + $0x10] sm:$0xff]
    %v5473 = vld [vmem:[%s13 + $0x18] sm:$0xff]
    %v5474 = vpack.c.bf16 %v5471, %v5470
    %v5475 = vpack.c.bf16 %v5473, %v5472
    %v5476 = vpack.c.bf16 %v5455, %v5454
    %v5477 = vpack.c.bf16 %v5457, %v5456
    %v5478 = vpack.c.bf16 %v5459, %v5458
    %v5479 = vpack.c.bf16 %v5461, %v5460
    %v5480 = vpack.c.bf16 %v5463, %v5462
    %v5481 = vpack.c.bf16 %v5465, %v5464
    %v5482 = vpack.c.bf16 %v5467, %v5466
    %v5483 = vpack.c.bf16 %v5469, %v5468
    %v5484 = vld [vmem:[%s14] sm:$0xff]
    %v5485 = vld [vmem:[%s14 + $0x8] sm:$0xff]
    %v5486 = vld [vmem:[%s14 + $0x10] sm:$0xff]
    %v5487 = vld [vmem:[%s14 + $0x18] sm:$0xff]
    %5489 = vset.pattern.permute.xlu0 0
    %5490 = vperm.xlu0 %5489, %v5484
    %v5491 = vpop.permute.xlu0 %5490
    %5494 = vset.pattern.permute.xlu0 0
    %5495 = vperm.xlu0 %5494, %v5485
    %v5496 = vpop.permute.xlu0 %5495
    %5499 = vset.pattern.permute.xlu0 0
    %5500 = vperm.xlu0 %5499, %v5486
    %v5501 = vpop.permute.xlu0 %5500
    %5504 = vset.pattern.permute.xlu0 0
    %5505 = vperm.xlu0 %5504, %v5487
    %v5506 = vpop.permute.xlu0 %5505
    %5508 = vmatprep.subr.bf16.mxu0 0
    %5509 = vmatpush1.bf16.msra.mxu0 %v5476
    %5510 = vmatprep.subr.bf16.mxu0 0
    %5511 = vmatpush1.bf16.msra.mxu0 %v5477
    %5512 = vmatprep.subr.bf16.mxu0 0
    %5513 = vmatpush1.bf16.msra.mxu0 %v5478
    %5514 = vmatprep.subr.bf16.mxu0 0
    %5515 = vmatpush1.bf16.msra.mxu0 %v5479
    %5516 = vmatprep.subr.bf16.mxu0 0
    %5517 = vmatpush1.bf16.msra.mxu0 %v5480
    %5518 = vmatprep.subr.bf16.mxu0 0
    %5519 = vmatpush1.bf16.msra.mxu0 %v5481
    %5520 = vmatprep.subr.bf16.mxu0 0
    %5521 = vmatpush1.bf16.msra.mxu0 %v5482
    %5522 = vmatprep.subr.bf16.mxu0 0
    %5523 = vmatpush1.bf16.msra.mxu0 %v5483
    %5524 = vmatprep.subr.bf16.mxu0 0
    %5525 = vmatpush1.bf16.msra.mxu0 0
    %5526 = vmatprep.subr.bf16.mxu0 0
    %5527 = vmatpush1.bf16.msra.mxu0 0
    %5528 = vmatprep.subr.bf16.mxu0 0
    %5529 = vmatpush1.bf16.msra.mxu0 0
    %5530 = vmatprep.subr.bf16.mxu0 0
    %5531 = vmatpush1.bf16.msra.mxu0 0
    %5532 = vmatprep.subr.bf16.mxu0 0
    %5533 = vmatpush1.bf16.msra.mxu0 0
    %5534 = vmatprep.subr.bf16.mxu0 0
    %5535 = vmatpush1.bf16.msra.mxu0 0
    %5536 = vmatprep.subr.bf16.mxu0 0
    %5537 = vmatpush1.bf16.msra.mxu0 0
    %5538 = vmatprep.subr.bf16.mxu0 0
    %5539 = vmatpush1.bf16.msra.mxu0 0
    %5540 = vmatprep.mubr.bf16.mxu0 0
    %5541 = vmatmul.mubr.bf16.gmra.mrb[0].mxu0 %v5474
    %v5542 = vpop.f32.mrb[0].mxu0
    %v5543 = vadd.f32 %v5491, %v5542
    %v5544 = vpop.f32.mrb[0].mxu0
    %v5545 = vpop.f32.mrb[0].mxu0
    %v5546 = vadd.f32 %v5496, %v5545
    %v5547 = vpop.f32.mrb[0].mxu0
    %5548 = vmatprep.mubr.bf16.mxu0 0
    %5549 = vmatmul.mubr.bf16.gmra.mrb[0].mxu0 %v5475
    %v5550 = vpop.f32.mrb[0].mxu0
    %v5551 = vadd.f32 %v5501, %v5550
    %v5552 = vpop.f32.mrb[0].mxu0
    %v5553 = vpop.f32.mrb[0].mxu0
    %v5554 = vadd.f32 %v5506, %v5553
    %v5555 = vpop.f32.mrb[0].mxu0
    %5556 = vdwg.mxu0
    %vm5557 = vcmp.ge.f32.partialorder %v5543, 0.0
    %vm5558 = vcmp.ge.f32.partialorder %v5546, 0.0
    %vm5559 = vcmp.ge.f32.partialorder %v5551, 0.0
    %vm5560 = vcmp.ge.f32.partialorder %v5554, 0.0
    %v5561 = vmul.f32 %v5543, 0.2
    %v5562 = vmul.f32 %v5546, 0.2
    %v5563 = vmul.f32 %v5551, 0.2
    %v5564 = vmul.f32 %v5554, 0.2
    %v5565 = vsel %vm5557, %v5543, %v5561
    %v5566 = vsel %vm5558, %v5546, %v5562
    %v5567 = vsel %vm5559, %v5551, %v5563
    %v5568 = vsel %vm5560, %v5554, %v5564
    %v5569 = vld [vmem:[%s15] sm:$0xff]
    %v5570 = vpack.c.bf16 %v5569, %v5569
    %v5571 = vpack.c.bf16 %v5566, %v5565
    %v5572 = vpack.c.bf16 %v5568, %v5567
    %v5573 = vld [vmem:[%s16] sm:$0xff]
    %5575 = vset.pattern.permute.xlu0 0
    %5576 = vperm.xlu0 %5575, %v5573
    %v5577 = vpop.permute.xlu0 %5576
    %v5580 = vsel %vm1300, %v5570, 0
    %5582 = vmatprep.subr.bf16.mxu0 0
    %5583 = vmatpush1.bf16.msra.mxu0 %v5571
    %5584 = vmatprep.subr.bf16.mxu0 0
    %5585 = vmatpush1.bf16.msra.mxu0 %v5572
    %5586 = vmatprep.subr.bf16.mxu0 0
    %5587 = vmatpush1.bf16.msra.mxu0 0
    %5588 = vmatprep.subr.bf16.mxu0 0
    %5589 = vmatpush1.bf16.msra.mxu0 0
    %5590 = vmatprep.subr.bf16.mxu0 0
    %5591 = vmatpush1.bf16.msra.mxu0 0
    %5592 = vmatprep.subr.bf16.mxu0 0
    %5593 = vmatpush1.bf16.msra.mxu0 0
    %5594 = vmatprep.subr.bf16.mxu0 0
    %5595 = vmatpush1.bf16.msra.mxu0 0
    %5596 = vmatprep.subr.bf16.mxu0 0
    %5597 = vmatpush1.bf16.msra.mxu0 0
    %5598 = vmatprep.subr.bf16.mxu0 0
    %5599 = vmatpush1.bf16.msra.mxu0 0
    %5600 = vmatprep.subr.bf16.mxu0 0
    %5601 = vmatpush1.bf16.msra.mxu0 0
    %5602 = vmatprep.subr.bf16.mxu0 0
    %5603 = vmatpush1.bf16.msra.mxu0 0
    %5604 = vmatprep.subr.bf16.mxu0 0
    %5605 = vmatpush1.bf16.msra.mxu0 0
    %5606 = vmatprep.subr.bf16.mxu0 0
    %5607 = vmatpush1.bf16.msra.mxu0 0
    %5608 = vmatprep.subr.bf16.mxu0 0
    %5609 = vmatpush1.bf16.msra.mxu0 0
    %5610 = vmatprep.subr.bf16.mxu0 0
    %5611 = vmatpush1.bf16.msra.mxu0 0
    %5612 = vmatprep.subr.bf16.mxu0 0
    %5613 = vmatpush1.bf16.msra.mxu0 0
    %5614 = vmatprep.mubr.bf16.mxu0 0
    %5615 = vmatmul.mubr.bf16.gmra.mrb[0].mxu0 %v5580
    %v5616 = vpop.f32.mrb[0].mxu0
    %v5617 = vadd.f32 %v5577, %v5616
    %v5618 = vpop.f32.mrb[0].mxu0
    %v5619 = vpop.f32.mrb[0].mxu0
    %v5620 = vpop.f32.mrb[0].mxu0
    %5621 = vdwg.mxu0
    %5622 = vxpose.xlu0.b32.start [1/16] %v5617, 128
    %5623 = vxpose.xlu0.b32.cont [2/16] 0.0, 128
    %5624 = vxpose.xlu0.b32.cont [3/16] 0.0, 128
    %5625 = vxpose.xlu0.b32.cont [4/16] 0.0, 128
    %5626 = vxpose.xlu0.b32.cont [5/16] 0.0, 128
    %5627 = vxpose.xlu0.b32.cont [6/16] 0.0, 128
    %5628 = vxpose.xlu0.b32.cont [7/16] 0.0, 128
    %5629 = vxpose.xlu0.b32.cont [8/16] 0.0, 128
    %5630 = vxpose.xlu0.b32.cont [9/16] 0.0, 128
    %5631 = vxpose.xlu0.b32.cont [10/16] 0.0, 128
    %5632 = vxpose.xlu0.b32.cont [11/16] 0.0, 128
    %5633 = vxpose.xlu0.b32.cont [12/16] 0.0, 128
    %5634 = vxpose.xlu0.b32.cont [13/16] 0.0, 128
    %5635 = vxpose.xlu0.b32.cont [14/16] 0.0, 128
    %5636 = vxpose.xlu0.b32.cont [15/16] 0.0, 128
    %5637 = vxpose.xlu0.b32.end [16/16] 0.0, 128
    %v5638 = vpop.trf.xlu0
    %v5639 = vpop.trf.xlu0
    %v5640 = vpop.trf.xlu0
    %v5641 = vpop.trf.xlu0
    %v5642 = vpop.trf.xlu0
    %v5643 = vpop.trf.xlu0
    %v5644 = vpop.trf.xlu0
    %v5645 = vpop.trf.xlu0
    %v5646 = vpop.trf.xlu0
    %v5647 = vpop.trf.xlu0
    %v5648 = vpop.trf.xlu0
    %v5649 = vpop.trf.xlu0
    %v5650 = vpop.trf.xlu0
    %v5651 = vpop.trf.xlu0
    %v5652 = vpop.trf.xlu0
    %v5653 = vpop.trf.xlu0
    %5654 = vst.msk [vmem:[#allocation2] sm:$0xff] %vm348, %v5638
    %5655 = vst.msk [vmem:[#allocation2 + $0x8] sm:$0xff] %vm348, %v5639
    // Predicated region
    $region70: #{conv_k_region_forward.3} parent=1 // pred_check
      _
    $region71: #{conv_k_region_forward.3} parent=1 // pred_check_branch
      %5657 = sbr.rel (0) target = $region73
    $region72: #{conv_k_region_forward.3} parent=1 // pred_region
      %s5659 = ssub.s32 256, 256
      %5660 = vsyncadd [#allocation3], %s5659
      %s5661 = sshll.u32 [#allocation2], 4
      %s5662 = int_to_ptr.vmem [resolvable:$true] %s5661
      %5667 = dma.vmem_to_hbm [thread:$0]  %s5662, 256, %s17, [#allocation3], 128, 128, 8
    $region73: #{conv_k_region_forward.3} parent=1 // pred_fallthru
      _
    // Predicated region
    $region74: #{conv_k_region_forward.3} parent=1 // pred_check
      _
    $region75: #{conv_k_region_forward.3} parent=1 // pred_check_branch
      %5669 = sbr.rel (0) target = $region77
    $region76: #{conv_k_region_forward.3} parent=1 // pred_region
      %5670 = dma.done [#allocation3], 256
    $region77: #{conv_k_region_forward.3} parent=1 // pred_fallthru
      _
    %5671 = vsyncpa [#allocation3], 1

</llo_original>
